<compile_context>
chip_gen: v5e
topology: v5e:2x2
jax: 0.10.0
libtpu: 0.0.40
codegen_flags: <defaults>
</compile_context>

<pallas_src>
import functools

import jax
import jax.numpy as jnp
from jax.experimental import pallas as pl
from jax.experimental.pallas import tpu as pltpu


# ----------------------------------------------------------------------------
# Kernel 1: (shifted-window conv | plain) matmul + bias, optional fused BN+ReLU
# ----------------------------------------------------------------------------
def _conv_mm_kernel(x_ref, w_ref, b_ref, o_ref, *, ksize, cin, n_rows,
                    row_shift, bn_relu):
    # x_ref: (rows_in, cin) bf16, time-major rows (row m = (t, b));
    # w_ref: (ksize*cin, tn) bf16; b_ref: (1, tn) f32; o_ref: (n_rows, tn) f32.
    # out[m, :] = sum_k x[m + k*row_shift, :] @ w[k*cin:(k+1)*cin, :] + b
    x = x_ref[...]
    acc = jnp.dot(x[0:n_rows, :], w_ref[0:cin, :],
                  preferred_element_type=jnp.float32)
    for k in range(1, ksize):
        acc += jnp.dot(x[k * row_shift:k * row_shift + n_rows, :],
                       w_ref[k * cin:(k + 1) * cin, :],
                       preferred_element_type=jnp.float32)
    acc = acc + b_ref[...]
    if bn_relu:
        # BatchNorm1d training-mode batch stats over all B*T rows (biased var),
        # gamma=1 / beta=0, followed by ReLU — all in f32.
        mean = jnp.mean(acc, axis=0, keepdims=True)
        cen = acc - mean
        var = jnp.mean(cen * cen, axis=0, keepdims=True)
        acc = jnp.maximum(cen * jax.lax.rsqrt(var + 1e-5), 0.0)
    o_ref[...] = acc


def _conv_mm_call(x2d, w, b, *, ksize, cin, n_rows, row_shift, bn_relu, tn=128):
    rows_in = x2d.shape[0]
    kcin, N = w.shape
    if N % tn != 0 or N < tn:
        tn = N  # small / non-multiple widths fall back to a single N block
    kern = functools.partial(_conv_mm_kernel, ksize=ksize, cin=cin,
                             n_rows=n_rows, row_shift=row_shift, bn_relu=bn_relu)
    return pl.pallas_call(
        kern,
        out_shape=jax.ShapeDtypeStruct((n_rows, N), jnp.float32),
        grid=(N // tn,),
        in_specs=[
            pl.BlockSpec((rows_in, cin), lambda j: (0, 0)),   # full M per step
            pl.BlockSpec((kcin, tn), lambda j: (0, j)),
            pl.BlockSpec((1, tn), lambda j: (0, j)),
        ],
        out_specs=pl.BlockSpec((n_rows, tn), lambda j: (0, j)),
        compiler_params=pltpu.CompilerParams(
            dimension_semantics=("parallel",),
            vmem_limit_bytes=48 * 1024 * 1024,
        ),
    )(x2d.astype(jnp.bfloat16), w.astype(jnp.bfloat16),
      b.reshape(1, N).astype(jnp.float32))


def conv_bn_relu(x_tm, w, b, *, ksize=5, pad=2):
    """ConvNorm(k=5,pad=2) + BatchNorm1d + ReLU.  x_tm: (T,B,Cin) -> (T,B,Cout)."""
    T, B, Cin = x_tm.shape
    Cout = w.shape[1]
    # Pad the time axis once; rows stay time-major so window shift k == k*B rows.
    xp = jnp.pad(x_tm, ((pad, pad), (0, 0), (0, 0))).reshape((T + 2 * pad) * B, Cin)
    y = _conv_mm_call(xp, w, b, ksize=ksize, cin=Cin, n_rows=T * B,
                      row_shift=B, bn_relu=True)
    return y.reshape(T, B, Cout)


def gate_projection(x_tm, w_in, b_in):
    """x @ w_in + b_in for all timesteps & both LSTM directions at once."""
    T, B, D = x_tm.shape
    return _conv_mm_call(x_tm.reshape(T * B, D), w_in, b_in,
                         ksize=1, cin=D, n_rows=T * B, row_shift=0,
                         bn_relu=False)


# ----------------------------------------------------------------------------
# Kernel 2: bidirectional LSTM recurrence (one grid step per direction)
# ----------------------------------------------------------------------------
def _bilstm_kernel(gx_ref, whh_ref, o_ref, *, seq_len, hidden):
    # gx_ref: (1, T, B, 4H) f32 pre-activations for this direction
    # whh_ref: (1, H, 4H) bf16 recurrent weight (transposed), resident in VMEM
    # o_ref:   (1, T, B, H) f32 hidden states placed in original time order
    d = pl.program_id(0)          # 0 = forward, 1 = backward
    H = hidden
    B = gx_ref.shape[2]
    whh = whh_ref[0]              # (H, 4H) bf16, loaded once

    def step(s, carry):
        h, c = carry
        t = s + d * (seq_len - 1 - 2 * s)      # d==0: t=s ; d==1: t=T-1-s
        gates = gx_ref[0, t] + jnp.dot(h.astype(jnp.bfloat16), whh,
                                       preferred_element_type=jnp.float32)
        i_g = jax.nn.sigmoid(gates[:, 0 * H:1 * H])
        f_g = jax.nn.sigmoid(gates[:, 1 * H:2 * H])
        g_g = jnp.tanh(gates[:, 2 * H:3 * H])
        o_g = jax.nn.sigmoid(gates[:, 3 * H:4 * H])
        c = f_g * c + i_g * g_g
        h = o_g * jnp.tanh(c)
        o_ref[0, t] = h
        return h, c

    zeros = jnp.zeros((B, H), jnp.float32)
    jax.lax.fori_loop(0, seq_len, step, (zeros, zeros))


def bilstm_layer(x_tm, layer):
    """One bidirectional LSTM layer (PyTorch gate order i,f,g,o, zero init).

    x_tm: (T, B, D) -> (2, T, B, H)  (dir 0 = forward, dir 1 = backward)."""
    T, B, D = x_tm.shape
    H = layer["fwd"]["w_hh"].shape[1]
    # Fused input projection for BOTH directions in one matmul: (T*B, 8H).
    w_in = jnp.concatenate([layer["fwd"]["w_ih"].T, layer["rev"]["w_ih"].T],
                           axis=1)                                   # (D, 8H)
    b_in = jnp.concatenate([layer["fwd"]["b_ih"] + layer["fwd"]["b_hh"],
                            layer["rev"]["b_ih"] + layer["rev"]["b_hh"]])
    gx = gate_projection(x_tm, w_in, b_in)                           # (T*B, 8H) f32
    gx = gx.reshape(T, B, 2, 4 * H).transpose(2, 0, 1, 3)            # (2,T,B,4H)
    whh = jnp.stack([layer["fwd"]["w_hh"].T,
                     layer["rev"]["w_hh"].T]).astype(jnp.bfloat16)   # (2,H,4H)
    return pl.pallas_call(
        functools.partial(_bilstm_kernel, seq_len=T, hidden=H),
        out_shape=jax.ShapeDtypeStruct((2, T, B, H), jnp.float32),
        grid=(2,),
        in_specs=[
            pl.BlockSpec((1, T, B, 4 * H), lambda d: (d, 0, 0, 0)),
            pl.BlockSpec((1, H, 4 * H), lambda d: (d, 0, 0)),
        ],
        out_specs=pl.BlockSpec((1, T, B, H), lambda d: (d, 0, 0, 0)),
        compiler_params=pltpu.CompilerParams(
            dimension_semantics=("parallel",),
            vmem_limit_bytes=48 * 1024 * 1024,
        ),
    )(gx, whh)


# ----------------------------------------------------------------------------
# Encoder forward (matches Encoder.forward in model_vc.py)
# ----------------------------------------------------------------------------
def encoder_fwd(params, x, c_org, *, dim_neck, freq):
    """x: (B, T, 80), c_org: (B, dim_emb) -> list of (B, 2*dim_neck) codes."""
    B, T, _ = x.shape
    # (B, T, 80) -> time-major (T, B, 80), then append the speaker embedding.
    h = jnp.concatenate(
        [jnp.transpose(x, (1, 0, 2)),
         jnp.broadcast_to(c_org[None, :, :], (T, B, c_org.shape[-1]))],
        axis=-1)                                                     # (T,B,80+emb)
    for conv in params["convs"]:
        h = conv_bn_relu(h, conv["w"], conv["b"])                    # (T,B,512)
    dirs = None
    for layer in params["lstm"]:
        dirs = bilstm_layer(h, layer)                                # (2,T,B,H)
        h = jnp.concatenate([dirs[0], dirs[1]], axis=-1)             # (T,B,2H)
    out_f, out_b = dirs[0], dirs[1]                                  # (T,B,dim_neck)
    codes = []
    for i in range(0, T, freq):
        codes.append(jnp.concatenate([out_f[i + freq - 1], out_b[i]], axis=-1))
    return codes


# ----------------------------------------------------------------------------
# Deterministic parameter init (shapes from Encoder.__init__)
# ----------------------------------------------------------------------------
def init_params(key, dim_neck, dim_emb):
    keys = iter(jax.random.split(key, 64))

    def nk():
        return next(keys)

    def xavier(shape, gain, fan_in, fan_out):
        bound = gain * (6.0 / (fan_in + fan_out)) ** 0.5
        return jax.random.uniform(nk(), shape, jnp.float32, -bound, bound)

    def conv_params(cin, cout, k, gain):
        # Pallas-friendly weight layout (k*cin, cout); fans match PyTorch Conv1d.
        w = xavier((k * cin, cout), gain, cin * k, cout * k)
        bb = 1.0 / (cin * k) ** 0.5
        b = jax.random.uniform(nk(), (cout,), jnp.float32, -bb, bb)
        return {"w": w, "b": b}

    def lstm_params(din, h):
        s = 1.0 / h ** 0.5
        return {
            "w_ih": jax.random.uniform(nk(), (4 * h, din), jnp.float32, -s, s),
            "w_hh": jax.random.uniform(nk(), (4 * h, h), jnp.float32, -s, s),
            "b_ih": jax.random.uniform(nk(), (4 * h,), jnp.float32, -s, s),
            "b_hh": jax.random.uniform(nk(), (4 * h,), jnp.float32, -s, s),
        }

    gain_relu = 2.0 ** 0.5
    return {
        "convs": [
            conv_params(80 + dim_emb, 512, 5, gain_relu),
            conv_params(512, 512, 5, gain_relu),
            conv_params(512, 512, 5, gain_relu),
        ],
        "lstm": [
            {"fwd": lstm_params(512, dim_neck), "rev": lstm_params(512, dim_neck)},
            {"fwd": lstm_params(2 * dim_neck, dim_neck),
             "rev": lstm_params(2 * dim_neck, dim_neck)},
        ],
    }


# ----------------------------------------------------------------------------
if __name__ == "__main__":
    dim_neck, dim_emb, freq = 8, 16, 4
    B, T = 2, 8  # freq must divide T

    key = jax.random.PRNGKey(0)
    kp, kx, kc = jax.random.split(key, 3)

    params = init_params(kp, dim_neck, dim_emb)
    x = jax.random.normal(kx, (B, T, 80), jnp.float32)       # mel spectrogram
    c_org = jax.random.normal(kc, (B, dim_emb), jnp.float32)  # speaker embedding

    fwd = jax.jit(functools.partial(encoder_fwd, dim_neck=dim_neck, freq=freq))
    codes = fwd(params, x, c_org)
    codes = jax.block_until_ready(codes)

    assert len(codes) == T // freq
    for code in codes:
        assert code.shape == (B, 2 * dim_neck)
        assert bool(jnp.all(jnp.isfinite(code)))

    print("KERNEL_OK")
</pallas_src>

<mosaic_0001>
module attributes {stable_mosaic.version = 11 : i64} {
  func.func @_conv_mm_kernel(%arg0: i32, %arg1: memref<24x96xbf16, #tpu.memory_space<vmem>>, %arg2: memref<480x128xbf16, #tpu.memory_space<vmem>>, %arg3: memref<1x128xf32, #tpu.memory_space<vmem>>, %arg4: memref<16x128xf32, #tpu.memory_space<vmem>>) attributes {dimension_semantics = [#tpu.dimension_semantics<parallel>], iteration_bounds = array<i64: 4>, scalar_prefetch = 0 : i64, scratch_operands = 0 : i64, tpu.core_type = #tpu.core_type<tc>, window_params = [{pipeline_mode = #tpu.pipeline_mode<synchronous>, transform_indices = @transform_0, window_bounds = array<i64: 24, 96>}, {transform_indices = @transform_1, window_bounds = array<i64: 480, 128>}, {transform_indices = @transform_2, window_bounds = array<i64: 1, 128>}, {transform_indices = @transform_3, window_bounds = array<i64: 16, 128>}]} {
    %c0 = arith.constant 0 : index
    %c0_0 = arith.constant 0 : index
    %0 = vector.load %arg1[%c0, %c0_0] : memref<24x96xbf16, #tpu.memory_space<vmem>>, vector<24x96xbf16>
    %1 = vector.extract_strided_slice %0 {offsets = [0, 0], sizes = [16, 96], strides = [1, 1]} : vector<24x96xbf16> to vector<16x96xbf16>
    %c0_1 = arith.constant 0 : index
    %c0_2 = arith.constant 0 : index
    %2 = vector.load %arg2[%c0_1, %c0_2] : memref<480x128xbf16, #tpu.memory_space<vmem>>, vector<96x128xbf16>
    %cst = arith.constant dense<0.000000e+00> : vector<16x128xf32>
    %3 = tpu.matmul %1, %2, %cst {dimension_numbers = #tpu.dot_dimension_numbers<[1], [0], [0], [1], [0, 0, 1, 1], [], []>} : vector<16x96xbf16>, vector<96x128xbf16>, vector<16x128xf32> -> vector<16x128xf32>
    %4 = vector.extract_strided_slice %0 {offsets = [2, 0], sizes = [16, 96], strides = [1, 1]} : vector<24x96xbf16> to vector<16x96xbf16>
    %c96 = arith.constant 96 : index
    %c0_3 = arith.constant 0 : index
    %5 = vector.load %arg2[%c96, %c0_3] : memref<480x128xbf16, #tpu.memory_space<vmem>>, vector<96x128xbf16>
    %cst_4 = arith.constant dense<0.000000e+00> : vector<16x128xf32>
    %6 = tpu.matmul %4, %5, %cst_4 {dimension_numbers = #tpu.dot_dimension_numbers<[1], [0], [0], [1], [0, 0, 1, 1], [], []>} : vector<16x96xbf16>, vector<96x128xbf16>, vector<16x128xf32> -> vector<16x128xf32>
    %7 = arith.addf %3, %6 : vector<16x128xf32>
    %8 = vector.extract_strided_slice %0 {offsets = [4, 0], sizes = [16, 96], strides = [1, 1]} : vector<24x96xbf16> to vector<16x96xbf16>
    %c192 = arith.constant 192 : index
    %c0_5 = arith.constant 0 : index
    %9 = vector.load %arg2[%c192, %c0_5] : memref<480x128xbf16, #tpu.memory_space<vmem>>, vector<96x128xbf16>
    %cst_6 = arith.constant dense<0.000000e+00> : vector<16x128xf32>
    %10 = tpu.matmul %8, %9, %cst_6 {dimension_numbers = #tpu.dot_dimension_numbers<[1], [0], [0], [1], [0, 0, 1, 1], [], []>} : vector<16x96xbf16>, vector<96x128xbf16>, vector<16x128xf32> -> vector<16x128xf32>
    %11 = arith.addf %7, %10 : vector<16x128xf32>
    %12 = vector.extract_strided_slice %0 {offsets = [6, 0], sizes = [16, 96], strides = [1, 1]} : vector<24x96xbf16> to vector<16x96xbf16>
    %c288 = arith.constant 288 : index
    %c0_7 = arith.constant 0 : index
    %13 = vector.load %arg2[%c288, %c0_7] : memref<480x128xbf16, #tpu.memory_space<vmem>>, vector<96x128xbf16>
    %cst_8 = arith.constant dense<0.000000e+00> : vector<16x128xf32>
    %14 = tpu.matmul %12, %13, %cst_8 {dimension_numbers = #tpu.dot_dimension_numbers<[1], [0], [0], [1], [0, 0, 1, 1], [], []>} : vector<16x96xbf16>, vector<96x128xbf16>, vector<16x128xf32> -> vector<16x128xf32>
    %15 = arith.addf %11, %14 : vector<16x128xf32>
    %16 = vector.extract_strided_slice %0 {offsets = [8, 0], sizes = [16, 96], strides = [1, 1]} : vector<24x96xbf16> to vector<16x96xbf16>
    %c384 = arith.constant 384 : index
    %c0_9 = arith.constant 0 : index
    %17 = vector.load %arg2[%c384, %c0_9] : memref<480x128xbf16, #tpu.memory_space<vmem>>, vector<96x128xbf16>
    %cst_10 = arith.constant dense<0.000000e+00> : vector<16x128xf32>
    %18 = tpu.matmul %16, %17, %cst_10 {dimension_numbers = #tpu.dot_dimension_numbers<[1], [0], [0], [1], [0, 0, 1, 1], [], []>} : vector<16x96xbf16>, vector<96x128xbf16>, vector<16x128xf32> -> vector<16x128xf32>
    %19 = arith.addf %15, %18 : vector<16x128xf32>
    %c0_11 = arith.constant 0 : index
    %c0_12 = arith.constant 0 : index
    %20 = vector.load %arg3[%c0_11, %c0_12] : memref<1x128xf32, #tpu.memory_space<vmem>>, vector<1x128xf32>
    %21 = vector.broadcast %20 : vector<1x128xf32> to vector<16x128xf32>
    %22 = arith.addf %19, %21 : vector<16x128xf32>
    %cst_13 = arith.constant dense<0.000000e+00> : vector<128xf32>
    %23 = vector.multi_reduction <add>, %22, %cst_13 [0] : vector<16x128xf32> to vector<128xf32>
    %24 = vector.shape_cast %23 : vector<128xf32> to vector<1x128xf32>
    %cst_14 = arith.constant 1.600000e+01 : f32
    %25 = vector.broadcast %cst_14 : f32 to vector<1x128xf32>
    %26 = arith.divf %24, %25 : vector<1x128xf32>
    %27 = vector.broadcast %26 : vector<1x128xf32> to vector<16x128xf32>
    %28 = arith.subf %22, %27 : vector<16x128xf32>
    %29 = arith.mulf %28, %28 : vector<16x128xf32>
    %cst_15 = arith.constant dense<0.000000e+00> : vector<128xf32>
    %30 = vector.multi_reduction <add>, %29, %cst_15 [0] : vector<16x128xf32> to vector<128xf32>
    %31 = vector.shape_cast %30 : vector<128xf32> to vector<1x128xf32>
    %cst_16 = arith.constant 1.600000e+01 : f32
    %32 = vector.broadcast %cst_16 : f32 to vector<1x128xf32>
    %33 = arith.divf %31, %32 : vector<1x128xf32>
    %cst_17 = arith.constant 9.99999974E-6 : f32
    %34 = vector.broadcast %cst_17 : f32 to vector<1x128xf32>
    %35 = arith.addf %33, %34 : vector<1x128xf32>
    %36 = math.rsqrt %35 : vector<1x128xf32>
    %37 = vector.broadcast %36 : vector<1x128xf32> to vector<16x128xf32>
    %38 = arith.mulf %28, %37 : vector<16x128xf32>
    %cst_18 = arith.constant 0.000000e+00 : f32
    %39 = vector.broadcast %cst_18 : f32 to vector<16x128xf32>
    %40 = arith.maximumf %38, %39 : vector<16x128xf32>
    %c0_19 = arith.constant 0 : index
    %c0_20 = arith.constant 0 : index
    %41 = vector.load %arg4[%c0_19, %c0_20] : memref<16x128xf32, #tpu.memory_space<vmem>>, vector<16x128xf32>
    tpu.vector_store %arg4[%c0_19, %c0_20], %40 {strides = array<i32>} : memref<16x128xf32, #tpu.memory_space<vmem>>, vector<16x128xf32>,
    return
  }
  func.func @transform_0(%arg0: i32) -> (i32, i32) {
    %c0_i32 = arith.constant 0 : i32
    %c0_i32_0 = arith.constant 0 : i32
    %c0_i32_1 = arith.constant 0 : i32
    return %c0_i32, %c0_i32_0 : i32, i32
  }
  func.func @transform_1(%arg0: i32) -> (i32, i32) {
    %c0_i32 = arith.constant 0 : i32
    %c0_i32_0 = arith.constant 0 : i32
    return %c0_i32, %arg0 : i32, i32
  }
  func.func @transform_2(%arg0: i32) -> (i32, i32) {
    %c0_i32 = arith.constant 0 : i32
    %c0_i32_0 = arith.constant 0 : i32
    return %c0_i32, %arg0 : i32, i32
  }
  func.func @transform_3(%arg0: i32) -> (i32, i32) {
    %c0_i32 = arith.constant 0 : i32
    %c0_i32_0 = arith.constant 0 : i32
    return %c0_i32, %arg0 : i32, i32
  }
}

module attributes {stable_mosaic.version = 11 : i64} {
  func.func @_conv_mm_kernel(%arg0: i32, %arg1: memref<24x512xbf16, #tpu.memory_space<vmem>>, %arg2: memref<2560x128xbf16, #tpu.memory_space<vmem>>, %arg3: memref<1x128xf32, #tpu.memory_space<vmem>>, %arg4: memref<16x128xf32, #tpu.memory_space<vmem>>) attributes {dimension_semantics = [#tpu.dimension_semantics<parallel>], iteration_bounds = array<i64: 4>, scalar_prefetch = 0 : i64, scratch_operands = 0 : i64, tpu.core_type = #tpu.core_type<tc>, window_params = [{pipeline_mode = #tpu.pipeline_mode<synchronous>, transform_indices = @transform_0, window_bounds = array<i64: 24, 512>}, {transform_indices = @transform_1, window_bounds = array<i64: 2560, 128>}, {transform_indices = @transform_2, window_bounds = array<i64: 1, 128>}, {transform_indices = @transform_3, window_bounds = array<i64: 16, 128>}]} {
    %c0 = arith.constant 0 : index
    %c0_0 = arith.constant 0 : index
    %0 = vector.load %arg1[%c0, %c0_0] : memref<24x512xbf16, #tpu.memory_space<vmem>>, vector<24x512xbf16>
    %1 = vector.extract_strided_slice %0 {offsets = [0, 0], sizes = [16, 512], strides = [1, 1]} : vector<24x512xbf16> to vector<16x512xbf16>
    %c0_1 = arith.constant 0 : index
    %c0_2 = arith.constant 0 : index
    %2 = vector.load %arg2[%c0_1, %c0_2] : memref<2560x128xbf16, #tpu.memory_space<vmem>>, vector<512x128xbf16>
    %cst = arith.constant dense<0.000000e+00> : vector<16x128xf32>
    %3 = tpu.matmul %1, %2, %cst {dimension_numbers = #tpu.dot_dimension_numbers<[1], [0], [0], [1], [0, 0, 1, 1], [], []>} : vector<16x512xbf16>, vector<512x128xbf16>, vector<16x128xf32> -> vector<16x128xf32>
    %4 = vector.extract_strided_slice %0 {offsets = [2, 0], sizes = [16, 512], strides = [1, 1]} : vector<24x512xbf16> to vector<16x512xbf16>
    %c512 = arith.constant 512 : index
    %c0_3 = arith.constant 0 : index
    %5 = vector.load %arg2[%c512, %c0_3] : memref<2560x128xbf16, #tpu.memory_space<vmem>>, vector<512x128xbf16>
    %cst_4 = arith.constant dense<0.000000e+00> : vector<16x128xf32>
    %6 = tpu.matmul %4, %5, %cst_4 {dimension_numbers = #tpu.dot_dimension_numbers<[1], [0], [0], [1], [0, 0, 1, 1], [], []>} : vector<16x512xbf16>, vector<512x128xbf16>, vector<16x128xf32> -> vector<16x128xf32>
    %7 = arith.addf %3, %6 : vector<16x128xf32>
    %8 = vector.extract_strided_slice %0 {offsets = [4, 0], sizes = [16, 512], strides = [1, 1]} : vector<24x512xbf16> to vector<16x512xbf16>
    %c1024 = arith.constant 1024 : index
    %c0_5 = arith.constant 0 : index
    %9 = vector.load %arg2[%c1024, %c0_5] : memref<2560x128xbf16, #tpu.memory_space<vmem>>, vector<512x128xbf16>
    %cst_6 = arith.constant dense<0.000000e+00> : vector<16x128xf32>
    %10 = tpu.matmul %8, %9, %cst_6 {dimension_numbers = #tpu.dot_dimension_numbers<[1], [0], [0], [1], [0, 0, 1, 1], [], []>} : vector<16x512xbf16>, vector<512x128xbf16>, vector<16x128xf32> -> vector<16x128xf32>
    %11 = arith.addf %7, %10 : vector<16x128xf32>
    %12 = vector.extract_strided_slice %0 {offsets = [6, 0], sizes = [16, 512], strides = [1, 1]} : vector<24x512xbf16> to vector<16x512xbf16>
    %c1536 = arith.constant 1536 : index
    %c0_7 = arith.constant 0 : index
    %13 = vector.load %arg2[%c1536, %c0_7] : memref<2560x128xbf16, #tpu.memory_space<vmem>>, vector<512x128xbf16>
    %cst_8 = arith.constant dense<0.000000e+00> : vector<16x128xf32>
    %14 = tpu.matmul %12, %13, %cst_8 {dimension_numbers = #tpu.dot_dimension_numbers<[1], [0], [0], [1], [0, 0, 1, 1], [], []>} : vector<16x512xbf16>, vector<512x128xbf16>, vector<16x128xf32> -> vector<16x128xf32>
    %15 = arith.addf %11, %14 : vector<16x128xf32>
    %16 = vector.extract_strided_slice %0 {offsets = [8, 0], sizes = [16, 512], strides = [1, 1]} : vector<24x512xbf16> to vector<16x512xbf16>
    %c2048 = arith.constant 2048 : index
    %c0_9 = arith.constant 0 : index
    %17 = vector.load %arg2[%c2048, %c0_9] : memref<2560x128xbf16, #tpu.memory_space<vmem>>, vector<512x128xbf16>
    %cst_10 = arith.constant dense<0.000000e+00> : vector<16x128xf32>
    %18 = tpu.matmul %16, %17, %cst_10 {dimension_numbers = #tpu.dot_dimension_numbers<[1], [0], [0], [1], [0, 0, 1, 1], [], []>} : vector<16x512xbf16>, vector<512x128xbf16>, vector<16x128xf32> -> vector<16x128xf32>
    %19 = arith.addf %15, %18 : vector<16x128xf32>
    %c0_11 = arith.constant 0 : index
    %c0_12 = arith.constant 0 : index
    %20 = vector.load %arg3[%c0_11, %c0_12] : memref<1x128xf32, #tpu.memory_space<vmem>>, vector<1x128xf32>
    %21 = vector.broadcast %20 : vector<1x128xf32> to vector<16x128xf32>
    %22 = arith.addf %19, %21 : vector<16x128xf32>
    %cst_13 = arith.constant dense<0.000000e+00> : vector<128xf32>
    %23 = vector.multi_reduction <add>, %22, %cst_13 [0] : vector<16x128xf32> to vector<128xf32>
    %24 = vector.shape_cast %23 : vector<128xf32> to vector<1x128xf32>
    %cst_14 = arith.constant 1.600000e+01 : f32
    %25 = vector.broadcast %cst_14 : f32 to vector<1x128xf32>
    %26 = arith.divf %24, %25 : vector<1x128xf32>
    %27 = vector.broadcast %26 : vector<1x128xf32> to vector<16x128xf32>
    %28 = arith.subf %22, %27 : vector<16x128xf32>
    %29 = arith.mulf %28, %28 : vector<16x128xf32>
    %cst_15 = arith.constant dense<0.000000e+00> : vector<128xf32>
    %30 = vector.multi_reduction <add>, %29, %cst_15 [0] : vector<16x128xf32> to vector<128xf32>
    %31 = vector.shape_cast %30 : vector<128xf32> to vector<1x128xf32>
    %cst_16 = arith.constant 1.600000e+01 : f32
    %32 = vector.broadcast %cst_16 : f32 to vector<1x128xf32>
    %33 = arith.divf %31, %32 : vector<1x128xf32>
    %cst_17 = arith.constant 9.99999974E-6 : f32
    %34 = vector.broadcast %cst_17 : f32 to vector<1x128xf32>
    %35 = arith.addf %33, %34 : vector<1x128xf32>
    %36 = math.rsqrt %35 : vector<1x128xf32>
    %37 = vector.broadcast %36 : vector<1x128xf32> to vector<16x128xf32>
    %38 = arith.mulf %28, %37 : vector<16x128xf32>
    %cst_18 = arith.constant 0.000000e+00 : f32
    %39 = vector.broadcast %cst_18 : f32 to vector<16x128xf32>
    %40 = arith.maximumf %38, %39 : vector<16x128xf32>
    %c0_19 = arith.constant 0 : index
    %c0_20 = arith.constant 0 : index
    %41 = vector.load %arg4[%c0_19, %c0_20] : memref<16x128xf32, #tpu.memory_space<vmem>>, vector<16x128xf32>
    tpu.vector_store %arg4[%c0_19, %c0_20], %40 {strides = array<i32>} : memref<16x128xf32, #tpu.memory_space<vmem>>, vector<16x128xf32>,
    return
  }
  func.func @transform_0(%arg0: i32) -> (i32, i32) {
    %c0_i32 = arith.constant 0 : i32
    %c0_i32_0 = arith.constant 0 : i32
    %c0_i32_1 = arith.constant 0 : i32
    return %c0_i32, %c0_i32_0 : i32, i32
  }
  func.func @transform_1(%arg0: i32) -> (i32, i32) {
    %c0_i32 = arith.constant 0 : i32
    %c0_i32_0 = arith.constant 0 : i32
    return %c0_i32, %arg0 : i32, i32
  }
  func.func @transform_2(%arg0: i32) -> (i32, i32) {
    %c0_i32 = arith.constant 0 : i32
    %c0_i32_0 = arith.constant 0 : i32
    return %c0_i32, %arg0 : i32, i32
  }
  func.func @transform_3(%arg0: i32) -> (i32, i32) {
    %c0_i32 = arith.constant 0 : i32
    %c0_i32_0 = arith.constant 0 : i32
    return %c0_i32, %arg0 : i32, i32
  }
}

module attributes {stable_mosaic.version = 11 : i64} {
  func.func @_bilstm_kernel(%arg0: i32, %arg1: memref<1x8x2x32xf32, #tpu.memory_space<vmem>>, %arg2: memref<1x8x32xbf16, #tpu.memory_space<vmem>>, %arg3: memref<1x8x2x8xf32, #tpu.memory_space<vmem>>) attributes {dimension_semantics = [#tpu.dimension_semantics<parallel>], iteration_bounds = array<i64: 2>, scalar_prefetch = 0 : i64, scratch_operands = 0 : i64, tpu.core_type = #tpu.core_type<tc>, window_params = [{transform_indices = @transform_0, window_bounds = array<i64: 1, 8, 2, 32>}, {transform_indices = @transform_1, window_bounds = array<i64: 1, 8, 32>}, {transform_indices = @transform_2, window_bounds = array<i64: 1, 8, 2, 8>}]} {
    %c0 = arith.constant 0 : index
    %c0_0 = arith.constant 0 : index
    %c0_1 = arith.constant 0 : index
    %0 = vector.load %arg2[%c0, %c0_0, %c0_1] : memref<1x8x32xbf16, #tpu.memory_space<vmem>>, vector<1x8x32xbf16>
    %1 = vector.shape_cast %0 : vector<1x8x32xbf16> to vector<8x32xbf16>
    %cst = arith.constant 0.000000e+00 : f32
    %2 = vector.broadcast %cst : f32 to vector<2x8xf32>
    %c0_i32 = arith.constant 0 : i32
    %c8_i32 = arith.constant 8 : i32
    %3 = arith.addi %c0_i32, %c8_i32 : i32
    %c1_i32 = arith.constant 1 : i32
    %4:2 = scf.for %arg4 = %c0_i32 to %3 step %c1_i32 iter_args(%arg5 = %2, %arg6 = %2) -> (vector<2x8xf32>, vector<2x8xf32>)  : i32 {
      %c2_i32 = arith.constant 2 : i32
      %5 = arith.muli %c2_i32, %arg4 : i32
      %c7_i32 = arith.constant 7 : i32
      %6 = arith.subi %c7_i32, %5 : i32
      %7 = arith.muli %arg0, %6 : i32
      %8 = arith.addi %arg4, %7 : i32
      %c0_3 = arith.constant 0 : index
      %9 = arith.index_cast %8 : i32 to index
      %c0_4 = arith.constant 0 : index
      %c0_5 = arith.constant 0 : index
      %10 = vector.load %arg1[%c0_3, %9, %c0_4, %c0_5] : memref<1x8x2x32xf32, #tpu.memory_space<vmem>>, vector<1x1x2x32xf32>
      %11 = vector.shape_cast %10 : vector<1x1x2x32xf32> to vector<2x32xf32>
      %12 = arith.truncf %arg5 : vector<2x8xf32> to vector<2x8xbf16>
      %cst_6 = arith.constant dense<0.000000e+00> : vector<2x32xf32>
      %13 = tpu.matmul %12, %1, %cst_6 {dimension_numbers = #tpu.dot_dimension_numbers<[1], [0], [0], [1], [0, 0, 1, 1], [], []>} : vector<2x8xbf16>, vector<8x32xbf16>, vector<2x32xf32> -> vector<2x32xf32>
      %14 = arith.addf %11, %13 : vector<2x32xf32>
      %15 = vector.extract_strided_slice %14 {offsets = [0, 0], sizes = [2, 8], strides = [1, 1]} : vector<2x32xf32> to vector<2x8xf32>
      %16 = arith.negf %15 : vector<2x8xf32>
      %17 = math.exp %16 : vector<2x8xf32>
      %cst_7 = arith.constant 1.000000e+00 : f32
      %18 = vector.broadcast %cst_7 : f32 to vector<2x8xf32>
      %19 = arith.addf %18, %17 : vector<2x8xf32>
      %20 = arith.divf %18, %19 : vector<2x8xf32>
      %21 = vector.extract_strided_slice %14 {offsets = [0, 8], sizes = [2, 8], strides = [1, 1]} : vector<2x32xf32> to vector<2x8xf32>
      %22 = arith.negf %21 : vector<2x8xf32>
      %23 = math.exp %22 : vector<2x8xf32>
      %cst_8 = arith.constant 1.000000e+00 : f32
      %24 = vector.broadcast %cst_8 : f32 to vector<2x8xf32>
      %25 = arith.addf %24, %23 : vector<2x8xf32>
      %26 = arith.divf %24, %25 : vector<2x8xf32>
      %27 = vector.extract_strided_slice %14 {offsets = [0, 16], sizes = [2, 8], strides = [1, 1]} : vector<2x32xf32> to vector<2x8xf32>
      %28 = math.tanh %27 : vector<2x8xf32>
      %29 = vector.extract_strided_slice %14 {offsets = [0, 24], sizes = [2, 8], strides = [1, 1]} : vector<2x32xf32> to vector<2x8xf32>
      %30 = arith.negf %29 : vector<2x8xf32>
      %31 = math.exp %30 : vector<2x8xf32>
      %cst_9 = arith.constant 1.000000e+00 : f32
      %32 = vector.broadcast %cst_9 : f32 to vector<2x8xf32>
      %33 = arith.addf %32, %31 : vector<2x8xf32>
      %34 = arith.divf %32, %33 : vector<2x8xf32>
      %35 = arith.mulf %26, %arg6 : vector<2x8xf32>
      %36 = arith.mulf %20, %28 : vector<2x8xf32>
      %37 = arith.addf %35, %36 : vector<2x8xf32>
      %38 = math.tanh %37 : vector<2x8xf32>
      %39 = arith.mulf %34, %38 : vector<2x8xf32>
      %c0_10 = arith.constant 0 : index
      %40 = arith.index_cast %8 : i32 to index
      %c0_11 = arith.constant 0 : index
      %c0_12 = arith.constant 0 : index
      %41 = vector.load %arg3[%c0_10, %40, %c0_11, %c0_12] : memref<1x8x2x8xf32, #tpu.memory_space<vmem>>, vector<1x1x2x8xf32>
      %42 = vector.shape_cast %41 : vector<1x1x2x8xf32> to vector<2x8xf32>
      %43 = vector.shape_cast %39 : vector<2x8xf32> to vector<1x1x2x8xf32>
      tpu.vector_store %arg3[%c0_10, %40, %c0_11, %c0_12], %43 {strides = array<i32>} : memref<1x8x2x8xf32, #tpu.memory_space<vmem>>, vector<1x1x2x8xf32>,
      scf.yield %39, %37 : vector<2x8xf32>, vector<2x8xf32>
    }
    %c8_i32_2 = arith.constant 8 : i32
    return
  }
  func.func @transform_0(%arg0: i32) -> (i32, i32, i32, i32) {
    %c0_i32 = arith.constant 0 : i32
    %c0_i32_0 = arith.constant 0 : i32
    %c0_i32_1 = arith.constant 0 : i32
    %c0_i32_2 = arith.constant 0 : i32
    return %arg0, %c0_i32, %c0_i32_0, %c0_i32_1 : i32, i32, i32, i32
  }
  func.func @transform_1(%arg0: i32) -> (i32, i32, i32) {
    %c0_i32 = arith.constant 0 : i32
    %c0_i32_0 = arith.constant 0 : i32
    %c0_i32_1 = arith.constant 0 : i32
    return %arg0, %c0_i32, %c0_i32_0 : i32, i32, i32
  }
  func.func @transform_2(%arg0: i32) -> (i32, i32, i32, i32) {
    %c0_i32 = arith.constant 0 : i32
    %c0_i32_0 = arith.constant 0 : i32
    %c0_i32_1 = arith.constant 0 : i32
    %c0_i32_2 = arith.constant 0 : i32
    return %arg0, %c0_i32, %c0_i32_0, %c0_i32_1 : i32, i32, i32, i32
  }
}

module attributes {stable_mosaic.version = 11 : i64} {
  func.func @_conv_mm_kernel(%arg0: i32, %arg1: memref<16x512xbf16, #tpu.memory_space<vmem>>, %arg2: memref<512x64xbf16, #tpu.memory_space<vmem>>, %arg3: memref<1x64xf32, #tpu.memory_space<vmem>>, %arg4: memref<16x64xf32, #tpu.memory_space<vmem>>) attributes {dimension_semantics = [#tpu.dimension_semantics<parallel>], iteration_bounds = array<i64: 1>, scalar_prefetch = 0 : i64, scratch_operands = 0 : i64, tpu.core_type = #tpu.core_type<tc>, window_params = [{pipeline_mode = #tpu.pipeline_mode<synchronous>, transform_indices = @transform_0, window_bounds = array<i64: 16, 512>}, {transform_indices = @transform_1, window_bounds = array<i64: 512, 64>}, {transform_indices = @transform_2, window_bounds = array<i64: 1, 64>}, {transform_indices = @transform_3, window_bounds = array<i64: 16, 64>}]} {
    %c0 = arith.constant 0 : index
    %c0_0 = arith.constant 0 : index
    %0 = vector.load %arg1[%c0, %c0_0] : memref<16x512xbf16, #tpu.memory_space<vmem>>, vector<16x512xbf16>
    %c0_1 = arith.constant 0 : index
    %c0_2 = arith.constant 0 : index
    %1 = vector.load %arg2[%c0_1, %c0_2] : memref<512x64xbf16, #tpu.memory_space<vmem>>, vector<512x64xbf16>
    %cst = arith.constant dense<0.000000e+00> : vector<16x64xf32>
    %2 = tpu.matmul %0, %1, %cst {dimension_numbers = #tpu.dot_dimension_numbers<[1], [0], [0], [1], [0, 0, 1, 1], [], []>} : vector<16x512xbf16>, vector<512x64xbf16>, vector<16x64xf32> -> vector<16x64xf32>
    %c0_3 = arith.constant 0 : index
    %c0_4 = arith.constant 0 : index
    %3 = vector.load %arg3[%c0_3, %c0_4] : memref<1x64xf32, #tpu.memory_space<vmem>>, vector<1x64xf32>
    %4 = vector.broadcast %3 : vector<1x64xf32> to vector<16x64xf32>
    %5 = arith.addf %2, %4 : vector<16x64xf32>
    %c0_5 = arith.constant 0 : index
    %c0_6 = arith.constant 0 : index
    %6 = vector.load %arg4[%c0_5, %c0_6] : memref<16x64xf32, #tpu.memory_space<vmem>>, vector<16x64xf32>
    tpu.vector_store %arg4[%c0_5, %c0_6], %5 {strides = array<i32>} : memref<16x64xf32, #tpu.memory_space<vmem>>, vector<16x64xf32>,
    return
  }
  func.func @transform_0(%arg0: i32) -> (i32, i32) {
    %c0_i32 = arith.constant 0 : i32
    %c0_i32_0 = arith.constant 0 : i32
    %c0_i32_1 = arith.constant 0 : i32
    return %c0_i32, %c0_i32_0 : i32, i32
  }
  func.func @transform_1(%arg0: i32) -> (i32, i32) {
    %c0_i32 = arith.constant 0 : i32
    %c0_i32_0 = arith.constant 0 : i32
    return %c0_i32, %arg0 : i32, i32
  }
  func.func @transform_2(%arg0: i32) -> (i32, i32) {
    %c0_i32 = arith.constant 0 : i32
    %c0_i32_0 = arith.constant 0 : i32
    return %c0_i32, %arg0 : i32, i32
  }
  func.func @transform_3(%arg0: i32) -> (i32, i32) {
    %c0_i32 = arith.constant 0 : i32
    %c0_i32_0 = arith.constant 0 : i32
    return %c0_i32, %arg0 : i32, i32
  }
}

module attributes {stable_mosaic.version = 11 : i64} {
  func.func @_conv_mm_kernel(%arg0: i32, %arg1: memref<16x16xbf16, #tpu.memory_space<vmem>>, %arg2: memref<16x64xbf16, #tpu.memory_space<vmem>>, %arg3: memref<1x64xf32, #tpu.memory_space<vmem>>, %arg4: memref<16x64xf32, #tpu.memory_space<vmem>>) attributes {dimension_semantics = [#tpu.dimension_semantics<parallel>], iteration_bounds = array<i64: 1>, scalar_prefetch = 0 : i64, scratch_operands = 0 : i64, tpu.core_type = #tpu.core_type<tc>, window_params = [{pipeline_mode = #tpu.pipeline_mode<synchronous>, transform_indices = @transform_0, window_bounds = array<i64: 16, 16>}, {transform_indices = @transform_1, window_bounds = array<i64: 16, 64>}, {transform_indices = @transform_2, window_bounds = array<i64: 1, 64>}, {transform_indices = @transform_3, window_bounds = array<i64: 16, 64>}]} {
    %c0 = arith.constant 0 : index
    %c0_0 = arith.constant 0 : index
    %0 = vector.load %arg1[%c0, %c0_0] : memref<16x16xbf16, #tpu.memory_space<vmem>>, vector<16x16xbf16>
    %c0_1 = arith.constant 0 : index
    %c0_2 = arith.constant 0 : index
    %1 = vector.load %arg2[%c0_1, %c0_2] : memref<16x64xbf16, #tpu.memory_space<vmem>>, vector<16x64xbf16>
    %cst = arith.constant dense<0.000000e+00> : vector<16x64xf32>
    %2 = tpu.matmul %0, %1, %cst {dimension_numbers = #tpu.dot_dimension_numbers<[1], [0], [0], [1], [0, 0, 1, 1], [], []>} : vector<16x16xbf16>, vector<16x64xbf16>, vector<16x64xf32> -> vector<16x64xf32>
    %c0_3 = arith.constant 0 : index
    %c0_4 = arith.constant 0 : index
    %3 = vector.load %arg3[%c0_3, %c0_4] : memref<1x64xf32, #tpu.memory_space<vmem>>, vector<1x64xf32>
    %4 = vector.broadcast %3 : vector<1x64xf32> to vector<16x64xf32>
    %5 = arith.addf %2, %4 : vector<16x64xf32>
    %c0_5 = arith.constant 0 : index
    %c0_6 = arith.constant 0 : index
    %6 = vector.load %arg4[%c0_5, %c0_6] : memref<16x64xf32, #tpu.memory_space<vmem>>, vector<16x64xf32>
    tpu.vector_store %arg4[%c0_5, %c0_6], %5 {strides = array<i32>} : memref<16x64xf32, #tpu.memory_space<vmem>>, vector<16x64xf32>,
    return
  }
  func.func @transform_0(%arg0: i32) -> (i32, i32) {
    %c0_i32 = arith.constant 0 : i32
    %c0_i32_0 = arith.constant 0 : i32
    %c0_i32_1 = arith.constant 0 : i32
    return %c0_i32, %c0_i32_0 : i32, i32
  }
  func.func @transform_1(%arg0: i32) -> (i32, i32) {
    %c0_i32 = arith.constant 0 : i32
    %c0_i32_0 = arith.constant 0 : i32
    return %c0_i32, %arg0 : i32, i32
  }
  func.func @transform_2(%arg0: i32) -> (i32, i32) {
    %c0_i32 = arith.constant 0 : i32
    %c0_i32_0 = arith.constant 0 : i32
    return %c0_i32, %arg0 : i32, i32
  }
  func.func @transform_3(%arg0: i32) -> (i32, i32) {
    %c0_i32 = arith.constant 0 : i32
    %c0_i32_0 = arith.constant 0 : i32
    return %c0_i32, %arg0 : i32, i32
  }
}

</mosaic_0001>

<llo_original>
// kernel: encoder_fwd.7
$region0: #{encoder_fwd.7}
  #allocation0 [shape = 'u32[]', space=smem, size = 0x4, offset = 0x4, fixed_abs, tag = 'smem constant byte address 0x4 - core index']
  #allocation1 [shape = 'u32[72,128]{1,0:T(1,128)}', space=vmem, size = 0x9000, scoped, tag = 'internal scratch']
  %s0 = inlined_call_operand.vmem [shape: bf16[24,96], index: 0, kind: input, shape index: {}]
  %s1 = inlined_call_operand.vmem [shape: bf16[480,512], index: 1, kind: input, shape index: {}]
  %s2 = inlined_call_operand.hbm [shape: f32[1,512], index: 2, kind: input, shape index: {}]
  %s3 = inlined_call_operand.vmem [shape: f32[16,512], index: 3, kind: output, shape index: {}]
  %s4 = sld [smem:[#allocation0]]
  $region124: #{encoder_fwd.7} parent=0
    _
  %s6 = ssub.s32 1, %s4
  %s7 = scalar_select 0, %s6, %s4
  $region1: #{encoder_fwd.7} parent=0
    #allocation2 [shape = 'u8[245760]{0}', space=vmem, size = 0x3c000, scoped, tag = 'input window, operand 1']
    #allocation3 [shape = 'u8[1024]{0}', space=vmem, size = 0x400, scoped, tag = 'input window, operand 2']
    #allocation4 [shape = 's32[2]{0}', space=sflag, size = 0x8, scoped, tag = 'scoped memory for encoder_fwd.7']
    #allocation5 [shape = 'u8[16384]{0}', space=vmem, size = 0x4000, scoped, tag = 'output window, operand 0']
    %8 = vsyncpa [#allocation4], 0
    %s9 = scalar_lea.sflag [#allocation4], 1
    %10 = vsyncpa %s9, 0
    loop: start=0, step=1, limit=6
    $region2: #{encoder_fwd.7} parent=1 // loop_pre_header
      _
    $region3: #{encoder_fwd.7} parent=1 // loop_header
      %s12 = sphi 0, %s16
      %p13 = scmp.ge.s32.totalorder %s12, 6
      %s20 = sphi 0, %s20
      %s22 = sphi 0, %s20
      %s23 = sphi 0, %s22
      %s37 = sphi 0, %s23
      %s43 = sphi 0, %s45
      %s46 = sphi 0, %s43
      %s47 = sphi 0, %s46
      %s63 = sphi 0, %s47
      %s69 = sphi 0, %s71
      %s72 = sphi 0, %s69
      %s73 = sphi 0, %s72
      %s89 = sphi 0, %s73
      %s95 = sphi 0, %s97
      %s98 = sphi 0, %s95
      %s99 = sphi 0, %s98
      %s115 = sphi 0, %s99
    $region4: #{encoder_fwd.7} parent=1 // loop_header_branch
      %15 = sbr.rel (%p13) target = $region8
    $region5: #{encoder_fwd.7} parent=1 // loop_body
      %s17 = ssub.s32 %s12, 1
      %s18 = ssub.s32 %s12, 2
      %s19 = sadd.s32 %s12, 1
      %s21 = sadd.s32 %s20, 1
      %p24 = scmp.eq.s32.totalorder %s12, 3
      %p25 = scmp.ne.s32.totalorder %s20, %s22
      %p26 = scmp.eq.s32.totalorder %s12, 0
      %p27 = por %p25, %p26
      %p28 = scmp.ne.s32.totalorder %s20, %s22
      %p29 = scmp.eq.s32.totalorder %s17, 3
      %p30 = por %p28, %p29
      %p31 = scmp.ne.s32.totalorder %s22, %s23
      %p32 = scmp.eq.s32.totalorder %s17, 0
      %p33 = por %p31, %p32
      %p34 = scmp.ne.s32.totalorder %s22, %s23
      %p35 = scmp.eq.s32.totalorder %s18, 3
      %p36 = por %p34, %p35
      %p38 = scmp.ne.s32.totalorder %s23, %s37
      %p39 = scmp.eq.s32.totalorder %s18, 0
      %p40 = por %p38, %p39
      %s41 = ssub.s32 %s12, %s19
      %p42 = scmp.eq.s32.totalorder %s41, 0
      %s44 = sadd.s32 %s43, 1
      %s45 = scalar_select %p42, %s43, %s44
      %p48 = pneg %p42
      %p49 = scmp.eq.s32.totalorder %s12, 3
      %p50 = por %p48, %p49
      %p51 = scmp.ne.s32.totalorder %s43, %s46
      %p52 = scmp.eq.s32.totalorder %s12, 0
      %p53 = por %p51, %p52
      %p54 = scmp.ne.s32.totalorder %s43, %s46
      %p55 = scmp.eq.s32.totalorder %s17, 3
      %p56 = por %p54, %p55
      %p57 = scmp.ne.s32.totalorder %s46, %s47
      %p58 = scmp.eq.s32.totalorder %s17, 0
      %p59 = por %p57, %p58
      %p60 = scmp.ne.s32.totalorder %s46, %s47
      %p61 = scmp.eq.s32.totalorder %s18, 3
      %p62 = por %p60, %p61
      %p64 = scmp.ne.s32.totalorder %s47, %s63
      %p65 = scmp.eq.s32.totalorder %s18, 0
      %p66 = por %p64, %p65
      %s67 = ssub.s32 %s12, %s19
      %p68 = scmp.eq.s32.totalorder %s67, 0
      %s70 = sadd.s32 %s69, 1
      %s71 = scalar_select %p68, %s69, %s70
      %p74 = pneg %p68
      %p75 = scmp.eq.s32.totalorder %s12, 3
      %p76 = por %p74, %p75
      %p77 = scmp.ne.s32.totalorder %s69, %s72
      %p78 = scmp.eq.s32.totalorder %s12, 0
      %p79 = por %p77, %p78
      %p80 = scmp.ne.s32.totalorder %s69, %s72
      %p81 = scmp.eq.s32.totalorder %s17, 3
      %p82 = por %p80, %p81
      %p83 = scmp.ne.s32.totalorder %s72, %s73
      %p84 = scmp.eq.s32.totalorder %s17, 0
      %p85 = por %p83, %p84
      %p86 = scmp.ne.s32.totalorder %s72, %s73
      %p87 = scmp.eq.s32.totalorder %s18, 3
      %p88 = por %p86, %p87
      %p90 = scmp.ne.s32.totalorder %s73, %s89
      %p91 = scmp.eq.s32.totalorder %s18, 0
      %p92 = por %p90, %p91
      %s93 = ssub.s32 %s12, %s19
      %p94 = scmp.eq.s32.totalorder %s93, 0
      %s96 = sadd.s32 %s95, 1
      %s97 = scalar_select %p94, %s95, %s96
      %p100 = pneg %p94
      %p101 = scmp.eq.s32.totalorder %s12, 3
      %p102 = por %p100, %p101
      %p103 = scmp.ne.s32.totalorder %s95, %s98
      %p104 = scmp.eq.s32.totalorder %s12, 0
      %p105 = por %p103, %p104
      %p106 = scmp.ne.s32.totalorder %s95, %s98
      %p107 = scmp.eq.s32.totalorder %s17, 3
      %p108 = por %p106, %p107
      %p109 = scmp.ne.s32.totalorder %s98, %s99
      %p110 = scmp.eq.s32.totalorder %s17, 0
      %p111 = por %p109, %p110
      %p112 = scmp.ne.s32.totalorder %s98, %s99
      %p113 = scmp.eq.s32.totalorder %s18, 3
      %p114 = por %p112, %p113
      %p116 = scmp.ne.s32.totalorder %s99, %s115
      %p117 = scmp.eq.s32.totalorder %s18, 0
      %p118 = por %p116, %p117
      %p119 = scmp.le.s32.totalorder 1, %s12
      %p120 = scmp.lt.s32.totalorder %s12, 5
      %p121 = pnand %p119, %p120
      %p122 = pneg %p121
      // Predicated region
      $region9: #{encoder_fwd.7} parent=5 // pred_check
        _
      $region10: #{encoder_fwd.7} parent=5 // pred_check_branch
        %124 = sbr.rel (%p121) target = $region12
      $region11: #{encoder_fwd.7} parent=5 // pred_region
        %s125 = ssub.s32 %s12, 1
        // Predicated region
        $region13: #{encoder_fwd.7} parent=11 // pred_check
          %p126 = pneg %p33
        $region14: #{encoder_fwd.7} parent=11 // pred_check_branch
          %128 = sbr.rel (%p126) target = $region16
        $region15: #{encoder_fwd.7} parent=11 // pred_region
          _
        $region16: #{encoder_fwd.7} parent=11 // pred_fallthru
          _
      $region12: #{encoder_fwd.7} parent=5 // pred_fallthru
        _
      %p129 = scmp.lt.s32.totalorder %s12, 4
      // Predicated region
      $region17: #{encoder_fwd.7} parent=5 // pred_check
        %p130 = pneg %p129
      $region18: #{encoder_fwd.7} parent=5 // pred_check_branch
        %132 = sbr.rel (%p130) target = $region20
      $region19: #{encoder_fwd.7} parent=5 // pred_region
        // Predicated region
        $region21: #{encoder_fwd.7} parent=19 // pred_check
          %p133 = pneg %p53
        $region22: #{encoder_fwd.7} parent=19 // pred_check_branch
          %135 = sbr.rel (%p133) target = $region24
        $region23: #{encoder_fwd.7} parent=19 // pred_region
          %s136 = sand.u32 %s43, 1
          %s137 = sand.u32 %s43, 1
          %s138 = smul.addr %s137, 240
          %s139 = scalar_lea.vmem [#allocation2], %s138
          %s140 = smul.addr %s12, 4
          %s141 = scalar_lea.vmem %s1, %s140
          // Predicated region
          $region25: #{encoder_fwd.7} parent=23 // pred_check
            _
          $region26: #{encoder_fwd.7} parent=23 // pred_check_branch
            %143 = sbr.rel (0) target = $region28
          $region27: #{encoder_fwd.7} parent=23 // pred_region
            // Predicated region
            $region29: #{encoder_fwd.7} parent=27 // pred_check
              _
            $region30: #{encoder_fwd.7} parent=27 // pred_check_branch
              %145 = sbr.rel target = $region32
            $region31: #{encoder_fwd.7} parent=27 // pred_region
              // Predicated region
              $region44: #{encoder_fwd.7} parent=31 // pred_check
                _
              $region45: #{encoder_fwd.7} parent=31 // pred_check_branch
                %279 = sbr.rel (0) target = $region47
              $region46: #{encoder_fwd.7} parent=31 // pred_region
                loop: start=0, step=1, limit=1
                $region48: #{encoder_fwd.7} parent=46 // loop_pre_header
                  _
                $region49: #{encoder_fwd.7} parent=46 // loop_header
                  %s281 = sphi 0, %s285
                  %p282 = scmp.ge.s32.totalorder %s281, 1
                  %s286 = sphi %s141, %s141
                  %s287 = sphi %s139, %s139
                $region50: #{encoder_fwd.7} parent=46 // loop_header_branch
                  %284 = sbr.rel (%p282) target = $region54
                $region51: #{encoder_fwd.7} parent=46 // loop_body
                  _
                $region52: #{encoder_fwd.7} parent=46 // loop_footer
                  %s285 = sadd.s32 1, %s281
                $region53: #{encoder_fwd.7} parent=46 // loop_footer_branch
                  %280 = sbr.rel target = $region49
                $region54: #{encoder_fwd.7} parent=46 // loop_exit
                  _
                %s289 = ssub.s32 16, 1
                loop: start=0, step=1, limit=1
                $region55: #{encoder_fwd.7} parent=46 // loop_pre_header
                  _
                $region56: #{encoder_fwd.7} parent=46 // loop_header
                  %s291 = sphi 0, %s295
                  %p292 = scmp.ge.s32.totalorder %s291, 1
                  %s296 = sphi %s141, %s141
                  %s297 = sphi %s139, %s139
                $region57: #{encoder_fwd.7} parent=46 // loop_header_branch
                  %294 = sbr.rel (%p292) target = $region61
                $region58: #{encoder_fwd.7} parent=46 // loop_body
                  %v298 = vld [vmem:[%s296] sm:%s289]
                  %299 = vst [vmem:[%s297] sm:%s289] %v298
                  %v300 = vld [vmem:[%s296 + $0x10] sm:%s289]
                  %301 = vst [vmem:[%s297 + $0x4] sm:%s289] %v300
                  %v302 = vld [vmem:[%s296 + $0x20] sm:%s289]
                  %303 = vst [vmem:[%s297 + $0x8] sm:%s289] %v302
                  %v304 = vld [vmem:[%s296 + $0x30] sm:%s289]
                  %305 = vst [vmem:[%s297 + $0xc] sm:%s289] %v304
                  %v306 = vld [vmem:[%s296 + $0x40] sm:%s289]
                  %307 = vst [vmem:[%s297 + $0x10] sm:%s289] %v306
                  %v308 = vld [vmem:[%s296 + $0x50] sm:%s289]
                  %309 = vst [vmem:[%s297 + $0x14] sm:%s289] %v308
                  %v310 = vld [vmem:[%s296 + $0x60] sm:%s289]
                  %311 = vst [vmem:[%s297 + $0x18] sm:%s289] %v310
                  %v312 = vld [vmem:[%s296 + $0x70] sm:%s289]
                  %313 = vst [vmem:[%s297 + $0x1c] sm:%s289] %v312
                  %v314 = vld [vmem:[%s296 + $0x80] sm:%s289]
                  %315 = vst [vmem:[%s297 + $0x20] sm:%s289] %v314
                  %v316 = vld [vmem:[%s296 + $0x90] sm:%s289]
                  %317 = vst [vmem:[%s297 + $0x24] sm:%s289] %v316
                  %v318 = vld [vmem:[%s296 + $0xa0] sm:%s289]
                  %319 = vst [vmem:[%s297 + $0x28] sm:%s289] %v318
                  %v320 = vld [vmem:[%s296 + $0xb0] sm:%s289]
                  %321 = vst [vmem:[%s297 + $0x2c] sm:%s289] %v320
                  %v322 = vld [vmem:[%s296 + $0xc0] sm:%s289]
                  %323 = vst [vmem:[%s297 + $0x30] sm:%s289] %v322
                  %v324 = vld [vmem:[%s296 + $0xd0] sm:%s289]
                  %325 = vst [vmem:[%s297 + $0x34] sm:%s289] %v324
                  %v326 = vld [vmem:[%s296 + $0xe0] sm:%s289]
                  %327 = vst [vmem:[%s297 + $0x38] sm:%s289] %v326
                  %v328 = vld [vmem:[%s296 + $0xf0] sm:%s289]
                  %329 = vst [vmem:[%s297 + $0x3c] sm:%s289] %v328
                  %v330 = vld [vmem:[%s296 + $0x100] sm:%s289]
                  %331 = vst [vmem:[%s297 + $0x40] sm:%s289] %v330
                  %v332 = vld [vmem:[%s296 + $0x110] sm:%s289]
                  %333 = vst [vmem:[%s297 + $0x44] sm:%s289] %v332
                  %v334 = vld [vmem:[%s296 + $0x120] sm:%s289]
                  %335 = vst [vmem:[%s297 + $0x48] sm:%s289] %v334
                  %v336 = vld [vmem:[%s296 + $0x130] sm:%s289]
                  %337 = vst [vmem:[%s297 + $0x4c] sm:%s289] %v336
                  %v338 = vld [vmem:[%s296 + $0x140] sm:%s289]
                  %339 = vst [vmem:[%s297 + $0x50] sm:%s289] %v338
                  %v340 = vld [vmem:[%s296 + $0x150] sm:%s289]
                  %341 = vst [vmem:[%s297 + $0x54] sm:%s289] %v340
                  %v342 = vld [vmem:[%s296 + $0x160] sm:%s289]
                  %343 = vst [vmem:[%s297 + $0x58] sm:%s289] %v342
                  %v344 = vld [vmem:[%s296 + $0x170] sm:%s289]
                  %345 = vst [vmem:[%s297 + $0x5c] sm:%s289] %v344
                  %v346 = vld [vmem:[%s296 + $0x180] sm:%s289]
                  %347 = vst [vmem:[%s297 + $0x60] sm:%s289] %v346
                  %v348 = vld [vmem:[%s296 + $0x190] sm:%s289]
                  %349 = vst [vmem:[%s297 + $0x64] sm:%s289] %v348
                  %v350 = vld [vmem:[%s296 + $0x1a0] sm:%s289]
                  %351 = vst [vmem:[%s297 + $0x68] sm:%s289] %v350
                  %v352 = vld [vmem:[%s296 + $0x1b0] sm:%s289]
                  %353 = vst [vmem:[%s297 + $0x6c] sm:%s289] %v352
                  %v354 = vld [vmem:[%s296 + $0x1c0] sm:%s289]
                  %355 = vst [vmem:[%s297 + $0x70] sm:%s289] %v354
                  %v356 = vld [vmem:[%s296 + $0x1d0] sm:%s289]
                  %357 = vst [vmem:[%s297 + $0x74] sm:%s289] %v356
                  %v358 = vld [vmem:[%s296 + $0x1e0] sm:%s289]
                  %359 = vst [vmem:[%s297 + $0x78] sm:%s289] %v358
                  %v360 = vld [vmem:[%s296 + $0x1f0] sm:%s289]
                  %361 = vst [vmem:[%s297 + $0x7c] sm:%s289] %v360
                  %v362 = vld [vmem:[%s296 + $0x200] sm:%s289]
                  %363 = vst [vmem:[%s297 + $0x80] sm:%s289] %v362
                  %v364 = vld [vmem:[%s296 + $0x210] sm:%s289]
                  %365 = vst [vmem:[%s297 + $0x84] sm:%s289] %v364
                  %v366 = vld [vmem:[%s296 + $0x220] sm:%s289]
                  %367 = vst [vmem:[%s297 + $0x88] sm:%s289] %v366
                  %v368 = vld [vmem:[%s296 + $0x230] sm:%s289]
                  %369 = vst [vmem:[%s297 + $0x8c] sm:%s289] %v368
                  %v370 = vld [vmem:[%s296 + $0x240] sm:%s289]
                  %371 = vst [vmem:[%s297 + $0x90] sm:%s289] %v370
                  %v372 = vld [vmem:[%s296 + $0x250] sm:%s289]
                  %373 = vst [vmem:[%s297 + $0x94] sm:%s289] %v372
                  %v374 = vld [vmem:[%s296 + $0x260] sm:%s289]
                  %375 = vst [vmem:[%s297 + $0x98] sm:%s289] %v374
                  %v376 = vld [vmem:[%s296 + $0x270] sm:%s289]
                  %377 = vst [vmem:[%s297 + $0x9c] sm:%s289] %v376
                  %v378 = vld [vmem:[%s296 + $0x280] sm:%s289]
                  %379 = vst [vmem:[%s297 + $0xa0] sm:%s289] %v378
                  %v380 = vld [vmem:[%s296 + $0x290] sm:%s289]
                  %381 = vst [vmem:[%s297 + $0xa4] sm:%s289] %v380
                  %v382 = vld [vmem:[%s296 + $0x2a0] sm:%s289]
                  %383 = vst [vmem:[%s297 + $0xa8] sm:%s289] %v382
                  %v384 = vld [vmem:[%s296 + $0x2b0] sm:%s289]
                  %385 = vst [vmem:[%s297 + $0xac] sm:%s289] %v384
                  %v386 = vld [vmem:[%s296 + $0x2c0] sm:%s289]
                  %387 = vst [vmem:[%s297 + $0xb0] sm:%s289] %v386
                  %v388 = vld [vmem:[%s296 + $0x2d0] sm:%s289]
                  %389 = vst [vmem:[%s297 + $0xb4] sm:%s289] %v388
                  %v390 = vld [vmem:[%s296 + $0x2e0] sm:%s289]
                  %391 = vst [vmem:[%s297 + $0xb8] sm:%s289] %v390
                  %v392 = vld [vmem:[%s296 + $0x2f0] sm:%s289]
                  %393 = vst [vmem:[%s297 + $0xbc] sm:%s289] %v392
                  %v394 = vld [vmem:[%s296 + $0x300] sm:%s289]
                  %395 = vst [vmem:[%s297 + $0xc0] sm:%s289] %v394
                  %v396 = vld [vmem:[%s296 + $0x310] sm:%s289]
                  %397 = vst [vmem:[%s297 + $0xc4] sm:%s289] %v396
                  %v398 = vld [vmem:[%s296 + $0x320] sm:%s289]
                  %399 = vst [vmem:[%s297 + $0xc8] sm:%s289] %v398
                  %v400 = vld [vmem:[%s296 + $0x330] sm:%s289]
                  %401 = vst [vmem:[%s297 + $0xcc] sm:%s289] %v400
                  %v402 = vld [vmem:[%s296 + $0x340] sm:%s289]
                  %403 = vst [vmem:[%s297 + $0xd0] sm:%s289] %v402
                  %v404 = vld [vmem:[%s296 + $0x350] sm:%s289]
                  %405 = vst [vmem:[%s297 + $0xd4] sm:%s289] %v404
                  %v406 = vld [vmem:[%s296 + $0x360] sm:%s289]
                  %407 = vst [vmem:[%s297 + $0xd8] sm:%s289] %v406
                  %v408 = vld [vmem:[%s296 + $0x370] sm:%s289]
                  %409 = vst [vmem:[%s297 + $0xdc] sm:%s289] %v408
                  %v410 = vld [vmem:[%s296 + $0x380] sm:%s289]
                  %411 = vst [vmem:[%s297 + $0xe0] sm:%s289] %v410
                  %v412 = vld [vmem:[%s296 + $0x390] sm:%s289]
                  %413 = vst [vmem:[%s297 + $0xe4] sm:%s289] %v412
                  %v414 = vld [vmem:[%s296 + $0x3a0] sm:%s289]
                  %415 = vst [vmem:[%s297 + $0xe8] sm:%s289] %v414
                  %v416 = vld [vmem:[%s296 + $0x3b0] sm:%s289]
                  %417 = vst [vmem:[%s297 + $0xec] sm:%s289] %v416
                $region59: #{encoder_fwd.7} parent=46 // loop_footer
                  %s295 = sadd.s32 1, %s291
                $region60: #{encoder_fwd.7} parent=46 // loop_footer_branch
                  %290 = sbr.rel target = $region56
                $region61: #{encoder_fwd.7} parent=46 // loop_exit
                  _
              $region47: #{encoder_fwd.7} parent=31 // pred_fallthru
                _
            $region32: #{encoder_fwd.7} parent=27 // pred_fallthru
              _
            // Predicated region
            $region33: #{encoder_fwd.7} parent=27 // pred_check
              _
            $region34: #{encoder_fwd.7} parent=27 // pred_check_branch
              %147 = sbr.rel (0) target = $region36
            $region35: #{encoder_fwd.7} parent=27 // pred_region
              %s149 = ssub.s32 16, 1
              loop: start=0, step=1, limit=1
              $region37: #{encoder_fwd.7} parent=35 // loop_pre_header
                _
              $region38: #{encoder_fwd.7} parent=35 // loop_header
                %s151 = sphi 0, %s155
                %p152 = scmp.ge.s32.totalorder %s151, 1
                %s156 = sphi %s141, %s141
                %s157 = sphi %s139, %s139
              $region39: #{encoder_fwd.7} parent=35 // loop_header_branch
                %154 = sbr.rel (%p152) target = $region43
              $region40: #{encoder_fwd.7} parent=35 // loop_body
                %v158 = vld [vmem:[%s156] sm:%s149]
                %159 = vst [vmem:[%s157] sm:%s149] %v158
                %v160 = vld [vmem:[%s156 + $0x10] sm:%s149]
                %161 = vst [vmem:[%s157 + $0x4] sm:%s149] %v160
                %v162 = vld [vmem:[%s156 + $0x20] sm:%s149]
                %163 = vst [vmem:[%s157 + $0x8] sm:%s149] %v162
                %v164 = vld [vmem:[%s156 + $0x30] sm:%s149]
                %165 = vst [vmem:[%s157 + $0xc] sm:%s149] %v164
                %v166 = vld [vmem:[%s156 + $0x40] sm:%s149]
                %167 = vst [vmem:[%s157 + $0x10] sm:%s149] %v166
                %v168 = vld [vmem:[%s156 + $0x50] sm:%s149]
                %169 = vst [vmem:[%s157 + $0x14] sm:%s149] %v168
                %v170 = vld [vmem:[%s156 + $0x60] sm:%s149]
                %171 = vst [vmem:[%s157 + $0x18] sm:%s149] %v170
                %v172 = vld [vmem:[%s156 + $0x70] sm:%s149]
                %173 = vst [vmem:[%s157 + $0x1c] sm:%s149] %v172
                %v174 = vld [vmem:[%s156 + $0x80] sm:%s149]
                %175 = vst [vmem:[%s157 + $0x20] sm:%s149] %v174
                %v176 = vld [vmem:[%s156 + $0x90] sm:%s149]
                %177 = vst [vmem:[%s157 + $0x24] sm:%s149] %v176
                %v178 = vld [vmem:[%s156 + $0xa0] sm:%s149]
                %179 = vst [vmem:[%s157 + $0x28] sm:%s149] %v178
                %v180 = vld [vmem:[%s156 + $0xb0] sm:%s149]
                %181 = vst [vmem:[%s157 + $0x2c] sm:%s149] %v180
                %v182 = vld [vmem:[%s156 + $0xc0] sm:%s149]
                %183 = vst [vmem:[%s157 + $0x30] sm:%s149] %v182
                %v184 = vld [vmem:[%s156 + $0xd0] sm:%s149]
                %185 = vst [vmem:[%s157 + $0x34] sm:%s149] %v184
                %v186 = vld [vmem:[%s156 + $0xe0] sm:%s149]
                %187 = vst [vmem:[%s157 + $0x38] sm:%s149] %v186
                %v188 = vld [vmem:[%s156 + $0xf0] sm:%s149]
                %189 = vst [vmem:[%s157 + $0x3c] sm:%s149] %v188
                %v190 = vld [vmem:[%s156 + $0x100] sm:%s149]
                %191 = vst [vmem:[%s157 + $0x40] sm:%s149] %v190
                %v192 = vld [vmem:[%s156 + $0x110] sm:%s149]
                %193 = vst [vmem:[%s157 + $0x44] sm:%s149] %v192
                %v194 = vld [vmem:[%s156 + $0x120] sm:%s149]
                %195 = vst [vmem:[%s157 + $0x48] sm:%s149] %v194
                %v196 = vld [vmem:[%s156 + $0x130] sm:%s149]
                %197 = vst [vmem:[%s157 + $0x4c] sm:%s149] %v196
                %v198 = vld [vmem:[%s156 + $0x140] sm:%s149]
                %199 = vst [vmem:[%s157 + $0x50] sm:%s149] %v198
                %v200 = vld [vmem:[%s156 + $0x150] sm:%s149]
                %201 = vst [vmem:[%s157 + $0x54] sm:%s149] %v200
                %v202 = vld [vmem:[%s156 + $0x160] sm:%s149]
                %203 = vst [vmem:[%s157 + $0x58] sm:%s149] %v202
                %v204 = vld [vmem:[%s156 + $0x170] sm:%s149]
                %205 = vst [vmem:[%s157 + $0x5c] sm:%s149] %v204
                %v206 = vld [vmem:[%s156 + $0x180] sm:%s149]
                %207 = vst [vmem:[%s157 + $0x60] sm:%s149] %v206
                %v208 = vld [vmem:[%s156 + $0x190] sm:%s149]
                %209 = vst [vmem:[%s157 + $0x64] sm:%s149] %v208
                %v210 = vld [vmem:[%s156 + $0x1a0] sm:%s149]
                %211 = vst [vmem:[%s157 + $0x68] sm:%s149] %v210
                %v212 = vld [vmem:[%s156 + $0x1b0] sm:%s149]
                %213 = vst [vmem:[%s157 + $0x6c] sm:%s149] %v212
                %v214 = vld [vmem:[%s156 + $0x1c0] sm:%s149]
                %215 = vst [vmem:[%s157 + $0x70] sm:%s149] %v214
                %v216 = vld [vmem:[%s156 + $0x1d0] sm:%s149]
                %217 = vst [vmem:[%s157 + $0x74] sm:%s149] %v216
                %v218 = vld [vmem:[%s156 + $0x1e0] sm:%s149]
                %219 = vst [vmem:[%s157 + $0x78] sm:%s149] %v218
                %v220 = vld [vmem:[%s156 + $0x1f0] sm:%s149]
                %221 = vst [vmem:[%s157 + $0x7c] sm:%s149] %v220
                %v222 = vld [vmem:[%s156 + $0x200] sm:%s149]
                %223 = vst [vmem:[%s157 + $0x80] sm:%s149] %v222
                %v224 = vld [vmem:[%s156 + $0x210] sm:%s149]
                %225 = vst [vmem:[%s157 + $0x84] sm:%s149] %v224
                %v226 = vld [vmem:[%s156 + $0x220] sm:%s149]
                %227 = vst [vmem:[%s157 + $0x88] sm:%s149] %v226
                %v228 = vld [vmem:[%s156 + $0x230] sm:%s149]
                %229 = vst [vmem:[%s157 + $0x8c] sm:%s149] %v228
                %v230 = vld [vmem:[%s156 + $0x240] sm:%s149]
                %231 = vst [vmem:[%s157 + $0x90] sm:%s149] %v230
                %v232 = vld [vmem:[%s156 + $0x250] sm:%s149]
                %233 = vst [vmem:[%s157 + $0x94] sm:%s149] %v232
                %v234 = vld [vmem:[%s156 + $0x260] sm:%s149]
                %235 = vst [vmem:[%s157 + $0x98] sm:%s149] %v234
                %v236 = vld [vmem:[%s156 + $0x270] sm:%s149]
                %237 = vst [vmem:[%s157 + $0x9c] sm:%s149] %v236
                %v238 = vld [vmem:[%s156 + $0x280] sm:%s149]
                %239 = vst [vmem:[%s157 + $0xa0] sm:%s149] %v238
                %v240 = vld [vmem:[%s156 + $0x290] sm:%s149]
                %241 = vst [vmem:[%s157 + $0xa4] sm:%s149] %v240
                %v242 = vld [vmem:[%s156 + $0x2a0] sm:%s149]
                %243 = vst [vmem:[%s157 + $0xa8] sm:%s149] %v242
                %v244 = vld [vmem:[%s156 + $0x2b0] sm:%s149]
                %245 = vst [vmem:[%s157 + $0xac] sm:%s149] %v244
                %v246 = vld [vmem:[%s156 + $0x2c0] sm:%s149]
                %247 = vst [vmem:[%s157 + $0xb0] sm:%s149] %v246
                %v248 = vld [vmem:[%s156 + $0x2d0] sm:%s149]
                %249 = vst [vmem:[%s157 + $0xb4] sm:%s149] %v248
                %v250 = vld [vmem:[%s156 + $0x2e0] sm:%s149]
                %251 = vst [vmem:[%s157 + $0xb8] sm:%s149] %v250
                %v252 = vld [vmem:[%s156 + $0x2f0] sm:%s149]
                %253 = vst [vmem:[%s157 + $0xbc] sm:%s149] %v252
                %v254 = vld [vmem:[%s156 + $0x300] sm:%s149]
                %255 = vst [vmem:[%s157 + $0xc0] sm:%s149] %v254
                %v256 = vld [vmem:[%s156 + $0x310] sm:%s149]
                %257 = vst [vmem:[%s157 + $0xc4] sm:%s149] %v256
                %v258 = vld [vmem:[%s156 + $0x320] sm:%s149]
                %259 = vst [vmem:[%s157 + $0xc8] sm:%s149] %v258
                %v260 = vld [vmem:[%s156 + $0x330] sm:%s149]
                %261 = vst [vmem:[%s157 + $0xcc] sm:%s149] %v260
                %v262 = vld [vmem:[%s156 + $0x340] sm:%s149]
                %263 = vst [vmem:[%s157 + $0xd0] sm:%s149] %v262
                %v264 = vld [vmem:[%s156 + $0x350] sm:%s149]
                %265 = vst [vmem:[%s157 + $0xd4] sm:%s149] %v264
                %v266 = vld [vmem:[%s156 + $0x360] sm:%s149]
                %267 = vst [vmem:[%s157 + $0xd8] sm:%s149] %v266
                %v268 = vld [vmem:[%s156 + $0x370] sm:%s149]
                %269 = vst [vmem:[%s157 + $0xdc] sm:%s149] %v268
                %v270 = vld [vmem:[%s156 + $0x380] sm:%s149]
                %271 = vst [vmem:[%s157 + $0xe0] sm:%s149] %v270
                %v272 = vld [vmem:[%s156 + $0x390] sm:%s149]
                %273 = vst [vmem:[%s157 + $0xe4] sm:%s149] %v272
                %v274 = vld [vmem:[%s156 + $0x3a0] sm:%s149]
                %275 = vst [vmem:[%s157 + $0xe8] sm:%s149] %v274
                %v276 = vld [vmem:[%s156 + $0x3b0] sm:%s149]
                %277 = vst [vmem:[%s157 + $0xec] sm:%s149] %v276
              $region41: #{encoder_fwd.7} parent=35 // loop_footer
                %s155 = sadd.s32 1, %s151
              $region42: #{encoder_fwd.7} parent=35 // loop_footer_branch
                %150 = sbr.rel target = $region38
              $region43: #{encoder_fwd.7} parent=35 // loop_exit
                _
            $region36: #{encoder_fwd.7} parent=27 // pred_fallthru
              _
          $region28: #{encoder_fwd.7} parent=23 // pred_fallthru
            _
          %418 = vnop
        $region24: #{encoder_fwd.7} parent=19 // pred_fallthru
          _
        // Predicated region
        $region62: #{encoder_fwd.7} parent=19 // pred_check
          %p419 = pneg %p79
        $region63: #{encoder_fwd.7} parent=19 // pred_check_branch
          %421 = sbr.rel (%p419) target = $region65
        $region64: #{encoder_fwd.7} parent=19 // pred_region
          %s422 = sand.u32 %s69, 1
          %s423 = scalar_lea.sflag [#allocation4], %s422
          %s424 = sand.u32 %s69, 1
          %s425 = scalar_lea.vmem [#allocation3], %s424
          %427 = vsyncadd %s423, 0
          %s428 = scalar_lea.hbm %s2, %s12
          %s430 = sshll.u32 %s428, 4
          %s431 = int_to_ptr.hbm [resolvable:$true] %s430
          %s432 = sshll.u32 %s425, 4
          %s433 = int_to_ptr.vmem [resolvable:$true] %s432
          %435 = dma.hbm_to_vmem [thread:$0]  %s431, 16, %s433, %s423
        $region65: #{encoder_fwd.7} parent=19 // pred_fallthru
          _
      $region20: #{encoder_fwd.7} parent=5 // pred_fallthru
        _
      %p436 = scmp.le.s32.totalorder 1, %s12
      %p437 = scmp.lt.s32.totalorder %s12, 5
      %p438 = pnand %p436, %p437
      %p439 = pneg %p438
      // Predicated region
      $region66: #{encoder_fwd.7} parent=5 // pred_check
        _
      $region67: #{encoder_fwd.7} parent=5 // pred_check_branch
        %441 = sbr.rel (%p438) target = $region69
      $region68: #{encoder_fwd.7} parent=5 // pred_region
        %s442 = ssub.s32 %s12, 1
        %s443 = sand.u32 %s46, 1
        %s444 = sand.u32 %s46, 1
        %s445 = smul.addr %s444, 240
        %s446 = scalar_lea.vmem [#allocation2], %s445
        // Predicated region
        $region70: #{encoder_fwd.7} parent=68 // pred_check
          %p447 = pneg %p59
        $region71: #{encoder_fwd.7} parent=68 // pred_check_branch
          %449 = sbr.rel (%p447) target = $region73
        $region72: #{encoder_fwd.7} parent=68 // pred_region
          _
        $region73: #{encoder_fwd.7} parent=68 // pred_fallthru
          _
        %s450 = sand.u32 %s72, 1
        %s451 = scalar_lea.sflag [#allocation4], %s450
        %s452 = sand.u32 %s72, 1
        %s453 = scalar_lea.vmem [#allocation3], %s452
        // Predicated region
        $region74: #{encoder_fwd.7} parent=68 // pred_check
          %p454 = pneg %p85
        $region75: #{encoder_fwd.7} parent=68 // pred_check_branch
          %456 = sbr.rel (%p454) target = $region77
        $region76: #{encoder_fwd.7} parent=68 // pred_region
          %458 = dma.done %s451, 16
        $region77: #{encoder_fwd.7} parent=68 // pred_fallthru
          _
        %p459 = pneg %p33
        %p460 = pneg %p30
        %s461 = sand.u32 %s46, 1
        %s462 = sand.u32 %s46, 1
        %s463 = smul.addr %s462, 240
        %s464 = scalar_lea.vmem [#allocation2], %s463
        %p465 = pneg %p59
        %p466 = pneg %p56
        %s467 = sand.u32 %s72, 1
        %s468 = scalar_lea.sflag [#allocation4], %s467
        %s469 = sand.u32 %s72, 1
        %s470 = scalar_lea.vmem [#allocation3], %s469
        %p471 = pneg %p85
        %p472 = pneg %p82
        %p473 = pneg %p111
        %p474 = pneg %p108
        %s475 = sand.u32 %s98, 1
        %s476 = sand.u32 %s98, 1
        %s477 = smul.addr %s476, 16
        %s478 = scalar_lea.vmem [#allocation5], %s477
        %v480 = vld [vmem:[%s0] sm:$0xf]
        %v481 = vld [vmem:[%s0 + $0x4] sm:$0xf]
        %v482 = vld [vmem:[%s0 + $0x8] sm:$0xf]
        %v483 = vld [vmem:[%s446] sm:$0xf]
        %v484 = vld [vmem:[%s446 + $0x4] sm:$0xf]
        %v485 = vld [vmem:[%s446 + $0x8] sm:$0xf]
        %v486 = vld [vmem:[%s446 + $0xc] sm:$0xf]
        %v487 = vld [vmem:[%s446 + $0x10] sm:$0xf]
        %v488 = vld [vmem:[%s446 + $0x14] sm:$0xf]
        %v489 = vld [vmem:[%s446 + $0x18] sm:$0xf]
        %v490 = vld [vmem:[%s446 + $0x1c] sm:$0xf]
        %v491 = vld [vmem:[%s446 + $0x20] sm:$0xf]
        %v492 = vld [vmem:[%s446 + $0x24] sm:$0xf]
        %v493 = vld [vmem:[%s446 + $0x28] sm:$0xf]
        %v494 = vld [vmem:[%s446 + $0x2c] sm:$0xf]
        %v495 = vld [vmem:[%s446 + $0x30] sm:$0xf]
        %v496 = vld [vmem:[%s446 + $0x34] sm:$0xf]
        %v497 = vld [vmem:[%s446 + $0x38] sm:$0xf]
        %v498 = vld [vmem:[%s446 + $0x3c] sm:$0xf]
        %v499 = vld [vmem:[%s446 + $0x40] sm:$0xf]
        %v500 = vld [vmem:[%s446 + $0x44] sm:$0xf]
        %v501 = vld [vmem:[%s446 + $0x48] sm:$0xf]
        %v502 = vld [vmem:[%s446 + $0x4c] sm:$0xf]
        %v503 = vld [vmem:[%s446 + $0x50] sm:$0xf]
        %v504 = vld [vmem:[%s446 + $0x54] sm:$0xf]
        %v505 = vld [vmem:[%s446 + $0x58] sm:$0xf]
        %v506 = vld [vmem:[%s446 + $0x5c] sm:$0xf]
        %v510 = vunpack.c.l.b16 %v480
        %v511 = vunpack.c.l.b16 %v481
        %v512 = vunpack.c.l.b16 %v482
        %v513 = vpack.c.b16 %v511, %v510
        %v514 = vpack.c.b16 %v512, %v512
        %vm515 = vcmask 1046528
        %v516 = vrot.slane %v513, 1
        %v517 = vrot.slane %v514, 1
        %v518 = vsel %vm515, %v516, %v517
        %v531 = vunpack.c.l.b16 %v495
        %v532 = vunpack.c.l.b16 %v496
        %v533 = vunpack.c.l.b16 %v497
        %v534 = vunpack.c.l.b16 %v498
        %v535 = vunpack.c.l.b16 %v499
        %v536 = vunpack.c.l.b16 %v500
        %v537 = vunpack.c.l.b16 %v501
        %v538 = vunpack.c.l.b16 %v502
        %v539 = vunpack.c.l.b16 %v503
        %v540 = vunpack.c.l.b16 %v504
        %v541 = vunpack.c.l.b16 %v505
        %v542 = vunpack.c.l.b16 %v506
        %v543 = vpack.c.b16 %v532, %v531
        %v544 = vpack.c.b16 %v534, %v533
        %v545 = vpack.c.b16 %v536, %v535
        %v546 = vpack.c.b16 %v538, %v537
        %v547 = vpack.c.b16 %v540, %v539
        %v548 = vpack.c.b16 %v542, %v541
        %vm555 = vcmask 785408
        %v557 = vsel %vm555, %v518, 0
        %559 = vmatpush.bf16.msra.mxu0 0
        %560 = vmatpush.bf16.msra.mxu0 0
        %561 = vmatpush.bf16.msra.mxu0 %v548
        %562 = vmatpush.bf16.msra.mxu0 %v547
        %563 = vmatpush.bf16.msra.mxu0 %v546
        %564 = vmatpush.bf16.msra.mxu0 %v545
        %565 = vmatpush.bf16.msra.mxu0 %v544
        %566 = vmatpush.bf16.msra.mxu0 %v543
        %567 = vmatmul.bf16.gmra.mxu0 %v557
        %v568 = vpop.f32.mrf.mxu0
        %v569 = vadd.f32 0.0, %v568
        %v570 = vpop.f32.mrf.mxu0
        %v571 = vadd.f32 0.0, %v570
        %572 = vdwg.mxu0
        %v585 = vunpack.c.l.b16 %v483
        %v586 = vunpack.c.l.b16 %v484
        %v587 = vunpack.c.l.b16 %v485
        %v588 = vunpack.c.l.b16 %v486
        %v589 = vunpack.c.l.b16 %v487
        %v590 = vunpack.c.l.b16 %v488
        %v591 = vunpack.c.l.b16 %v489
        %v592 = vunpack.c.l.b16 %v490
        %v593 = vunpack.c.l.b16 %v491
        %v594 = vunpack.c.l.b16 %v492
        %v595 = vunpack.c.l.b16 %v493
        %v596 = vunpack.c.l.b16 %v494
        %v597 = vpack.c.b16 %v586, %v585
        %v598 = vpack.c.b16 %v588, %v587
        %v599 = vpack.c.b16 %v590, %v589
        %v600 = vpack.c.b16 %v592, %v591
        %v601 = vpack.c.b16 %v594, %v593
        %v602 = vpack.c.b16 %v596, %v595
        %v610 = vsel %vm555, %v513, 0
        %612 = vmatpush.bf16.msra.mxu0 0
        %613 = vmatpush.bf16.msra.mxu0 0
        %614 = vmatpush.bf16.msra.mxu0 %v602
        %615 = vmatpush.bf16.msra.mxu0 %v601
        %616 = vmatpush.bf16.msra.mxu0 %v600
        %617 = vmatpush.bf16.msra.mxu0 %v599
        %618 = vmatpush.bf16.msra.mxu0 %v598
        %619 = vmatpush.bf16.msra.mxu0 %v597
        %620 = vmatmul.bf16.gmra.mxu0 %v610
        %v621 = vpop.f32.mrf.mxu0
        %v622 = vadd.f32 %v569, %v621
        %v623 = vpop.f32.mrf.mxu0
        %v624 = vadd.f32 %v571, %v623
        %625 = vdwg.mxu0
        %v626 = vld [vmem:[%s446 + $0x60] sm:$0xf]
        %v627 = vld [vmem:[%s446 + $0x64] sm:$0xf]
        %v628 = vld [vmem:[%s446 + $0x68] sm:$0xf]
        %v629 = vld [vmem:[%s446 + $0x6c] sm:$0xf]
        %v630 = vld [vmem:[%s446 + $0x70] sm:$0xf]
        %v631 = vld [vmem:[%s446 + $0x74] sm:$0xf]
        %v632 = vld [vmem:[%s446 + $0x78] sm:$0xf]
        %v633 = vld [vmem:[%s446 + $0x7c] sm:$0xf]
        %v634 = vld [vmem:[%s446 + $0x80] sm:$0xf]
        %v635 = vld [vmem:[%s446 + $0x84] sm:$0xf]
        %v636 = vld [vmem:[%s446 + $0x88] sm:$0xf]
        %v637 = vld [vmem:[%s446 + $0x8c] sm:$0xf]
        %vm638 = vcmask 1045504
        %v639 = vrot.slane %v513, 2
        %v640 = vrot.slane %v514, 2
        %v641 = vsel %vm638, %v639, %v640
        %v654 = vunpack.c.l.b16 %v626
        %v655 = vunpack.c.l.b16 %v627
        %v656 = vunpack.c.l.b16 %v628
        %v657 = vunpack.c.l.b16 %v629
        %v658 = vunpack.c.l.b16 %v630
        %v659 = vunpack.c.l.b16 %v631
        %v660 = vunpack.c.l.b16 %v632
        %v661 = vunpack.c.l.b16 %v633
        %v662 = vunpack.c.l.b16 %v634
        %v663 = vunpack.c.l.b16 %v635
        %v664 = vunpack.c.l.b16 %v636
        %v665 = vunpack.c.l.b16 %v637
        %v666 = vpack.c.b16 %v655, %v654
        %v667 = vpack.c.b16 %v657, %v656
        %v668 = vpack.c.b16 %v659, %v658
        %v669 = vpack.c.b16 %v661, %v660
        %v670 = vpack.c.b16 %v663, %v662
        %v671 = vpack.c.b16 %v665, %v664
        %v679 = vsel %vm555, %v641, 0
        %681 = vmatpush.bf16.msra.mxu0 0
        %682 = vmatpush.bf16.msra.mxu0 0
        %683 = vmatpush.bf16.msra.mxu0 %v671
        %684 = vmatpush.bf16.msra.mxu0 %v670
        %685 = vmatpush.bf16.msra.mxu0 %v669
        %686 = vmatpush.bf16.msra.mxu0 %v668
        %687 = vmatpush.bf16.msra.mxu0 %v667
        %688 = vmatpush.bf16.msra.mxu0 %v666
        %689 = vmatmul.bf16.gmra.mxu0 %v679
        %v690 = vpop.f32.mrf.mxu0
        %v691 = vadd.f32 0.0, %v690
        %v692 = vpop.f32.mrf.mxu0
        %v693 = vadd.f32 0.0, %v692
        %694 = vdwg.mxu0
        %v695 = vadd.f32 %v622, %v691
        %v696 = vadd.f32 %v624, %v693
        %v697 = vld [vmem:[%s446 + $0x90] sm:$0xf]
        %v698 = vld [vmem:[%s446 + $0x94] sm:$0xf]
        %v699 = vld [vmem:[%s446 + $0x98] sm:$0xf]
        %v700 = vld [vmem:[%s446 + $0x9c] sm:$0xf]
        %v701 = vld [vmem:[%s446 + $0xa0] sm:$0xf]
        %v702 = vld [vmem:[%s446 + $0xa4] sm:$0xf]
        %v703 = vld [vmem:[%s446 + $0xa8] sm:$0xf]
        %v704 = vld [vmem:[%s446 + $0xac] sm:$0xf]
        %v705 = vld [vmem:[%s446 + $0xb0] sm:$0xf]
        %v706 = vld [vmem:[%s446 + $0xb4] sm:$0xf]
        %v707 = vld [vmem:[%s446 + $0xb8] sm:$0xf]
        %v708 = vld [vmem:[%s446 + $0xbc] sm:$0xf]
        %vm709 = vcmask 1044480
        %v710 = vrot.slane %v513, 3
        %v711 = vrot.slane %v514, 3
        %v712 = vsel %vm709, %v710, %v711
        %v725 = vunpack.c.l.b16 %v697
        %v726 = vunpack.c.l.b16 %v698
        %v727 = vunpack.c.l.b16 %v699
        %v728 = vunpack.c.l.b16 %v700
        %v729 = vunpack.c.l.b16 %v701
        %v730 = vunpack.c.l.b16 %v702
        %v731 = vunpack.c.l.b16 %v703
        %v732 = vunpack.c.l.b16 %v704
        %v733 = vunpack.c.l.b16 %v705
        %v734 = vunpack.c.l.b16 %v706
        %v735 = vunpack.c.l.b16 %v707
        %v736 = vunpack.c.l.b16 %v708
        %v737 = vpack.c.b16 %v726, %v725
        %v738 = vpack.c.b16 %v728, %v727
        %v739 = vpack.c.b16 %v730, %v729
        %v740 = vpack.c.b16 %v732, %v731
        %v741 = vpack.c.b16 %v734, %v733
        %v742 = vpack.c.b16 %v736, %v735
        %v750 = vsel %vm555, %v712, 0
        %752 = vmatpush.bf16.msra.mxu0 0
        %753 = vmatpush.bf16.msra.mxu0 0
        %754 = vmatpush.bf16.msra.mxu0 %v742
        %755 = vmatpush.bf16.msra.mxu0 %v741
        %756 = vmatpush.bf16.msra.mxu0 %v740
        %757 = vmatpush.bf16.msra.mxu0 %v739
        %758 = vmatpush.bf16.msra.mxu0 %v738
        %759 = vmatpush.bf16.msra.mxu0 %v737
        %760 = vmatmul.bf16.gmra.mxu0 %v750
        %v761 = vpop.f32.mrf.mxu0
        %v762 = vadd.f32 0.0, %v761
        %v763 = vpop.f32.mrf.mxu0
        %v764 = vadd.f32 0.0, %v763
        %765 = vdwg.mxu0
        %v766 = vadd.f32 %v695, %v762
        %v767 = vadd.f32 %v696, %v764
        %v768 = vld [vmem:[%s446 + $0xc0] sm:$0xf]
        %v769 = vld [vmem:[%s446 + $0xc4] sm:$0xf]
        %v770 = vld [vmem:[%s446 + $0xc8] sm:$0xf]
        %v771 = vld [vmem:[%s446 + $0xcc] sm:$0xf]
        %v772 = vld [vmem:[%s446 + $0xd0] sm:$0xf]
        %v773 = vld [vmem:[%s446 + $0xd4] sm:$0xf]
        %v774 = vld [vmem:[%s446 + $0xd8] sm:$0xf]
        %v775 = vld [vmem:[%s446 + $0xdc] sm:$0xf]
        %v776 = vld [vmem:[%s446 + $0xe0] sm:$0xf]
        %v777 = vld [vmem:[%s446 + $0xe4] sm:$0xf]
        %v778 = vld [vmem:[%s446 + $0xe8] sm:$0xf]
        %v779 = vld [vmem:[%s446 + $0xec] sm:$0xf]
        %v780 = vpack.c.b16 %v512, %v511
        %v793 = vunpack.c.l.b16 %v768
        %v794 = vunpack.c.l.b16 %v769
        %v795 = vunpack.c.l.b16 %v770
        %v796 = vunpack.c.l.b16 %v771
        %v797 = vunpack.c.l.b16 %v772
        %v798 = vunpack.c.l.b16 %v773
        %v799 = vunpack.c.l.b16 %v774
        %v800 = vunpack.c.l.b16 %v775
        %v801 = vunpack.c.l.b16 %v776
        %v802 = vunpack.c.l.b16 %v777
        %v803 = vunpack.c.l.b16 %v778
        %v804 = vunpack.c.l.b16 %v779
        %v805 = vpack.c.b16 %v794, %v793
        %v806 = vpack.c.b16 %v796, %v795
        %v807 = vpack.c.b16 %v798, %v797
        %v808 = vpack.c.b16 %v800, %v799
        %v809 = vpack.c.b16 %v802, %v801
        %v810 = vpack.c.b16 %v804, %v803
        %v818 = vsel %vm555, %v780, 0
        %820 = vmatpush.bf16.msra.mxu0 0
        %821 = vmatpush.bf16.msra.mxu0 0
        %822 = vmatpush.bf16.msra.mxu0 %v810
        %823 = vmatpush.bf16.msra.mxu0 %v809
        %824 = vmatpush.bf16.msra.mxu0 %v808
        %825 = vmatpush.bf16.msra.mxu0 %v807
        %826 = vmatpush.bf16.msra.mxu0 %v806
        %827 = vmatpush.bf16.msra.mxu0 %v805
        %828 = vmatmul.bf16.gmra.mxu0 %v818
        %v829 = vpop.f32.mrf.mxu0
        %v830 = vadd.f32 0.0, %v829
        %v831 = vpop.f32.mrf.mxu0
        %v832 = vadd.f32 0.0, %v831
        %833 = vdwg.mxu0
        %v834 = vadd.f32 %v766, %v830
        %v835 = vadd.f32 %v767, %v832
        %v836 = vld [vmem:[%s453] sm:$0x1]
        %v838 = vperm.slane %v836, 0
        %v840 = vadd.f32 %v834, %v838
        %v841 = vadd.f32 %v835, %v838
        %v842 = vadd.f32 %v840, %v841
        %v843 = vrot.slane %v842, 4
        %v844 = vadd.f32 %v842, %v843
        %v845 = vrot.slane %v844, 2
        %v846 = vadd.f32 %v844, %v845
        %v847 = vrot.slane %v846, 1
        %v848 = vadd.f32 %v846, %v847
        %v849 = vrcp.pop 16.0
        %v850 = vmul.f32 16.0, %v849
        %v851 = vsub.f32 1.0, %v850
        %v852 = vmul.f32 %v849, %v851
        %v853 = vadd.f32 %v849, %v852
        %vm854 = vweird.f32 %v849
        %v855 = vsel %vm854, %v849, %v853
        %v856 = vmul.f32 %v848, %v855
        %v857 = vsub.f32 %v840, %v856
        %v858 = vsub.f32 %v841, %v856
        %v859 = vmul.f32 %v857, %v857
        %v860 = vmul.f32 %v858, %v858
        %v861 = vadd.f32 %v859, %v860
        %v862 = vrot.slane %v861, 4
        %v863 = vadd.f32 %v861, %v862
        %v864 = vrot.slane %v863, 2
        %v865 = vadd.f32 %v863, %v864
        %v866 = vrot.slane %v865, 1
        %v867 = vadd.f32 %v865, %v866
        %v868 = vmul.f32 %v867, %v855
        %v869 = vadd.f32 %v868, 1e-05
        %v870 = vrsqrt.pop %v869
        %v871 = vmul.f32 %v870, %v869
        %v872 = vmul.f32 %v871, %v870
        %v873 = vmul.f32 0.5, %v872
        %v874 = vsub.f32 1.5, %v873
        %v875 = vmul.f32 %v870, %v874
        %vm876 = vweird.f32 %v869
        %vm877 = vweird.f32 %v870
        %vm878 = vmor %vm876, %vm877
        %v879 = vsel %vm878, %v870, %v875
        %v880 = vmul.f32 %v857, %v879
        %v881 = vmul.f32 %v858, %v879
        %v882 = vmax.f32 %v880, 0.0
        %v883 = vmax.f32 %v881, 0.0
        %884 = vst [vmem:[%s478] sm:$0xff] %v882
        %885 = vst [vmem:[%s478 + $0x8] sm:$0xff] %v883
        %s886 = sand.u32 %s98, 1
        %s887 = sand.u32 %s98, 1
        %s888 = smul.addr %s887, 16
        %s889 = scalar_lea.vmem [#allocation5], %s888
        // Predicated region
        $region78: #{encoder_fwd.7} parent=68 // pred_check
          %p890 = pneg %p108
        $region79: #{encoder_fwd.7} parent=68 // pred_check_branch
          %892 = sbr.rel (%p890) target = $region81
        $region80: #{encoder_fwd.7} parent=68 // pred_region
          %s893 = smul.addr %s17, 8
          %s894 = scalar_lea.vmem %s3, %s893
          // Predicated region
          $region82: #{encoder_fwd.7} parent=80 // pred_check
            _
          $region83: #{encoder_fwd.7} parent=80 // pred_check_branch
            %896 = sbr.rel (0) target = $region85
          $region84: #{encoder_fwd.7} parent=80 // pred_region
            // Predicated region
            $region86: #{encoder_fwd.7} parent=84 // pred_check
              _
            $region87: #{encoder_fwd.7} parent=84 // pred_check_branch
              %898 = sbr.rel (0) target = $region89
            $region88: #{encoder_fwd.7} parent=84 // pred_region
              // Predicated region
              $region101: #{encoder_fwd.7} parent=88 // pred_check
                _
              $region102: #{encoder_fwd.7} parent=88 // pred_check_branch
                %916 = sbr.rel (0) target = $region104
              $region103: #{encoder_fwd.7} parent=88 // pred_region
                loop: start=0, step=1, limit=1
                $region105: #{encoder_fwd.7} parent=103 // loop_pre_header
                  _
                $region106: #{encoder_fwd.7} parent=103 // loop_header
                  %s918 = sphi 0, %s922
                  %p919 = scmp.ge.s32.totalorder %s918, 1
                  %s923 = sphi %s889, %s889
                  %s924 = sphi %s894, %s894
                $region107: #{encoder_fwd.7} parent=103 // loop_header_branch
                  %921 = sbr.rel (%p919) target = $region111
                $region108: #{encoder_fwd.7} parent=103 // loop_body
                  %v925 = vld [vmem:[%s923] sm:$0xff]
                  %926 = vst [vmem:[%s924] sm:$0xff] %v925
                  %v927 = vld [vmem:[%s923 + $0x8] sm:$0xff]
                  %928 = vst [vmem:[%s924 + $0x20] sm:$0xff] %v927
                $region109: #{encoder_fwd.7} parent=103 // loop_footer
                  %s922 = sadd.s32 1, %s918
                $region110: #{encoder_fwd.7} parent=103 // loop_footer_branch
                  %917 = sbr.rel target = $region106
                $region111: #{encoder_fwd.7} parent=103 // loop_exit
                  _
              $region104: #{encoder_fwd.7} parent=88 // pred_fallthru
                _
              // Predicated region
              $region112: #{encoder_fwd.7} parent=88 // pred_check
                _
              $region113: #{encoder_fwd.7} parent=88 // pred_check_branch
                %930 = sbr.rel target = $region115
              $region114: #{encoder_fwd.7} parent=88 // pred_region
                _
              $region115: #{encoder_fwd.7} parent=88 // pred_fallthru
                _
            $region89: #{encoder_fwd.7} parent=84 // pred_fallthru
              _
            // Predicated region
            $region90: #{encoder_fwd.7} parent=84 // pred_check
              _
            $region91: #{encoder_fwd.7} parent=84 // pred_check_branch
              %900 = sbr.rel target = $region93
            $region92: #{encoder_fwd.7} parent=84 // pred_region
              %s902 = ssub.s32 256, 1
              loop: start=0, step=1, limit=1
              $region94: #{encoder_fwd.7} parent=92 // loop_pre_header
                _
              $region95: #{encoder_fwd.7} parent=92 // loop_header
                %s904 = sphi 0, %s908
                %p905 = scmp.ge.s32.totalorder %s904, 1
                %s909 = sphi %s889, %s889
                %s910 = sphi %s894, %s894
              $region96: #{encoder_fwd.7} parent=92 // loop_header_branch
                %907 = sbr.rel (%p905) target = $region100
              $region97: #{encoder_fwd.7} parent=92 // loop_body
                %v911 = vld [vmem:[%s909] sm:%s902]
                %912 = vst [vmem:[%s910] sm:%s902] %v911
                %v913 = vld [vmem:[%s909 + $0x8] sm:%s902]
                %914 = vst [vmem:[%s910 + $0x20] sm:%s902] %v913
              $region98: #{encoder_fwd.7} parent=92 // loop_footer
                %s908 = sadd.s32 1, %s904
              $region99: #{encoder_fwd.7} parent=92 // loop_footer_branch
                %903 = sbr.rel target = $region95
              $region100: #{encoder_fwd.7} parent=92 // loop_exit
                _
            $region93: #{encoder_fwd.7} parent=84 // pred_fallthru
              _
          $region85: #{encoder_fwd.7} parent=80 // pred_fallthru
            _
          %931 = vnop
        $region81: #{encoder_fwd.7} parent=68 // pred_fallthru
          _
      $region69: #{encoder_fwd.7} parent=5 // pred_fallthru
        _
      %p932 = scmp.le.s32.totalorder 2, %s12
      // Predicated region
      $region116: #{encoder_fwd.7} parent=5 // pred_check
        %p933 = pneg %p932
      $region117: #{encoder_fwd.7} parent=5 // pred_check_branch
        %935 = sbr.rel (%p933) target = $region119
      $region118: #{encoder_fwd.7} parent=5 // pred_region
        %s936 = ssub.s32 %s12, 2
        // Predicated region
        $region120: #{encoder_fwd.7} parent=118 // pred_check
          %p937 = pneg %p114
        $region121: #{encoder_fwd.7} parent=118 // pred_check_branch
          %939 = sbr.rel (%p937) target = $region123
        $region122: #{encoder_fwd.7} parent=118 // pred_region
          %s940 = sand.u32 %s99, 1
          %s941 = sand.u32 %s99, 1
          %s942 = smul.addr %s941, 16
          %s943 = scalar_lea.vmem [#allocation5], %s942
        $region123: #{encoder_fwd.7} parent=118 // pred_fallthru
          _
      $region119: #{encoder_fwd.7} parent=5 // pred_fallthru
        _
    $region6: #{encoder_fwd.7} parent=1 // loop_footer
      %s16 = sadd.s32 1, %s12
    $region7: #{encoder_fwd.7} parent=1 // loop_footer_branch
      %11 = sbr.rel target = $region3
    $region8: #{encoder_fwd.7} parent=1 // loop_exit
      _
    %944 = vsyncpa [#allocation4], 1
    %s945 = scalar_lea.sflag [#allocation4], 1
    %946 = vsyncpa %s945, 1

// kernel: encoder_fwd.11
$region0: #{encoder_fwd.11}
  #allocation0 [shape = 'u32[]', space=smem, size = 0x4, offset = 0x4, fixed_abs, tag = 'smem constant byte address 0x4 - core index']
  #allocation1 [shape = 'u32[72,128]{1,0:T(1,128)}', space=vmem, size = 0x9000, scoped, tag = 'internal scratch']
  %s0 = inlined_call_operand.vmem [shape: f32[2,8,2,32], index: 0, kind: input, shape index: {}]
  %s1 = inlined_call_operand.vmem [shape: bf16[2,8,32], index: 1, kind: input, shape index: {}]
  %s2 = inlined_call_operand.vmem [shape: f32[2,8,2,8], index: 2, kind: output, shape index: {}]
  %s3 = sld [smem:[#allocation0]]
  $region48: #{encoder_fwd.11} parent=0
    _
  %s5 = ssub.s32 1, %s3
  %s6 = scalar_select 0, %s5, %s3
  loop: start=0, step=1, limit=4
  $region2: #{encoder_fwd.11} parent=0 // loop_pre_header
    _
  $region3: #{encoder_fwd.11} parent=0 // loop_header
    %s8 = sphi 0, %s12
    %p9 = scmp.ge.s32.totalorder %s8, 4
    %s18 = sphi 0, %s20
    %s21 = sphi 0, %s18
    %s22 = sphi 0, %s21
    %s38 = sphi 0, %s22
    %s44 = sphi 0, %s46
    %s47 = sphi 0, %s44
    %s48 = sphi 0, %s47
    %s64 = sphi 0, %s48
    %s70 = sphi 0, %s72
    %s73 = sphi 0, %s70
    %s74 = sphi 0, %s73
    %s90 = sphi 0, %s74
  $region4: #{encoder_fwd.11} parent=0 // loop_header_branch
    %11 = sbr.rel (%p9) target = $region8
  $region5: #{encoder_fwd.11} parent=0 // loop_body
    %s13 = ssub.s32 %s8, 1
    %s14 = ssub.s32 %s8, 2
    %s15 = sadd.s32 %s8, 1
    %s16 = ssub.s32 %s8, %s15
    %p17 = scmp.eq.s32.totalorder %s16, 0
    %s19 = sadd.s32 %s18, 1
    %s20 = scalar_select %p17, %s18, %s19
    %p23 = pneg %p17
    %p24 = scmp.eq.s32.totalorder %s8, 1
    %p25 = por %p23, %p24
    %p26 = scmp.ne.s32.totalorder %s18, %s21
    %p27 = scmp.eq.s32.totalorder %s8, 0
    %p28 = por %p26, %p27
    %p29 = scmp.ne.s32.totalorder %s18, %s21
    %p30 = scmp.eq.s32.totalorder %s13, 1
    %p31 = por %p29, %p30
    %p32 = scmp.ne.s32.totalorder %s21, %s22
    %p33 = scmp.eq.s32.totalorder %s13, 0
    %p34 = por %p32, %p33
    %p35 = scmp.ne.s32.totalorder %s21, %s22
    %p36 = scmp.eq.s32.totalorder %s14, 1
    %p37 = por %p35, %p36
    %p39 = scmp.ne.s32.totalorder %s22, %s38
    %p40 = scmp.eq.s32.totalorder %s14, 0
    %p41 = por %p39, %p40
    %s42 = ssub.s32 %s8, %s15
    %p43 = scmp.eq.s32.totalorder %s42, 0
    %s45 = sadd.s32 %s44, 1
    %s46 = scalar_select %p43, %s44, %s45
    %p49 = pneg %p43
    %p50 = scmp.eq.s32.totalorder %s8, 1
    %p51 = por %p49, %p50
    %p52 = scmp.ne.s32.totalorder %s44, %s47
    %p53 = scmp.eq.s32.totalorder %s8, 0
    %p54 = por %p52, %p53
    %p55 = scmp.ne.s32.totalorder %s44, %s47
    %p56 = scmp.eq.s32.totalorder %s13, 1
    %p57 = por %p55, %p56
    %p58 = scmp.ne.s32.totalorder %s47, %s48
    %p59 = scmp.eq.s32.totalorder %s13, 0
    %p60 = por %p58, %p59
    %p61 = scmp.ne.s32.totalorder %s47, %s48
    %p62 = scmp.eq.s32.totalorder %s14, 1
    %p63 = por %p61, %p62
    %p65 = scmp.ne.s32.totalorder %s48, %s64
    %p66 = scmp.eq.s32.totalorder %s14, 0
    %p67 = por %p65, %p66
    %s68 = ssub.s32 %s8, %s15
    %p69 = scmp.eq.s32.totalorder %s68, 0
    %s71 = sadd.s32 %s70, 1
    %s72 = scalar_select %p69, %s70, %s71
    %p75 = pneg %p69
    %p76 = scmp.eq.s32.totalorder %s8, 1
    %p77 = por %p75, %p76
    %p78 = scmp.ne.s32.totalorder %s70, %s73
    %p79 = scmp.eq.s32.totalorder %s8, 0
    %p80 = por %p78, %p79
    %p81 = scmp.ne.s32.totalorder %s70, %s73
    %p82 = scmp.eq.s32.totalorder %s13, 1
    %p83 = por %p81, %p82
    %p84 = scmp.ne.s32.totalorder %s73, %s74
    %p85 = scmp.eq.s32.totalorder %s13, 0
    %p86 = por %p84, %p85
    %p87 = scmp.ne.s32.totalorder %s73, %s74
    %p88 = scmp.eq.s32.totalorder %s14, 1
    %p89 = por %p87, %p88
    %p91 = scmp.ne.s32.totalorder %s74, %s90
    %p92 = scmp.eq.s32.totalorder %s14, 0
    %p93 = por %p91, %p92
    %p94 = scmp.le.s32.totalorder 1, %s8
    %p95 = scmp.lt.s32.totalorder %s8, 3
    %p96 = pnand %p94, %p95
    %p97 = pneg %p96
    // Predicated region
    $region9: #{encoder_fwd.11} parent=5 // pred_check
      _
    $region10: #{encoder_fwd.11} parent=5 // pred_check_branch
      %99 = sbr.rel (%p96) target = $region12
    $region11: #{encoder_fwd.11} parent=5 // pred_region
      %s100 = ssub.s32 %s8, 1
    $region12: #{encoder_fwd.11} parent=5 // pred_fallthru
      _
    %p101 = scmp.lt.s32.totalorder %s8, 2
    // Predicated region
    $region13: #{encoder_fwd.11} parent=5 // pred_check
      %p102 = pneg %p101
    $region14: #{encoder_fwd.11} parent=5 // pred_check_branch
      %104 = sbr.rel (%p102) target = $region16
    $region15: #{encoder_fwd.11} parent=5 // pred_region
      // Predicated region
      $region17: #{encoder_fwd.11} parent=15 // pred_check
        %p105 = pneg %p28
      $region18: #{encoder_fwd.11} parent=15 // pred_check_branch
        %107 = sbr.rel (%p105) target = $region20
      $region19: #{encoder_fwd.11} parent=15 // pred_region
        %p108 = scmp.lt.s32.totalorder %s8, 1
        %s109 = scalar_select %p108, %s8, 1
        %s110 = smul.addr %s109, 8
        %s111 = smul.addr %s110, 2
        %s112 = scalar_lea.vmem %s0, %s111
      $region20: #{encoder_fwd.11} parent=15 // pred_fallthru
        _
      // Predicated region
      $region21: #{encoder_fwd.11} parent=15 // pred_check
        %p113 = pneg %p54
      $region22: #{encoder_fwd.11} parent=15 // pred_check_branch
        %115 = sbr.rel (%p113) target = $region24
      $region23: #{encoder_fwd.11} parent=15 // pred_region
        %p116 = scmp.lt.s32.totalorder %s8, 1
        %s117 = scalar_select %p116, %s8, 1
        %s118 = smul.addr %s117, 4
        %s119 = scalar_lea.vmem %s1, %s118
      $region24: #{encoder_fwd.11} parent=15 // pred_fallthru
        _
    $region16: #{encoder_fwd.11} parent=5 // pred_fallthru
      _
    %p120 = scmp.le.s32.totalorder 1, %s8
    %p121 = scmp.lt.s32.totalorder %s8, 3
    %p122 = pnand %p120, %p121
    %p123 = pneg %p122
    // Predicated region
    $region25: #{encoder_fwd.11} parent=5 // pred_check
      _
    $region26: #{encoder_fwd.11} parent=5 // pred_check_branch
      %125 = sbr.rel (%p122) target = $region28
    $region27: #{encoder_fwd.11} parent=5 // pred_region
      %s126 = ssub.s32 %s8, 1
      %p127 = scmp.lt.s32.totalorder %s13, 1
      %s128 = scalar_select %p127, %s13, 1
      %s129 = smul.addr %s128, 8
      %s130 = smul.addr %s129, 2
      %s131 = scalar_lea.vmem %s0, %s130
      %p132 = pneg %p34
      %p133 = pneg %p31
      %p134 = scmp.lt.s32.totalorder %s13, 1
      %s135 = scalar_select %p134, %s13, 1
      %s136 = smul.addr %s135, 4
      %s137 = scalar_lea.vmem %s1, %s136
      %p138 = pneg %p60
      %p139 = pneg %p57
      %p140 = pneg %p86
      %p141 = pneg %p83
      %p142 = scmp.lt.s32.totalorder %s13, 1
      %s143 = scalar_select %p142, %s13, 1
      %s144 = smul.addr %s143, 8
      %s145 = smul.addr %s144, 2
      %s146 = scalar_lea.vmem %s2, %s145
      %p147 = scmp.lt.s32.totalorder %s13, 1
      %s148 = scalar_select %p147, %s13, 1
      %s149 = smul.addr %s148, 8
      %s150 = smul.addr %s149, 2
      %s151 = scalar_lea.vmem %s0, %s150
      %p152 = scmp.lt.s32.totalorder %s13, 1
      %s153 = scalar_select %p152, %s13, 1
      %s154 = smul.addr %s153, 4
      %s155 = scalar_lea.vmem %s1, %s154
      %p156 = scmp.lt.s32.totalorder %s13, 1
      %s157 = scalar_select %p156, %s13, 1
      %s158 = smul.addr %s157, 8
      %s159 = smul.addr %s158, 2
      %s160 = scalar_lea.vmem %s2, %s159
      %v162 = vld [vmem:[%s155] sm:$0xf]
      loop: start=0, step=1, limit=8
      $region29: #{encoder_fwd.11} parent=27 // loop_pre_header
        _
      $region30: #{encoder_fwd.11} parent=27 // loop_header
        %s164 = sphi 0, %s168
        %p165 = scmp.ge.s32.totalorder %s164, 8
        %v169 = vphi 0.0, %v240
        %v170 = vphi 0.0, %v234
      $region31: #{encoder_fwd.11} parent=27 // loop_header_branch
        %167 = sbr.rel (%p165) target = $region35
      $region32: #{encoder_fwd.11} parent=27 // loop_body
        %s171 = smul.u32 %s164, 2
        %s172 = ssub.s32 7, %s171
        %s173 = smul.u32 %s13, %s172
        %s174 = sadd.s32 %s164, %s173
        %s175 = smul.u32 %s174, 2
        %s176 = scalar_lea.vmem %s151, %s175
        %v177 = vld [vmem:[%s176] sm:$0x3]
        %v178 = vpack.c.bf16 %v169, %v169
        %180 = vrot.lane.b32.xlu0 %v178, 104
        %v181 = vpop.permute.xlu0 %180
        %vm182 = vcmask 64512
        %v184 = vsel %vm182, %v181, 0
        %vm186 = vcmask 1043456
        %v188 = vsel %vm186, %v162, 0
        %190 = vmatpush.bf16.msra.mxu0 0
        %191 = vmatpush.bf16.msra.mxu0 0
        %192 = vmatpush.bf16.msra.mxu0 0
        %193 = vmatpush.bf16.msra.mxu0 0
        %194 = vmatpush.bf16.msra.mxu0 0
        %195 = vmatpush.bf16.msra.mxu0 0
        %196 = vmatpush.bf16.msra.mxu0 0
        %197 = vmatpush.bf16.msra.mxu0 %v188
        %198 = vmatmul.bf16.gmra.mxu0 %v184
        %v199 = vpop.f32.mrf.mxu0
        %v200 = vadd.f32 0.0, %v199
        %v201 = vpop.f32.mrf.mxu0
        %202 = vdwg.mxu0
        %v203 = vadd.f32 %v177, %v200
        %v204 = vxor.u32 %v203, 2147483648
        %v205 = vmul.f32 %v204, 1.442695
        %v206 = vpow.pop %v205
        %v207 = vadd.f32 %v206, 1.0
        %v208 = vrcp.pop %v207
        %v209 = vmul.f32 %v207, %v208
        %v210 = vsub.f32 1.0, %v209
        %v211 = vmul.f32 %v208, %v210
        %v212 = vadd.f32 %v208, %v211
        %vm213 = vweird.f32 %v207
        %vm214 = vweird.f32 %v208
        %vm215 = vmor %vm213, %vm214
        %v216 = vsel %vm215, %v208, %v212
        %v217 = vand.u32 2147483647, %v207
        %vm218 = vcmp.eq.f32.partialorder %v217, 8.507059e+37
        %v219 = vand.u32 %v207, 2147483648
        %v220 = vor.u32 1.1754944e-38, %v219
        %v221 = vsel %vm218, %v220, %v216
        %v222 = vmul.f32 1.0, %v221
        %v223 = vtanh.pop %v203
        %v224 = vmul.f32 %v222, %v170
        %226 = vrot.lane.b32.xlu0 %v223, 112
        %v227 = vpop.permute.xlu0 %226
        %v229 = vmul.f32 %v222, %v227
        %231 = vrot.lane.b32.xlu0 %v229, 8
        %v232 = vpop.permute.xlu0 %231
        %v234 = vadd.f32 %v224, %v232
        %v235 = vtanh.pop %v234
        %237 = vrot.lane.b32.xlu0 %v235, 16
        %v238 = vpop.permute.xlu0 %237
        %v240 = vmul.f32 %v222, %v238
        %242 = vrot.lane.b32.xlu0 %v240, 104
        %v243 = vpop.permute.xlu0 %242
        %s245 = scalar_lea.vmem %s160, %s175
        %vm246 = vcmask 58368
        %247 = vst.msk [vmem:[%s245] sm:$0x3] %vm246, %v243
      $region33: #{encoder_fwd.11} parent=27 // loop_footer
        %s168 = sadd.s32 1, %s164
      $region34: #{encoder_fwd.11} parent=27 // loop_footer_branch
        %163 = sbr.rel target = $region30
      $region35: #{encoder_fwd.11} parent=27 // loop_exit
        _
      %p248 = scmp.lt.s32.totalorder %s13, 1
      %s249 = scalar_select %p248, %s13, 1
      %s250 = smul.addr %s249, 8
      %s251 = smul.addr %s250, 2
      %s252 = scalar_lea.vmem %s2, %s251
      // Predicated region
      $region36: #{encoder_fwd.11} parent=27 // pred_check
        %p253 = pneg %p83
      $region37: #{encoder_fwd.11} parent=27 // pred_check_branch
        %255 = sbr.rel (%p253) target = $region39
      $region38: #{encoder_fwd.11} parent=27 // pred_region
        _
      $region39: #{encoder_fwd.11} parent=27 // pred_fallthru
        _
    $region28: #{encoder_fwd.11} parent=5 // pred_fallthru
      _
    %p256 = scmp.le.s32.totalorder 2, %s8
    // Predicated region
    $region40: #{encoder_fwd.11} parent=5 // pred_check
      %p257 = pneg %p256
    $region41: #{encoder_fwd.11} parent=5 // pred_check_branch
      %259 = sbr.rel (%p257) target = $region43
    $region42: #{encoder_fwd.11} parent=5 // pred_region
      %s260 = ssub.s32 %s8, 2
      // Predicated region
      $region44: #{encoder_fwd.11} parent=42 // pred_check
        %p261 = pneg %p89
      $region45: #{encoder_fwd.11} parent=42 // pred_check_branch
        %263 = sbr.rel (%p261) target = $region47
      $region46: #{encoder_fwd.11} parent=42 // pred_region
        %p264 = scmp.lt.s32.totalorder %s14, 1
        %s265 = scalar_select %p264, %s14, 1
        %s266 = smul.addr %s265, 8
        %s267 = smul.addr %s266, 2
        %s268 = scalar_lea.vmem %s2, %s267
      $region47: #{encoder_fwd.11} parent=42 // pred_fallthru
        _
    $region43: #{encoder_fwd.11} parent=5 // pred_fallthru
      _
  $region6: #{encoder_fwd.11} parent=0 // loop_footer
    %s12 = sadd.s32 1, %s8
  $region7: #{encoder_fwd.11} parent=0 // loop_footer_branch
    %7 = sbr.rel target = $region3
  $region8: #{encoder_fwd.11} parent=0 // loop_exit
    _

// kernel: encoder_fwd.10
$region0: #{encoder_fwd.10}
  #allocation0 [shape = 'u32[]', space=smem, size = 0x4, offset = 0x4, fixed_abs, tag = 'smem constant byte address 0x4 - core index']
  #allocation1 [shape = 'u32[72,128]{1,0:T(1,128)}', space=vmem, size = 0x9000, scoped, tag = 'internal scratch']
  %s0 = inlined_call_operand.vmem [shape: bf16[16,512], index: 0, kind: input, shape index: {}]
  %s1 = inlined_call_operand.vmem [shape: bf16[512,64], index: 1, kind: input, shape index: {}]
  %s2 = inlined_call_operand.vmem [shape: f32[1,64], index: 2, kind: input, shape index: {}]
  %s3 = inlined_call_operand.vmem [shape: f32[16,64], index: 3, kind: output, shape index: {}]
  %s4 = sld [smem:[#allocation0]]
  $region22: #{encoder_fwd.10} parent=0
    _
  %s6 = ssub.s32 1, %s4
  %s7 = scalar_select 0, %s6, %s4
  // Predicated region
  $region2: #{encoder_fwd.10} parent=0 // pred_check
    _
  $region3: #{encoder_fwd.10} parent=0 // pred_check_branch
    %9 = sbr.rel (0) target = $region5
  $region4: #{encoder_fwd.10} parent=0 // pred_region
    _
  $region5: #{encoder_fwd.10} parent=0 // pred_fallthru
    _
  // Predicated region
  $region6: #{encoder_fwd.10} parent=0 // pred_check
    _
  $region7: #{encoder_fwd.10} parent=0 // pred_check_branch
    %11 = sbr.rel (0) target = $region9
  $region8: #{encoder_fwd.10} parent=0 // pred_region
    _
  $region9: #{encoder_fwd.10} parent=0 // pred_fallthru
    _
  // Predicated region
  $region10: #{encoder_fwd.10} parent=0 // pred_check
    _
  $region11: #{encoder_fwd.10} parent=0 // pred_check_branch
    %13 = sbr.rel (0) target = $region13
  $region12: #{encoder_fwd.10} parent=0 // pred_region
    _
  $region13: #{encoder_fwd.10} parent=0 // pred_fallthru
    _
  %v14 = vld [vmem:[%s0] sm:$0xff]
  %v15 = vld [vmem:[%s0 + $0x8] sm:$0xff]
  %v16 = vld [vmem:[%s0 + $0x10] sm:$0xff]
  %v17 = vld [vmem:[%s0 + $0x18] sm:$0xff]
  %v18 = vld [vmem:[%s1] sm:$0xf]
  %v19 = vld [vmem:[%s1 + $0x4] sm:$0xf]
  %v20 = vld [vmem:[%s1 + $0x8] sm:$0xf]
  %v21 = vld [vmem:[%s1 + $0xc] sm:$0xf]
  %v22 = vld [vmem:[%s1 + $0x10] sm:$0xf]
  %v23 = vld [vmem:[%s1 + $0x14] sm:$0xf]
  %v24 = vld [vmem:[%s1 + $0x18] sm:$0xf]
  %v25 = vld [vmem:[%s1 + $0x1c] sm:$0xf]
  %v26 = vld [vmem:[%s1 + $0x20] sm:$0xf]
  %v27 = vld [vmem:[%s1 + $0x24] sm:$0xf]
  %v28 = vld [vmem:[%s1 + $0x28] sm:$0xf]
  %v29 = vld [vmem:[%s1 + $0x2c] sm:$0xf]
  %v30 = vld [vmem:[%s1 + $0x30] sm:$0xf]
  %v31 = vld [vmem:[%s1 + $0x34] sm:$0xf]
  %v32 = vld [vmem:[%s1 + $0x38] sm:$0xf]
  %v33 = vld [vmem:[%s1 + $0x3c] sm:$0xf]
  %v34 = vld [vmem:[%s1 + $0x40] sm:$0xf]
  %v35 = vld [vmem:[%s1 + $0x44] sm:$0xf]
  %v36 = vld [vmem:[%s1 + $0x48] sm:$0xf]
  %v37 = vld [vmem:[%s1 + $0x4c] sm:$0xf]
  %v38 = vld [vmem:[%s1 + $0x50] sm:$0xf]
  %v39 = vld [vmem:[%s1 + $0x54] sm:$0xf]
  %v40 = vld [vmem:[%s1 + $0x58] sm:$0xf]
  %v41 = vld [vmem:[%s1 + $0x5c] sm:$0xf]
  %v42 = vld [vmem:[%s1 + $0x60] sm:$0xf]
  %v43 = vld [vmem:[%s1 + $0x64] sm:$0xf]
  %v44 = vld [vmem:[%s1 + $0x68] sm:$0xf]
  %v45 = vld [vmem:[%s1 + $0x6c] sm:$0xf]
  %v46 = vld [vmem:[%s1 + $0x70] sm:$0xf]
  %v47 = vld [vmem:[%s1 + $0x74] sm:$0xf]
  %v48 = vld [vmem:[%s1 + $0x78] sm:$0xf]
  %v49 = vld [vmem:[%s1 + $0x7c] sm:$0xf]
  %v50 = vld [vmem:[%s1 + $0x80] sm:$0xf]
  %v51 = vld [vmem:[%s1 + $0x84] sm:$0xf]
  %v52 = vld [vmem:[%s1 + $0x88] sm:$0xf]
  %v53 = vld [vmem:[%s1 + $0x8c] sm:$0xf]
  %v54 = vld [vmem:[%s1 + $0x90] sm:$0xf]
  %v55 = vld [vmem:[%s1 + $0x94] sm:$0xf]
  %v56 = vld [vmem:[%s1 + $0x98] sm:$0xf]
  %v57 = vld [vmem:[%s1 + $0x9c] sm:$0xf]
  %v58 = vld [vmem:[%s1 + $0xa0] sm:$0xf]
  %v59 = vld [vmem:[%s1 + $0xa4] sm:$0xf]
  %v60 = vld [vmem:[%s1 + $0xa8] sm:$0xf]
  %v61 = vld [vmem:[%s1 + $0xac] sm:$0xf]
  %v62 = vld [vmem:[%s1 + $0xb0] sm:$0xf]
  %v63 = vld [vmem:[%s1 + $0xb4] sm:$0xf]
  %v64 = vld [vmem:[%s1 + $0xb8] sm:$0xf]
  %v65 = vld [vmem:[%s1 + $0xbc] sm:$0xf]
  %v66 = vld [vmem:[%s1 + $0xc0] sm:$0xf]
  %v67 = vld [vmem:[%s1 + $0xc4] sm:$0xf]
  %v68 = vld [vmem:[%s1 + $0xc8] sm:$0xf]
  %v69 = vld [vmem:[%s1 + $0xcc] sm:$0xf]
  %v70 = vld [vmem:[%s1 + $0xd0] sm:$0xf]
  %v71 = vld [vmem:[%s1 + $0xd4] sm:$0xf]
  %v72 = vld [vmem:[%s1 + $0xd8] sm:$0xf]
  %v73 = vld [vmem:[%s1 + $0xdc] sm:$0xf]
  %v74 = vld [vmem:[%s1 + $0xe0] sm:$0xf]
  %v75 = vld [vmem:[%s1 + $0xe4] sm:$0xf]
  %v76 = vld [vmem:[%s1 + $0xe8] sm:$0xf]
  %v77 = vld [vmem:[%s1 + $0xec] sm:$0xf]
  %v78 = vld [vmem:[%s1 + $0xf0] sm:$0xf]
  %v79 = vld [vmem:[%s1 + $0xf4] sm:$0xf]
  %v80 = vld [vmem:[%s1 + $0xf8] sm:$0xf]
  %v81 = vld [vmem:[%s1 + $0xfc] sm:$0xf]
  %v82 = vld [vmem:[%s2] sm:$0x1]
  %v84 = vperm.slane %v82, 0
  %v90 = vunpack.c.l.b16 %v14
  %v91 = vunpack.c.h.b16 %v14
  %v92 = vunpack.c.l.b16 %v15
  %v93 = vunpack.c.h.b16 %v15
  %v94 = vunpack.c.l.b16 %v16
  %v95 = vunpack.c.h.b16 %v16
  %v96 = vunpack.c.l.b16 %v17
  %v97 = vunpack.c.h.b16 %v17
  %v98 = vpack.c.b16 %v94, %v90
  %v99 = vpack.c.b16 %v95, %v91
  %v100 = vpack.c.b16 %v96, %v92
  %v101 = vpack.c.b16 %v97, %v93
  %v170 = vunpack.c.l.b16 %v18
  %v171 = vunpack.c.l.b16 %v19
  %v172 = vunpack.c.l.b16 %v20
  %v173 = vunpack.c.l.b16 %v21
  %v174 = vunpack.c.l.b16 %v22
  %v175 = vunpack.c.l.b16 %v23
  %v176 = vunpack.c.l.b16 %v24
  %v177 = vunpack.c.l.b16 %v25
  %v178 = vunpack.c.l.b16 %v26
  %v179 = vunpack.c.l.b16 %v27
  %v180 = vunpack.c.l.b16 %v28
  %v181 = vunpack.c.l.b16 %v29
  %v182 = vunpack.c.l.b16 %v30
  %v183 = vunpack.c.l.b16 %v31
  %v184 = vunpack.c.l.b16 %v32
  %v185 = vunpack.c.l.b16 %v33
  %v186 = vunpack.c.l.b16 %v34
  %v187 = vunpack.c.l.b16 %v35
  %v188 = vunpack.c.l.b16 %v36
  %v189 = vunpack.c.l.b16 %v37
  %v190 = vunpack.c.l.b16 %v38
  %v191 = vunpack.c.l.b16 %v39
  %v192 = vunpack.c.l.b16 %v40
  %v193 = vunpack.c.l.b16 %v41
  %v194 = vunpack.c.l.b16 %v42
  %v195 = vunpack.c.l.b16 %v43
  %v196 = vunpack.c.l.b16 %v44
  %v197 = vunpack.c.l.b16 %v45
  %v198 = vunpack.c.l.b16 %v46
  %v199 = vunpack.c.l.b16 %v47
  %v200 = vunpack.c.l.b16 %v48
  %v201 = vunpack.c.l.b16 %v49
  %v202 = vunpack.c.l.b16 %v50
  %v203 = vunpack.c.l.b16 %v51
  %v204 = vunpack.c.l.b16 %v52
  %v205 = vunpack.c.l.b16 %v53
  %v206 = vunpack.c.l.b16 %v54
  %v207 = vunpack.c.l.b16 %v55
  %v208 = vunpack.c.l.b16 %v56
  %v209 = vunpack.c.l.b16 %v57
  %v210 = vunpack.c.l.b16 %v58
  %v211 = vunpack.c.l.b16 %v59
  %v212 = vunpack.c.l.b16 %v60
  %v213 = vunpack.c.l.b16 %v61
  %v214 = vunpack.c.l.b16 %v62
  %v215 = vunpack.c.l.b16 %v63
  %v216 = vunpack.c.l.b16 %v64
  %v217 = vunpack.c.l.b16 %v65
  %v218 = vunpack.c.l.b16 %v66
  %v219 = vunpack.c.l.b16 %v67
  %v220 = vunpack.c.l.b16 %v68
  %v221 = vunpack.c.l.b16 %v69
  %v222 = vunpack.c.l.b16 %v70
  %v223 = vunpack.c.l.b16 %v71
  %v224 = vunpack.c.l.b16 %v72
  %v225 = vunpack.c.l.b16 %v73
  %v226 = vunpack.c.l.b16 %v74
  %v227 = vunpack.c.l.b16 %v75
  %v228 = vunpack.c.l.b16 %v76
  %v229 = vunpack.c.l.b16 %v77
  %v230 = vunpack.c.l.b16 %v78
  %v231 = vunpack.c.l.b16 %v79
  %v232 = vunpack.c.l.b16 %v80
  %v233 = vunpack.c.l.b16 %v81
  %v234 = vpack.c.b16 %v171, %v170
  %v235 = vpack.c.b16 %v173, %v172
  %v236 = vpack.c.b16 %v175, %v174
  %v237 = vpack.c.b16 %v177, %v176
  %v238 = vpack.c.b16 %v179, %v178
  %v239 = vpack.c.b16 %v181, %v180
  %v240 = vpack.c.b16 %v183, %v182
  %v241 = vpack.c.b16 %v185, %v184
  %v242 = vpack.c.b16 %v187, %v186
  %v243 = vpack.c.b16 %v189, %v188
  %v244 = vpack.c.b16 %v191, %v190
  %v245 = vpack.c.b16 %v193, %v192
  %v246 = vpack.c.b16 %v195, %v194
  %v247 = vpack.c.b16 %v197, %v196
  %v248 = vpack.c.b16 %v199, %v198
  %v249 = vpack.c.b16 %v201, %v200
  %v250 = vpack.c.b16 %v203, %v202
  %v251 = vpack.c.b16 %v205, %v204
  %v252 = vpack.c.b16 %v207, %v206
  %v253 = vpack.c.b16 %v209, %v208
  %v254 = vpack.c.b16 %v211, %v210
  %v255 = vpack.c.b16 %v213, %v212
  %v256 = vpack.c.b16 %v215, %v214
  %v257 = vpack.c.b16 %v217, %v216
  %v258 = vpack.c.b16 %v219, %v218
  %v259 = vpack.c.b16 %v221, %v220
  %v260 = vpack.c.b16 %v223, %v222
  %v261 = vpack.c.b16 %v225, %v224
  %v262 = vpack.c.b16 %v227, %v226
  %v263 = vpack.c.b16 %v229, %v228
  %v264 = vpack.c.b16 %v231, %v230
  %v265 = vpack.c.b16 %v233, %v232
  %298 = vmatpush.bf16.msra.mxu0 %v241
  %299 = vmatpush.bf16.msra.mxu0 %v240
  %300 = vmatpush.bf16.msra.mxu0 %v239
  %301 = vmatpush.bf16.msra.mxu0 %v238
  %302 = vmatpush.bf16.msra.mxu0 %v237
  %303 = vmatpush.bf16.msra.mxu0 %v236
  %304 = vmatpush.bf16.msra.mxu0 %v235
  %305 = vmatpush.bf16.msra.mxu0 %v234
  %306 = vmatmul.bf16.gmra.mxu0 %v98
  %v307 = vpop.f32.mrf.mxu0
  %v308 = vadd.f32 %v84, %v307
  %v309 = vpop.f32.mrf.mxu0
  %v310 = vadd.f32 %v84, %v309
  %311 = vdwg.mxu0
  %312 = vmatpush.bf16.msra.mxu0 %v249
  %313 = vmatpush.bf16.msra.mxu0 %v248
  %314 = vmatpush.bf16.msra.mxu0 %v247
  %315 = vmatpush.bf16.msra.mxu0 %v246
  %316 = vmatpush.bf16.msra.mxu0 %v245
  %317 = vmatpush.bf16.msra.mxu0 %v244
  %318 = vmatpush.bf16.msra.mxu0 %v243
  %319 = vmatpush.bf16.msra.mxu0 %v242
  %320 = vmatmul.bf16.gmra.mxu0 %v99
  %v321 = vpop.f32.mrf.mxu0
  %v322 = vadd.f32 %v308, %v321
  %v323 = vpop.f32.mrf.mxu0
  %v324 = vadd.f32 %v310, %v323
  %325 = vdwg.mxu0
  %326 = vmatpush.bf16.msra.mxu0 %v257
  %327 = vmatpush.bf16.msra.mxu0 %v256
  %328 = vmatpush.bf16.msra.mxu0 %v255
  %329 = vmatpush.bf16.msra.mxu0 %v254
  %330 = vmatpush.bf16.msra.mxu0 %v253
  %331 = vmatpush.bf16.msra.mxu0 %v252
  %332 = vmatpush.bf16.msra.mxu0 %v251
  %333 = vmatpush.bf16.msra.mxu0 %v250
  %334 = vmatmul.bf16.gmra.mxu0 %v100
  %v335 = vpop.f32.mrf.mxu0
  %v336 = vadd.f32 %v322, %v335
  %v337 = vpop.f32.mrf.mxu0
  %v338 = vadd.f32 %v324, %v337
  %339 = vdwg.mxu0
  %340 = vmatpush.bf16.msra.mxu0 %v265
  %341 = vmatpush.bf16.msra.mxu0 %v264
  %342 = vmatpush.bf16.msra.mxu0 %v263
  %343 = vmatpush.bf16.msra.mxu0 %v262
  %344 = vmatpush.bf16.msra.mxu0 %v261
  %345 = vmatpush.bf16.msra.mxu0 %v260
  %346 = vmatpush.bf16.msra.mxu0 %v259
  %347 = vmatpush.bf16.msra.mxu0 %v258
  %348 = vmatmul.bf16.gmra.mxu0 %v101
  %v349 = vpop.f32.mrf.mxu0
  %v350 = vadd.f32 %v336, %v349
  %v351 = vpop.f32.mrf.mxu0
  %v352 = vadd.f32 %v338, %v351
  %353 = vdwg.mxu0
  %vm354 = vcmask 523264
  %355 = vst.msk [vmem:[%s3] sm:$0xff] %vm354, %v350
  %356 = vst.msk [vmem:[%s3 + $0x8] sm:$0xff] %vm354, %v352
  // Predicated region
  $region14: #{encoder_fwd.10} parent=0 // pred_check
    _
  $region15: #{encoder_fwd.10} parent=0 // pred_check_branch
    %358 = sbr.rel (0) target = $region17
  $region16: #{encoder_fwd.10} parent=0 // pred_region
    _
  $region17: #{encoder_fwd.10} parent=0 // pred_fallthru
    _
  // Predicated region
  $region18: #{encoder_fwd.10} parent=0 // pred_check
    _
  $region19: #{encoder_fwd.10} parent=0 // pred_check_branch
    %360 = sbr.rel (0) target = $region21
  $region20: #{encoder_fwd.10} parent=0 // pred_region
    _
  $region21: #{encoder_fwd.10} parent=0 // pred_fallthru
    _

// kernel: encoder_fwd.8
$region0: #{encoder_fwd.8}
  #allocation0 [shape = 'u32[]', space=smem, size = 0x4, offset = 0x4, fixed_abs, tag = 'smem constant byte address 0x4 - core index']
  #allocation1 [shape = 'u32[72,128]{1,0:T(1,128)}', space=vmem, size = 0x9000, scoped, tag = 'internal scratch']
  %s0 = inlined_call_operand.vmem [shape: bf16[24,512], index: 0, kind: input, shape index: {}]
  %s1 = inlined_call_operand.vmem [shape: bf16[2560,512], index: 1, kind: input, shape index: {}]
  %s2 = inlined_call_operand.vmem [shape: f32[1,512], index: 2, kind: input, shape index: {}]
  %s3 = inlined_call_operand.vmem [shape: f32[16,512], index: 3, kind: output, shape index: {}]
  %s4 = sld [smem:[#allocation0]]
  $region131: #{encoder_fwd.8} parent=0
    _
  %s6 = ssub.s32 1, %s4
  %s7 = scalar_select 0, %s6, %s4
  $region1: #{encoder_fwd.8} parent=0
    #allocation2 [shape = 'u8[1310720]{0}', space=vmem, size = 0x140000, scoped, tag = 'input window, operand 1']
    #allocation3 [shape = 'u8[16384]{0}', space=vmem, size = 0x4000, scoped, tag = 'output window, operand 0']
    loop: start=0, step=1, limit=6
    $region2: #{encoder_fwd.8} parent=1 // loop_pre_header
      _
    $region3: #{encoder_fwd.8} parent=1 // loop_header
      %s9 = sphi 0, %s13
      %p10 = scmp.ge.s32.totalorder %s9, 6
      %s17 = sphi 0, %s17
      %s19 = sphi 0, %s17
      %s20 = sphi 0, %s19
      %s34 = sphi 0, %s20
      %s40 = sphi 0, %s42
      %s43 = sphi 0, %s40
      %s44 = sphi 0, %s43
      %s60 = sphi 0, %s44
      %s66 = sphi 0, %s68
      %s69 = sphi 0, %s66
      %s70 = sphi 0, %s69
      %s86 = sphi 0, %s70
      %s92 = sphi 0, %s94
      %s95 = sphi 0, %s92
      %s96 = sphi 0, %s95
      %s112 = sphi 0, %s96
    $region4: #{encoder_fwd.8} parent=1 // loop_header_branch
      %12 = sbr.rel (%p10) target = $region8
    $region5: #{encoder_fwd.8} parent=1 // loop_body
      %s14 = ssub.s32 %s9, 1
      %s15 = ssub.s32 %s9, 2
      %s16 = sadd.s32 %s9, 1
      %s18 = sadd.s32 %s17, 1
      %p21 = scmp.eq.s32.totalorder %s9, 3
      %p22 = scmp.ne.s32.totalorder %s17, %s19
      %p23 = scmp.eq.s32.totalorder %s9, 0
      %p24 = por %p22, %p23
      %p25 = scmp.ne.s32.totalorder %s17, %s19
      %p26 = scmp.eq.s32.totalorder %s14, 3
      %p27 = por %p25, %p26
      %p28 = scmp.ne.s32.totalorder %s19, %s20
      %p29 = scmp.eq.s32.totalorder %s14, 0
      %p30 = por %p28, %p29
      %p31 = scmp.ne.s32.totalorder %s19, %s20
      %p32 = scmp.eq.s32.totalorder %s15, 3
      %p33 = por %p31, %p32
      %p35 = scmp.ne.s32.totalorder %s20, %s34
      %p36 = scmp.eq.s32.totalorder %s15, 0
      %p37 = por %p35, %p36
      %s38 = ssub.s32 %s9, %s16
      %p39 = scmp.eq.s32.totalorder %s38, 0
      %s41 = sadd.s32 %s40, 1
      %s42 = scalar_select %p39, %s40, %s41
      %p45 = pneg %p39
      %p46 = scmp.eq.s32.totalorder %s9, 3
      %p47 = por %p45, %p46
      %p48 = scmp.ne.s32.totalorder %s40, %s43
      %p49 = scmp.eq.s32.totalorder %s9, 0
      %p50 = por %p48, %p49
      %p51 = scmp.ne.s32.totalorder %s40, %s43
      %p52 = scmp.eq.s32.totalorder %s14, 3
      %p53 = por %p51, %p52
      %p54 = scmp.ne.s32.totalorder %s43, %s44
      %p55 = scmp.eq.s32.totalorder %s14, 0
      %p56 = por %p54, %p55
      %p57 = scmp.ne.s32.totalorder %s43, %s44
      %p58 = scmp.eq.s32.totalorder %s15, 3
      %p59 = por %p57, %p58
      %p61 = scmp.ne.s32.totalorder %s44, %s60
      %p62 = scmp.eq.s32.totalorder %s15, 0
      %p63 = por %p61, %p62
      %s64 = ssub.s32 %s9, %s16
      %p65 = scmp.eq.s32.totalorder %s64, 0
      %s67 = sadd.s32 %s66, 1
      %s68 = scalar_select %p65, %s66, %s67
      %p71 = pneg %p65
      %p72 = scmp.eq.s32.totalorder %s9, 3
      %p73 = por %p71, %p72
      %p74 = scmp.ne.s32.totalorder %s66, %s69
      %p75 = scmp.eq.s32.totalorder %s9, 0
      %p76 = por %p74, %p75
      %p77 = scmp.ne.s32.totalorder %s66, %s69
      %p78 = scmp.eq.s32.totalorder %s14, 3
      %p79 = por %p77, %p78
      %p80 = scmp.ne.s32.totalorder %s69, %s70
      %p81 = scmp.eq.s32.totalorder %s14, 0
      %p82 = por %p80, %p81
      %p83 = scmp.ne.s32.totalorder %s69, %s70
      %p84 = scmp.eq.s32.totalorder %s15, 3
      %p85 = por %p83, %p84
      %p87 = scmp.ne.s32.totalorder %s70, %s86
      %p88 = scmp.eq.s32.totalorder %s15, 0
      %p89 = por %p87, %p88
      %s90 = ssub.s32 %s9, %s16
      %p91 = scmp.eq.s32.totalorder %s90, 0
      %s93 = sadd.s32 %s92, 1
      %s94 = scalar_select %p91, %s92, %s93
      %p97 = pneg %p91
      %p98 = scmp.eq.s32.totalorder %s9, 3
      %p99 = por %p97, %p98
      %p100 = scmp.ne.s32.totalorder %s92, %s95
      %p101 = scmp.eq.s32.totalorder %s9, 0
      %p102 = por %p100, %p101
      %p103 = scmp.ne.s32.totalorder %s92, %s95
      %p104 = scmp.eq.s32.totalorder %s14, 3
      %p105 = por %p103, %p104
      %p106 = scmp.ne.s32.totalorder %s95, %s96
      %p107 = scmp.eq.s32.totalorder %s14, 0
      %p108 = por %p106, %p107
      %p109 = scmp.ne.s32.totalorder %s95, %s96
      %p110 = scmp.eq.s32.totalorder %s15, 3
      %p111 = por %p109, %p110
      %p113 = scmp.ne.s32.totalorder %s96, %s112
      %p114 = scmp.eq.s32.totalorder %s15, 0
      %p115 = por %p113, %p114
      %p116 = scmp.le.s32.totalorder 1, %s9
      %p117 = scmp.lt.s32.totalorder %s9, 5
      %p118 = pnand %p116, %p117
      %p119 = pneg %p118
      // Predicated region
      $region9: #{encoder_fwd.8} parent=5 // pred_check
        _
      $region10: #{encoder_fwd.8} parent=5 // pred_check_branch
        %121 = sbr.rel (%p118) target = $region12
      $region11: #{encoder_fwd.8} parent=5 // pred_region
        %s122 = ssub.s32 %s9, 1
        // Predicated region
        $region13: #{encoder_fwd.8} parent=11 // pred_check
          %p123 = pneg %p30
        $region14: #{encoder_fwd.8} parent=11 // pred_check_branch
          %125 = sbr.rel (%p123) target = $region16
        $region15: #{encoder_fwd.8} parent=11 // pred_region
          _
        $region16: #{encoder_fwd.8} parent=11 // pred_fallthru
          _
      $region12: #{encoder_fwd.8} parent=5 // pred_fallthru
        _
      %p126 = scmp.lt.s32.totalorder %s9, 4
      // Predicated region
      $region17: #{encoder_fwd.8} parent=5 // pred_check
        %p127 = pneg %p126
      $region18: #{encoder_fwd.8} parent=5 // pred_check_branch
        %129 = sbr.rel (%p127) target = $region20
      $region19: #{encoder_fwd.8} parent=5 // pred_region
        // Predicated region
        $region21: #{encoder_fwd.8} parent=19 // pred_check
          %p130 = pneg %p50
        $region22: #{encoder_fwd.8} parent=19 // pred_check_branch
          %132 = sbr.rel (%p130) target = $region24
        $region23: #{encoder_fwd.8} parent=19 // pred_region
          %s133 = sand.u32 %s40, 1
          %s134 = sand.u32 %s40, 1
          %s135 = smul.addr %s134, 1280
          %s136 = scalar_lea.vmem [#allocation2], %s135
          %s137 = smul.addr %s9, 4
          %s138 = scalar_lea.vmem %s1, %s137
          // Predicated region
          $region25: #{encoder_fwd.8} parent=23 // pred_check
            _
          $region26: #{encoder_fwd.8} parent=23 // pred_check_branch
            %140 = sbr.rel (0) target = $region28
          $region27: #{encoder_fwd.8} parent=23 // pred_region
            // Predicated region
            $region29: #{encoder_fwd.8} parent=27 // pred_check
              _
            $region30: #{encoder_fwd.8} parent=27 // pred_check_branch
              %142 = sbr.rel target = $region32
            $region31: #{encoder_fwd.8} parent=27 // pred_region
              // Predicated region
              $region44: #{encoder_fwd.8} parent=31 // pred_check
                _
              $region45: #{encoder_fwd.8} parent=31 // pred_check_branch
                %796 = sbr.rel target = $region47
              $region46: #{encoder_fwd.8} parent=31 // pred_region
                loop: start=0, step=1, limit=0
                $region48: #{encoder_fwd.8} parent=46 // loop_pre_header
                  _
                $region49: #{encoder_fwd.8} parent=46 // loop_header
                  %s798 = sphi 0, %s802
                  %p799 = scmp.ge.s32.totalorder %s798, 0
                  %s803 = sphi 0, %s1448
                  %s804 = sphi %s138, %s1451
                  %s805 = sphi %s136, %s1452
                $region50: #{encoder_fwd.8} parent=46 // loop_header_branch
                  %801 = sbr.rel (%p799) target = $region54
                $region51: #{encoder_fwd.8} parent=46 // loop_body
                  %v806 = vld [vmem:[%s804] sm:$0xff]
                  %807 = vst [vmem:[%s805] sm:$0xff] %v806
                  %v808 = vld [vmem:[%s804 + $0x10] sm:$0xff]
                  %809 = vst [vmem:[%s805 + $0x4] sm:$0xff] %v808
                  %v810 = vld [vmem:[%s804 + $0x20] sm:$0xff]
                  %811 = vst [vmem:[%s805 + $0x8] sm:$0xff] %v810
                  %v812 = vld [vmem:[%s804 + $0x30] sm:$0xff]
                  %813 = vst [vmem:[%s805 + $0xc] sm:$0xff] %v812
                  %v814 = vld [vmem:[%s804 + $0x40] sm:$0xff]
                  %815 = vst [vmem:[%s805 + $0x10] sm:$0xff] %v814
                  %v816 = vld [vmem:[%s804 + $0x50] sm:$0xff]
                  %817 = vst [vmem:[%s805 + $0x14] sm:$0xff] %v816
                  %v818 = vld [vmem:[%s804 + $0x60] sm:$0xff]
                  %819 = vst [vmem:[%s805 + $0x18] sm:$0xff] %v818
                  %v820 = vld [vmem:[%s804 + $0x70] sm:$0xff]
                  %821 = vst [vmem:[%s805 + $0x1c] sm:$0xff] %v820
                  %v822 = vld [vmem:[%s804 + $0x80] sm:$0xff]
                  %823 = vst [vmem:[%s805 + $0x20] sm:$0xff] %v822
                  %v824 = vld [vmem:[%s804 + $0x90] sm:$0xff]
                  %825 = vst [vmem:[%s805 + $0x24] sm:$0xff] %v824
                  %v826 = vld [vmem:[%s804 + $0xa0] sm:$0xff]
                  %827 = vst [vmem:[%s805 + $0x28] sm:$0xff] %v826
                  %v828 = vld [vmem:[%s804 + $0xb0] sm:$0xff]
                  %829 = vst [vmem:[%s805 + $0x2c] sm:$0xff] %v828
                  %v830 = vld [vmem:[%s804 + $0xc0] sm:$0xff]
                  %831 = vst [vmem:[%s805 + $0x30] sm:$0xff] %v830
                  %v832 = vld [vmem:[%s804 + $0xd0] sm:$0xff]
                  %833 = vst [vmem:[%s805 + $0x34] sm:$0xff] %v832
                  %v834 = vld [vmem:[%s804 + $0xe0] sm:$0xff]
                  %835 = vst [vmem:[%s805 + $0x38] sm:$0xff] %v834
                  %v836 = vld [vmem:[%s804 + $0xf0] sm:$0xff]
                  %837 = vst [vmem:[%s805 + $0x3c] sm:$0xff] %v836
                  %v838 = vld [vmem:[%s804 + $0x100] sm:$0xff]
                  %839 = vst [vmem:[%s805 + $0x40] sm:$0xff] %v838
                  %v840 = vld [vmem:[%s804 + $0x110] sm:$0xff]
                  %841 = vst [vmem:[%s805 + $0x44] sm:$0xff] %v840
                  %v842 = vld [vmem:[%s804 + $0x120] sm:$0xff]
                  %843 = vst [vmem:[%s805 + $0x48] sm:$0xff] %v842
                  %v844 = vld [vmem:[%s804 + $0x130] sm:$0xff]
                  %845 = vst [vmem:[%s805 + $0x4c] sm:$0xff] %v844
                  %v846 = vld [vmem:[%s804 + $0x140] sm:$0xff]
                  %847 = vst [vmem:[%s805 + $0x50] sm:$0xff] %v846
                  %v848 = vld [vmem:[%s804 + $0x150] sm:$0xff]
                  %849 = vst [vmem:[%s805 + $0x54] sm:$0xff] %v848
                  %v850 = vld [vmem:[%s804 + $0x160] sm:$0xff]
                  %851 = vst [vmem:[%s805 + $0x58] sm:$0xff] %v850
                  %v852 = vld [vmem:[%s804 + $0x170] sm:$0xff]
                  %853 = vst [vmem:[%s805 + $0x5c] sm:$0xff] %v852
                  %v854 = vld [vmem:[%s804 + $0x180] sm:$0xff]
                  %855 = vst [vmem:[%s805 + $0x60] sm:$0xff] %v854
                  %v856 = vld [vmem:[%s804 + $0x190] sm:$0xff]
                  %857 = vst [vmem:[%s805 + $0x64] sm:$0xff] %v856
                  %v858 = vld [vmem:[%s804 + $0x1a0] sm:$0xff]
                  %859 = vst [vmem:[%s805 + $0x68] sm:$0xff] %v858
                  %v860 = vld [vmem:[%s804 + $0x1b0] sm:$0xff]
                  %861 = vst [vmem:[%s805 + $0x6c] sm:$0xff] %v860
                  %v862 = vld [vmem:[%s804 + $0x1c0] sm:$0xff]
                  %863 = vst [vmem:[%s805 + $0x70] sm:$0xff] %v862
                  %v864 = vld [vmem:[%s804 + $0x1d0] sm:$0xff]
                  %865 = vst [vmem:[%s805 + $0x74] sm:$0xff] %v864
                  %v866 = vld [vmem:[%s804 + $0x1e0] sm:$0xff]
                  %867 = vst [vmem:[%s805 + $0x78] sm:$0xff] %v866
                  %v868 = vld [vmem:[%s804 + $0x1f0] sm:$0xff]
                  %869 = vst [vmem:[%s805 + $0x7c] sm:$0xff] %v868
                  %v870 = vld [vmem:[%s804 + $0x200] sm:$0xff]
                  %871 = vst [vmem:[%s805 + $0x80] sm:$0xff] %v870
                  %v872 = vld [vmem:[%s804 + $0x210] sm:$0xff]
                  %873 = vst [vmem:[%s805 + $0x84] sm:$0xff] %v872
                  %v874 = vld [vmem:[%s804 + $0x220] sm:$0xff]
                  %875 = vst [vmem:[%s805 + $0x88] sm:$0xff] %v874
                  %v876 = vld [vmem:[%s804 + $0x230] sm:$0xff]
                  %877 = vst [vmem:[%s805 + $0x8c] sm:$0xff] %v876
                  %v878 = vld [vmem:[%s804 + $0x240] sm:$0xff]
                  %879 = vst [vmem:[%s805 + $0x90] sm:$0xff] %v878
                  %v880 = vld [vmem:[%s804 + $0x250] sm:$0xff]
                  %881 = vst [vmem:[%s805 + $0x94] sm:$0xff] %v880
                  %v882 = vld [vmem:[%s804 + $0x260] sm:$0xff]
                  %883 = vst [vmem:[%s805 + $0x98] sm:$0xff] %v882
                  %v884 = vld [vmem:[%s804 + $0x270] sm:$0xff]
                  %885 = vst [vmem:[%s805 + $0x9c] sm:$0xff] %v884
                  %v886 = vld [vmem:[%s804 + $0x280] sm:$0xff]
                  %887 = vst [vmem:[%s805 + $0xa0] sm:$0xff] %v886
                  %v888 = vld [vmem:[%s804 + $0x290] sm:$0xff]
                  %889 = vst [vmem:[%s805 + $0xa4] sm:$0xff] %v888
                  %v890 = vld [vmem:[%s804 + $0x2a0] sm:$0xff]
                  %891 = vst [vmem:[%s805 + $0xa8] sm:$0xff] %v890
                  %v892 = vld [vmem:[%s804 + $0x2b0] sm:$0xff]
                  %893 = vst [vmem:[%s805 + $0xac] sm:$0xff] %v892
                  %v894 = vld [vmem:[%s804 + $0x2c0] sm:$0xff]
                  %895 = vst [vmem:[%s805 + $0xb0] sm:$0xff] %v894
                  %v896 = vld [vmem:[%s804 + $0x2d0] sm:$0xff]
                  %897 = vst [vmem:[%s805 + $0xb4] sm:$0xff] %v896
                  %v898 = vld [vmem:[%s804 + $0x2e0] sm:$0xff]
                  %899 = vst [vmem:[%s805 + $0xb8] sm:$0xff] %v898
                  %v900 = vld [vmem:[%s804 + $0x2f0] sm:$0xff]
                  %901 = vst [vmem:[%s805 + $0xbc] sm:$0xff] %v900
                  %v902 = vld [vmem:[%s804 + $0x300] sm:$0xff]
                  %903 = vst [vmem:[%s805 + $0xc0] sm:$0xff] %v902
                  %v904 = vld [vmem:[%s804 + $0x310] sm:$0xff]
                  %905 = vst [vmem:[%s805 + $0xc4] sm:$0xff] %v904
                  %v906 = vld [vmem:[%s804 + $0x320] sm:$0xff]
                  %907 = vst [vmem:[%s805 + $0xc8] sm:$0xff] %v906
                  %v908 = vld [vmem:[%s804 + $0x330] sm:$0xff]
                  %909 = vst [vmem:[%s805 + $0xcc] sm:$0xff] %v908
                  %v910 = vld [vmem:[%s804 + $0x340] sm:$0xff]
                  %911 = vst [vmem:[%s805 + $0xd0] sm:$0xff] %v910
                  %v912 = vld [vmem:[%s804 + $0x350] sm:$0xff]
                  %913 = vst [vmem:[%s805 + $0xd4] sm:$0xff] %v912
                  %v914 = vld [vmem:[%s804 + $0x360] sm:$0xff]
                  %915 = vst [vmem:[%s805 + $0xd8] sm:$0xff] %v914
                  %v916 = vld [vmem:[%s804 + $0x370] sm:$0xff]
                  %917 = vst [vmem:[%s805 + $0xdc] sm:$0xff] %v916
                  %v918 = vld [vmem:[%s804 + $0x380] sm:$0xff]
                  %919 = vst [vmem:[%s805 + $0xe0] sm:$0xff] %v918
                  %v920 = vld [vmem:[%s804 + $0x390] sm:$0xff]
                  %921 = vst [vmem:[%s805 + $0xe4] sm:$0xff] %v920
                  %v922 = vld [vmem:[%s804 + $0x3a0] sm:$0xff]
                  %923 = vst [vmem:[%s805 + $0xe8] sm:$0xff] %v922
                  %v924 = vld [vmem:[%s804 + $0x3b0] sm:$0xff]
                  %925 = vst [vmem:[%s805 + $0xec] sm:$0xff] %v924
                  %v926 = vld [vmem:[%s804 + $0x3c0] sm:$0xff]
                  %927 = vst [vmem:[%s805 + $0xf0] sm:$0xff] %v926
                  %v928 = vld [vmem:[%s804 + $0x3d0] sm:$0xff]
                  %929 = vst [vmem:[%s805 + $0xf4] sm:$0xff] %v928
                  %v930 = vld [vmem:[%s804 + $0x3e0] sm:$0xff]
                  %931 = vst [vmem:[%s805 + $0xf8] sm:$0xff] %v930
                  %v932 = vld [vmem:[%s804 + $0x3f0] sm:$0xff]
                  %933 = vst [vmem:[%s805 + $0xfc] sm:$0xff] %v932
                  %v934 = vld [vmem:[%s804 + $0x400] sm:$0xff]
                  %935 = vst [vmem:[%s805 + $0x100] sm:$0xff] %v934
                  %v936 = vld [vmem:[%s804 + $0x410] sm:$0xff]
                  %937 = vst [vmem:[%s805 + $0x104] sm:$0xff] %v936
                  %v938 = vld [vmem:[%s804 + $0x420] sm:$0xff]
                  %939 = vst [vmem:[%s805 + $0x108] sm:$0xff] %v938
                  %v940 = vld [vmem:[%s804 + $0x430] sm:$0xff]
                  %941 = vst [vmem:[%s805 + $0x10c] sm:$0xff] %v940
                  %v942 = vld [vmem:[%s804 + $0x440] sm:$0xff]
                  %943 = vst [vmem:[%s805 + $0x110] sm:$0xff] %v942
                  %v944 = vld [vmem:[%s804 + $0x450] sm:$0xff]
                  %945 = vst [vmem:[%s805 + $0x114] sm:$0xff] %v944
                  %v946 = vld [vmem:[%s804 + $0x460] sm:$0xff]
                  %947 = vst [vmem:[%s805 + $0x118] sm:$0xff] %v946
                  %v948 = vld [vmem:[%s804 + $0x470] sm:$0xff]
                  %949 = vst [vmem:[%s805 + $0x11c] sm:$0xff] %v948
                  %v950 = vld [vmem:[%s804 + $0x480] sm:$0xff]
                  %951 = vst [vmem:[%s805 + $0x120] sm:$0xff] %v950
                  %v952 = vld [vmem:[%s804 + $0x490] sm:$0xff]
                  %953 = vst [vmem:[%s805 + $0x124] sm:$0xff] %v952
                  %v954 = vld [vmem:[%s804 + $0x4a0] sm:$0xff]
                  %955 = vst [vmem:[%s805 + $0x128] sm:$0xff] %v954
                  %v956 = vld [vmem:[%s804 + $0x4b0] sm:$0xff]
                  %957 = vst [vmem:[%s805 + $0x12c] sm:$0xff] %v956
                  %v958 = vld [vmem:[%s804 + $0x4c0] sm:$0xff]
                  %959 = vst [vmem:[%s805 + $0x130] sm:$0xff] %v958
                  %v960 = vld [vmem:[%s804 + $0x4d0] sm:$0xff]
                  %961 = vst [vmem:[%s805 + $0x134] sm:$0xff] %v960
                  %v962 = vld [vmem:[%s804 + $0x4e0] sm:$0xff]
                  %963 = vst [vmem:[%s805 + $0x138] sm:$0xff] %v962
                  %v964 = vld [vmem:[%s804 + $0x4f0] sm:$0xff]
                  %965 = vst [vmem:[%s805 + $0x13c] sm:$0xff] %v964
                  %v966 = vld [vmem:[%s804 + $0x500] sm:$0xff]
                  %967 = vst [vmem:[%s805 + $0x140] sm:$0xff] %v966
                  %v968 = vld [vmem:[%s804 + $0x510] sm:$0xff]
                  %969 = vst [vmem:[%s805 + $0x144] sm:$0xff] %v968
                  %v970 = vld [vmem:[%s804 + $0x520] sm:$0xff]
                  %971 = vst [vmem:[%s805 + $0x148] sm:$0xff] %v970
                  %v972 = vld [vmem:[%s804 + $0x530] sm:$0xff]
                  %973 = vst [vmem:[%s805 + $0x14c] sm:$0xff] %v972
                  %v974 = vld [vmem:[%s804 + $0x540] sm:$0xff]
                  %975 = vst [vmem:[%s805 + $0x150] sm:$0xff] %v974
                  %v976 = vld [vmem:[%s804 + $0x550] sm:$0xff]
                  %977 = vst [vmem:[%s805 + $0x154] sm:$0xff] %v976
                  %v978 = vld [vmem:[%s804 + $0x560] sm:$0xff]
                  %979 = vst [vmem:[%s805 + $0x158] sm:$0xff] %v978
                  %v980 = vld [vmem:[%s804 + $0x570] sm:$0xff]
                  %981 = vst [vmem:[%s805 + $0x15c] sm:$0xff] %v980
                  %v982 = vld [vmem:[%s804 + $0x580] sm:$0xff]
                  %983 = vst [vmem:[%s805 + $0x160] sm:$0xff] %v982
                  %v984 = vld [vmem:[%s804 + $0x590] sm:$0xff]
                  %985 = vst [vmem:[%s805 + $0x164] sm:$0xff] %v984
                  %v986 = vld [vmem:[%s804 + $0x5a0] sm:$0xff]
                  %987 = vst [vmem:[%s805 + $0x168] sm:$0xff] %v986
                  %v988 = vld [vmem:[%s804 + $0x5b0] sm:$0xff]
                  %989 = vst [vmem:[%s805 + $0x16c] sm:$0xff] %v988
                  %v990 = vld [vmem:[%s804 + $0x5c0] sm:$0xff]
                  %991 = vst [vmem:[%s805 + $0x170] sm:$0xff] %v990
                  %v992 = vld [vmem:[%s804 + $0x5d0] sm:$0xff]
                  %993 = vst [vmem:[%s805 + $0x174] sm:$0xff] %v992
                  %v994 = vld [vmem:[%s804 + $0x5e0] sm:$0xff]
                  %995 = vst [vmem:[%s805 + $0x178] sm:$0xff] %v994
                  %v996 = vld [vmem:[%s804 + $0x5f0] sm:$0xff]
                  %997 = vst [vmem:[%s805 + $0x17c] sm:$0xff] %v996
                  %v998 = vld [vmem:[%s804 + $0x600] sm:$0xff]
                  %999 = vst [vmem:[%s805 + $0x180] sm:$0xff] %v998
                  %v1000 = vld [vmem:[%s804 + $0x610] sm:$0xff]
                  %1001 = vst [vmem:[%s805 + $0x184] sm:$0xff] %v1000
                  %v1002 = vld [vmem:[%s804 + $0x620] sm:$0xff]
                  %1003 = vst [vmem:[%s805 + $0x188] sm:$0xff] %v1002
                  %v1004 = vld [vmem:[%s804 + $0x630] sm:$0xff]
                  %1005 = vst [vmem:[%s805 + $0x18c] sm:$0xff] %v1004
                  %v1006 = vld [vmem:[%s804 + $0x640] sm:$0xff]
                  %1007 = vst [vmem:[%s805 + $0x190] sm:$0xff] %v1006
                  %v1008 = vld [vmem:[%s804 + $0x650] sm:$0xff]
                  %1009 = vst [vmem:[%s805 + $0x194] sm:$0xff] %v1008
                  %v1010 = vld [vmem:[%s804 + $0x660] sm:$0xff]
                  %1011 = vst [vmem:[%s805 + $0x198] sm:$0xff] %v1010
                  %v1012 = vld [vmem:[%s804 + $0x670] sm:$0xff]
                  %1013 = vst [vmem:[%s805 + $0x19c] sm:$0xff] %v1012
                  %v1014 = vld [vmem:[%s804 + $0x680] sm:$0xff]
                  %1015 = vst [vmem:[%s805 + $0x1a0] sm:$0xff] %v1014
                  %v1016 = vld [vmem:[%s804 + $0x690] sm:$0xff]
                  %1017 = vst [vmem:[%s805 + $0x1a4] sm:$0xff] %v1016
                  %v1018 = vld [vmem:[%s804 + $0x6a0] sm:$0xff]
                  %1019 = vst [vmem:[%s805 + $0x1a8] sm:$0xff] %v1018
                  %v1020 = vld [vmem:[%s804 + $0x6b0] sm:$0xff]
                  %1021 = vst [vmem:[%s805 + $0x1ac] sm:$0xff] %v1020
                  %v1022 = vld [vmem:[%s804 + $0x6c0] sm:$0xff]
                  %1023 = vst [vmem:[%s805 + $0x1b0] sm:$0xff] %v1022
                  %v1024 = vld [vmem:[%s804 + $0x6d0] sm:$0xff]
                  %1025 = vst [vmem:[%s805 + $0x1b4] sm:$0xff] %v1024
                  %v1026 = vld [vmem:[%s804 + $0x6e0] sm:$0xff]
                  %1027 = vst [vmem:[%s805 + $0x1b8] sm:$0xff] %v1026
                  %v1028 = vld [vmem:[%s804 + $0x6f0] sm:$0xff]
                  %1029 = vst [vmem:[%s805 + $0x1bc] sm:$0xff] %v1028
                  %v1030 = vld [vmem:[%s804 + $0x700] sm:$0xff]
                  %1031 = vst [vmem:[%s805 + $0x1c0] sm:$0xff] %v1030
                  %v1032 = vld [vmem:[%s804 + $0x710] sm:$0xff]
                  %1033 = vst [vmem:[%s805 + $0x1c4] sm:$0xff] %v1032
                  %v1034 = vld [vmem:[%s804 + $0x720] sm:$0xff]
                  %1035 = vst [vmem:[%s805 + $0x1c8] sm:$0xff] %v1034
                  %v1036 = vld [vmem:[%s804 + $0x730] sm:$0xff]
                  %1037 = vst [vmem:[%s805 + $0x1cc] sm:$0xff] %v1036
                  %v1038 = vld [vmem:[%s804 + $0x740] sm:$0xff]
                  %1039 = vst [vmem:[%s805 + $0x1d0] sm:$0xff] %v1038
                  %v1040 = vld [vmem:[%s804 + $0x750] sm:$0xff]
                  %1041 = vst [vmem:[%s805 + $0x1d4] sm:$0xff] %v1040
                  %v1042 = vld [vmem:[%s804 + $0x760] sm:$0xff]
                  %1043 = vst [vmem:[%s805 + $0x1d8] sm:$0xff] %v1042
                  %v1044 = vld [vmem:[%s804 + $0x770] sm:$0xff]
                  %1045 = vst [vmem:[%s805 + $0x1dc] sm:$0xff] %v1044
                  %v1046 = vld [vmem:[%s804 + $0x780] sm:$0xff]
                  %1047 = vst [vmem:[%s805 + $0x1e0] sm:$0xff] %v1046
                  %v1048 = vld [vmem:[%s804 + $0x790] sm:$0xff]
                  %1049 = vst [vmem:[%s805 + $0x1e4] sm:$0xff] %v1048
                  %v1050 = vld [vmem:[%s804 + $0x7a0] sm:$0xff]
                  %1051 = vst [vmem:[%s805 + $0x1e8] sm:$0xff] %v1050
                  %v1052 = vld [vmem:[%s804 + $0x7b0] sm:$0xff]
                  %1053 = vst [vmem:[%s805 + $0x1ec] sm:$0xff] %v1052
                  %v1054 = vld [vmem:[%s804 + $0x7c0] sm:$0xff]
                  %1055 = vst [vmem:[%s805 + $0x1f0] sm:$0xff] %v1054
                  %v1056 = vld [vmem:[%s804 + $0x7d0] sm:$0xff]
                  %1057 = vst [vmem:[%s805 + $0x1f4] sm:$0xff] %v1056
                  %v1058 = vld [vmem:[%s804 + $0x7e0] sm:$0xff]
                  %1059 = vst [vmem:[%s805 + $0x1f8] sm:$0xff] %v1058
                  %v1060 = vld [vmem:[%s804 + $0x7f0] sm:$0xff]
                  %1061 = vst [vmem:[%s805 + $0x1fc] sm:$0xff] %v1060
                  %v1062 = vld [vmem:[%s804 + $0x800] sm:$0xff]
                  %1063 = vst [vmem:[%s805 + $0x200] sm:$0xff] %v1062
                  %v1064 = vld [vmem:[%s804 + $0x810] sm:$0xff]
                  %1065 = vst [vmem:[%s805 + $0x204] sm:$0xff] %v1064
                  %v1066 = vld [vmem:[%s804 + $0x820] sm:$0xff]
                  %1067 = vst [vmem:[%s805 + $0x208] sm:$0xff] %v1066
                  %v1068 = vld [vmem:[%s804 + $0x830] sm:$0xff]
                  %1069 = vst [vmem:[%s805 + $0x20c] sm:$0xff] %v1068
                  %v1070 = vld [vmem:[%s804 + $0x840] sm:$0xff]
                  %1071 = vst [vmem:[%s805 + $0x210] sm:$0xff] %v1070
                  %v1072 = vld [vmem:[%s804 + $0x850] sm:$0xff]
                  %1073 = vst [vmem:[%s805 + $0x214] sm:$0xff] %v1072
                  %v1074 = vld [vmem:[%s804 + $0x860] sm:$0xff]
                  %1075 = vst [vmem:[%s805 + $0x218] sm:$0xff] %v1074
                  %v1076 = vld [vmem:[%s804 + $0x870] sm:$0xff]
                  %1077 = vst [vmem:[%s805 + $0x21c] sm:$0xff] %v1076
                  %v1078 = vld [vmem:[%s804 + $0x880] sm:$0xff]
                  %1079 = vst [vmem:[%s805 + $0x220] sm:$0xff] %v1078
                  %v1080 = vld [vmem:[%s804 + $0x890] sm:$0xff]
                  %1081 = vst [vmem:[%s805 + $0x224] sm:$0xff] %v1080
                  %v1082 = vld [vmem:[%s804 + $0x8a0] sm:$0xff]
                  %1083 = vst [vmem:[%s805 + $0x228] sm:$0xff] %v1082
                  %v1084 = vld [vmem:[%s804 + $0x8b0] sm:$0xff]
                  %1085 = vst [vmem:[%s805 + $0x22c] sm:$0xff] %v1084
                  %v1086 = vld [vmem:[%s804 + $0x8c0] sm:$0xff]
                  %1087 = vst [vmem:[%s805 + $0x230] sm:$0xff] %v1086
                  %v1088 = vld [vmem:[%s804 + $0x8d0] sm:$0xff]
                  %1089 = vst [vmem:[%s805 + $0x234] sm:$0xff] %v1088
                  %v1090 = vld [vmem:[%s804 + $0x8e0] sm:$0xff]
                  %1091 = vst [vmem:[%s805 + $0x238] sm:$0xff] %v1090
                  %v1092 = vld [vmem:[%s804 + $0x8f0] sm:$0xff]
                  %1093 = vst [vmem:[%s805 + $0x23c] sm:$0xff] %v1092
                  %v1094 = vld [vmem:[%s804 + $0x900] sm:$0xff]
                  %1095 = vst [vmem:[%s805 + $0x240] sm:$0xff] %v1094
                  %v1096 = vld [vmem:[%s804 + $0x910] sm:$0xff]
                  %1097 = vst [vmem:[%s805 + $0x244] sm:$0xff] %v1096
                  %v1098 = vld [vmem:[%s804 + $0x920] sm:$0xff]
                  %1099 = vst [vmem:[%s805 + $0x248] sm:$0xff] %v1098
                  %v1100 = vld [vmem:[%s804 + $0x930] sm:$0xff]
                  %1101 = vst [vmem:[%s805 + $0x24c] sm:$0xff] %v1100
                  %v1102 = vld [vmem:[%s804 + $0x940] sm:$0xff]
                  %1103 = vst [vmem:[%s805 + $0x250] sm:$0xff] %v1102
                  %v1104 = vld [vmem:[%s804 + $0x950] sm:$0xff]
                  %1105 = vst [vmem:[%s805 + $0x254] sm:$0xff] %v1104
                  %v1106 = vld [vmem:[%s804 + $0x960] sm:$0xff]
                  %1107 = vst [vmem:[%s805 + $0x258] sm:$0xff] %v1106
                  %v1108 = vld [vmem:[%s804 + $0x970] sm:$0xff]
                  %1109 = vst [vmem:[%s805 + $0x25c] sm:$0xff] %v1108
                  %v1110 = vld [vmem:[%s804 + $0x980] sm:$0xff]
                  %1111 = vst [vmem:[%s805 + $0x260] sm:$0xff] %v1110
                  %v1112 = vld [vmem:[%s804 + $0x990] sm:$0xff]
                  %1113 = vst [vmem:[%s805 + $0x264] sm:$0xff] %v1112
                  %v1114 = vld [vmem:[%s804 + $0x9a0] sm:$0xff]
                  %1115 = vst [vmem:[%s805 + $0x268] sm:$0xff] %v1114
                  %v1116 = vld [vmem:[%s804 + $0x9b0] sm:$0xff]
                  %1117 = vst [vmem:[%s805 + $0x26c] sm:$0xff] %v1116
                  %v1118 = vld [vmem:[%s804 + $0x9c0] sm:$0xff]
                  %1119 = vst [vmem:[%s805 + $0x270] sm:$0xff] %v1118
                  %v1120 = vld [vmem:[%s804 + $0x9d0] sm:$0xff]
                  %1121 = vst [vmem:[%s805 + $0x274] sm:$0xff] %v1120
                  %v1122 = vld [vmem:[%s804 + $0x9e0] sm:$0xff]
                  %1123 = vst [vmem:[%s805 + $0x278] sm:$0xff] %v1122
                  %v1124 = vld [vmem:[%s804 + $0x9f0] sm:$0xff]
                  %1125 = vst [vmem:[%s805 + $0x27c] sm:$0xff] %v1124
                  %v1126 = vld [vmem:[%s804 + $0xa00] sm:$0xff]
                  %1127 = vst [vmem:[%s805 + $0x280] sm:$0xff] %v1126
                  %v1128 = vld [vmem:[%s804 + $0xa10] sm:$0xff]
                  %1129 = vst [vmem:[%s805 + $0x284] sm:$0xff] %v1128
                  %v1130 = vld [vmem:[%s804 + $0xa20] sm:$0xff]
                  %1131 = vst [vmem:[%s805 + $0x288] sm:$0xff] %v1130
                  %v1132 = vld [vmem:[%s804 + $0xa30] sm:$0xff]
                  %1133 = vst [vmem:[%s805 + $0x28c] sm:$0xff] %v1132
                  %v1134 = vld [vmem:[%s804 + $0xa40] sm:$0xff]
                  %1135 = vst [vmem:[%s805 + $0x290] sm:$0xff] %v1134
                  %v1136 = vld [vmem:[%s804 + $0xa50] sm:$0xff]
                  %1137 = vst [vmem:[%s805 + $0x294] sm:$0xff] %v1136
                  %v1138 = vld [vmem:[%s804 + $0xa60] sm:$0xff]
                  %1139 = vst [vmem:[%s805 + $0x298] sm:$0xff] %v1138
                  %v1140 = vld [vmem:[%s804 + $0xa70] sm:$0xff]
                  %1141 = vst [vmem:[%s805 + $0x29c] sm:$0xff] %v1140
                  %v1142 = vld [vmem:[%s804 + $0xa80] sm:$0xff]
                  %1143 = vst [vmem:[%s805 + $0x2a0] sm:$0xff] %v1142
                  %v1144 = vld [vmem:[%s804 + $0xa90] sm:$0xff]
                  %1145 = vst [vmem:[%s805 + $0x2a4] sm:$0xff] %v1144
                  %v1146 = vld [vmem:[%s804 + $0xaa0] sm:$0xff]
                  %1147 = vst [vmem:[%s805 + $0x2a8] sm:$0xff] %v1146
                  %v1148 = vld [vmem:[%s804 + $0xab0] sm:$0xff]
                  %1149 = vst [vmem:[%s805 + $0x2ac] sm:$0xff] %v1148
                  %v1150 = vld [vmem:[%s804 + $0xac0] sm:$0xff]
                  %1151 = vst [vmem:[%s805 + $0x2b0] sm:$0xff] %v1150
                  %v1152 = vld [vmem:[%s804 + $0xad0] sm:$0xff]
                  %1153 = vst [vmem:[%s805 + $0x2b4] sm:$0xff] %v1152
                  %v1154 = vld [vmem:[%s804 + $0xae0] sm:$0xff]
                  %1155 = vst [vmem:[%s805 + $0x2b8] sm:$0xff] %v1154
                  %v1156 = vld [vmem:[%s804 + $0xaf0] sm:$0xff]
                  %1157 = vst [vmem:[%s805 + $0x2bc] sm:$0xff] %v1156
                  %v1158 = vld [vmem:[%s804 + $0xb00] sm:$0xff]
                  %1159 = vst [vmem:[%s805 + $0x2c0] sm:$0xff] %v1158
                  %v1160 = vld [vmem:[%s804 + $0xb10] sm:$0xff]
                  %1161 = vst [vmem:[%s805 + $0x2c4] sm:$0xff] %v1160
                  %v1162 = vld [vmem:[%s804 + $0xb20] sm:$0xff]
                  %1163 = vst [vmem:[%s805 + $0x2c8] sm:$0xff] %v1162
                  %v1164 = vld [vmem:[%s804 + $0xb30] sm:$0xff]
                  %1165 = vst [vmem:[%s805 + $0x2cc] sm:$0xff] %v1164
                  %v1166 = vld [vmem:[%s804 + $0xb40] sm:$0xff]
                  %1167 = vst [vmem:[%s805 + $0x2d0] sm:$0xff] %v1166
                  %v1168 = vld [vmem:[%s804 + $0xb50] sm:$0xff]
                  %1169 = vst [vmem:[%s805 + $0x2d4] sm:$0xff] %v1168
                  %v1170 = vld [vmem:[%s804 + $0xb60] sm:$0xff]
                  %1171 = vst [vmem:[%s805 + $0x2d8] sm:$0xff] %v1170
                  %v1172 = vld [vmem:[%s804 + $0xb70] sm:$0xff]
                  %1173 = vst [vmem:[%s805 + $0x2dc] sm:$0xff] %v1172
                  %v1174 = vld [vmem:[%s804 + $0xb80] sm:$0xff]
                  %1175 = vst [vmem:[%s805 + $0x2e0] sm:$0xff] %v1174
                  %v1176 = vld [vmem:[%s804 + $0xb90] sm:$0xff]
                  %1177 = vst [vmem:[%s805 + $0x2e4] sm:$0xff] %v1176
                  %v1178 = vld [vmem:[%s804 + $0xba0] sm:$0xff]
                  %1179 = vst [vmem:[%s805 + $0x2e8] sm:$0xff] %v1178
                  %v1180 = vld [vmem:[%s804 + $0xbb0] sm:$0xff]
                  %1181 = vst [vmem:[%s805 + $0x2ec] sm:$0xff] %v1180
                  %v1182 = vld [vmem:[%s804 + $0xbc0] sm:$0xff]
                  %1183 = vst [vmem:[%s805 + $0x2f0] sm:$0xff] %v1182
                  %v1184 = vld [vmem:[%s804 + $0xbd0] sm:$0xff]
                  %1185 = vst [vmem:[%s805 + $0x2f4] sm:$0xff] %v1184
                  %v1186 = vld [vmem:[%s804 + $0xbe0] sm:$0xff]
                  %1187 = vst [vmem:[%s805 + $0x2f8] sm:$0xff] %v1186
                  %v1188 = vld [vmem:[%s804 + $0xbf0] sm:$0xff]
                  %1189 = vst [vmem:[%s805 + $0x2fc] sm:$0xff] %v1188
                  %v1190 = vld [vmem:[%s804 + $0xc00] sm:$0xff]
                  %1191 = vst [vmem:[%s805 + $0x300] sm:$0xff] %v1190
                  %v1192 = vld [vmem:[%s804 + $0xc10] sm:$0xff]
                  %1193 = vst [vmem:[%s805 + $0x304] sm:$0xff] %v1192
                  %v1194 = vld [vmem:[%s804 + $0xc20] sm:$0xff]
                  %1195 = vst [vmem:[%s805 + $0x308] sm:$0xff] %v1194
                  %v1196 = vld [vmem:[%s804 + $0xc30] sm:$0xff]
                  %1197 = vst [vmem:[%s805 + $0x30c] sm:$0xff] %v1196
                  %v1198 = vld [vmem:[%s804 + $0xc40] sm:$0xff]
                  %1199 = vst [vmem:[%s805 + $0x310] sm:$0xff] %v1198
                  %v1200 = vld [vmem:[%s804 + $0xc50] sm:$0xff]
                  %1201 = vst [vmem:[%s805 + $0x314] sm:$0xff] %v1200
                  %v1202 = vld [vmem:[%s804 + $0xc60] sm:$0xff]
                  %1203 = vst [vmem:[%s805 + $0x318] sm:$0xff] %v1202
                  %v1204 = vld [vmem:[%s804 + $0xc70] sm:$0xff]
                  %1205 = vst [vmem:[%s805 + $0x31c] sm:$0xff] %v1204
                  %v1206 = vld [vmem:[%s804 + $0xc80] sm:$0xff]
                  %1207 = vst [vmem:[%s805 + $0x320] sm:$0xff] %v1206
                  %v1208 = vld [vmem:[%s804 + $0xc90] sm:$0xff]
                  %1209 = vst [vmem:[%s805 + $0x324] sm:$0xff] %v1208
                  %v1210 = vld [vmem:[%s804 + $0xca0] sm:$0xff]
                  %1211 = vst [vmem:[%s805 + $0x328] sm:$0xff] %v1210
                  %v1212 = vld [vmem:[%s804 + $0xcb0] sm:$0xff]
                  %1213 = vst [vmem:[%s805 + $0x32c] sm:$0xff] %v1212
                  %v1214 = vld [vmem:[%s804 + $0xcc0] sm:$0xff]
                  %1215 = vst [vmem:[%s805 + $0x330] sm:$0xff] %v1214
                  %v1216 = vld [vmem:[%s804 + $0xcd0] sm:$0xff]
                  %1217 = vst [vmem:[%s805 + $0x334] sm:$0xff] %v1216
                  %v1218 = vld [vmem:[%s804 + $0xce0] sm:$0xff]
                  %1219 = vst [vmem:[%s805 + $0x338] sm:$0xff] %v1218
                  %v1220 = vld [vmem:[%s804 + $0xcf0] sm:$0xff]
                  %1221 = vst [vmem:[%s805 + $0x33c] sm:$0xff] %v1220
                  %v1222 = vld [vmem:[%s804 + $0xd00] sm:$0xff]
                  %1223 = vst [vmem:[%s805 + $0x340] sm:$0xff] %v1222
                  %v1224 = vld [vmem:[%s804 + $0xd10] sm:$0xff]
                  %1225 = vst [vmem:[%s805 + $0x344] sm:$0xff] %v1224
                  %v1226 = vld [vmem:[%s804 + $0xd20] sm:$0xff]
                  %1227 = vst [vmem:[%s805 + $0x348] sm:$0xff] %v1226
                  %v1228 = vld [vmem:[%s804 + $0xd30] sm:$0xff]
                  %1229 = vst [vmem:[%s805 + $0x34c] sm:$0xff] %v1228
                  %v1230 = vld [vmem:[%s804 + $0xd40] sm:$0xff]
                  %1231 = vst [vmem:[%s805 + $0x350] sm:$0xff] %v1230
                  %v1232 = vld [vmem:[%s804 + $0xd50] sm:$0xff]
                  %1233 = vst [vmem:[%s805 + $0x354] sm:$0xff] %v1232
                  %v1234 = vld [vmem:[%s804 + $0xd60] sm:$0xff]
                  %1235 = vst [vmem:[%s805 + $0x358] sm:$0xff] %v1234
                  %v1236 = vld [vmem:[%s804 + $0xd70] sm:$0xff]
                  %1237 = vst [vmem:[%s805 + $0x35c] sm:$0xff] %v1236
                  %v1238 = vld [vmem:[%s804 + $0xd80] sm:$0xff]
                  %1239 = vst [vmem:[%s805 + $0x360] sm:$0xff] %v1238
                  %v1240 = vld [vmem:[%s804 + $0xd90] sm:$0xff]
                  %1241 = vst [vmem:[%s805 + $0x364] sm:$0xff] %v1240
                  %v1242 = vld [vmem:[%s804 + $0xda0] sm:$0xff]
                  %1243 = vst [vmem:[%s805 + $0x368] sm:$0xff] %v1242
                  %v1244 = vld [vmem:[%s804 + $0xdb0] sm:$0xff]
                  %1245 = vst [vmem:[%s805 + $0x36c] sm:$0xff] %v1244
                  %v1246 = vld [vmem:[%s804 + $0xdc0] sm:$0xff]
                  %1247 = vst [vmem:[%s805 + $0x370] sm:$0xff] %v1246
                  %v1248 = vld [vmem:[%s804 + $0xdd0] sm:$0xff]
                  %1249 = vst [vmem:[%s805 + $0x374] sm:$0xff] %v1248
                  %v1250 = vld [vmem:[%s804 + $0xde0] sm:$0xff]
                  %1251 = vst [vmem:[%s805 + $0x378] sm:$0xff] %v1250
                  %v1252 = vld [vmem:[%s804 + $0xdf0] sm:$0xff]
                  %1253 = vst [vmem:[%s805 + $0x37c] sm:$0xff] %v1252
                  %v1254 = vld [vmem:[%s804 + $0xe00] sm:$0xff]
                  %1255 = vst [vmem:[%s805 + $0x380] sm:$0xff] %v1254
                  %v1256 = vld [vmem:[%s804 + $0xe10] sm:$0xff]
                  %1257 = vst [vmem:[%s805 + $0x384] sm:$0xff] %v1256
                  %v1258 = vld [vmem:[%s804 + $0xe20] sm:$0xff]
                  %1259 = vst [vmem:[%s805 + $0x388] sm:$0xff] %v1258
                  %v1260 = vld [vmem:[%s804 + $0xe30] sm:$0xff]
                  %1261 = vst [vmem:[%s805 + $0x38c] sm:$0xff] %v1260
                  %v1262 = vld [vmem:[%s804 + $0xe40] sm:$0xff]
                  %1263 = vst [vmem:[%s805 + $0x390] sm:$0xff] %v1262
                  %v1264 = vld [vmem:[%s804 + $0xe50] sm:$0xff]
                  %1265 = vst [vmem:[%s805 + $0x394] sm:$0xff] %v1264
                  %v1266 = vld [vmem:[%s804 + $0xe60] sm:$0xff]
                  %1267 = vst [vmem:[%s805 + $0x398] sm:$0xff] %v1266
                  %v1268 = vld [vmem:[%s804 + $0xe70] sm:$0xff]
                  %1269 = vst [vmem:[%s805 + $0x39c] sm:$0xff] %v1268
                  %v1270 = vld [vmem:[%s804 + $0xe80] sm:$0xff]
                  %1271 = vst [vmem:[%s805 + $0x3a0] sm:$0xff] %v1270
                  %v1272 = vld [vmem:[%s804 + $0xe90] sm:$0xff]
                  %1273 = vst [vmem:[%s805 + $0x3a4] sm:$0xff] %v1272
                  %v1274 = vld [vmem:[%s804 + $0xea0] sm:$0xff]
                  %1275 = vst [vmem:[%s805 + $0x3a8] sm:$0xff] %v1274
                  %v1276 = vld [vmem:[%s804 + $0xeb0] sm:$0xff]
                  %1277 = vst [vmem:[%s805 + $0x3ac] sm:$0xff] %v1276
                  %v1278 = vld [vmem:[%s804 + $0xec0] sm:$0xff]
                  %1279 = vst [vmem:[%s805 + $0x3b0] sm:$0xff] %v1278
                  %v1280 = vld [vmem:[%s804 + $0xed0] sm:$0xff]
                  %1281 = vst [vmem:[%s805 + $0x3b4] sm:$0xff] %v1280
                  %v1282 = vld [vmem:[%s804 + $0xee0] sm:$0xff]
                  %1283 = vst [vmem:[%s805 + $0x3b8] sm:$0xff] %v1282
                  %v1284 = vld [vmem:[%s804 + $0xef0] sm:$0xff]
                  %1285 = vst [vmem:[%s805 + $0x3bc] sm:$0xff] %v1284
                  %v1286 = vld [vmem:[%s804 + $0xf00] sm:$0xff]
                  %1287 = vst [vmem:[%s805 + $0x3c0] sm:$0xff] %v1286
                  %v1288 = vld [vmem:[%s804 + $0xf10] sm:$0xff]
                  %1289 = vst [vmem:[%s805 + $0x3c4] sm:$0xff] %v1288
                  %v1290 = vld [vmem:[%s804 + $0xf20] sm:$0xff]
                  %1291 = vst [vmem:[%s805 + $0x3c8] sm:$0xff] %v1290
                  %v1292 = vld [vmem:[%s804 + $0xf30] sm:$0xff]
                  %1293 = vst [vmem:[%s805 + $0x3cc] sm:$0xff] %v1292
                  %v1294 = vld [vmem:[%s804 + $0xf40] sm:$0xff]
                  %1295 = vst [vmem:[%s805 + $0x3d0] sm:$0xff] %v1294
                  %v1296 = vld [vmem:[%s804 + $0xf50] sm:$0xff]
                  %1297 = vst [vmem:[%s805 + $0x3d4] sm:$0xff] %v1296
                  %v1298 = vld [vmem:[%s804 + $0xf60] sm:$0xff]
                  %1299 = vst [vmem:[%s805 + $0x3d8] sm:$0xff] %v1298
                  %v1300 = vld [vmem:[%s804 + $0xf70] sm:$0xff]
                  %1301 = vst [vmem:[%s805 + $0x3dc] sm:$0xff] %v1300
                  %v1302 = vld [vmem:[%s804 + $0xf80] sm:$0xff]
                  %1303 = vst [vmem:[%s805 + $0x3e0] sm:$0xff] %v1302
                  %v1304 = vld [vmem:[%s804 + $0xf90] sm:$0xff]
                  %1305 = vst [vmem:[%s805 + $0x3e4] sm:$0xff] %v1304
                  %v1306 = vld [vmem:[%s804 + $0xfa0] sm:$0xff]
                  %1307 = vst [vmem:[%s805 + $0x3e8] sm:$0xff] %v1306
                  %v1308 = vld [vmem:[%s804 + $0xfb0] sm:$0xff]
                  %1309 = vst [vmem:[%s805 + $0x3ec] sm:$0xff] %v1308
                  %v1310 = vld [vmem:[%s804 + $0xfc0] sm:$0xff]
                  %1311 = vst [vmem:[%s805 + $0x3f0] sm:$0xff] %v1310
                  %v1312 = vld [vmem:[%s804 + $0xfd0] sm:$0xff]
                  %1313 = vst [vmem:[%s805 + $0x3f4] sm:$0xff] %v1312
                  %v1314 = vld [vmem:[%s804 + $0xfe0] sm:$0xff]
                  %1315 = vst [vmem:[%s805 + $0x3f8] sm:$0xff] %v1314
                  %v1316 = vld [vmem:[%s804 + $0xff0] sm:$0xff]
                  %1317 = vst [vmem:[%s805 + $0x3fc] sm:$0xff] %v1316
                  %v1318 = vld [vmem:[%s804 + $0x1000] sm:$0xff]
                  %1319 = vst [vmem:[%s805 + $0x400] sm:$0xff] %v1318
                  %v1320 = vld [vmem:[%s804 + $0x1010] sm:$0xff]
                  %1321 = vst [vmem:[%s805 + $0x404] sm:$0xff] %v1320
                  %v1322 = vld [vmem:[%s804 + $0x1020] sm:$0xff]
                  %1323 = vst [vmem:[%s805 + $0x408] sm:$0xff] %v1322
                  %v1324 = vld [vmem:[%s804 + $0x1030] sm:$0xff]
                  %1325 = vst [vmem:[%s805 + $0x40c] sm:$0xff] %v1324
                  %v1326 = vld [vmem:[%s804 + $0x1040] sm:$0xff]
                  %1327 = vst [vmem:[%s805 + $0x410] sm:$0xff] %v1326
                  %v1328 = vld [vmem:[%s804 + $0x1050] sm:$0xff]
                  %1329 = vst [vmem:[%s805 + $0x414] sm:$0xff] %v1328
                  %v1330 = vld [vmem:[%s804 + $0x1060] sm:$0xff]
                  %1331 = vst [vmem:[%s805 + $0x418] sm:$0xff] %v1330
                  %v1332 = vld [vmem:[%s804 + $0x1070] sm:$0xff]
                  %1333 = vst [vmem:[%s805 + $0x41c] sm:$0xff] %v1332
                  %v1334 = vld [vmem:[%s804 + $0x1080] sm:$0xff]
                  %1335 = vst [vmem:[%s805 + $0x420] sm:$0xff] %v1334
                  %v1336 = vld [vmem:[%s804 + $0x1090] sm:$0xff]
                  %1337 = vst [vmem:[%s805 + $0x424] sm:$0xff] %v1336
                  %v1338 = vld [vmem:[%s804 + $0x10a0] sm:$0xff]
                  %1339 = vst [vmem:[%s805 + $0x428] sm:$0xff] %v1338
                  %v1340 = vld [vmem:[%s804 + $0x10b0] sm:$0xff]
                  %1341 = vst [vmem:[%s805 + $0x42c] sm:$0xff] %v1340
                  %v1342 = vld [vmem:[%s804 + $0x10c0] sm:$0xff]
                  %1343 = vst [vmem:[%s805 + $0x430] sm:$0xff] %v1342
                  %v1344 = vld [vmem:[%s804 + $0x10d0] sm:$0xff]
                  %1345 = vst [vmem:[%s805 + $0x434] sm:$0xff] %v1344
                  %v1346 = vld [vmem:[%s804 + $0x10e0] sm:$0xff]
                  %1347 = vst [vmem:[%s805 + $0x438] sm:$0xff] %v1346
                  %v1348 = vld [vmem:[%s804 + $0x10f0] sm:$0xff]
                  %1349 = vst [vmem:[%s805 + $0x43c] sm:$0xff] %v1348
                  %v1350 = vld [vmem:[%s804 + $0x1100] sm:$0xff]
                  %1351 = vst [vmem:[%s805 + $0x440] sm:$0xff] %v1350
                  %v1352 = vld [vmem:[%s804 + $0x1110] sm:$0xff]
                  %1353 = vst [vmem:[%s805 + $0x444] sm:$0xff] %v1352
                  %v1354 = vld [vmem:[%s804 + $0x1120] sm:$0xff]
                  %1355 = vst [vmem:[%s805 + $0x448] sm:$0xff] %v1354
                  %v1356 = vld [vmem:[%s804 + $0x1130] sm:$0xff]
                  %1357 = vst [vmem:[%s805 + $0x44c] sm:$0xff] %v1356
                  %v1358 = vld [vmem:[%s804 + $0x1140] sm:$0xff]
                  %1359 = vst [vmem:[%s805 + $0x450] sm:$0xff] %v1358
                  %v1360 = vld [vmem:[%s804 + $0x1150] sm:$0xff]
                  %1361 = vst [vmem:[%s805 + $0x454] sm:$0xff] %v1360
                  %v1362 = vld [vmem:[%s804 + $0x1160] sm:$0xff]
                  %1363 = vst [vmem:[%s805 + $0x458] sm:$0xff] %v1362
                  %v1364 = vld [vmem:[%s804 + $0x1170] sm:$0xff]
                  %1365 = vst [vmem:[%s805 + $0x45c] sm:$0xff] %v1364
                  %v1366 = vld [vmem:[%s804 + $0x1180] sm:$0xff]
                  %1367 = vst [vmem:[%s805 + $0x460] sm:$0xff] %v1366
                  %v1368 = vld [vmem:[%s804 + $0x1190] sm:$0xff]
                  %1369 = vst [vmem:[%s805 + $0x464] sm:$0xff] %v1368
                  %v1370 = vld [vmem:[%s804 + $0x11a0] sm:$0xff]
                  %1371 = vst [vmem:[%s805 + $0x468] sm:$0xff] %v1370
                  %v1372 = vld [vmem:[%s804 + $0x11b0] sm:$0xff]
                  %1373 = vst [vmem:[%s805 + $0x46c] sm:$0xff] %v1372
                  %v1374 = vld [vmem:[%s804 + $0x11c0] sm:$0xff]
                  %1375 = vst [vmem:[%s805 + $0x470] sm:$0xff] %v1374
                  %v1376 = vld [vmem:[%s804 + $0x11d0] sm:$0xff]
                  %1377 = vst [vmem:[%s805 + $0x474] sm:$0xff] %v1376
                  %v1378 = vld [vmem:[%s804 + $0x11e0] sm:$0xff]
                  %1379 = vst [vmem:[%s805 + $0x478] sm:$0xff] %v1378
                  %v1380 = vld [vmem:[%s804 + $0x11f0] sm:$0xff]
                  %1381 = vst [vmem:[%s805 + $0x47c] sm:$0xff] %v1380
                  %v1382 = vld [vmem:[%s804 + $0x1200] sm:$0xff]
                  %1383 = vst [vmem:[%s805 + $0x480] sm:$0xff] %v1382
                  %v1384 = vld [vmem:[%s804 + $0x1210] sm:$0xff]
                  %1385 = vst [vmem:[%s805 + $0x484] sm:$0xff] %v1384
                  %v1386 = vld [vmem:[%s804 + $0x1220] sm:$0xff]
                  %1387 = vst [vmem:[%s805 + $0x488] sm:$0xff] %v1386
                  %v1388 = vld [vmem:[%s804 + $0x1230] sm:$0xff]
                  %1389 = vst [vmem:[%s805 + $0x48c] sm:$0xff] %v1388
                  %v1390 = vld [vmem:[%s804 + $0x1240] sm:$0xff]
                  %1391 = vst [vmem:[%s805 + $0x490] sm:$0xff] %v1390
                  %v1392 = vld [vmem:[%s804 + $0x1250] sm:$0xff]
                  %1393 = vst [vmem:[%s805 + $0x494] sm:$0xff] %v1392
                  %v1394 = vld [vmem:[%s804 + $0x1260] sm:$0xff]
                  %1395 = vst [vmem:[%s805 + $0x498] sm:$0xff] %v1394
                  %v1396 = vld [vmem:[%s804 + $0x1270] sm:$0xff]
                  %1397 = vst [vmem:[%s805 + $0x49c] sm:$0xff] %v1396
                  %v1398 = vld [vmem:[%s804 + $0x1280] sm:$0xff]
                  %1399 = vst [vmem:[%s805 + $0x4a0] sm:$0xff] %v1398
                  %v1400 = vld [vmem:[%s804 + $0x1290] sm:$0xff]
                  %1401 = vst [vmem:[%s805 + $0x4a4] sm:$0xff] %v1400
                  %v1402 = vld [vmem:[%s804 + $0x12a0] sm:$0xff]
                  %1403 = vst [vmem:[%s805 + $0x4a8] sm:$0xff] %v1402
                  %v1404 = vld [vmem:[%s804 + $0x12b0] sm:$0xff]
                  %1405 = vst [vmem:[%s805 + $0x4ac] sm:$0xff] %v1404
                  %v1406 = vld [vmem:[%s804 + $0x12c0] sm:$0xff]
                  %1407 = vst [vmem:[%s805 + $0x4b0] sm:$0xff] %v1406
                  %v1408 = vld [vmem:[%s804 + $0x12d0] sm:$0xff]
                  %1409 = vst [vmem:[%s805 + $0x4b4] sm:$0xff] %v1408
                  %v1410 = vld [vmem:[%s804 + $0x12e0] sm:$0xff]
                  %1411 = vst [vmem:[%s805 + $0x4b8] sm:$0xff] %v1410
                  %v1412 = vld [vmem:[%s804 + $0x12f0] sm:$0xff]
                  %1413 = vst [vmem:[%s805 + $0x4bc] sm:$0xff] %v1412
                  %v1414 = vld [vmem:[%s804 + $0x1300] sm:$0xff]
                  %1415 = vst [vmem:[%s805 + $0x4c0] sm:$0xff] %v1414
                  %v1416 = vld [vmem:[%s804 + $0x1310] sm:$0xff]
                  %1417 = vst [vmem:[%s805 + $0x4c4] sm:$0xff] %v1416
                  %v1418 = vld [vmem:[%s804 + $0x1320] sm:$0xff]
                  %1419 = vst [vmem:[%s805 + $0x4c8] sm:$0xff] %v1418
                  %v1420 = vld [vmem:[%s804 + $0x1330] sm:$0xff]
                  %1421 = vst [vmem:[%s805 + $0x4cc] sm:$0xff] %v1420
                  %v1422 = vld [vmem:[%s804 + $0x1340] sm:$0xff]
                  %1423 = vst [vmem:[%s805 + $0x4d0] sm:$0xff] %v1422
                  %v1424 = vld [vmem:[%s804 + $0x1350] sm:$0xff]
                  %1425 = vst [vmem:[%s805 + $0x4d4] sm:$0xff] %v1424
                  %v1426 = vld [vmem:[%s804 + $0x1360] sm:$0xff]
                  %1427 = vst [vmem:[%s805 + $0x4d8] sm:$0xff] %v1426
                  %v1428 = vld [vmem:[%s804 + $0x1370] sm:$0xff]
                  %1429 = vst [vmem:[%s805 + $0x4dc] sm:$0xff] %v1428
                  %v1430 = vld [vmem:[%s804 + $0x1380] sm:$0xff]
                  %1431 = vst [vmem:[%s805 + $0x4e0] sm:$0xff] %v1430
                  %v1432 = vld [vmem:[%s804 + $0x1390] sm:$0xff]
                  %1433 = vst [vmem:[%s805 + $0x4e4] sm:$0xff] %v1432
                  %v1434 = vld [vmem:[%s804 + $0x13a0] sm:$0xff]
                  %1435 = vst [vmem:[%s805 + $0x4e8] sm:$0xff] %v1434
                  %v1436 = vld [vmem:[%s804 + $0x13b0] sm:$0xff]
                  %1437 = vst [vmem:[%s805 + $0x4ec] sm:$0xff] %v1436
                  %v1438 = vld [vmem:[%s804 + $0x13c0] sm:$0xff]
                  %1439 = vst [vmem:[%s805 + $0x4f0] sm:$0xff] %v1438
                  %v1440 = vld [vmem:[%s804 + $0x13d0] sm:$0xff]
                  %1441 = vst [vmem:[%s805 + $0x4f4] sm:$0xff] %v1440
                  %v1442 = vld [vmem:[%s804 + $0x13e0] sm:$0xff]
                  %1443 = vst [vmem:[%s805 + $0x4f8] sm:$0xff] %v1442
                  %v1444 = vld [vmem:[%s804 + $0x13f0] sm:$0xff]
                  %1445 = vst [vmem:[%s805 + $0x4fc] sm:$0xff] %v1444
                  %s1446 = sadd.s32 1, %s803
                  %p1447 = scmp.ge.s32.totalorder %s1446, 0
                  %s1448 = scalar_select %p1447, 0, %s1446
                  %s1449 = smul.u32 %s1448, 8
                  %s1450 = smul.u32 %s1448, 8
                  %s1451 = scalar_lea.vmem %s138, %s1449
                  %s1452 = scalar_lea.vmem %s136, %s1450 [#allocation2]
                $region52: #{encoder_fwd.8} parent=46 // loop_footer
                  %s802 = sadd.s32 1, %s798
                $region53: #{encoder_fwd.8} parent=46 // loop_footer_branch
                  %797 = sbr.rel target = $region49
                $region54: #{encoder_fwd.8} parent=46 // loop_exit
                  _
              $region47: #{encoder_fwd.8} parent=31 // pred_fallthru
                _
              // Predicated region
              $region55: #{encoder_fwd.8} parent=31 // pred_check
                _
              $region56: #{encoder_fwd.8} parent=31 // pred_check_branch
                %1454 = sbr.rel (0) target = $region58
              $region57: #{encoder_fwd.8} parent=31 // pred_region
                loop: start=0, step=1, limit=0
                $region59: #{encoder_fwd.8} parent=57 // loop_pre_header
                  _
                $region60: #{encoder_fwd.8} parent=57 // loop_header
                  %s1456 = sphi 0, %s1460
                  %p1457 = scmp.ge.s32.totalorder %s1456, 0
                  %s1461 = sphi 0, %s2106
                  %s1462 = sphi %s138, %s2109
                  %s1463 = sphi %s136, %s2110
                $region61: #{encoder_fwd.8} parent=57 // loop_header_branch
                  %1459 = sbr.rel (%p1457) target = $region65
                $region62: #{encoder_fwd.8} parent=57 // loop_body
                  %v1464 = vld [vmem:[%s1462] sm:$0xff]
                  %1465 = vst [vmem:[%s1463] sm:$0xff] %v1464
                  %v1466 = vld [vmem:[%s1462 + $0x10] sm:$0xff]
                  %1467 = vst [vmem:[%s1463 + $0x4] sm:$0xff] %v1466
                  %v1468 = vld [vmem:[%s1462 + $0x20] sm:$0xff]
                  %1469 = vst [vmem:[%s1463 + $0x8] sm:$0xff] %v1468
                  %v1470 = vld [vmem:[%s1462 + $0x30] sm:$0xff]
                  %1471 = vst [vmem:[%s1463 + $0xc] sm:$0xff] %v1470
                  %v1472 = vld [vmem:[%s1462 + $0x40] sm:$0xff]
                  %1473 = vst [vmem:[%s1463 + $0x10] sm:$0xff] %v1472
                  %v1474 = vld [vmem:[%s1462 + $0x50] sm:$0xff]
                  %1475 = vst [vmem:[%s1463 + $0x14] sm:$0xff] %v1474
                  %v1476 = vld [vmem:[%s1462 + $0x60] sm:$0xff]
                  %1477 = vst [vmem:[%s1463 + $0x18] sm:$0xff] %v1476
                  %v1478 = vld [vmem:[%s1462 + $0x70] sm:$0xff]
                  %1479 = vst [vmem:[%s1463 + $0x1c] sm:$0xff] %v1478
                  %v1480 = vld [vmem:[%s1462 + $0x80] sm:$0xff]
                  %1481 = vst [vmem:[%s1463 + $0x20] sm:$0xff] %v1480
                  %v1482 = vld [vmem:[%s1462 + $0x90] sm:$0xff]
                  %1483 = vst [vmem:[%s1463 + $0x24] sm:$0xff] %v1482
                  %v1484 = vld [vmem:[%s1462 + $0xa0] sm:$0xff]
                  %1485 = vst [vmem:[%s1463 + $0x28] sm:$0xff] %v1484
                  %v1486 = vld [vmem:[%s1462 + $0xb0] sm:$0xff]
                  %1487 = vst [vmem:[%s1463 + $0x2c] sm:$0xff] %v1486
                  %v1488 = vld [vmem:[%s1462 + $0xc0] sm:$0xff]
                  %1489 = vst [vmem:[%s1463 + $0x30] sm:$0xff] %v1488
                  %v1490 = vld [vmem:[%s1462 + $0xd0] sm:$0xff]
                  %1491 = vst [vmem:[%s1463 + $0x34] sm:$0xff] %v1490
                  %v1492 = vld [vmem:[%s1462 + $0xe0] sm:$0xff]
                  %1493 = vst [vmem:[%s1463 + $0x38] sm:$0xff] %v1492
                  %v1494 = vld [vmem:[%s1462 + $0xf0] sm:$0xff]
                  %1495 = vst [vmem:[%s1463 + $0x3c] sm:$0xff] %v1494
                  %v1496 = vld [vmem:[%s1462 + $0x100] sm:$0xff]
                  %1497 = vst [vmem:[%s1463 + $0x40] sm:$0xff] %v1496
                  %v1498 = vld [vmem:[%s1462 + $0x110] sm:$0xff]
                  %1499 = vst [vmem:[%s1463 + $0x44] sm:$0xff] %v1498
                  %v1500 = vld [vmem:[%s1462 + $0x120] sm:$0xff]
                  %1501 = vst [vmem:[%s1463 + $0x48] sm:$0xff] %v1500
                  %v1502 = vld [vmem:[%s1462 + $0x130] sm:$0xff]
                  %1503 = vst [vmem:[%s1463 + $0x4c] sm:$0xff] %v1502
                  %v1504 = vld [vmem:[%s1462 + $0x140] sm:$0xff]
                  %1505 = vst [vmem:[%s1463 + $0x50] sm:$0xff] %v1504
                  %v1506 = vld [vmem:[%s1462 + $0x150] sm:$0xff]
                  %1507 = vst [vmem:[%s1463 + $0x54] sm:$0xff] %v1506
                  %v1508 = vld [vmem:[%s1462 + $0x160] sm:$0xff]
                  %1509 = vst [vmem:[%s1463 + $0x58] sm:$0xff] %v1508
                  %v1510 = vld [vmem:[%s1462 + $0x170] sm:$0xff]
                  %1511 = vst [vmem:[%s1463 + $0x5c] sm:$0xff] %v1510
                  %v1512 = vld [vmem:[%s1462 + $0x180] sm:$0xff]
                  %1513 = vst [vmem:[%s1463 + $0x60] sm:$0xff] %v1512
                  %v1514 = vld [vmem:[%s1462 + $0x190] sm:$0xff]
                  %1515 = vst [vmem:[%s1463 + $0x64] sm:$0xff] %v1514
                  %v1516 = vld [vmem:[%s1462 + $0x1a0] sm:$0xff]
                  %1517 = vst [vmem:[%s1463 + $0x68] sm:$0xff] %v1516
                  %v1518 = vld [vmem:[%s1462 + $0x1b0] sm:$0xff]
                  %1519 = vst [vmem:[%s1463 + $0x6c] sm:$0xff] %v1518
                  %v1520 = vld [vmem:[%s1462 + $0x1c0] sm:$0xff]
                  %1521 = vst [vmem:[%s1463 + $0x70] sm:$0xff] %v1520
                  %v1522 = vld [vmem:[%s1462 + $0x1d0] sm:$0xff]
                  %1523 = vst [vmem:[%s1463 + $0x74] sm:$0xff] %v1522
                  %v1524 = vld [vmem:[%s1462 + $0x1e0] sm:$0xff]
                  %1525 = vst [vmem:[%s1463 + $0x78] sm:$0xff] %v1524
                  %v1526 = vld [vmem:[%s1462 + $0x1f0] sm:$0xff]
                  %1527 = vst [vmem:[%s1463 + $0x7c] sm:$0xff] %v1526
                  %v1528 = vld [vmem:[%s1462 + $0x200] sm:$0xff]
                  %1529 = vst [vmem:[%s1463 + $0x80] sm:$0xff] %v1528
                  %v1530 = vld [vmem:[%s1462 + $0x210] sm:$0xff]
                  %1531 = vst [vmem:[%s1463 + $0x84] sm:$0xff] %v1530
                  %v1532 = vld [vmem:[%s1462 + $0x220] sm:$0xff]
                  %1533 = vst [vmem:[%s1463 + $0x88] sm:$0xff] %v1532
                  %v1534 = vld [vmem:[%s1462 + $0x230] sm:$0xff]
                  %1535 = vst [vmem:[%s1463 + $0x8c] sm:$0xff] %v1534
                  %v1536 = vld [vmem:[%s1462 + $0x240] sm:$0xff]
                  %1537 = vst [vmem:[%s1463 + $0x90] sm:$0xff] %v1536
                  %v1538 = vld [vmem:[%s1462 + $0x250] sm:$0xff]
                  %1539 = vst [vmem:[%s1463 + $0x94] sm:$0xff] %v1538
                  %v1540 = vld [vmem:[%s1462 + $0x260] sm:$0xff]
                  %1541 = vst [vmem:[%s1463 + $0x98] sm:$0xff] %v1540
                  %v1542 = vld [vmem:[%s1462 + $0x270] sm:$0xff]
                  %1543 = vst [vmem:[%s1463 + $0x9c] sm:$0xff] %v1542
                  %v1544 = vld [vmem:[%s1462 + $0x280] sm:$0xff]
                  %1545 = vst [vmem:[%s1463 + $0xa0] sm:$0xff] %v1544
                  %v1546 = vld [vmem:[%s1462 + $0x290] sm:$0xff]
                  %1547 = vst [vmem:[%s1463 + $0xa4] sm:$0xff] %v1546
                  %v1548 = vld [vmem:[%s1462 + $0x2a0] sm:$0xff]
                  %1549 = vst [vmem:[%s1463 + $0xa8] sm:$0xff] %v1548
                  %v1550 = vld [vmem:[%s1462 + $0x2b0] sm:$0xff]
                  %1551 = vst [vmem:[%s1463 + $0xac] sm:$0xff] %v1550
                  %v1552 = vld [vmem:[%s1462 + $0x2c0] sm:$0xff]
                  %1553 = vst [vmem:[%s1463 + $0xb0] sm:$0xff] %v1552
                  %v1554 = vld [vmem:[%s1462 + $0x2d0] sm:$0xff]
                  %1555 = vst [vmem:[%s1463 + $0xb4] sm:$0xff] %v1554
                  %v1556 = vld [vmem:[%s1462 + $0x2e0] sm:$0xff]
                  %1557 = vst [vmem:[%s1463 + $0xb8] sm:$0xff] %v1556
                  %v1558 = vld [vmem:[%s1462 + $0x2f0] sm:$0xff]
                  %1559 = vst [vmem:[%s1463 + $0xbc] sm:$0xff] %v1558
                  %v1560 = vld [vmem:[%s1462 + $0x300] sm:$0xff]
                  %1561 = vst [vmem:[%s1463 + $0xc0] sm:$0xff] %v1560
                  %v1562 = vld [vmem:[%s1462 + $0x310] sm:$0xff]
                  %1563 = vst [vmem:[%s1463 + $0xc4] sm:$0xff] %v1562
                  %v1564 = vld [vmem:[%s1462 + $0x320] sm:$0xff]
                  %1565 = vst [vmem:[%s1463 + $0xc8] sm:$0xff] %v1564
                  %v1566 = vld [vmem:[%s1462 + $0x330] sm:$0xff]
                  %1567 = vst [vmem:[%s1463 + $0xcc] sm:$0xff] %v1566
                  %v1568 = vld [vmem:[%s1462 + $0x340] sm:$0xff]
                  %1569 = vst [vmem:[%s1463 + $0xd0] sm:$0xff] %v1568
                  %v1570 = vld [vmem:[%s1462 + $0x350] sm:$0xff]
                  %1571 = vst [vmem:[%s1463 + $0xd4] sm:$0xff] %v1570
                  %v1572 = vld [vmem:[%s1462 + $0x360] sm:$0xff]
                  %1573 = vst [vmem:[%s1463 + $0xd8] sm:$0xff] %v1572
                  %v1574 = vld [vmem:[%s1462 + $0x370] sm:$0xff]
                  %1575 = vst [vmem:[%s1463 + $0xdc] sm:$0xff] %v1574
                  %v1576 = vld [vmem:[%s1462 + $0x380] sm:$0xff]
                  %1577 = vst [vmem:[%s1463 + $0xe0] sm:$0xff] %v1576
                  %v1578 = vld [vmem:[%s1462 + $0x390] sm:$0xff]
                  %1579 = vst [vmem:[%s1463 + $0xe4] sm:$0xff] %v1578
                  %v1580 = vld [vmem:[%s1462 + $0x3a0] sm:$0xff]
                  %1581 = vst [vmem:[%s1463 + $0xe8] sm:$0xff] %v1580
                  %v1582 = vld [vmem:[%s1462 + $0x3b0] sm:$0xff]
                  %1583 = vst [vmem:[%s1463 + $0xec] sm:$0xff] %v1582
                  %v1584 = vld [vmem:[%s1462 + $0x3c0] sm:$0xff]
                  %1585 = vst [vmem:[%s1463 + $0xf0] sm:$0xff] %v1584
                  %v1586 = vld [vmem:[%s1462 + $0x3d0] sm:$0xff]
                  %1587 = vst [vmem:[%s1463 + $0xf4] sm:$0xff] %v1586
                  %v1588 = vld [vmem:[%s1462 + $0x3e0] sm:$0xff]
                  %1589 = vst [vmem:[%s1463 + $0xf8] sm:$0xff] %v1588
                  %v1590 = vld [vmem:[%s1462 + $0x3f0] sm:$0xff]
                  %1591 = vst [vmem:[%s1463 + $0xfc] sm:$0xff] %v1590
                  %v1592 = vld [vmem:[%s1462 + $0x400] sm:$0xff]
                  %1593 = vst [vmem:[%s1463 + $0x100] sm:$0xff] %v1592
                  %v1594 = vld [vmem:[%s1462 + $0x410] sm:$0xff]
                  %1595 = vst [vmem:[%s1463 + $0x104] sm:$0xff] %v1594
                  %v1596 = vld [vmem:[%s1462 + $0x420] sm:$0xff]
                  %1597 = vst [vmem:[%s1463 + $0x108] sm:$0xff] %v1596
                  %v1598 = vld [vmem:[%s1462 + $0x430] sm:$0xff]
                  %1599 = vst [vmem:[%s1463 + $0x10c] sm:$0xff] %v1598
                  %v1600 = vld [vmem:[%s1462 + $0x440] sm:$0xff]
                  %1601 = vst [vmem:[%s1463 + $0x110] sm:$0xff] %v1600
                  %v1602 = vld [vmem:[%s1462 + $0x450] sm:$0xff]
                  %1603 = vst [vmem:[%s1463 + $0x114] sm:$0xff] %v1602
                  %v1604 = vld [vmem:[%s1462 + $0x460] sm:$0xff]
                  %1605 = vst [vmem:[%s1463 + $0x118] sm:$0xff] %v1604
                  %v1606 = vld [vmem:[%s1462 + $0x470] sm:$0xff]
                  %1607 = vst [vmem:[%s1463 + $0x11c] sm:$0xff] %v1606
                  %v1608 = vld [vmem:[%s1462 + $0x480] sm:$0xff]
                  %1609 = vst [vmem:[%s1463 + $0x120] sm:$0xff] %v1608
                  %v1610 = vld [vmem:[%s1462 + $0x490] sm:$0xff]
                  %1611 = vst [vmem:[%s1463 + $0x124] sm:$0xff] %v1610
                  %v1612 = vld [vmem:[%s1462 + $0x4a0] sm:$0xff]
                  %1613 = vst [vmem:[%s1463 + $0x128] sm:$0xff] %v1612
                  %v1614 = vld [vmem:[%s1462 + $0x4b0] sm:$0xff]
                  %1615 = vst [vmem:[%s1463 + $0x12c] sm:$0xff] %v1614
                  %v1616 = vld [vmem:[%s1462 + $0x4c0] sm:$0xff]
                  %1617 = vst [vmem:[%s1463 + $0x130] sm:$0xff] %v1616
                  %v1618 = vld [vmem:[%s1462 + $0x4d0] sm:$0xff]
                  %1619 = vst [vmem:[%s1463 + $0x134] sm:$0xff] %v1618
                  %v1620 = vld [vmem:[%s1462 + $0x4e0] sm:$0xff]
                  %1621 = vst [vmem:[%s1463 + $0x138] sm:$0xff] %v1620
                  %v1622 = vld [vmem:[%s1462 + $0x4f0] sm:$0xff]
                  %1623 = vst [vmem:[%s1463 + $0x13c] sm:$0xff] %v1622
                  %v1624 = vld [vmem:[%s1462 + $0x500] sm:$0xff]
                  %1625 = vst [vmem:[%s1463 + $0x140] sm:$0xff] %v1624
                  %v1626 = vld [vmem:[%s1462 + $0x510] sm:$0xff]
                  %1627 = vst [vmem:[%s1463 + $0x144] sm:$0xff] %v1626
                  %v1628 = vld [vmem:[%s1462 + $0x520] sm:$0xff]
                  %1629 = vst [vmem:[%s1463 + $0x148] sm:$0xff] %v1628
                  %v1630 = vld [vmem:[%s1462 + $0x530] sm:$0xff]
                  %1631 = vst [vmem:[%s1463 + $0x14c] sm:$0xff] %v1630
                  %v1632 = vld [vmem:[%s1462 + $0x540] sm:$0xff]
                  %1633 = vst [vmem:[%s1463 + $0x150] sm:$0xff] %v1632
                  %v1634 = vld [vmem:[%s1462 + $0x550] sm:$0xff]
                  %1635 = vst [vmem:[%s1463 + $0x154] sm:$0xff] %v1634
                  %v1636 = vld [vmem:[%s1462 + $0x560] sm:$0xff]
                  %1637 = vst [vmem:[%s1463 + $0x158] sm:$0xff] %v1636
                  %v1638 = vld [vmem:[%s1462 + $0x570] sm:$0xff]
                  %1639 = vst [vmem:[%s1463 + $0x15c] sm:$0xff] %v1638
                  %v1640 = vld [vmem:[%s1462 + $0x580] sm:$0xff]
                  %1641 = vst [vmem:[%s1463 + $0x160] sm:$0xff] %v1640
                  %v1642 = vld [vmem:[%s1462 + $0x590] sm:$0xff]
                  %1643 = vst [vmem:[%s1463 + $0x164] sm:$0xff] %v1642
                  %v1644 = vld [vmem:[%s1462 + $0x5a0] sm:$0xff]
                  %1645 = vst [vmem:[%s1463 + $0x168] sm:$0xff] %v1644
                  %v1646 = vld [vmem:[%s1462 + $0x5b0] sm:$0xff]
                  %1647 = vst [vmem:[%s1463 + $0x16c] sm:$0xff] %v1646
                  %v1648 = vld [vmem:[%s1462 + $0x5c0] sm:$0xff]
                  %1649 = vst [vmem:[%s1463 + $0x170] sm:$0xff] %v1648
                  %v1650 = vld [vmem:[%s1462 + $0x5d0] sm:$0xff]
                  %1651 = vst [vmem:[%s1463 + $0x174] sm:$0xff] %v1650
                  %v1652 = vld [vmem:[%s1462 + $0x5e0] sm:$0xff]
                  %1653 = vst [vmem:[%s1463 + $0x178] sm:$0xff] %v1652
                  %v1654 = vld [vmem:[%s1462 + $0x5f0] sm:$0xff]
                  %1655 = vst [vmem:[%s1463 + $0x17c] sm:$0xff] %v1654
                  %v1656 = vld [vmem:[%s1462 + $0x600] sm:$0xff]
                  %1657 = vst [vmem:[%s1463 + $0x180] sm:$0xff] %v1656
                  %v1658 = vld [vmem:[%s1462 + $0x610] sm:$0xff]
                  %1659 = vst [vmem:[%s1463 + $0x184] sm:$0xff] %v1658
                  %v1660 = vld [vmem:[%s1462 + $0x620] sm:$0xff]
                  %1661 = vst [vmem:[%s1463 + $0x188] sm:$0xff] %v1660
                  %v1662 = vld [vmem:[%s1462 + $0x630] sm:$0xff]
                  %1663 = vst [vmem:[%s1463 + $0x18c] sm:$0xff] %v1662
                  %v1664 = vld [vmem:[%s1462 + $0x640] sm:$0xff]
                  %1665 = vst [vmem:[%s1463 + $0x190] sm:$0xff] %v1664
                  %v1666 = vld [vmem:[%s1462 + $0x650] sm:$0xff]
                  %1667 = vst [vmem:[%s1463 + $0x194] sm:$0xff] %v1666
                  %v1668 = vld [vmem:[%s1462 + $0x660] sm:$0xff]
                  %1669 = vst [vmem:[%s1463 + $0x198] sm:$0xff] %v1668
                  %v1670 = vld [vmem:[%s1462 + $0x670] sm:$0xff]
                  %1671 = vst [vmem:[%s1463 + $0x19c] sm:$0xff] %v1670
                  %v1672 = vld [vmem:[%s1462 + $0x680] sm:$0xff]
                  %1673 = vst [vmem:[%s1463 + $0x1a0] sm:$0xff] %v1672
                  %v1674 = vld [vmem:[%s1462 + $0x690] sm:$0xff]
                  %1675 = vst [vmem:[%s1463 + $0x1a4] sm:$0xff] %v1674
                  %v1676 = vld [vmem:[%s1462 + $0x6a0] sm:$0xff]
                  %1677 = vst [vmem:[%s1463 + $0x1a8] sm:$0xff] %v1676
                  %v1678 = vld [vmem:[%s1462 + $0x6b0] sm:$0xff]
                  %1679 = vst [vmem:[%s1463 + $0x1ac] sm:$0xff] %v1678
                  %v1680 = vld [vmem:[%s1462 + $0x6c0] sm:$0xff]
                  %1681 = vst [vmem:[%s1463 + $0x1b0] sm:$0xff] %v1680
                  %v1682 = vld [vmem:[%s1462 + $0x6d0] sm:$0xff]
                  %1683 = vst [vmem:[%s1463 + $0x1b4] sm:$0xff] %v1682
                  %v1684 = vld [vmem:[%s1462 + $0x6e0] sm:$0xff]
                  %1685 = vst [vmem:[%s1463 + $0x1b8] sm:$0xff] %v1684
                  %v1686 = vld [vmem:[%s1462 + $0x6f0] sm:$0xff]
                  %1687 = vst [vmem:[%s1463 + $0x1bc] sm:$0xff] %v1686
                  %v1688 = vld [vmem:[%s1462 + $0x700] sm:$0xff]
                  %1689 = vst [vmem:[%s1463 + $0x1c0] sm:$0xff] %v1688
                  %v1690 = vld [vmem:[%s1462 + $0x710] sm:$0xff]
                  %1691 = vst [vmem:[%s1463 + $0x1c4] sm:$0xff] %v1690
                  %v1692 = vld [vmem:[%s1462 + $0x720] sm:$0xff]
                  %1693 = vst [vmem:[%s1463 + $0x1c8] sm:$0xff] %v1692
                  %v1694 = vld [vmem:[%s1462 + $0x730] sm:$0xff]
                  %1695 = vst [vmem:[%s1463 + $0x1cc] sm:$0xff] %v1694
                  %v1696 = vld [vmem:[%s1462 + $0x740] sm:$0xff]
                  %1697 = vst [vmem:[%s1463 + $0x1d0] sm:$0xff] %v1696
                  %v1698 = vld [vmem:[%s1462 + $0x750] sm:$0xff]
                  %1699 = vst [vmem:[%s1463 + $0x1d4] sm:$0xff] %v1698
                  %v1700 = vld [vmem:[%s1462 + $0x760] sm:$0xff]
                  %1701 = vst [vmem:[%s1463 + $0x1d8] sm:$0xff] %v1700
                  %v1702 = vld [vmem:[%s1462 + $0x770] sm:$0xff]
                  %1703 = vst [vmem:[%s1463 + $0x1dc] sm:$0xff] %v1702
                  %v1704 = vld [vmem:[%s1462 + $0x780] sm:$0xff]
                  %1705 = vst [vmem:[%s1463 + $0x1e0] sm:$0xff] %v1704
                  %v1706 = vld [vmem:[%s1462 + $0x790] sm:$0xff]
                  %1707 = vst [vmem:[%s1463 + $0x1e4] sm:$0xff] %v1706
                  %v1708 = vld [vmem:[%s1462 + $0x7a0] sm:$0xff]
                  %1709 = vst [vmem:[%s1463 + $0x1e8] sm:$0xff] %v1708
                  %v1710 = vld [vmem:[%s1462 + $0x7b0] sm:$0xff]
                  %1711 = vst [vmem:[%s1463 + $0x1ec] sm:$0xff] %v1710
                  %v1712 = vld [vmem:[%s1462 + $0x7c0] sm:$0xff]
                  %1713 = vst [vmem:[%s1463 + $0x1f0] sm:$0xff] %v1712
                  %v1714 = vld [vmem:[%s1462 + $0x7d0] sm:$0xff]
                  %1715 = vst [vmem:[%s1463 + $0x1f4] sm:$0xff] %v1714
                  %v1716 = vld [vmem:[%s1462 + $0x7e0] sm:$0xff]
                  %1717 = vst [vmem:[%s1463 + $0x1f8] sm:$0xff] %v1716
                  %v1718 = vld [vmem:[%s1462 + $0x7f0] sm:$0xff]
                  %1719 = vst [vmem:[%s1463 + $0x1fc] sm:$0xff] %v1718
                  %v1720 = vld [vmem:[%s1462 + $0x800] sm:$0xff]
                  %1721 = vst [vmem:[%s1463 + $0x200] sm:$0xff] %v1720
                  %v1722 = vld [vmem:[%s1462 + $0x810] sm:$0xff]
                  %1723 = vst [vmem:[%s1463 + $0x204] sm:$0xff] %v1722
                  %v1724 = vld [vmem:[%s1462 + $0x820] sm:$0xff]
                  %1725 = vst [vmem:[%s1463 + $0x208] sm:$0xff] %v1724
                  %v1726 = vld [vmem:[%s1462 + $0x830] sm:$0xff]
                  %1727 = vst [vmem:[%s1463 + $0x20c] sm:$0xff] %v1726
                  %v1728 = vld [vmem:[%s1462 + $0x840] sm:$0xff]
                  %1729 = vst [vmem:[%s1463 + $0x210] sm:$0xff] %v1728
                  %v1730 = vld [vmem:[%s1462 + $0x850] sm:$0xff]
                  %1731 = vst [vmem:[%s1463 + $0x214] sm:$0xff] %v1730
                  %v1732 = vld [vmem:[%s1462 + $0x860] sm:$0xff]
                  %1733 = vst [vmem:[%s1463 + $0x218] sm:$0xff] %v1732
                  %v1734 = vld [vmem:[%s1462 + $0x870] sm:$0xff]
                  %1735 = vst [vmem:[%s1463 + $0x21c] sm:$0xff] %v1734
                  %v1736 = vld [vmem:[%s1462 + $0x880] sm:$0xff]
                  %1737 = vst [vmem:[%s1463 + $0x220] sm:$0xff] %v1736
                  %v1738 = vld [vmem:[%s1462 + $0x890] sm:$0xff]
                  %1739 = vst [vmem:[%s1463 + $0x224] sm:$0xff] %v1738
                  %v1740 = vld [vmem:[%s1462 + $0x8a0] sm:$0xff]
                  %1741 = vst [vmem:[%s1463 + $0x228] sm:$0xff] %v1740
                  %v1742 = vld [vmem:[%s1462 + $0x8b0] sm:$0xff]
                  %1743 = vst [vmem:[%s1463 + $0x22c] sm:$0xff] %v1742
                  %v1744 = vld [vmem:[%s1462 + $0x8c0] sm:$0xff]
                  %1745 = vst [vmem:[%s1463 + $0x230] sm:$0xff] %v1744
                  %v1746 = vld [vmem:[%s1462 + $0x8d0] sm:$0xff]
                  %1747 = vst [vmem:[%s1463 + $0x234] sm:$0xff] %v1746
                  %v1748 = vld [vmem:[%s1462 + $0x8e0] sm:$0xff]
                  %1749 = vst [vmem:[%s1463 + $0x238] sm:$0xff] %v1748
                  %v1750 = vld [vmem:[%s1462 + $0x8f0] sm:$0xff]
                  %1751 = vst [vmem:[%s1463 + $0x23c] sm:$0xff] %v1750
                  %v1752 = vld [vmem:[%s1462 + $0x900] sm:$0xff]
                  %1753 = vst [vmem:[%s1463 + $0x240] sm:$0xff] %v1752
                  %v1754 = vld [vmem:[%s1462 + $0x910] sm:$0xff]
                  %1755 = vst [vmem:[%s1463 + $0x244] sm:$0xff] %v1754
                  %v1756 = vld [vmem:[%s1462 + $0x920] sm:$0xff]
                  %1757 = vst [vmem:[%s1463 + $0x248] sm:$0xff] %v1756
                  %v1758 = vld [vmem:[%s1462 + $0x930] sm:$0xff]
                  %1759 = vst [vmem:[%s1463 + $0x24c] sm:$0xff] %v1758
                  %v1760 = vld [vmem:[%s1462 + $0x940] sm:$0xff]
                  %1761 = vst [vmem:[%s1463 + $0x250] sm:$0xff] %v1760
                  %v1762 = vld [vmem:[%s1462 + $0x950] sm:$0xff]
                  %1763 = vst [vmem:[%s1463 + $0x254] sm:$0xff] %v1762
                  %v1764 = vld [vmem:[%s1462 + $0x960] sm:$0xff]
                  %1765 = vst [vmem:[%s1463 + $0x258] sm:$0xff] %v1764
                  %v1766 = vld [vmem:[%s1462 + $0x970] sm:$0xff]
                  %1767 = vst [vmem:[%s1463 + $0x25c] sm:$0xff] %v1766
                  %v1768 = vld [vmem:[%s1462 + $0x980] sm:$0xff]
                  %1769 = vst [vmem:[%s1463 + $0x260] sm:$0xff] %v1768
                  %v1770 = vld [vmem:[%s1462 + $0x990] sm:$0xff]
                  %1771 = vst [vmem:[%s1463 + $0x264] sm:$0xff] %v1770
                  %v1772 = vld [vmem:[%s1462 + $0x9a0] sm:$0xff]
                  %1773 = vst [vmem:[%s1463 + $0x268] sm:$0xff] %v1772
                  %v1774 = vld [vmem:[%s1462 + $0x9b0] sm:$0xff]
                  %1775 = vst [vmem:[%s1463 + $0x26c] sm:$0xff] %v1774
                  %v1776 = vld [vmem:[%s1462 + $0x9c0] sm:$0xff]
                  %1777 = vst [vmem:[%s1463 + $0x270] sm:$0xff] %v1776
                  %v1778 = vld [vmem:[%s1462 + $0x9d0] sm:$0xff]
                  %1779 = vst [vmem:[%s1463 + $0x274] sm:$0xff] %v1778
                  %v1780 = vld [vmem:[%s1462 + $0x9e0] sm:$0xff]
                  %1781 = vst [vmem:[%s1463 + $0x278] sm:$0xff] %v1780
                  %v1782 = vld [vmem:[%s1462 + $0x9f0] sm:$0xff]
                  %1783 = vst [vmem:[%s1463 + $0x27c] sm:$0xff] %v1782
                  %v1784 = vld [vmem:[%s1462 + $0xa00] sm:$0xff]
                  %1785 = vst [vmem:[%s1463 + $0x280] sm:$0xff] %v1784
                  %v1786 = vld [vmem:[%s1462 + $0xa10] sm:$0xff]
                  %1787 = vst [vmem:[%s1463 + $0x284] sm:$0xff] %v1786
                  %v1788 = vld [vmem:[%s1462 + $0xa20] sm:$0xff]
                  %1789 = vst [vmem:[%s1463 + $0x288] sm:$0xff] %v1788
                  %v1790 = vld [vmem:[%s1462 + $0xa30] sm:$0xff]
                  %1791 = vst [vmem:[%s1463 + $0x28c] sm:$0xff] %v1790
                  %v1792 = vld [vmem:[%s1462 + $0xa40] sm:$0xff]
                  %1793 = vst [vmem:[%s1463 + $0x290] sm:$0xff] %v1792
                  %v1794 = vld [vmem:[%s1462 + $0xa50] sm:$0xff]
                  %1795 = vst [vmem:[%s1463 + $0x294] sm:$0xff] %v1794
                  %v1796 = vld [vmem:[%s1462 + $0xa60] sm:$0xff]
                  %1797 = vst [vmem:[%s1463 + $0x298] sm:$0xff] %v1796
                  %v1798 = vld [vmem:[%s1462 + $0xa70] sm:$0xff]
                  %1799 = vst [vmem:[%s1463 + $0x29c] sm:$0xff] %v1798
                  %v1800 = vld [vmem:[%s1462 + $0xa80] sm:$0xff]
                  %1801 = vst [vmem:[%s1463 + $0x2a0] sm:$0xff] %v1800
                  %v1802 = vld [vmem:[%s1462 + $0xa90] sm:$0xff]
                  %1803 = vst [vmem:[%s1463 + $0x2a4] sm:$0xff] %v1802
                  %v1804 = vld [vmem:[%s1462 + $0xaa0] sm:$0xff]
                  %1805 = vst [vmem:[%s1463 + $0x2a8] sm:$0xff] %v1804
                  %v1806 = vld [vmem:[%s1462 + $0xab0] sm:$0xff]
                  %1807 = vst [vmem:[%s1463 + $0x2ac] sm:$0xff] %v1806
                  %v1808 = vld [vmem:[%s1462 + $0xac0] sm:$0xff]
                  %1809 = vst [vmem:[%s1463 + $0x2b0] sm:$0xff] %v1808
                  %v1810 = vld [vmem:[%s1462 + $0xad0] sm:$0xff]
                  %1811 = vst [vmem:[%s1463 + $0x2b4] sm:$0xff] %v1810
                  %v1812 = vld [vmem:[%s1462 + $0xae0] sm:$0xff]
                  %1813 = vst [vmem:[%s1463 + $0x2b8] sm:$0xff] %v1812
                  %v1814 = vld [vmem:[%s1462 + $0xaf0] sm:$0xff]
                  %1815 = vst [vmem:[%s1463 + $0x2bc] sm:$0xff] %v1814
                  %v1816 = vld [vmem:[%s1462 + $0xb00] sm:$0xff]
                  %1817 = vst [vmem:[%s1463 + $0x2c0] sm:$0xff] %v1816
                  %v1818 = vld [vmem:[%s1462 + $0xb10] sm:$0xff]
                  %1819 = vst [vmem:[%s1463 + $0x2c4] sm:$0xff] %v1818
                  %v1820 = vld [vmem:[%s1462 + $0xb20] sm:$0xff]
                  %1821 = vst [vmem:[%s1463 + $0x2c8] sm:$0xff] %v1820
                  %v1822 = vld [vmem:[%s1462 + $0xb30] sm:$0xff]
                  %1823 = vst [vmem:[%s1463 + $0x2cc] sm:$0xff] %v1822
                  %v1824 = vld [vmem:[%s1462 + $0xb40] sm:$0xff]
                  %1825 = vst [vmem:[%s1463 + $0x2d0] sm:$0xff] %v1824
                  %v1826 = vld [vmem:[%s1462 + $0xb50] sm:$0xff]
                  %1827 = vst [vmem:[%s1463 + $0x2d4] sm:$0xff] %v1826
                  %v1828 = vld [vmem:[%s1462 + $0xb60] sm:$0xff]
                  %1829 = vst [vmem:[%s1463 + $0x2d8] sm:$0xff] %v1828
                  %v1830 = vld [vmem:[%s1462 + $0xb70] sm:$0xff]
                  %1831 = vst [vmem:[%s1463 + $0x2dc] sm:$0xff] %v1830
                  %v1832 = vld [vmem:[%s1462 + $0xb80] sm:$0xff]
                  %1833 = vst [vmem:[%s1463 + $0x2e0] sm:$0xff] %v1832
                  %v1834 = vld [vmem:[%s1462 + $0xb90] sm:$0xff]
                  %1835 = vst [vmem:[%s1463 + $0x2e4] sm:$0xff] %v1834
                  %v1836 = vld [vmem:[%s1462 + $0xba0] sm:$0xff]
                  %1837 = vst [vmem:[%s1463 + $0x2e8] sm:$0xff] %v1836
                  %v1838 = vld [vmem:[%s1462 + $0xbb0] sm:$0xff]
                  %1839 = vst [vmem:[%s1463 + $0x2ec] sm:$0xff] %v1838
                  %v1840 = vld [vmem:[%s1462 + $0xbc0] sm:$0xff]
                  %1841 = vst [vmem:[%s1463 + $0x2f0] sm:$0xff] %v1840
                  %v1842 = vld [vmem:[%s1462 + $0xbd0] sm:$0xff]
                  %1843 = vst [vmem:[%s1463 + $0x2f4] sm:$0xff] %v1842
                  %v1844 = vld [vmem:[%s1462 + $0xbe0] sm:$0xff]
                  %1845 = vst [vmem:[%s1463 + $0x2f8] sm:$0xff] %v1844
                  %v1846 = vld [vmem:[%s1462 + $0xbf0] sm:$0xff]
                  %1847 = vst [vmem:[%s1463 + $0x2fc] sm:$0xff] %v1846
                  %v1848 = vld [vmem:[%s1462 + $0xc00] sm:$0xff]
                  %1849 = vst [vmem:[%s1463 + $0x300] sm:$0xff] %v1848
                  %v1850 = vld [vmem:[%s1462 + $0xc10] sm:$0xff]
                  %1851 = vst [vmem:[%s1463 + $0x304] sm:$0xff] %v1850
                  %v1852 = vld [vmem:[%s1462 + $0xc20] sm:$0xff]
                  %1853 = vst [vmem:[%s1463 + $0x308] sm:$0xff] %v1852
                  %v1854 = vld [vmem:[%s1462 + $0xc30] sm:$0xff]
                  %1855 = vst [vmem:[%s1463 + $0x30c] sm:$0xff] %v1854
                  %v1856 = vld [vmem:[%s1462 + $0xc40] sm:$0xff]
                  %1857 = vst [vmem:[%s1463 + $0x310] sm:$0xff] %v1856
                  %v1858 = vld [vmem:[%s1462 + $0xc50] sm:$0xff]
                  %1859 = vst [vmem:[%s1463 + $0x314] sm:$0xff] %v1858
                  %v1860 = vld [vmem:[%s1462 + $0xc60] sm:$0xff]
                  %1861 = vst [vmem:[%s1463 + $0x318] sm:$0xff] %v1860
                  %v1862 = vld [vmem:[%s1462 + $0xc70] sm:$0xff]
                  %1863 = vst [vmem:[%s1463 + $0x31c] sm:$0xff] %v1862
                  %v1864 = vld [vmem:[%s1462 + $0xc80] sm:$0xff]
                  %1865 = vst [vmem:[%s1463 + $0x320] sm:$0xff] %v1864
                  %v1866 = vld [vmem:[%s1462 + $0xc90] sm:$0xff]
                  %1867 = vst [vmem:[%s1463 + $0x324] sm:$0xff] %v1866
                  %v1868 = vld [vmem:[%s1462 + $0xca0] sm:$0xff]
                  %1869 = vst [vmem:[%s1463 + $0x328] sm:$0xff] %v1868
                  %v1870 = vld [vmem:[%s1462 + $0xcb0] sm:$0xff]
                  %1871 = vst [vmem:[%s1463 + $0x32c] sm:$0xff] %v1870
                  %v1872 = vld [vmem:[%s1462 + $0xcc0] sm:$0xff]
                  %1873 = vst [vmem:[%s1463 + $0x330] sm:$0xff] %v1872
                  %v1874 = vld [vmem:[%s1462 + $0xcd0] sm:$0xff]
                  %1875 = vst [vmem:[%s1463 + $0x334] sm:$0xff] %v1874
                  %v1876 = vld [vmem:[%s1462 + $0xce0] sm:$0xff]
                  %1877 = vst [vmem:[%s1463 + $0x338] sm:$0xff] %v1876
                  %v1878 = vld [vmem:[%s1462 + $0xcf0] sm:$0xff]
                  %1879 = vst [vmem:[%s1463 + $0x33c] sm:$0xff] %v1878
                  %v1880 = vld [vmem:[%s1462 + $0xd00] sm:$0xff]
                  %1881 = vst [vmem:[%s1463 + $0x340] sm:$0xff] %v1880
                  %v1882 = vld [vmem:[%s1462 + $0xd10] sm:$0xff]
                  %1883 = vst [vmem:[%s1463 + $0x344] sm:$0xff] %v1882
                  %v1884 = vld [vmem:[%s1462 + $0xd20] sm:$0xff]
                  %1885 = vst [vmem:[%s1463 + $0x348] sm:$0xff] %v1884
                  %v1886 = vld [vmem:[%s1462 + $0xd30] sm:$0xff]
                  %1887 = vst [vmem:[%s1463 + $0x34c] sm:$0xff] %v1886
                  %v1888 = vld [vmem:[%s1462 + $0xd40] sm:$0xff]
                  %1889 = vst [vmem:[%s1463 + $0x350] sm:$0xff] %v1888
                  %v1890 = vld [vmem:[%s1462 + $0xd50] sm:$0xff]
                  %1891 = vst [vmem:[%s1463 + $0x354] sm:$0xff] %v1890
                  %v1892 = vld [vmem:[%s1462 + $0xd60] sm:$0xff]
                  %1893 = vst [vmem:[%s1463 + $0x358] sm:$0xff] %v1892
                  %v1894 = vld [vmem:[%s1462 + $0xd70] sm:$0xff]
                  %1895 = vst [vmem:[%s1463 + $0x35c] sm:$0xff] %v1894
                  %v1896 = vld [vmem:[%s1462 + $0xd80] sm:$0xff]
                  %1897 = vst [vmem:[%s1463 + $0x360] sm:$0xff] %v1896
                  %v1898 = vld [vmem:[%s1462 + $0xd90] sm:$0xff]
                  %1899 = vst [vmem:[%s1463 + $0x364] sm:$0xff] %v1898
                  %v1900 = vld [vmem:[%s1462 + $0xda0] sm:$0xff]
                  %1901 = vst [vmem:[%s1463 + $0x368] sm:$0xff] %v1900
                  %v1902 = vld [vmem:[%s1462 + $0xdb0] sm:$0xff]
                  %1903 = vst [vmem:[%s1463 + $0x36c] sm:$0xff] %v1902
                  %v1904 = vld [vmem:[%s1462 + $0xdc0] sm:$0xff]
                  %1905 = vst [vmem:[%s1463 + $0x370] sm:$0xff] %v1904
                  %v1906 = vld [vmem:[%s1462 + $0xdd0] sm:$0xff]
                  %1907 = vst [vmem:[%s1463 + $0x374] sm:$0xff] %v1906
                  %v1908 = vld [vmem:[%s1462 + $0xde0] sm:$0xff]
                  %1909 = vst [vmem:[%s1463 + $0x378] sm:$0xff] %v1908
                  %v1910 = vld [vmem:[%s1462 + $0xdf0] sm:$0xff]
                  %1911 = vst [vmem:[%s1463 + $0x37c] sm:$0xff] %v1910
                  %v1912 = vld [vmem:[%s1462 + $0xe00] sm:$0xff]
                  %1913 = vst [vmem:[%s1463 + $0x380] sm:$0xff] %v1912
                  %v1914 = vld [vmem:[%s1462 + $0xe10] sm:$0xff]
                  %1915 = vst [vmem:[%s1463 + $0x384] sm:$0xff] %v1914
                  %v1916 = vld [vmem:[%s1462 + $0xe20] sm:$0xff]
                  %1917 = vst [vmem:[%s1463 + $0x388] sm:$0xff] %v1916
                  %v1918 = vld [vmem:[%s1462 + $0xe30] sm:$0xff]
                  %1919 = vst [vmem:[%s1463 + $0x38c] sm:$0xff] %v1918
                  %v1920 = vld [vmem:[%s1462 + $0xe40] sm:$0xff]
                  %1921 = vst [vmem:[%s1463 + $0x390] sm:$0xff] %v1920
                  %v1922 = vld [vmem:[%s1462 + $0xe50] sm:$0xff]
                  %1923 = vst [vmem:[%s1463 + $0x394] sm:$0xff] %v1922
                  %v1924 = vld [vmem:[%s1462 + $0xe60] sm:$0xff]
                  %1925 = vst [vmem:[%s1463 + $0x398] sm:$0xff] %v1924
                  %v1926 = vld [vmem:[%s1462 + $0xe70] sm:$0xff]
                  %1927 = vst [vmem:[%s1463 + $0x39c] sm:$0xff] %v1926
                  %v1928 = vld [vmem:[%s1462 + $0xe80] sm:$0xff]
                  %1929 = vst [vmem:[%s1463 + $0x3a0] sm:$0xff] %v1928
                  %v1930 = vld [vmem:[%s1462 + $0xe90] sm:$0xff]
                  %1931 = vst [vmem:[%s1463 + $0x3a4] sm:$0xff] %v1930
                  %v1932 = vld [vmem:[%s1462 + $0xea0] sm:$0xff]
                  %1933 = vst [vmem:[%s1463 + $0x3a8] sm:$0xff] %v1932
                  %v1934 = vld [vmem:[%s1462 + $0xeb0] sm:$0xff]
                  %1935 = vst [vmem:[%s1463 + $0x3ac] sm:$0xff] %v1934
                  %v1936 = vld [vmem:[%s1462 + $0xec0] sm:$0xff]
                  %1937 = vst [vmem:[%s1463 + $0x3b0] sm:$0xff] %v1936
                  %v1938 = vld [vmem:[%s1462 + $0xed0] sm:$0xff]
                  %1939 = vst [vmem:[%s1463 + $0x3b4] sm:$0xff] %v1938
                  %v1940 = vld [vmem:[%s1462 + $0xee0] sm:$0xff]
                  %1941 = vst [vmem:[%s1463 + $0x3b8] sm:$0xff] %v1940
                  %v1942 = vld [vmem:[%s1462 + $0xef0] sm:$0xff]
                  %1943 = vst [vmem:[%s1463 + $0x3bc] sm:$0xff] %v1942
                  %v1944 = vld [vmem:[%s1462 + $0xf00] sm:$0xff]
                  %1945 = vst [vmem:[%s1463 + $0x3c0] sm:$0xff] %v1944
                  %v1946 = vld [vmem:[%s1462 + $0xf10] sm:$0xff]
                  %1947 = vst [vmem:[%s1463 + $0x3c4] sm:$0xff] %v1946
                  %v1948 = vld [vmem:[%s1462 + $0xf20] sm:$0xff]
                  %1949 = vst [vmem:[%s1463 + $0x3c8] sm:$0xff] %v1948
                  %v1950 = vld [vmem:[%s1462 + $0xf30] sm:$0xff]
                  %1951 = vst [vmem:[%s1463 + $0x3cc] sm:$0xff] %v1950
                  %v1952 = vld [vmem:[%s1462 + $0xf40] sm:$0xff]
                  %1953 = vst [vmem:[%s1463 + $0x3d0] sm:$0xff] %v1952
                  %v1954 = vld [vmem:[%s1462 + $0xf50] sm:$0xff]
                  %1955 = vst [vmem:[%s1463 + $0x3d4] sm:$0xff] %v1954
                  %v1956 = vld [vmem:[%s1462 + $0xf60] sm:$0xff]
                  %1957 = vst [vmem:[%s1463 + $0x3d8] sm:$0xff] %v1956
                  %v1958 = vld [vmem:[%s1462 + $0xf70] sm:$0xff]
                  %1959 = vst [vmem:[%s1463 + $0x3dc] sm:$0xff] %v1958
                  %v1960 = vld [vmem:[%s1462 + $0xf80] sm:$0xff]
                  %1961 = vst [vmem:[%s1463 + $0x3e0] sm:$0xff] %v1960
                  %v1962 = vld [vmem:[%s1462 + $0xf90] sm:$0xff]
                  %1963 = vst [vmem:[%s1463 + $0x3e4] sm:$0xff] %v1962
                  %v1964 = vld [vmem:[%s1462 + $0xfa0] sm:$0xff]
                  %1965 = vst [vmem:[%s1463 + $0x3e8] sm:$0xff] %v1964
                  %v1966 = vld [vmem:[%s1462 + $0xfb0] sm:$0xff]
                  %1967 = vst [vmem:[%s1463 + $0x3ec] sm:$0xff] %v1966
                  %v1968 = vld [vmem:[%s1462 + $0xfc0] sm:$0xff]
                  %1969 = vst [vmem:[%s1463 + $0x3f0] sm:$0xff] %v1968
                  %v1970 = vld [vmem:[%s1462 + $0xfd0] sm:$0xff]
                  %1971 = vst [vmem:[%s1463 + $0x3f4] sm:$0xff] %v1970
                  %v1972 = vld [vmem:[%s1462 + $0xfe0] sm:$0xff]
                  %1973 = vst [vmem:[%s1463 + $0x3f8] sm:$0xff] %v1972
                  %v1974 = vld [vmem:[%s1462 + $0xff0] sm:$0xff]
                  %1975 = vst [vmem:[%s1463 + $0x3fc] sm:$0xff] %v1974
                  %v1976 = vld [vmem:[%s1462 + $0x1000] sm:$0xff]
                  %1977 = vst [vmem:[%s1463 + $0x400] sm:$0xff] %v1976
                  %v1978 = vld [vmem:[%s1462 + $0x1010] sm:$0xff]
                  %1979 = vst [vmem:[%s1463 + $0x404] sm:$0xff] %v1978
                  %v1980 = vld [vmem:[%s1462 + $0x1020] sm:$0xff]
                  %1981 = vst [vmem:[%s1463 + $0x408] sm:$0xff] %v1980
                  %v1982 = vld [vmem:[%s1462 + $0x1030] sm:$0xff]
                  %1983 = vst [vmem:[%s1463 + $0x40c] sm:$0xff] %v1982
                  %v1984 = vld [vmem:[%s1462 + $0x1040] sm:$0xff]
                  %1985 = vst [vmem:[%s1463 + $0x410] sm:$0xff] %v1984
                  %v1986 = vld [vmem:[%s1462 + $0x1050] sm:$0xff]
                  %1987 = vst [vmem:[%s1463 + $0x414] sm:$0xff] %v1986
                  %v1988 = vld [vmem:[%s1462 + $0x1060] sm:$0xff]
                  %1989 = vst [vmem:[%s1463 + $0x418] sm:$0xff] %v1988
                  %v1990 = vld [vmem:[%s1462 + $0x1070] sm:$0xff]
                  %1991 = vst [vmem:[%s1463 + $0x41c] sm:$0xff] %v1990
                  %v1992 = vld [vmem:[%s1462 + $0x1080] sm:$0xff]
                  %1993 = vst [vmem:[%s1463 + $0x420] sm:$0xff] %v1992
                  %v1994 = vld [vmem:[%s1462 + $0x1090] sm:$0xff]
                  %1995 = vst [vmem:[%s1463 + $0x424] sm:$0xff] %v1994
                  %v1996 = vld [vmem:[%s1462 + $0x10a0] sm:$0xff]
                  %1997 = vst [vmem:[%s1463 + $0x428] sm:$0xff] %v1996
                  %v1998 = vld [vmem:[%s1462 + $0x10b0] sm:$0xff]
                  %1999 = vst [vmem:[%s1463 + $0x42c] sm:$0xff] %v1998
                  %v2000 = vld [vmem:[%s1462 + $0x10c0] sm:$0xff]
                  %2001 = vst [vmem:[%s1463 + $0x430] sm:$0xff] %v2000
                  %v2002 = vld [vmem:[%s1462 + $0x10d0] sm:$0xff]
                  %2003 = vst [vmem:[%s1463 + $0x434] sm:$0xff] %v2002
                  %v2004 = vld [vmem:[%s1462 + $0x10e0] sm:$0xff]
                  %2005 = vst [vmem:[%s1463 + $0x438] sm:$0xff] %v2004
                  %v2006 = vld [vmem:[%s1462 + $0x10f0] sm:$0xff]
                  %2007 = vst [vmem:[%s1463 + $0x43c] sm:$0xff] %v2006
                  %v2008 = vld [vmem:[%s1462 + $0x1100] sm:$0xff]
                  %2009 = vst [vmem:[%s1463 + $0x440] sm:$0xff] %v2008
                  %v2010 = vld [vmem:[%s1462 + $0x1110] sm:$0xff]
                  %2011 = vst [vmem:[%s1463 + $0x444] sm:$0xff] %v2010
                  %v2012 = vld [vmem:[%s1462 + $0x1120] sm:$0xff]
                  %2013 = vst [vmem:[%s1463 + $0x448] sm:$0xff] %v2012
                  %v2014 = vld [vmem:[%s1462 + $0x1130] sm:$0xff]
                  %2015 = vst [vmem:[%s1463 + $0x44c] sm:$0xff] %v2014
                  %v2016 = vld [vmem:[%s1462 + $0x1140] sm:$0xff]
                  %2017 = vst [vmem:[%s1463 + $0x450] sm:$0xff] %v2016
                  %v2018 = vld [vmem:[%s1462 + $0x1150] sm:$0xff]
                  %2019 = vst [vmem:[%s1463 + $0x454] sm:$0xff] %v2018
                  %v2020 = vld [vmem:[%s1462 + $0x1160] sm:$0xff]
                  %2021 = vst [vmem:[%s1463 + $0x458] sm:$0xff] %v2020
                  %v2022 = vld [vmem:[%s1462 + $0x1170] sm:$0xff]
                  %2023 = vst [vmem:[%s1463 + $0x45c] sm:$0xff] %v2022
                  %v2024 = vld [vmem:[%s1462 + $0x1180] sm:$0xff]
                  %2025 = vst [vmem:[%s1463 + $0x460] sm:$0xff] %v2024
                  %v2026 = vld [vmem:[%s1462 + $0x1190] sm:$0xff]
                  %2027 = vst [vmem:[%s1463 + $0x464] sm:$0xff] %v2026
                  %v2028 = vld [vmem:[%s1462 + $0x11a0] sm:$0xff]
                  %2029 = vst [vmem:[%s1463 + $0x468] sm:$0xff] %v2028
                  %v2030 = vld [vmem:[%s1462 + $0x11b0] sm:$0xff]
                  %2031 = vst [vmem:[%s1463 + $0x46c] sm:$0xff] %v2030
                  %v2032 = vld [vmem:[%s1462 + $0x11c0] sm:$0xff]
                  %2033 = vst [vmem:[%s1463 + $0x470] sm:$0xff] %v2032
                  %v2034 = vld [vmem:[%s1462 + $0x11d0] sm:$0xff]
                  %2035 = vst [vmem:[%s1463 + $0x474] sm:$0xff] %v2034
                  %v2036 = vld [vmem:[%s1462 + $0x11e0] sm:$0xff]
                  %2037 = vst [vmem:[%s1463 + $0x478] sm:$0xff] %v2036
                  %v2038 = vld [vmem:[%s1462 + $0x11f0] sm:$0xff]
                  %2039 = vst [vmem:[%s1463 + $0x47c] sm:$0xff] %v2038
                  %v2040 = vld [vmem:[%s1462 + $0x1200] sm:$0xff]
                  %2041 = vst [vmem:[%s1463 + $0x480] sm:$0xff] %v2040
                  %v2042 = vld [vmem:[%s1462 + $0x1210] sm:$0xff]
                  %2043 = vst [vmem:[%s1463 + $0x484] sm:$0xff] %v2042
                  %v2044 = vld [vmem:[%s1462 + $0x1220] sm:$0xff]
                  %2045 = vst [vmem:[%s1463 + $0x488] sm:$0xff] %v2044
                  %v2046 = vld [vmem:[%s1462 + $0x1230] sm:$0xff]
                  %2047 = vst [vmem:[%s1463 + $0x48c] sm:$0xff] %v2046
                  %v2048 = vld [vmem:[%s1462 + $0x1240] sm:$0xff]
                  %2049 = vst [vmem:[%s1463 + $0x490] sm:$0xff] %v2048
                  %v2050 = vld [vmem:[%s1462 + $0x1250] sm:$0xff]
                  %2051 = vst [vmem:[%s1463 + $0x494] sm:$0xff] %v2050
                  %v2052 = vld [vmem:[%s1462 + $0x1260] sm:$0xff]
                  %2053 = vst [vmem:[%s1463 + $0x498] sm:$0xff] %v2052
                  %v2054 = vld [vmem:[%s1462 + $0x1270] sm:$0xff]
                  %2055 = vst [vmem:[%s1463 + $0x49c] sm:$0xff] %v2054
                  %v2056 = vld [vmem:[%s1462 + $0x1280] sm:$0xff]
                  %2057 = vst [vmem:[%s1463 + $0x4a0] sm:$0xff] %v2056
                  %v2058 = vld [vmem:[%s1462 + $0x1290] sm:$0xff]
                  %2059 = vst [vmem:[%s1463 + $0x4a4] sm:$0xff] %v2058
                  %v2060 = vld [vmem:[%s1462 + $0x12a0] sm:$0xff]
                  %2061 = vst [vmem:[%s1463 + $0x4a8] sm:$0xff] %v2060
                  %v2062 = vld [vmem:[%s1462 + $0x12b0] sm:$0xff]
                  %2063 = vst [vmem:[%s1463 + $0x4ac] sm:$0xff] %v2062
                  %v2064 = vld [vmem:[%s1462 + $0x12c0] sm:$0xff]
                  %2065 = vst [vmem:[%s1463 + $0x4b0] sm:$0xff] %v2064
                  %v2066 = vld [vmem:[%s1462 + $0x12d0] sm:$0xff]
                  %2067 = vst [vmem:[%s1463 + $0x4b4] sm:$0xff] %v2066
                  %v2068 = vld [vmem:[%s1462 + $0x12e0] sm:$0xff]
                  %2069 = vst [vmem:[%s1463 + $0x4b8] sm:$0xff] %v2068
                  %v2070 = vld [vmem:[%s1462 + $0x12f0] sm:$0xff]
                  %2071 = vst [vmem:[%s1463 + $0x4bc] sm:$0xff] %v2070
                  %v2072 = vld [vmem:[%s1462 + $0x1300] sm:$0xff]
                  %2073 = vst [vmem:[%s1463 + $0x4c0] sm:$0xff] %v2072
                  %v2074 = vld [vmem:[%s1462 + $0x1310] sm:$0xff]
                  %2075 = vst [vmem:[%s1463 + $0x4c4] sm:$0xff] %v2074
                  %v2076 = vld [vmem:[%s1462 + $0x1320] sm:$0xff]
                  %2077 = vst [vmem:[%s1463 + $0x4c8] sm:$0xff] %v2076
                  %v2078 = vld [vmem:[%s1462 + $0x1330] sm:$0xff]
                  %2079 = vst [vmem:[%s1463 + $0x4cc] sm:$0xff] %v2078
                  %v2080 = vld [vmem:[%s1462 + $0x1340] sm:$0xff]
                  %2081 = vst [vmem:[%s1463 + $0x4d0] sm:$0xff] %v2080
                  %v2082 = vld [vmem:[%s1462 + $0x1350] sm:$0xff]
                  %2083 = vst [vmem:[%s1463 + $0x4d4] sm:$0xff] %v2082
                  %v2084 = vld [vmem:[%s1462 + $0x1360] sm:$0xff]
                  %2085 = vst [vmem:[%s1463 + $0x4d8] sm:$0xff] %v2084
                  %v2086 = vld [vmem:[%s1462 + $0x1370] sm:$0xff]
                  %2087 = vst [vmem:[%s1463 + $0x4dc] sm:$0xff] %v2086
                  %v2088 = vld [vmem:[%s1462 + $0x1380] sm:$0xff]
                  %2089 = vst [vmem:[%s1463 + $0x4e0] sm:$0xff] %v2088
                  %v2090 = vld [vmem:[%s1462 + $0x1390] sm:$0xff]
                  %2091 = vst [vmem:[%s1463 + $0x4e4] sm:$0xff] %v2090
                  %v2092 = vld [vmem:[%s1462 + $0x13a0] sm:$0xff]
                  %2093 = vst [vmem:[%s1463 + $0x4e8] sm:$0xff] %v2092
                  %v2094 = vld [vmem:[%s1462 + $0x13b0] sm:$0xff]
                  %2095 = vst [vmem:[%s1463 + $0x4ec] sm:$0xff] %v2094
                  %v2096 = vld [vmem:[%s1462 + $0x13c0] sm:$0xff]
                  %2097 = vst [vmem:[%s1463 + $0x4f0] sm:$0xff] %v2096
                  %v2098 = vld [vmem:[%s1462 + $0x13d0] sm:$0xff]
                  %2099 = vst [vmem:[%s1463 + $0x4f4] sm:$0xff] %v2098
                  %v2100 = vld [vmem:[%s1462 + $0x13e0] sm:$0xff]
                  %2101 = vst [vmem:[%s1463 + $0x4f8] sm:$0xff] %v2100
                  %v2102 = vld [vmem:[%s1462 + $0x13f0] sm:$0xff]
                  %2103 = vst [vmem:[%s1463 + $0x4fc] sm:$0xff] %v2102
                  %s2104 = sadd.s32 1, %s1461
                  %p2105 = scmp.ge.s32.totalorder %s2104, 0
                  %s2106 = scalar_select %p2105, 0, %s2104
                  %s2107 = smul.u32 %s2106, 8
                  %s2108 = smul.u32 %s2106, 8
                  %s2109 = scalar_lea.vmem %s138, %s2107
                  %s2110 = scalar_lea.vmem %s136, %s2108 [#allocation2]
                $region63: #{encoder_fwd.8} parent=57 // loop_footer
                  %s1460 = sadd.s32 1, %s1456
                $region64: #{encoder_fwd.8} parent=57 // loop_footer_branch
                  %1455 = sbr.rel target = $region60
                $region65: #{encoder_fwd.8} parent=57 // loop_exit
                  _
                %s2112 = ssub.s32 16, 1
                loop: start=0, step=1, limit=1
                $region66: #{encoder_fwd.8} parent=57 // loop_pre_header
                  _
                $region67: #{encoder_fwd.8} parent=57 // loop_header
                  %s2114 = sphi 0, %s2118
                  %p2115 = scmp.ge.s32.totalorder %s2114, 1
                  %s2119 = sphi %s138, %s138
                  %s2120 = sphi %s136, %s136
                $region68: #{encoder_fwd.8} parent=57 // loop_header_branch
                  %2117 = sbr.rel (%p2115) target = $region72
                $region69: #{encoder_fwd.8} parent=57 // loop_body
                  %v2121 = vld [vmem:[%s2119] sm:%s2112]
                  %2122 = vst [vmem:[%s2120] sm:%s2112] %v2121
                  %v2123 = vld [vmem:[%s2119 + $0x10] sm:%s2112]
                  %2124 = vst [vmem:[%s2120 + $0x4] sm:%s2112] %v2123
                  %v2125 = vld [vmem:[%s2119 + $0x20] sm:%s2112]
                  %2126 = vst [vmem:[%s2120 + $0x8] sm:%s2112] %v2125
                  %v2127 = vld [vmem:[%s2119 + $0x30] sm:%s2112]
                  %2128 = vst [vmem:[%s2120 + $0xc] sm:%s2112] %v2127
                  %v2129 = vld [vmem:[%s2119 + $0x40] sm:%s2112]
                  %2130 = vst [vmem:[%s2120 + $0x10] sm:%s2112] %v2129
                  %v2131 = vld [vmem:[%s2119 + $0x50] sm:%s2112]
                  %2132 = vst [vmem:[%s2120 + $0x14] sm:%s2112] %v2131
                  %v2133 = vld [vmem:[%s2119 + $0x60] sm:%s2112]
                  %2134 = vst [vmem:[%s2120 + $0x18] sm:%s2112] %v2133
                  %v2135 = vld [vmem:[%s2119 + $0x70] sm:%s2112]
                  %2136 = vst [vmem:[%s2120 + $0x1c] sm:%s2112] %v2135
                  %v2137 = vld [vmem:[%s2119 + $0x80] sm:%s2112]
                  %2138 = vst [vmem:[%s2120 + $0x20] sm:%s2112] %v2137
                  %v2139 = vld [vmem:[%s2119 + $0x90] sm:%s2112]
                  %2140 = vst [vmem:[%s2120 + $0x24] sm:%s2112] %v2139
                  %v2141 = vld [vmem:[%s2119 + $0xa0] sm:%s2112]
                  %2142 = vst [vmem:[%s2120 + $0x28] sm:%s2112] %v2141
                  %v2143 = vld [vmem:[%s2119 + $0xb0] sm:%s2112]
                  %2144 = vst [vmem:[%s2120 + $0x2c] sm:%s2112] %v2143
                  %v2145 = vld [vmem:[%s2119 + $0xc0] sm:%s2112]
                  %2146 = vst [vmem:[%s2120 + $0x30] sm:%s2112] %v2145
                  %v2147 = vld [vmem:[%s2119 + $0xd0] sm:%s2112]
                  %2148 = vst [vmem:[%s2120 + $0x34] sm:%s2112] %v2147
                  %v2149 = vld [vmem:[%s2119 + $0xe0] sm:%s2112]
                  %2150 = vst [vmem:[%s2120 + $0x38] sm:%s2112] %v2149
                  %v2151 = vld [vmem:[%s2119 + $0xf0] sm:%s2112]
                  %2152 = vst [vmem:[%s2120 + $0x3c] sm:%s2112] %v2151
                  %v2153 = vld [vmem:[%s2119 + $0x100] sm:%s2112]
                  %2154 = vst [vmem:[%s2120 + $0x40] sm:%s2112] %v2153
                  %v2155 = vld [vmem:[%s2119 + $0x110] sm:%s2112]
                  %2156 = vst [vmem:[%s2120 + $0x44] sm:%s2112] %v2155
                  %v2157 = vld [vmem:[%s2119 + $0x120] sm:%s2112]
                  %2158 = vst [vmem:[%s2120 + $0x48] sm:%s2112] %v2157
                  %v2159 = vld [vmem:[%s2119 + $0x130] sm:%s2112]
                  %2160 = vst [vmem:[%s2120 + $0x4c] sm:%s2112] %v2159
                  %v2161 = vld [vmem:[%s2119 + $0x140] sm:%s2112]
                  %2162 = vst [vmem:[%s2120 + $0x50] sm:%s2112] %v2161
                  %v2163 = vld [vmem:[%s2119 + $0x150] sm:%s2112]
                  %2164 = vst [vmem:[%s2120 + $0x54] sm:%s2112] %v2163
                  %v2165 = vld [vmem:[%s2119 + $0x160] sm:%s2112]
                  %2166 = vst [vmem:[%s2120 + $0x58] sm:%s2112] %v2165
                  %v2167 = vld [vmem:[%s2119 + $0x170] sm:%s2112]
                  %2168 = vst [vmem:[%s2120 + $0x5c] sm:%s2112] %v2167
                  %v2169 = vld [vmem:[%s2119 + $0x180] sm:%s2112]
                  %2170 = vst [vmem:[%s2120 + $0x60] sm:%s2112] %v2169
                  %v2171 = vld [vmem:[%s2119 + $0x190] sm:%s2112]
                  %2172 = vst [vmem:[%s2120 + $0x64] sm:%s2112] %v2171
                  %v2173 = vld [vmem:[%s2119 + $0x1a0] sm:%s2112]
                  %2174 = vst [vmem:[%s2120 + $0x68] sm:%s2112] %v2173
                  %v2175 = vld [vmem:[%s2119 + $0x1b0] sm:%s2112]
                  %2176 = vst [vmem:[%s2120 + $0x6c] sm:%s2112] %v2175
                  %v2177 = vld [vmem:[%s2119 + $0x1c0] sm:%s2112]
                  %2178 = vst [vmem:[%s2120 + $0x70] sm:%s2112] %v2177
                  %v2179 = vld [vmem:[%s2119 + $0x1d0] sm:%s2112]
                  %2180 = vst [vmem:[%s2120 + $0x74] sm:%s2112] %v2179
                  %v2181 = vld [vmem:[%s2119 + $0x1e0] sm:%s2112]
                  %2182 = vst [vmem:[%s2120 + $0x78] sm:%s2112] %v2181
                  %v2183 = vld [vmem:[%s2119 + $0x1f0] sm:%s2112]
                  %2184 = vst [vmem:[%s2120 + $0x7c] sm:%s2112] %v2183
                  %v2185 = vld [vmem:[%s2119 + $0x200] sm:%s2112]
                  %2186 = vst [vmem:[%s2120 + $0x80] sm:%s2112] %v2185
                  %v2187 = vld [vmem:[%s2119 + $0x210] sm:%s2112]
                  %2188 = vst [vmem:[%s2120 + $0x84] sm:%s2112] %v2187
                  %v2189 = vld [vmem:[%s2119 + $0x220] sm:%s2112]
                  %2190 = vst [vmem:[%s2120 + $0x88] sm:%s2112] %v2189
                  %v2191 = vld [vmem:[%s2119 + $0x230] sm:%s2112]
                  %2192 = vst [vmem:[%s2120 + $0x8c] sm:%s2112] %v2191
                  %v2193 = vld [vmem:[%s2119 + $0x240] sm:%s2112]
                  %2194 = vst [vmem:[%s2120 + $0x90] sm:%s2112] %v2193
                  %v2195 = vld [vmem:[%s2119 + $0x250] sm:%s2112]
                  %2196 = vst [vmem:[%s2120 + $0x94] sm:%s2112] %v2195
                  %v2197 = vld [vmem:[%s2119 + $0x260] sm:%s2112]
                  %2198 = vst [vmem:[%s2120 + $0x98] sm:%s2112] %v2197
                  %v2199 = vld [vmem:[%s2119 + $0x270] sm:%s2112]
                  %2200 = vst [vmem:[%s2120 + $0x9c] sm:%s2112] %v2199
                  %v2201 = vld [vmem:[%s2119 + $0x280] sm:%s2112]
                  %2202 = vst [vmem:[%s2120 + $0xa0] sm:%s2112] %v2201
                  %v2203 = vld [vmem:[%s2119 + $0x290] sm:%s2112]
                  %2204 = vst [vmem:[%s2120 + $0xa4] sm:%s2112] %v2203
                  %v2205 = vld [vmem:[%s2119 + $0x2a0] sm:%s2112]
                  %2206 = vst [vmem:[%s2120 + $0xa8] sm:%s2112] %v2205
                  %v2207 = vld [vmem:[%s2119 + $0x2b0] sm:%s2112]
                  %2208 = vst [vmem:[%s2120 + $0xac] sm:%s2112] %v2207
                  %v2209 = vld [vmem:[%s2119 + $0x2c0] sm:%s2112]
                  %2210 = vst [vmem:[%s2120 + $0xb0] sm:%s2112] %v2209
                  %v2211 = vld [vmem:[%s2119 + $0x2d0] sm:%s2112]
                  %2212 = vst [vmem:[%s2120 + $0xb4] sm:%s2112] %v2211
                  %v2213 = vld [vmem:[%s2119 + $0x2e0] sm:%s2112]
                  %2214 = vst [vmem:[%s2120 + $0xb8] sm:%s2112] %v2213
                  %v2215 = vld [vmem:[%s2119 + $0x2f0] sm:%s2112]
                  %2216 = vst [vmem:[%s2120 + $0xbc] sm:%s2112] %v2215
                  %v2217 = vld [vmem:[%s2119 + $0x300] sm:%s2112]
                  %2218 = vst [vmem:[%s2120 + $0xc0] sm:%s2112] %v2217
                  %v2219 = vld [vmem:[%s2119 + $0x310] sm:%s2112]
                  %2220 = vst [vmem:[%s2120 + $0xc4] sm:%s2112] %v2219
                  %v2221 = vld [vmem:[%s2119 + $0x320] sm:%s2112]
                  %2222 = vst [vmem:[%s2120 + $0xc8] sm:%s2112] %v2221
                  %v2223 = vld [vmem:[%s2119 + $0x330] sm:%s2112]
                  %2224 = vst [vmem:[%s2120 + $0xcc] sm:%s2112] %v2223
                  %v2225 = vld [vmem:[%s2119 + $0x340] sm:%s2112]
                  %2226 = vst [vmem:[%s2120 + $0xd0] sm:%s2112] %v2225
                  %v2227 = vld [vmem:[%s2119 + $0x350] sm:%s2112]
                  %2228 = vst [vmem:[%s2120 + $0xd4] sm:%s2112] %v2227
                  %v2229 = vld [vmem:[%s2119 + $0x360] sm:%s2112]
                  %2230 = vst [vmem:[%s2120 + $0xd8] sm:%s2112] %v2229
                  %v2231 = vld [vmem:[%s2119 + $0x370] sm:%s2112]
                  %2232 = vst [vmem:[%s2120 + $0xdc] sm:%s2112] %v2231
                  %v2233 = vld [vmem:[%s2119 + $0x380] sm:%s2112]
                  %2234 = vst [vmem:[%s2120 + $0xe0] sm:%s2112] %v2233
                  %v2235 = vld [vmem:[%s2119 + $0x390] sm:%s2112]
                  %2236 = vst [vmem:[%s2120 + $0xe4] sm:%s2112] %v2235
                  %v2237 = vld [vmem:[%s2119 + $0x3a0] sm:%s2112]
                  %2238 = vst [vmem:[%s2120 + $0xe8] sm:%s2112] %v2237
                  %v2239 = vld [vmem:[%s2119 + $0x3b0] sm:%s2112]
                  %2240 = vst [vmem:[%s2120 + $0xec] sm:%s2112] %v2239
                  %v2241 = vld [vmem:[%s2119 + $0x3c0] sm:%s2112]
                  %2242 = vst [vmem:[%s2120 + $0xf0] sm:%s2112] %v2241
                  %v2243 = vld [vmem:[%s2119 + $0x3d0] sm:%s2112]
                  %2244 = vst [vmem:[%s2120 + $0xf4] sm:%s2112] %v2243
                  %v2245 = vld [vmem:[%s2119 + $0x3e0] sm:%s2112]
                  %2246 = vst [vmem:[%s2120 + $0xf8] sm:%s2112] %v2245
                  %v2247 = vld [vmem:[%s2119 + $0x3f0] sm:%s2112]
                  %2248 = vst [vmem:[%s2120 + $0xfc] sm:%s2112] %v2247
                  %v2249 = vld [vmem:[%s2119 + $0x400] sm:%s2112]
                  %2250 = vst [vmem:[%s2120 + $0x100] sm:%s2112] %v2249
                  %v2251 = vld [vmem:[%s2119 + $0x410] sm:%s2112]
                  %2252 = vst [vmem:[%s2120 + $0x104] sm:%s2112] %v2251
                  %v2253 = vld [vmem:[%s2119 + $0x420] sm:%s2112]
                  %2254 = vst [vmem:[%s2120 + $0x108] sm:%s2112] %v2253
                  %v2255 = vld [vmem:[%s2119 + $0x430] sm:%s2112]
                  %2256 = vst [vmem:[%s2120 + $0x10c] sm:%s2112] %v2255
                  %v2257 = vld [vmem:[%s2119 + $0x440] sm:%s2112]
                  %2258 = vst [vmem:[%s2120 + $0x110] sm:%s2112] %v2257
                  %v2259 = vld [vmem:[%s2119 + $0x450] sm:%s2112]
                  %2260 = vst [vmem:[%s2120 + $0x114] sm:%s2112] %v2259
                  %v2261 = vld [vmem:[%s2119 + $0x460] sm:%s2112]
                  %2262 = vst [vmem:[%s2120 + $0x118] sm:%s2112] %v2261
                  %v2263 = vld [vmem:[%s2119 + $0x470] sm:%s2112]
                  %2264 = vst [vmem:[%s2120 + $0x11c] sm:%s2112] %v2263
                  %v2265 = vld [vmem:[%s2119 + $0x480] sm:%s2112]
                  %2266 = vst [vmem:[%s2120 + $0x120] sm:%s2112] %v2265
                  %v2267 = vld [vmem:[%s2119 + $0x490] sm:%s2112]
                  %2268 = vst [vmem:[%s2120 + $0x124] sm:%s2112] %v2267
                  %v2269 = vld [vmem:[%s2119 + $0x4a0] sm:%s2112]
                  %2270 = vst [vmem:[%s2120 + $0x128] sm:%s2112] %v2269
                  %v2271 = vld [vmem:[%s2119 + $0x4b0] sm:%s2112]
                  %2272 = vst [vmem:[%s2120 + $0x12c] sm:%s2112] %v2271
                  %v2273 = vld [vmem:[%s2119 + $0x4c0] sm:%s2112]
                  %2274 = vst [vmem:[%s2120 + $0x130] sm:%s2112] %v2273
                  %v2275 = vld [vmem:[%s2119 + $0x4d0] sm:%s2112]
                  %2276 = vst [vmem:[%s2120 + $0x134] sm:%s2112] %v2275
                  %v2277 = vld [vmem:[%s2119 + $0x4e0] sm:%s2112]
                  %2278 = vst [vmem:[%s2120 + $0x138] sm:%s2112] %v2277
                  %v2279 = vld [vmem:[%s2119 + $0x4f0] sm:%s2112]
                  %2280 = vst [vmem:[%s2120 + $0x13c] sm:%s2112] %v2279
                  %v2281 = vld [vmem:[%s2119 + $0x500] sm:%s2112]
                  %2282 = vst [vmem:[%s2120 + $0x140] sm:%s2112] %v2281
                  %v2283 = vld [vmem:[%s2119 + $0x510] sm:%s2112]
                  %2284 = vst [vmem:[%s2120 + $0x144] sm:%s2112] %v2283
                  %v2285 = vld [vmem:[%s2119 + $0x520] sm:%s2112]
                  %2286 = vst [vmem:[%s2120 + $0x148] sm:%s2112] %v2285
                  %v2287 = vld [vmem:[%s2119 + $0x530] sm:%s2112]
                  %2288 = vst [vmem:[%s2120 + $0x14c] sm:%s2112] %v2287
                  %v2289 = vld [vmem:[%s2119 + $0x540] sm:%s2112]
                  %2290 = vst [vmem:[%s2120 + $0x150] sm:%s2112] %v2289
                  %v2291 = vld [vmem:[%s2119 + $0x550] sm:%s2112]
                  %2292 = vst [vmem:[%s2120 + $0x154] sm:%s2112] %v2291
                  %v2293 = vld [vmem:[%s2119 + $0x560] sm:%s2112]
                  %2294 = vst [vmem:[%s2120 + $0x158] sm:%s2112] %v2293
                  %v2295 = vld [vmem:[%s2119 + $0x570] sm:%s2112]
                  %2296 = vst [vmem:[%s2120 + $0x15c] sm:%s2112] %v2295
                  %v2297 = vld [vmem:[%s2119 + $0x580] sm:%s2112]
                  %2298 = vst [vmem:[%s2120 + $0x160] sm:%s2112] %v2297
                  %v2299 = vld [vmem:[%s2119 + $0x590] sm:%s2112]
                  %2300 = vst [vmem:[%s2120 + $0x164] sm:%s2112] %v2299
                  %v2301 = vld [vmem:[%s2119 + $0x5a0] sm:%s2112]
                  %2302 = vst [vmem:[%s2120 + $0x168] sm:%s2112] %v2301
                  %v2303 = vld [vmem:[%s2119 + $0x5b0] sm:%s2112]
                  %2304 = vst [vmem:[%s2120 + $0x16c] sm:%s2112] %v2303
                  %v2305 = vld [vmem:[%s2119 + $0x5c0] sm:%s2112]
                  %2306 = vst [vmem:[%s2120 + $0x170] sm:%s2112] %v2305
                  %v2307 = vld [vmem:[%s2119 + $0x5d0] sm:%s2112]
                  %2308 = vst [vmem:[%s2120 + $0x174] sm:%s2112] %v2307
                  %v2309 = vld [vmem:[%s2119 + $0x5e0] sm:%s2112]
                  %2310 = vst [vmem:[%s2120 + $0x178] sm:%s2112] %v2309
                  %v2311 = vld [vmem:[%s2119 + $0x5f0] sm:%s2112]
                  %2312 = vst [vmem:[%s2120 + $0x17c] sm:%s2112] %v2311
                  %v2313 = vld [vmem:[%s2119 + $0x600] sm:%s2112]
                  %2314 = vst [vmem:[%s2120 + $0x180] sm:%s2112] %v2313
                  %v2315 = vld [vmem:[%s2119 + $0x610] sm:%s2112]
                  %2316 = vst [vmem:[%s2120 + $0x184] sm:%s2112] %v2315
                  %v2317 = vld [vmem:[%s2119 + $0x620] sm:%s2112]
                  %2318 = vst [vmem:[%s2120 + $0x188] sm:%s2112] %v2317
                  %v2319 = vld [vmem:[%s2119 + $0x630] sm:%s2112]
                  %2320 = vst [vmem:[%s2120 + $0x18c] sm:%s2112] %v2319
                  %v2321 = vld [vmem:[%s2119 + $0x640] sm:%s2112]
                  %2322 = vst [vmem:[%s2120 + $0x190] sm:%s2112] %v2321
                  %v2323 = vld [vmem:[%s2119 + $0x650] sm:%s2112]
                  %2324 = vst [vmem:[%s2120 + $0x194] sm:%s2112] %v2323
                  %v2325 = vld [vmem:[%s2119 + $0x660] sm:%s2112]
                  %2326 = vst [vmem:[%s2120 + $0x198] sm:%s2112] %v2325
                  %v2327 = vld [vmem:[%s2119 + $0x670] sm:%s2112]
                  %2328 = vst [vmem:[%s2120 + $0x19c] sm:%s2112] %v2327
                  %v2329 = vld [vmem:[%s2119 + $0x680] sm:%s2112]
                  %2330 = vst [vmem:[%s2120 + $0x1a0] sm:%s2112] %v2329
                  %v2331 = vld [vmem:[%s2119 + $0x690] sm:%s2112]
                  %2332 = vst [vmem:[%s2120 + $0x1a4] sm:%s2112] %v2331
                  %v2333 = vld [vmem:[%s2119 + $0x6a0] sm:%s2112]
                  %2334 = vst [vmem:[%s2120 + $0x1a8] sm:%s2112] %v2333
                  %v2335 = vld [vmem:[%s2119 + $0x6b0] sm:%s2112]
                  %2336 = vst [vmem:[%s2120 + $0x1ac] sm:%s2112] %v2335
                  %v2337 = vld [vmem:[%s2119 + $0x6c0] sm:%s2112]
                  %2338 = vst [vmem:[%s2120 + $0x1b0] sm:%s2112] %v2337
                  %v2339 = vld [vmem:[%s2119 + $0x6d0] sm:%s2112]
                  %2340 = vst [vmem:[%s2120 + $0x1b4] sm:%s2112] %v2339
                  %v2341 = vld [vmem:[%s2119 + $0x6e0] sm:%s2112]
                  %2342 = vst [vmem:[%s2120 + $0x1b8] sm:%s2112] %v2341
                  %v2343 = vld [vmem:[%s2119 + $0x6f0] sm:%s2112]
                  %2344 = vst [vmem:[%s2120 + $0x1bc] sm:%s2112] %v2343
                  %v2345 = vld [vmem:[%s2119 + $0x700] sm:%s2112]
                  %2346 = vst [vmem:[%s2120 + $0x1c0] sm:%s2112] %v2345
                  %v2347 = vld [vmem:[%s2119 + $0x710] sm:%s2112]
                  %2348 = vst [vmem:[%s2120 + $0x1c4] sm:%s2112] %v2347
                  %v2349 = vld [vmem:[%s2119 + $0x720] sm:%s2112]
                  %2350 = vst [vmem:[%s2120 + $0x1c8] sm:%s2112] %v2349
                  %v2351 = vld [vmem:[%s2119 + $0x730] sm:%s2112]
                  %2352 = vst [vmem:[%s2120 + $0x1cc] sm:%s2112] %v2351
                  %v2353 = vld [vmem:[%s2119 + $0x740] sm:%s2112]
                  %2354 = vst [vmem:[%s2120 + $0x1d0] sm:%s2112] %v2353
                  %v2355 = vld [vmem:[%s2119 + $0x750] sm:%s2112]
                  %2356 = vst [vmem:[%s2120 + $0x1d4] sm:%s2112] %v2355
                  %v2357 = vld [vmem:[%s2119 + $0x760] sm:%s2112]
                  %2358 = vst [vmem:[%s2120 + $0x1d8] sm:%s2112] %v2357
                  %v2359 = vld [vmem:[%s2119 + $0x770] sm:%s2112]
                  %2360 = vst [vmem:[%s2120 + $0x1dc] sm:%s2112] %v2359
                  %v2361 = vld [vmem:[%s2119 + $0x780] sm:%s2112]
                  %2362 = vst [vmem:[%s2120 + $0x1e0] sm:%s2112] %v2361
                  %v2363 = vld [vmem:[%s2119 + $0x790] sm:%s2112]
                  %2364 = vst [vmem:[%s2120 + $0x1e4] sm:%s2112] %v2363
                  %v2365 = vld [vmem:[%s2119 + $0x7a0] sm:%s2112]
                  %2366 = vst [vmem:[%s2120 + $0x1e8] sm:%s2112] %v2365
                  %v2367 = vld [vmem:[%s2119 + $0x7b0] sm:%s2112]
                  %2368 = vst [vmem:[%s2120 + $0x1ec] sm:%s2112] %v2367
                  %v2369 = vld [vmem:[%s2119 + $0x7c0] sm:%s2112]
                  %2370 = vst [vmem:[%s2120 + $0x1f0] sm:%s2112] %v2369
                  %v2371 = vld [vmem:[%s2119 + $0x7d0] sm:%s2112]
                  %2372 = vst [vmem:[%s2120 + $0x1f4] sm:%s2112] %v2371
                  %v2373 = vld [vmem:[%s2119 + $0x7e0] sm:%s2112]
                  %2374 = vst [vmem:[%s2120 + $0x1f8] sm:%s2112] %v2373
                  %v2375 = vld [vmem:[%s2119 + $0x7f0] sm:%s2112]
                  %2376 = vst [vmem:[%s2120 + $0x1fc] sm:%s2112] %v2375
                  %v2377 = vld [vmem:[%s2119 + $0x800] sm:%s2112]
                  %2378 = vst [vmem:[%s2120 + $0x200] sm:%s2112] %v2377
                  %v2379 = vld [vmem:[%s2119 + $0x810] sm:%s2112]
                  %2380 = vst [vmem:[%s2120 + $0x204] sm:%s2112] %v2379
                  %v2381 = vld [vmem:[%s2119 + $0x820] sm:%s2112]
                  %2382 = vst [vmem:[%s2120 + $0x208] sm:%s2112] %v2381
                  %v2383 = vld [vmem:[%s2119 + $0x830] sm:%s2112]
                  %2384 = vst [vmem:[%s2120 + $0x20c] sm:%s2112] %v2383
                  %v2385 = vld [vmem:[%s2119 + $0x840] sm:%s2112]
                  %2386 = vst [vmem:[%s2120 + $0x210] sm:%s2112] %v2385
                  %v2387 = vld [vmem:[%s2119 + $0x850] sm:%s2112]
                  %2388 = vst [vmem:[%s2120 + $0x214] sm:%s2112] %v2387
                  %v2389 = vld [vmem:[%s2119 + $0x860] sm:%s2112]
                  %2390 = vst [vmem:[%s2120 + $0x218] sm:%s2112] %v2389
                  %v2391 = vld [vmem:[%s2119 + $0x870] sm:%s2112]
                  %2392 = vst [vmem:[%s2120 + $0x21c] sm:%s2112] %v2391
                  %v2393 = vld [vmem:[%s2119 + $0x880] sm:%s2112]
                  %2394 = vst [vmem:[%s2120 + $0x220] sm:%s2112] %v2393
                  %v2395 = vld [vmem:[%s2119 + $0x890] sm:%s2112]
                  %2396 = vst [vmem:[%s2120 + $0x224] sm:%s2112] %v2395
                  %v2397 = vld [vmem:[%s2119 + $0x8a0] sm:%s2112]
                  %2398 = vst [vmem:[%s2120 + $0x228] sm:%s2112] %v2397
                  %v2399 = vld [vmem:[%s2119 + $0x8b0] sm:%s2112]
                  %2400 = vst [vmem:[%s2120 + $0x22c] sm:%s2112] %v2399
                  %v2401 = vld [vmem:[%s2119 + $0x8c0] sm:%s2112]
                  %2402 = vst [vmem:[%s2120 + $0x230] sm:%s2112] %v2401
                  %v2403 = vld [vmem:[%s2119 + $0x8d0] sm:%s2112]
                  %2404 = vst [vmem:[%s2120 + $0x234] sm:%s2112] %v2403
                  %v2405 = vld [vmem:[%s2119 + $0x8e0] sm:%s2112]
                  %2406 = vst [vmem:[%s2120 + $0x238] sm:%s2112] %v2405
                  %v2407 = vld [vmem:[%s2119 + $0x8f0] sm:%s2112]
                  %2408 = vst [vmem:[%s2120 + $0x23c] sm:%s2112] %v2407
                  %v2409 = vld [vmem:[%s2119 + $0x900] sm:%s2112]
                  %2410 = vst [vmem:[%s2120 + $0x240] sm:%s2112] %v2409
                  %v2411 = vld [vmem:[%s2119 + $0x910] sm:%s2112]
                  %2412 = vst [vmem:[%s2120 + $0x244] sm:%s2112] %v2411
                  %v2413 = vld [vmem:[%s2119 + $0x920] sm:%s2112]
                  %2414 = vst [vmem:[%s2120 + $0x248] sm:%s2112] %v2413
                  %v2415 = vld [vmem:[%s2119 + $0x930] sm:%s2112]
                  %2416 = vst [vmem:[%s2120 + $0x24c] sm:%s2112] %v2415
                  %v2417 = vld [vmem:[%s2119 + $0x940] sm:%s2112]
                  %2418 = vst [vmem:[%s2120 + $0x250] sm:%s2112] %v2417
                  %v2419 = vld [vmem:[%s2119 + $0x950] sm:%s2112]
                  %2420 = vst [vmem:[%s2120 + $0x254] sm:%s2112] %v2419
                  %v2421 = vld [vmem:[%s2119 + $0x960] sm:%s2112]
                  %2422 = vst [vmem:[%s2120 + $0x258] sm:%s2112] %v2421
                  %v2423 = vld [vmem:[%s2119 + $0x970] sm:%s2112]
                  %2424 = vst [vmem:[%s2120 + $0x25c] sm:%s2112] %v2423
                  %v2425 = vld [vmem:[%s2119 + $0x980] sm:%s2112]
                  %2426 = vst [vmem:[%s2120 + $0x260] sm:%s2112] %v2425
                  %v2427 = vld [vmem:[%s2119 + $0x990] sm:%s2112]
                  %2428 = vst [vmem:[%s2120 + $0x264] sm:%s2112] %v2427
                  %v2429 = vld [vmem:[%s2119 + $0x9a0] sm:%s2112]
                  %2430 = vst [vmem:[%s2120 + $0x268] sm:%s2112] %v2429
                  %v2431 = vld [vmem:[%s2119 + $0x9b0] sm:%s2112]
                  %2432 = vst [vmem:[%s2120 + $0x26c] sm:%s2112] %v2431
                  %v2433 = vld [vmem:[%s2119 + $0x9c0] sm:%s2112]
                  %2434 = vst [vmem:[%s2120 + $0x270] sm:%s2112] %v2433
                  %v2435 = vld [vmem:[%s2119 + $0x9d0] sm:%s2112]
                  %2436 = vst [vmem:[%s2120 + $0x274] sm:%s2112] %v2435
                  %v2437 = vld [vmem:[%s2119 + $0x9e0] sm:%s2112]
                  %2438 = vst [vmem:[%s2120 + $0x278] sm:%s2112] %v2437
                  %v2439 = vld [vmem:[%s2119 + $0x9f0] sm:%s2112]
                  %2440 = vst [vmem:[%s2120 + $0x27c] sm:%s2112] %v2439
                  %v2441 = vld [vmem:[%s2119 + $0xa00] sm:%s2112]
                  %2442 = vst [vmem:[%s2120 + $0x280] sm:%s2112] %v2441
                  %v2443 = vld [vmem:[%s2119 + $0xa10] sm:%s2112]
                  %2444 = vst [vmem:[%s2120 + $0x284] sm:%s2112] %v2443
                  %v2445 = vld [vmem:[%s2119 + $0xa20] sm:%s2112]
                  %2446 = vst [vmem:[%s2120 + $0x288] sm:%s2112] %v2445
                  %v2447 = vld [vmem:[%s2119 + $0xa30] sm:%s2112]
                  %2448 = vst [vmem:[%s2120 + $0x28c] sm:%s2112] %v2447
                  %v2449 = vld [vmem:[%s2119 + $0xa40] sm:%s2112]
                  %2450 = vst [vmem:[%s2120 + $0x290] sm:%s2112] %v2449
                  %v2451 = vld [vmem:[%s2119 + $0xa50] sm:%s2112]
                  %2452 = vst [vmem:[%s2120 + $0x294] sm:%s2112] %v2451
                  %v2453 = vld [vmem:[%s2119 + $0xa60] sm:%s2112]
                  %2454 = vst [vmem:[%s2120 + $0x298] sm:%s2112] %v2453
                  %v2455 = vld [vmem:[%s2119 + $0xa70] sm:%s2112]
                  %2456 = vst [vmem:[%s2120 + $0x29c] sm:%s2112] %v2455
                  %v2457 = vld [vmem:[%s2119 + $0xa80] sm:%s2112]
                  %2458 = vst [vmem:[%s2120 + $0x2a0] sm:%s2112] %v2457
                  %v2459 = vld [vmem:[%s2119 + $0xa90] sm:%s2112]
                  %2460 = vst [vmem:[%s2120 + $0x2a4] sm:%s2112] %v2459
                  %v2461 = vld [vmem:[%s2119 + $0xaa0] sm:%s2112]
                  %2462 = vst [vmem:[%s2120 + $0x2a8] sm:%s2112] %v2461
                  %v2463 = vld [vmem:[%s2119 + $0xab0] sm:%s2112]
                  %2464 = vst [vmem:[%s2120 + $0x2ac] sm:%s2112] %v2463
                  %v2465 = vld [vmem:[%s2119 + $0xac0] sm:%s2112]
                  %2466 = vst [vmem:[%s2120 + $0x2b0] sm:%s2112] %v2465
                  %v2467 = vld [vmem:[%s2119 + $0xad0] sm:%s2112]
                  %2468 = vst [vmem:[%s2120 + $0x2b4] sm:%s2112] %v2467
                  %v2469 = vld [vmem:[%s2119 + $0xae0] sm:%s2112]
                  %2470 = vst [vmem:[%s2120 + $0x2b8] sm:%s2112] %v2469
                  %v2471 = vld [vmem:[%s2119 + $0xaf0] sm:%s2112]
                  %2472 = vst [vmem:[%s2120 + $0x2bc] sm:%s2112] %v2471
                  %v2473 = vld [vmem:[%s2119 + $0xb00] sm:%s2112]
                  %2474 = vst [vmem:[%s2120 + $0x2c0] sm:%s2112] %v2473
                  %v2475 = vld [vmem:[%s2119 + $0xb10] sm:%s2112]
                  %2476 = vst [vmem:[%s2120 + $0x2c4] sm:%s2112] %v2475
                  %v2477 = vld [vmem:[%s2119 + $0xb20] sm:%s2112]
                  %2478 = vst [vmem:[%s2120 + $0x2c8] sm:%s2112] %v2477
                  %v2479 = vld [vmem:[%s2119 + $0xb30] sm:%s2112]
                  %2480 = vst [vmem:[%s2120 + $0x2cc] sm:%s2112] %v2479
                  %v2481 = vld [vmem:[%s2119 + $0xb40] sm:%s2112]
                  %2482 = vst [vmem:[%s2120 + $0x2d0] sm:%s2112] %v2481
                  %v2483 = vld [vmem:[%s2119 + $0xb50] sm:%s2112]
                  %2484 = vst [vmem:[%s2120 + $0x2d4] sm:%s2112] %v2483
                  %v2485 = vld [vmem:[%s2119 + $0xb60] sm:%s2112]
                  %2486 = vst [vmem:[%s2120 + $0x2d8] sm:%s2112] %v2485
                  %v2487 = vld [vmem:[%s2119 + $0xb70] sm:%s2112]
                  %2488 = vst [vmem:[%s2120 + $0x2dc] sm:%s2112] %v2487
                  %v2489 = vld [vmem:[%s2119 + $0xb80] sm:%s2112]
                  %2490 = vst [vmem:[%s2120 + $0x2e0] sm:%s2112] %v2489
                  %v2491 = vld [vmem:[%s2119 + $0xb90] sm:%s2112]
                  %2492 = vst [vmem:[%s2120 + $0x2e4] sm:%s2112] %v2491
                  %v2493 = vld [vmem:[%s2119 + $0xba0] sm:%s2112]
                  %2494 = vst [vmem:[%s2120 + $0x2e8] sm:%s2112] %v2493
                  %v2495 = vld [vmem:[%s2119 + $0xbb0] sm:%s2112]
                  %2496 = vst [vmem:[%s2120 + $0x2ec] sm:%s2112] %v2495
                  %v2497 = vld [vmem:[%s2119 + $0xbc0] sm:%s2112]
                  %2498 = vst [vmem:[%s2120 + $0x2f0] sm:%s2112] %v2497
                  %v2499 = vld [vmem:[%s2119 + $0xbd0] sm:%s2112]
                  %2500 = vst [vmem:[%s2120 + $0x2f4] sm:%s2112] %v2499
                  %v2501 = vld [vmem:[%s2119 + $0xbe0] sm:%s2112]
                  %2502 = vst [vmem:[%s2120 + $0x2f8] sm:%s2112] %v2501
                  %v2503 = vld [vmem:[%s2119 + $0xbf0] sm:%s2112]
                  %2504 = vst [vmem:[%s2120 + $0x2fc] sm:%s2112] %v2503
                  %v2505 = vld [vmem:[%s2119 + $0xc00] sm:%s2112]
                  %2506 = vst [vmem:[%s2120 + $0x300] sm:%s2112] %v2505
                  %v2507 = vld [vmem:[%s2119 + $0xc10] sm:%s2112]
                  %2508 = vst [vmem:[%s2120 + $0x304] sm:%s2112] %v2507
                  %v2509 = vld [vmem:[%s2119 + $0xc20] sm:%s2112]
                  %2510 = vst [vmem:[%s2120 + $0x308] sm:%s2112] %v2509
                  %v2511 = vld [vmem:[%s2119 + $0xc30] sm:%s2112]
                  %2512 = vst [vmem:[%s2120 + $0x30c] sm:%s2112] %v2511
                  %v2513 = vld [vmem:[%s2119 + $0xc40] sm:%s2112]
                  %2514 = vst [vmem:[%s2120 + $0x310] sm:%s2112] %v2513
                  %v2515 = vld [vmem:[%s2119 + $0xc50] sm:%s2112]
                  %2516 = vst [vmem:[%s2120 + $0x314] sm:%s2112] %v2515
                  %v2517 = vld [vmem:[%s2119 + $0xc60] sm:%s2112]
                  %2518 = vst [vmem:[%s2120 + $0x318] sm:%s2112] %v2517
                  %v2519 = vld [vmem:[%s2119 + $0xc70] sm:%s2112]
                  %2520 = vst [vmem:[%s2120 + $0x31c] sm:%s2112] %v2519
                  %v2521 = vld [vmem:[%s2119 + $0xc80] sm:%s2112]
                  %2522 = vst [vmem:[%s2120 + $0x320] sm:%s2112] %v2521
                  %v2523 = vld [vmem:[%s2119 + $0xc90] sm:%s2112]
                  %2524 = vst [vmem:[%s2120 + $0x324] sm:%s2112] %v2523
                  %v2525 = vld [vmem:[%s2119 + $0xca0] sm:%s2112]
                  %2526 = vst [vmem:[%s2120 + $0x328] sm:%s2112] %v2525
                  %v2527 = vld [vmem:[%s2119 + $0xcb0] sm:%s2112]
                  %2528 = vst [vmem:[%s2120 + $0x32c] sm:%s2112] %v2527
                  %v2529 = vld [vmem:[%s2119 + $0xcc0] sm:%s2112]
                  %2530 = vst [vmem:[%s2120 + $0x330] sm:%s2112] %v2529
                  %v2531 = vld [vmem:[%s2119 + $0xcd0] sm:%s2112]
                  %2532 = vst [vmem:[%s2120 + $0x334] sm:%s2112] %v2531
                  %v2533 = vld [vmem:[%s2119 + $0xce0] sm:%s2112]
                  %2534 = vst [vmem:[%s2120 + $0x338] sm:%s2112] %v2533
                  %v2535 = vld [vmem:[%s2119 + $0xcf0] sm:%s2112]
                  %2536 = vst [vmem:[%s2120 + $0x33c] sm:%s2112] %v2535
                  %v2537 = vld [vmem:[%s2119 + $0xd00] sm:%s2112]
                  %2538 = vst [vmem:[%s2120 + $0x340] sm:%s2112] %v2537
                  %v2539 = vld [vmem:[%s2119 + $0xd10] sm:%s2112]
                  %2540 = vst [vmem:[%s2120 + $0x344] sm:%s2112] %v2539
                  %v2541 = vld [vmem:[%s2119 + $0xd20] sm:%s2112]
                  %2542 = vst [vmem:[%s2120 + $0x348] sm:%s2112] %v2541
                  %v2543 = vld [vmem:[%s2119 + $0xd30] sm:%s2112]
                  %2544 = vst [vmem:[%s2120 + $0x34c] sm:%s2112] %v2543
                  %v2545 = vld [vmem:[%s2119 + $0xd40] sm:%s2112]
                  %2546 = vst [vmem:[%s2120 + $0x350] sm:%s2112] %v2545
                  %v2547 = vld [vmem:[%s2119 + $0xd50] sm:%s2112]
                  %2548 = vst [vmem:[%s2120 + $0x354] sm:%s2112] %v2547
                  %v2549 = vld [vmem:[%s2119 + $0xd60] sm:%s2112]
                  %2550 = vst [vmem:[%s2120 + $0x358] sm:%s2112] %v2549
                  %v2551 = vld [vmem:[%s2119 + $0xd70] sm:%s2112]
                  %2552 = vst [vmem:[%s2120 + $0x35c] sm:%s2112] %v2551
                  %v2553 = vld [vmem:[%s2119 + $0xd80] sm:%s2112]
                  %2554 = vst [vmem:[%s2120 + $0x360] sm:%s2112] %v2553
                  %v2555 = vld [vmem:[%s2119 + $0xd90] sm:%s2112]
                  %2556 = vst [vmem:[%s2120 + $0x364] sm:%s2112] %v2555
                  %v2557 = vld [vmem:[%s2119 + $0xda0] sm:%s2112]
                  %2558 = vst [vmem:[%s2120 + $0x368] sm:%s2112] %v2557
                  %v2559 = vld [vmem:[%s2119 + $0xdb0] sm:%s2112]
                  %2560 = vst [vmem:[%s2120 + $0x36c] sm:%s2112] %v2559
                  %v2561 = vld [vmem:[%s2119 + $0xdc0] sm:%s2112]
                  %2562 = vst [vmem:[%s2120 + $0x370] sm:%s2112] %v2561
                  %v2563 = vld [vmem:[%s2119 + $0xdd0] sm:%s2112]
                  %2564 = vst [vmem:[%s2120 + $0x374] sm:%s2112] %v2563
                  %v2565 = vld [vmem:[%s2119 + $0xde0] sm:%s2112]
                  %2566 = vst [vmem:[%s2120 + $0x378] sm:%s2112] %v2565
                  %v2567 = vld [vmem:[%s2119 + $0xdf0] sm:%s2112]
                  %2568 = vst [vmem:[%s2120 + $0x37c] sm:%s2112] %v2567
                  %v2569 = vld [vmem:[%s2119 + $0xe00] sm:%s2112]
                  %2570 = vst [vmem:[%s2120 + $0x380] sm:%s2112] %v2569
                  %v2571 = vld [vmem:[%s2119 + $0xe10] sm:%s2112]
                  %2572 = vst [vmem:[%s2120 + $0x384] sm:%s2112] %v2571
                  %v2573 = vld [vmem:[%s2119 + $0xe20] sm:%s2112]
                  %2574 = vst [vmem:[%s2120 + $0x388] sm:%s2112] %v2573
                  %v2575 = vld [vmem:[%s2119 + $0xe30] sm:%s2112]
                  %2576 = vst [vmem:[%s2120 + $0x38c] sm:%s2112] %v2575
                  %v2577 = vld [vmem:[%s2119 + $0xe40] sm:%s2112]
                  %2578 = vst [vmem:[%s2120 + $0x390] sm:%s2112] %v2577
                  %v2579 = vld [vmem:[%s2119 + $0xe50] sm:%s2112]
                  %2580 = vst [vmem:[%s2120 + $0x394] sm:%s2112] %v2579
                  %v2581 = vld [vmem:[%s2119 + $0xe60] sm:%s2112]
                  %2582 = vst [vmem:[%s2120 + $0x398] sm:%s2112] %v2581
                  %v2583 = vld [vmem:[%s2119 + $0xe70] sm:%s2112]
                  %2584 = vst [vmem:[%s2120 + $0x39c] sm:%s2112] %v2583
                  %v2585 = vld [vmem:[%s2119 + $0xe80] sm:%s2112]
                  %2586 = vst [vmem:[%s2120 + $0x3a0] sm:%s2112] %v2585
                  %v2587 = vld [vmem:[%s2119 + $0xe90] sm:%s2112]
                  %2588 = vst [vmem:[%s2120 + $0x3a4] sm:%s2112] %v2587
                  %v2589 = vld [vmem:[%s2119 + $0xea0] sm:%s2112]
                  %2590 = vst [vmem:[%s2120 + $0x3a8] sm:%s2112] %v2589
                  %v2591 = vld [vmem:[%s2119 + $0xeb0] sm:%s2112]
                  %2592 = vst [vmem:[%s2120 + $0x3ac] sm:%s2112] %v2591
                  %v2593 = vld [vmem:[%s2119 + $0xec0] sm:%s2112]
                  %2594 = vst [vmem:[%s2120 + $0x3b0] sm:%s2112] %v2593
                  %v2595 = vld [vmem:[%s2119 + $0xed0] sm:%s2112]
                  %2596 = vst [vmem:[%s2120 + $0x3b4] sm:%s2112] %v2595
                  %v2597 = vld [vmem:[%s2119 + $0xee0] sm:%s2112]
                  %2598 = vst [vmem:[%s2120 + $0x3b8] sm:%s2112] %v2597
                  %v2599 = vld [vmem:[%s2119 + $0xef0] sm:%s2112]
                  %2600 = vst [vmem:[%s2120 + $0x3bc] sm:%s2112] %v2599
                  %v2601 = vld [vmem:[%s2119 + $0xf00] sm:%s2112]
                  %2602 = vst [vmem:[%s2120 + $0x3c0] sm:%s2112] %v2601
                  %v2603 = vld [vmem:[%s2119 + $0xf10] sm:%s2112]
                  %2604 = vst [vmem:[%s2120 + $0x3c4] sm:%s2112] %v2603
                  %v2605 = vld [vmem:[%s2119 + $0xf20] sm:%s2112]
                  %2606 = vst [vmem:[%s2120 + $0x3c8] sm:%s2112] %v2605
                  %v2607 = vld [vmem:[%s2119 + $0xf30] sm:%s2112]
                  %2608 = vst [vmem:[%s2120 + $0x3cc] sm:%s2112] %v2607
                  %v2609 = vld [vmem:[%s2119 + $0xf40] sm:%s2112]
                  %2610 = vst [vmem:[%s2120 + $0x3d0] sm:%s2112] %v2609
                  %v2611 = vld [vmem:[%s2119 + $0xf50] sm:%s2112]
                  %2612 = vst [vmem:[%s2120 + $0x3d4] sm:%s2112] %v2611
                  %v2613 = vld [vmem:[%s2119 + $0xf60] sm:%s2112]
                  %2614 = vst [vmem:[%s2120 + $0x3d8] sm:%s2112] %v2613
                  %v2615 = vld [vmem:[%s2119 + $0xf70] sm:%s2112]
                  %2616 = vst [vmem:[%s2120 + $0x3dc] sm:%s2112] %v2615
                  %v2617 = vld [vmem:[%s2119 + $0xf80] sm:%s2112]
                  %2618 = vst [vmem:[%s2120 + $0x3e0] sm:%s2112] %v2617
                  %v2619 = vld [vmem:[%s2119 + $0xf90] sm:%s2112]
                  %2620 = vst [vmem:[%s2120 + $0x3e4] sm:%s2112] %v2619
                  %v2621 = vld [vmem:[%s2119 + $0xfa0] sm:%s2112]
                  %2622 = vst [vmem:[%s2120 + $0x3e8] sm:%s2112] %v2621
                  %v2623 = vld [vmem:[%s2119 + $0xfb0] sm:%s2112]
                  %2624 = vst [vmem:[%s2120 + $0x3ec] sm:%s2112] %v2623
                  %v2625 = vld [vmem:[%s2119 + $0xfc0] sm:%s2112]
                  %2626 = vst [vmem:[%s2120 + $0x3f0] sm:%s2112] %v2625
                  %v2627 = vld [vmem:[%s2119 + $0xfd0] sm:%s2112]
                  %2628 = vst [vmem:[%s2120 + $0x3f4] sm:%s2112] %v2627
                  %v2629 = vld [vmem:[%s2119 + $0xfe0] sm:%s2112]
                  %2630 = vst [vmem:[%s2120 + $0x3f8] sm:%s2112] %v2629
                  %v2631 = vld [vmem:[%s2119 + $0xff0] sm:%s2112]
                  %2632 = vst [vmem:[%s2120 + $0x3fc] sm:%s2112] %v2631
                  %v2633 = vld [vmem:[%s2119 + $0x1000] sm:%s2112]
                  %2634 = vst [vmem:[%s2120 + $0x400] sm:%s2112] %v2633
                  %v2635 = vld [vmem:[%s2119 + $0x1010] sm:%s2112]
                  %2636 = vst [vmem:[%s2120 + $0x404] sm:%s2112] %v2635
                  %v2637 = vld [vmem:[%s2119 + $0x1020] sm:%s2112]
                  %2638 = vst [vmem:[%s2120 + $0x408] sm:%s2112] %v2637
                  %v2639 = vld [vmem:[%s2119 + $0x1030] sm:%s2112]
                  %2640 = vst [vmem:[%s2120 + $0x40c] sm:%s2112] %v2639
                  %v2641 = vld [vmem:[%s2119 + $0x1040] sm:%s2112]
                  %2642 = vst [vmem:[%s2120 + $0x410] sm:%s2112] %v2641
                  %v2643 = vld [vmem:[%s2119 + $0x1050] sm:%s2112]
                  %2644 = vst [vmem:[%s2120 + $0x414] sm:%s2112] %v2643
                  %v2645 = vld [vmem:[%s2119 + $0x1060] sm:%s2112]
                  %2646 = vst [vmem:[%s2120 + $0x418] sm:%s2112] %v2645
                  %v2647 = vld [vmem:[%s2119 + $0x1070] sm:%s2112]
                  %2648 = vst [vmem:[%s2120 + $0x41c] sm:%s2112] %v2647
                  %v2649 = vld [vmem:[%s2119 + $0x1080] sm:%s2112]
                  %2650 = vst [vmem:[%s2120 + $0x420] sm:%s2112] %v2649
                  %v2651 = vld [vmem:[%s2119 + $0x1090] sm:%s2112]
                  %2652 = vst [vmem:[%s2120 + $0x424] sm:%s2112] %v2651
                  %v2653 = vld [vmem:[%s2119 + $0x10a0] sm:%s2112]
                  %2654 = vst [vmem:[%s2120 + $0x428] sm:%s2112] %v2653
                  %v2655 = vld [vmem:[%s2119 + $0x10b0] sm:%s2112]
                  %2656 = vst [vmem:[%s2120 + $0x42c] sm:%s2112] %v2655
                  %v2657 = vld [vmem:[%s2119 + $0x10c0] sm:%s2112]
                  %2658 = vst [vmem:[%s2120 + $0x430] sm:%s2112] %v2657
                  %v2659 = vld [vmem:[%s2119 + $0x10d0] sm:%s2112]
                  %2660 = vst [vmem:[%s2120 + $0x434] sm:%s2112] %v2659
                  %v2661 = vld [vmem:[%s2119 + $0x10e0] sm:%s2112]
                  %2662 = vst [vmem:[%s2120 + $0x438] sm:%s2112] %v2661
                  %v2663 = vld [vmem:[%s2119 + $0x10f0] sm:%s2112]
                  %2664 = vst [vmem:[%s2120 + $0x43c] sm:%s2112] %v2663
                  %v2665 = vld [vmem:[%s2119 + $0x1100] sm:%s2112]
                  %2666 = vst [vmem:[%s2120 + $0x440] sm:%s2112] %v2665
                  %v2667 = vld [vmem:[%s2119 + $0x1110] sm:%s2112]
                  %2668 = vst [vmem:[%s2120 + $0x444] sm:%s2112] %v2667
                  %v2669 = vld [vmem:[%s2119 + $0x1120] sm:%s2112]
                  %2670 = vst [vmem:[%s2120 + $0x448] sm:%s2112] %v2669
                  %v2671 = vld [vmem:[%s2119 + $0x1130] sm:%s2112]
                  %2672 = vst [vmem:[%s2120 + $0x44c] sm:%s2112] %v2671
                  %v2673 = vld [vmem:[%s2119 + $0x1140] sm:%s2112]
                  %2674 = vst [vmem:[%s2120 + $0x450] sm:%s2112] %v2673
                  %v2675 = vld [vmem:[%s2119 + $0x1150] sm:%s2112]
                  %2676 = vst [vmem:[%s2120 + $0x454] sm:%s2112] %v2675
                  %v2677 = vld [vmem:[%s2119 + $0x1160] sm:%s2112]
                  %2678 = vst [vmem:[%s2120 + $0x458] sm:%s2112] %v2677
                  %v2679 = vld [vmem:[%s2119 + $0x1170] sm:%s2112]
                  %2680 = vst [vmem:[%s2120 + $0x45c] sm:%s2112] %v2679
                  %v2681 = vld [vmem:[%s2119 + $0x1180] sm:%s2112]
                  %2682 = vst [vmem:[%s2120 + $0x460] sm:%s2112] %v2681
                  %v2683 = vld [vmem:[%s2119 + $0x1190] sm:%s2112]
                  %2684 = vst [vmem:[%s2120 + $0x464] sm:%s2112] %v2683
                  %v2685 = vld [vmem:[%s2119 + $0x11a0] sm:%s2112]
                  %2686 = vst [vmem:[%s2120 + $0x468] sm:%s2112] %v2685
                  %v2687 = vld [vmem:[%s2119 + $0x11b0] sm:%s2112]
                  %2688 = vst [vmem:[%s2120 + $0x46c] sm:%s2112] %v2687
                  %v2689 = vld [vmem:[%s2119 + $0x11c0] sm:%s2112]
                  %2690 = vst [vmem:[%s2120 + $0x470] sm:%s2112] %v2689
                  %v2691 = vld [vmem:[%s2119 + $0x11d0] sm:%s2112]
                  %2692 = vst [vmem:[%s2120 + $0x474] sm:%s2112] %v2691
                  %v2693 = vld [vmem:[%s2119 + $0x11e0] sm:%s2112]
                  %2694 = vst [vmem:[%s2120 + $0x478] sm:%s2112] %v2693
                  %v2695 = vld [vmem:[%s2119 + $0x11f0] sm:%s2112]
                  %2696 = vst [vmem:[%s2120 + $0x47c] sm:%s2112] %v2695
                  %v2697 = vld [vmem:[%s2119 + $0x1200] sm:%s2112]
                  %2698 = vst [vmem:[%s2120 + $0x480] sm:%s2112] %v2697
                  %v2699 = vld [vmem:[%s2119 + $0x1210] sm:%s2112]
                  %2700 = vst [vmem:[%s2120 + $0x484] sm:%s2112] %v2699
                  %v2701 = vld [vmem:[%s2119 + $0x1220] sm:%s2112]
                  %2702 = vst [vmem:[%s2120 + $0x488] sm:%s2112] %v2701
                  %v2703 = vld [vmem:[%s2119 + $0x1230] sm:%s2112]
                  %2704 = vst [vmem:[%s2120 + $0x48c] sm:%s2112] %v2703
                  %v2705 = vld [vmem:[%s2119 + $0x1240] sm:%s2112]
                  %2706 = vst [vmem:[%s2120 + $0x490] sm:%s2112] %v2705
                  %v2707 = vld [vmem:[%s2119 + $0x1250] sm:%s2112]
                  %2708 = vst [vmem:[%s2120 + $0x494] sm:%s2112] %v2707
                  %v2709 = vld [vmem:[%s2119 + $0x1260] sm:%s2112]
                  %2710 = vst [vmem:[%s2120 + $0x498] sm:%s2112] %v2709
                  %v2711 = vld [vmem:[%s2119 + $0x1270] sm:%s2112]
                  %2712 = vst [vmem:[%s2120 + $0x49c] sm:%s2112] %v2711
                  %v2713 = vld [vmem:[%s2119 + $0x1280] sm:%s2112]
                  %2714 = vst [vmem:[%s2120 + $0x4a0] sm:%s2112] %v2713
                  %v2715 = vld [vmem:[%s2119 + $0x1290] sm:%s2112]
                  %2716 = vst [vmem:[%s2120 + $0x4a4] sm:%s2112] %v2715
                  %v2717 = vld [vmem:[%s2119 + $0x12a0] sm:%s2112]
                  %2718 = vst [vmem:[%s2120 + $0x4a8] sm:%s2112] %v2717
                  %v2719 = vld [vmem:[%s2119 + $0x12b0] sm:%s2112]
                  %2720 = vst [vmem:[%s2120 + $0x4ac] sm:%s2112] %v2719
                  %v2721 = vld [vmem:[%s2119 + $0x12c0] sm:%s2112]
                  %2722 = vst [vmem:[%s2120 + $0x4b0] sm:%s2112] %v2721
                  %v2723 = vld [vmem:[%s2119 + $0x12d0] sm:%s2112]
                  %2724 = vst [vmem:[%s2120 + $0x4b4] sm:%s2112] %v2723
                  %v2725 = vld [vmem:[%s2119 + $0x12e0] sm:%s2112]
                  %2726 = vst [vmem:[%s2120 + $0x4b8] sm:%s2112] %v2725
                  %v2727 = vld [vmem:[%s2119 + $0x12f0] sm:%s2112]
                  %2728 = vst [vmem:[%s2120 + $0x4bc] sm:%s2112] %v2727
                  %v2729 = vld [vmem:[%s2119 + $0x1300] sm:%s2112]
                  %2730 = vst [vmem:[%s2120 + $0x4c0] sm:%s2112] %v2729
                  %v2731 = vld [vmem:[%s2119 + $0x1310] sm:%s2112]
                  %2732 = vst [vmem:[%s2120 + $0x4c4] sm:%s2112] %v2731
                  %v2733 = vld [vmem:[%s2119 + $0x1320] sm:%s2112]
                  %2734 = vst [vmem:[%s2120 + $0x4c8] sm:%s2112] %v2733
                  %v2735 = vld [vmem:[%s2119 + $0x1330] sm:%s2112]
                  %2736 = vst [vmem:[%s2120 + $0x4cc] sm:%s2112] %v2735
                  %v2737 = vld [vmem:[%s2119 + $0x1340] sm:%s2112]
                  %2738 = vst [vmem:[%s2120 + $0x4d0] sm:%s2112] %v2737
                  %v2739 = vld [vmem:[%s2119 + $0x1350] sm:%s2112]
                  %2740 = vst [vmem:[%s2120 + $0x4d4] sm:%s2112] %v2739
                  %v2741 = vld [vmem:[%s2119 + $0x1360] sm:%s2112]
                  %2742 = vst [vmem:[%s2120 + $0x4d8] sm:%s2112] %v2741
                  %v2743 = vld [vmem:[%s2119 + $0x1370] sm:%s2112]
                  %2744 = vst [vmem:[%s2120 + $0x4dc] sm:%s2112] %v2743
                  %v2745 = vld [vmem:[%s2119 + $0x1380] sm:%s2112]
                  %2746 = vst [vmem:[%s2120 + $0x4e0] sm:%s2112] %v2745
                  %v2747 = vld [vmem:[%s2119 + $0x1390] sm:%s2112]
                  %2748 = vst [vmem:[%s2120 + $0x4e4] sm:%s2112] %v2747
                  %v2749 = vld [vmem:[%s2119 + $0x13a0] sm:%s2112]
                  %2750 = vst [vmem:[%s2120 + $0x4e8] sm:%s2112] %v2749
                  %v2751 = vld [vmem:[%s2119 + $0x13b0] sm:%s2112]
                  %2752 = vst [vmem:[%s2120 + $0x4ec] sm:%s2112] %v2751
                  %v2753 = vld [vmem:[%s2119 + $0x13c0] sm:%s2112]
                  %2754 = vst [vmem:[%s2120 + $0x4f0] sm:%s2112] %v2753
                  %v2755 = vld [vmem:[%s2119 + $0x13d0] sm:%s2112]
                  %2756 = vst [vmem:[%s2120 + $0x4f4] sm:%s2112] %v2755
                  %v2757 = vld [vmem:[%s2119 + $0x13e0] sm:%s2112]
                  %2758 = vst [vmem:[%s2120 + $0x4f8] sm:%s2112] %v2757
                  %v2759 = vld [vmem:[%s2119 + $0x13f0] sm:%s2112]
                  %2760 = vst [vmem:[%s2120 + $0x4fc] sm:%s2112] %v2759
                $region70: #{encoder_fwd.8} parent=57 // loop_footer
                  %s2118 = sadd.s32 1, %s2114
                $region71: #{encoder_fwd.8} parent=57 // loop_footer_branch
                  %2113 = sbr.rel target = $region67
                $region72: #{encoder_fwd.8} parent=57 // loop_exit
                  _
              $region58: #{encoder_fwd.8} parent=31 // pred_fallthru
                _
            $region32: #{encoder_fwd.8} parent=27 // pred_fallthru
              _
            // Predicated region
            $region33: #{encoder_fwd.8} parent=27 // pred_check
              _
            $region34: #{encoder_fwd.8} parent=27 // pred_check_branch
              %144 = sbr.rel (0) target = $region36
            $region35: #{encoder_fwd.8} parent=27 // pred_region
              %s146 = ssub.s32 16, 1
              loop: start=0, step=1, limit=1
              $region37: #{encoder_fwd.8} parent=35 // loop_pre_header
                _
              $region38: #{encoder_fwd.8} parent=35 // loop_header
                %s148 = sphi 0, %s152
                %p149 = scmp.ge.s32.totalorder %s148, 1
                %s153 = sphi %s138, %s138
                %s154 = sphi %s136, %s136
              $region39: #{encoder_fwd.8} parent=35 // loop_header_branch
                %151 = sbr.rel (%p149) target = $region43
              $region40: #{encoder_fwd.8} parent=35 // loop_body
                %v155 = vld [vmem:[%s153] sm:%s146]
                %156 = vst [vmem:[%s154] sm:%s146] %v155
                %v157 = vld [vmem:[%s153 + $0x10] sm:%s146]
                %158 = vst [vmem:[%s154 + $0x4] sm:%s146] %v157
                %v159 = vld [vmem:[%s153 + $0x20] sm:%s146]
                %160 = vst [vmem:[%s154 + $0x8] sm:%s146] %v159
                %v161 = vld [vmem:[%s153 + $0x30] sm:%s146]
                %162 = vst [vmem:[%s154 + $0xc] sm:%s146] %v161
                %v163 = vld [vmem:[%s153 + $0x40] sm:%s146]
                %164 = vst [vmem:[%s154 + $0x10] sm:%s146] %v163
                %v165 = vld [vmem:[%s153 + $0x50] sm:%s146]
                %166 = vst [vmem:[%s154 + $0x14] sm:%s146] %v165
                %v167 = vld [vmem:[%s153 + $0x60] sm:%s146]
                %168 = vst [vmem:[%s154 + $0x18] sm:%s146] %v167
                %v169 = vld [vmem:[%s153 + $0x70] sm:%s146]
                %170 = vst [vmem:[%s154 + $0x1c] sm:%s146] %v169
                %v171 = vld [vmem:[%s153 + $0x80] sm:%s146]
                %172 = vst [vmem:[%s154 + $0x20] sm:%s146] %v171
                %v173 = vld [vmem:[%s153 + $0x90] sm:%s146]
                %174 = vst [vmem:[%s154 + $0x24] sm:%s146] %v173
                %v175 = vld [vmem:[%s153 + $0xa0] sm:%s146]
                %176 = vst [vmem:[%s154 + $0x28] sm:%s146] %v175
                %v177 = vld [vmem:[%s153 + $0xb0] sm:%s146]
                %178 = vst [vmem:[%s154 + $0x2c] sm:%s146] %v177
                %v179 = vld [vmem:[%s153 + $0xc0] sm:%s146]
                %180 = vst [vmem:[%s154 + $0x30] sm:%s146] %v179
                %v181 = vld [vmem:[%s153 + $0xd0] sm:%s146]
                %182 = vst [vmem:[%s154 + $0x34] sm:%s146] %v181
                %v183 = vld [vmem:[%s153 + $0xe0] sm:%s146]
                %184 = vst [vmem:[%s154 + $0x38] sm:%s146] %v183
                %v185 = vld [vmem:[%s153 + $0xf0] sm:%s146]
                %186 = vst [vmem:[%s154 + $0x3c] sm:%s146] %v185
                %v187 = vld [vmem:[%s153 + $0x100] sm:%s146]
                %188 = vst [vmem:[%s154 + $0x40] sm:%s146] %v187
                %v189 = vld [vmem:[%s153 + $0x110] sm:%s146]
                %190 = vst [vmem:[%s154 + $0x44] sm:%s146] %v189
                %v191 = vld [vmem:[%s153 + $0x120] sm:%s146]
                %192 = vst [vmem:[%s154 + $0x48] sm:%s146] %v191
                %v193 = vld [vmem:[%s153 + $0x130] sm:%s146]
                %194 = vst [vmem:[%s154 + $0x4c] sm:%s146] %v193
                %v195 = vld [vmem:[%s153 + $0x140] sm:%s146]
                %196 = vst [vmem:[%s154 + $0x50] sm:%s146] %v195
                %v197 = vld [vmem:[%s153 + $0x150] sm:%s146]
                %198 = vst [vmem:[%s154 + $0x54] sm:%s146] %v197
                %v199 = vld [vmem:[%s153 + $0x160] sm:%s146]
                %200 = vst [vmem:[%s154 + $0x58] sm:%s146] %v199
                %v201 = vld [vmem:[%s153 + $0x170] sm:%s146]
                %202 = vst [vmem:[%s154 + $0x5c] sm:%s146] %v201
                %v203 = vld [vmem:[%s153 + $0x180] sm:%s146]
                %204 = vst [vmem:[%s154 + $0x60] sm:%s146] %v203
                %v205 = vld [vmem:[%s153 + $0x190] sm:%s146]
                %206 = vst [vmem:[%s154 + $0x64] sm:%s146] %v205
                %v207 = vld [vmem:[%s153 + $0x1a0] sm:%s146]
                %208 = vst [vmem:[%s154 + $0x68] sm:%s146] %v207
                %v209 = vld [vmem:[%s153 + $0x1b0] sm:%s146]
                %210 = vst [vmem:[%s154 + $0x6c] sm:%s146] %v209
                %v211 = vld [vmem:[%s153 + $0x1c0] sm:%s146]
                %212 = vst [vmem:[%s154 + $0x70] sm:%s146] %v211
                %v213 = vld [vmem:[%s153 + $0x1d0] sm:%s146]
                %214 = vst [vmem:[%s154 + $0x74] sm:%s146] %v213
                %v215 = vld [vmem:[%s153 + $0x1e0] sm:%s146]
                %216 = vst [vmem:[%s154 + $0x78] sm:%s146] %v215
                %v217 = vld [vmem:[%s153 + $0x1f0] sm:%s146]
                %218 = vst [vmem:[%s154 + $0x7c] sm:%s146] %v217
                %v219 = vld [vmem:[%s153 + $0x200] sm:%s146]
                %220 = vst [vmem:[%s154 + $0x80] sm:%s146] %v219
                %v221 = vld [vmem:[%s153 + $0x210] sm:%s146]
                %222 = vst [vmem:[%s154 + $0x84] sm:%s146] %v221
                %v223 = vld [vmem:[%s153 + $0x220] sm:%s146]
                %224 = vst [vmem:[%s154 + $0x88] sm:%s146] %v223
                %v225 = vld [vmem:[%s153 + $0x230] sm:%s146]
                %226 = vst [vmem:[%s154 + $0x8c] sm:%s146] %v225
                %v227 = vld [vmem:[%s153 + $0x240] sm:%s146]
                %228 = vst [vmem:[%s154 + $0x90] sm:%s146] %v227
                %v229 = vld [vmem:[%s153 + $0x250] sm:%s146]
                %230 = vst [vmem:[%s154 + $0x94] sm:%s146] %v229
                %v231 = vld [vmem:[%s153 + $0x260] sm:%s146]
                %232 = vst [vmem:[%s154 + $0x98] sm:%s146] %v231
                %v233 = vld [vmem:[%s153 + $0x270] sm:%s146]
                %234 = vst [vmem:[%s154 + $0x9c] sm:%s146] %v233
                %v235 = vld [vmem:[%s153 + $0x280] sm:%s146]
                %236 = vst [vmem:[%s154 + $0xa0] sm:%s146] %v235
                %v237 = vld [vmem:[%s153 + $0x290] sm:%s146]
                %238 = vst [vmem:[%s154 + $0xa4] sm:%s146] %v237
                %v239 = vld [vmem:[%s153 + $0x2a0] sm:%s146]
                %240 = vst [vmem:[%s154 + $0xa8] sm:%s146] %v239
                %v241 = vld [vmem:[%s153 + $0x2b0] sm:%s146]
                %242 = vst [vmem:[%s154 + $0xac] sm:%s146] %v241
                %v243 = vld [vmem:[%s153 + $0x2c0] sm:%s146]
                %244 = vst [vmem:[%s154 + $0xb0] sm:%s146] %v243
                %v245 = vld [vmem:[%s153 + $0x2d0] sm:%s146]
                %246 = vst [vmem:[%s154 + $0xb4] sm:%s146] %v245
                %v247 = vld [vmem:[%s153 + $0x2e0] sm:%s146]
                %248 = vst [vmem:[%s154 + $0xb8] sm:%s146] %v247
                %v249 = vld [vmem:[%s153 + $0x2f0] sm:%s146]
                %250 = vst [vmem:[%s154 + $0xbc] sm:%s146] %v249
                %v251 = vld [vmem:[%s153 + $0x300] sm:%s146]
                %252 = vst [vmem:[%s154 + $0xc0] sm:%s146] %v251
                %v253 = vld [vmem:[%s153 + $0x310] sm:%s146]
                %254 = vst [vmem:[%s154 + $0xc4] sm:%s146] %v253
                %v255 = vld [vmem:[%s153 + $0x320] sm:%s146]
                %256 = vst [vmem:[%s154 + $0xc8] sm:%s146] %v255
                %v257 = vld [vmem:[%s153 + $0x330] sm:%s146]
                %258 = vst [vmem:[%s154 + $0xcc] sm:%s146] %v257
                %v259 = vld [vmem:[%s153 + $0x340] sm:%s146]
                %260 = vst [vmem:[%s154 + $0xd0] sm:%s146] %v259
                %v261 = vld [vmem:[%s153 + $0x350] sm:%s146]
                %262 = vst [vmem:[%s154 + $0xd4] sm:%s146] %v261
                %v263 = vld [vmem:[%s153 + $0x360] sm:%s146]
                %264 = vst [vmem:[%s154 + $0xd8] sm:%s146] %v263
                %v265 = vld [vmem:[%s153 + $0x370] sm:%s146]
                %266 = vst [vmem:[%s154 + $0xdc] sm:%s146] %v265
                %v267 = vld [vmem:[%s153 + $0x380] sm:%s146]
                %268 = vst [vmem:[%s154 + $0xe0] sm:%s146] %v267
                %v269 = vld [vmem:[%s153 + $0x390] sm:%s146]
                %270 = vst [vmem:[%s154 + $0xe4] sm:%s146] %v269
                %v271 = vld [vmem:[%s153 + $0x3a0] sm:%s146]
                %272 = vst [vmem:[%s154 + $0xe8] sm:%s146] %v271
                %v273 = vld [vmem:[%s153 + $0x3b0] sm:%s146]
                %274 = vst [vmem:[%s154 + $0xec] sm:%s146] %v273
                %v275 = vld [vmem:[%s153 + $0x3c0] sm:%s146]
                %276 = vst [vmem:[%s154 + $0xf0] sm:%s146] %v275
                %v277 = vld [vmem:[%s153 + $0x3d0] sm:%s146]
                %278 = vst [vmem:[%s154 + $0xf4] sm:%s146] %v277
                %v279 = vld [vmem:[%s153 + $0x3e0] sm:%s146]
                %280 = vst [vmem:[%s154 + $0xf8] sm:%s146] %v279
                %v281 = vld [vmem:[%s153 + $0x3f0] sm:%s146]
                %282 = vst [vmem:[%s154 + $0xfc] sm:%s146] %v281
                %v283 = vld [vmem:[%s153 + $0x400] sm:%s146]
                %284 = vst [vmem:[%s154 + $0x100] sm:%s146] %v283
                %v285 = vld [vmem:[%s153 + $0x410] sm:%s146]
                %286 = vst [vmem:[%s154 + $0x104] sm:%s146] %v285
                %v287 = vld [vmem:[%s153 + $0x420] sm:%s146]
                %288 = vst [vmem:[%s154 + $0x108] sm:%s146] %v287
                %v289 = vld [vmem:[%s153 + $0x430] sm:%s146]
                %290 = vst [vmem:[%s154 + $0x10c] sm:%s146] %v289
                %v291 = vld [vmem:[%s153 + $0x440] sm:%s146]
                %292 = vst [vmem:[%s154 + $0x110] sm:%s146] %v291
                %v293 = vld [vmem:[%s153 + $0x450] sm:%s146]
                %294 = vst [vmem:[%s154 + $0x114] sm:%s146] %v293
                %v295 = vld [vmem:[%s153 + $0x460] sm:%s146]
                %296 = vst [vmem:[%s154 + $0x118] sm:%s146] %v295
                %v297 = vld [vmem:[%s153 + $0x470] sm:%s146]
                %298 = vst [vmem:[%s154 + $0x11c] sm:%s146] %v297
                %v299 = vld [vmem:[%s153 + $0x480] sm:%s146]
                %300 = vst [vmem:[%s154 + $0x120] sm:%s146] %v299
                %v301 = vld [vmem:[%s153 + $0x490] sm:%s146]
                %302 = vst [vmem:[%s154 + $0x124] sm:%s146] %v301
                %v303 = vld [vmem:[%s153 + $0x4a0] sm:%s146]
                %304 = vst [vmem:[%s154 + $0x128] sm:%s146] %v303
                %v305 = vld [vmem:[%s153 + $0x4b0] sm:%s146]
                %306 = vst [vmem:[%s154 + $0x12c] sm:%s146] %v305
                %v307 = vld [vmem:[%s153 + $0x4c0] sm:%s146]
                %308 = vst [vmem:[%s154 + $0x130] sm:%s146] %v307
                %v309 = vld [vmem:[%s153 + $0x4d0] sm:%s146]
                %310 = vst [vmem:[%s154 + $0x134] sm:%s146] %v309
                %v311 = vld [vmem:[%s153 + $0x4e0] sm:%s146]
                %312 = vst [vmem:[%s154 + $0x138] sm:%s146] %v311
                %v313 = vld [vmem:[%s153 + $0x4f0] sm:%s146]
                %314 = vst [vmem:[%s154 + $0x13c] sm:%s146] %v313
                %v315 = vld [vmem:[%s153 + $0x500] sm:%s146]
                %316 = vst [vmem:[%s154 + $0x140] sm:%s146] %v315
                %v317 = vld [vmem:[%s153 + $0x510] sm:%s146]
                %318 = vst [vmem:[%s154 + $0x144] sm:%s146] %v317
                %v319 = vld [vmem:[%s153 + $0x520] sm:%s146]
                %320 = vst [vmem:[%s154 + $0x148] sm:%s146] %v319
                %v321 = vld [vmem:[%s153 + $0x530] sm:%s146]
                %322 = vst [vmem:[%s154 + $0x14c] sm:%s146] %v321
                %v323 = vld [vmem:[%s153 + $0x540] sm:%s146]
                %324 = vst [vmem:[%s154 + $0x150] sm:%s146] %v323
                %v325 = vld [vmem:[%s153 + $0x550] sm:%s146]
                %326 = vst [vmem:[%s154 + $0x154] sm:%s146] %v325
                %v327 = vld [vmem:[%s153 + $0x560] sm:%s146]
                %328 = vst [vmem:[%s154 + $0x158] sm:%s146] %v327
                %v329 = vld [vmem:[%s153 + $0x570] sm:%s146]
                %330 = vst [vmem:[%s154 + $0x15c] sm:%s146] %v329
                %v331 = vld [vmem:[%s153 + $0x580] sm:%s146]
                %332 = vst [vmem:[%s154 + $0x160] sm:%s146] %v331
                %v333 = vld [vmem:[%s153 + $0x590] sm:%s146]
                %334 = vst [vmem:[%s154 + $0x164] sm:%s146] %v333
                %v335 = vld [vmem:[%s153 + $0x5a0] sm:%s146]
                %336 = vst [vmem:[%s154 + $0x168] sm:%s146] %v335
                %v337 = vld [vmem:[%s153 + $0x5b0] sm:%s146]
                %338 = vst [vmem:[%s154 + $0x16c] sm:%s146] %v337
                %v339 = vld [vmem:[%s153 + $0x5c0] sm:%s146]
                %340 = vst [vmem:[%s154 + $0x170] sm:%s146] %v339
                %v341 = vld [vmem:[%s153 + $0x5d0] sm:%s146]
                %342 = vst [vmem:[%s154 + $0x174] sm:%s146] %v341
                %v343 = vld [vmem:[%s153 + $0x5e0] sm:%s146]
                %344 = vst [vmem:[%s154 + $0x178] sm:%s146] %v343
                %v345 = vld [vmem:[%s153 + $0x5f0] sm:%s146]
                %346 = vst [vmem:[%s154 + $0x17c] sm:%s146] %v345
                %v347 = vld [vmem:[%s153 + $0x600] sm:%s146]
                %348 = vst [vmem:[%s154 + $0x180] sm:%s146] %v347
                %v349 = vld [vmem:[%s153 + $0x610] sm:%s146]
                %350 = vst [vmem:[%s154 + $0x184] sm:%s146] %v349
                %v351 = vld [vmem:[%s153 + $0x620] sm:%s146]
                %352 = vst [vmem:[%s154 + $0x188] sm:%s146] %v351
                %v353 = vld [vmem:[%s153 + $0x630] sm:%s146]
                %354 = vst [vmem:[%s154 + $0x18c] sm:%s146] %v353
                %v355 = vld [vmem:[%s153 + $0x640] sm:%s146]
                %356 = vst [vmem:[%s154 + $0x190] sm:%s146] %v355
                %v357 = vld [vmem:[%s153 + $0x650] sm:%s146]
                %358 = vst [vmem:[%s154 + $0x194] sm:%s146] %v357
                %v359 = vld [vmem:[%s153 + $0x660] sm:%s146]
                %360 = vst [vmem:[%s154 + $0x198] sm:%s146] %v359
                %v361 = vld [vmem:[%s153 + $0x670] sm:%s146]
                %362 = vst [vmem:[%s154 + $0x19c] sm:%s146] %v361
                %v363 = vld [vmem:[%s153 + $0x680] sm:%s146]
                %364 = vst [vmem:[%s154 + $0x1a0] sm:%s146] %v363
                %v365 = vld [vmem:[%s153 + $0x690] sm:%s146]
                %366 = vst [vmem:[%s154 + $0x1a4] sm:%s146] %v365
                %v367 = vld [vmem:[%s153 + $0x6a0] sm:%s146]
                %368 = vst [vmem:[%s154 + $0x1a8] sm:%s146] %v367
                %v369 = vld [vmem:[%s153 + $0x6b0] sm:%s146]
                %370 = vst [vmem:[%s154 + $0x1ac] sm:%s146] %v369
                %v371 = vld [vmem:[%s153 + $0x6c0] sm:%s146]
                %372 = vst [vmem:[%s154 + $0x1b0] sm:%s146] %v371
                %v373 = vld [vmem:[%s153 + $0x6d0] sm:%s146]
                %374 = vst [vmem:[%s154 + $0x1b4] sm:%s146] %v373
                %v375 = vld [vmem:[%s153 + $0x6e0] sm:%s146]
                %376 = vst [vmem:[%s154 + $0x1b8] sm:%s146] %v375
                %v377 = vld [vmem:[%s153 + $0x6f0] sm:%s146]
                %378 = vst [vmem:[%s154 + $0x1bc] sm:%s146] %v377
                %v379 = vld [vmem:[%s153 + $0x700] sm:%s146]
                %380 = vst [vmem:[%s154 + $0x1c0] sm:%s146] %v379
                %v381 = vld [vmem:[%s153 + $0x710] sm:%s146]
                %382 = vst [vmem:[%s154 + $0x1c4] sm:%s146] %v381
                %v383 = vld [vmem:[%s153 + $0x720] sm:%s146]
                %384 = vst [vmem:[%s154 + $0x1c8] sm:%s146] %v383
                %v385 = vld [vmem:[%s153 + $0x730] sm:%s146]
                %386 = vst [vmem:[%s154 + $0x1cc] sm:%s146] %v385
                %v387 = vld [vmem:[%s153 + $0x740] sm:%s146]
                %388 = vst [vmem:[%s154 + $0x1d0] sm:%s146] %v387
                %v389 = vld [vmem:[%s153 + $0x750] sm:%s146]
                %390 = vst [vmem:[%s154 + $0x1d4] sm:%s146] %v389
                %v391 = vld [vmem:[%s153 + $0x760] sm:%s146]
                %392 = vst [vmem:[%s154 + $0x1d8] sm:%s146] %v391
                %v393 = vld [vmem:[%s153 + $0x770] sm:%s146]
                %394 = vst [vmem:[%s154 + $0x1dc] sm:%s146] %v393
                %v395 = vld [vmem:[%s153 + $0x780] sm:%s146]
                %396 = vst [vmem:[%s154 + $0x1e0] sm:%s146] %v395
                %v397 = vld [vmem:[%s153 + $0x790] sm:%s146]
                %398 = vst [vmem:[%s154 + $0x1e4] sm:%s146] %v397
                %v399 = vld [vmem:[%s153 + $0x7a0] sm:%s146]
                %400 = vst [vmem:[%s154 + $0x1e8] sm:%s146] %v399
                %v401 = vld [vmem:[%s153 + $0x7b0] sm:%s146]
                %402 = vst [vmem:[%s154 + $0x1ec] sm:%s146] %v401
                %v403 = vld [vmem:[%s153 + $0x7c0] sm:%s146]
                %404 = vst [vmem:[%s154 + $0x1f0] sm:%s146] %v403
                %v405 = vld [vmem:[%s153 + $0x7d0] sm:%s146]
                %406 = vst [vmem:[%s154 + $0x1f4] sm:%s146] %v405
                %v407 = vld [vmem:[%s153 + $0x7e0] sm:%s146]
                %408 = vst [vmem:[%s154 + $0x1f8] sm:%s146] %v407
                %v409 = vld [vmem:[%s153 + $0x7f0] sm:%s146]
                %410 = vst [vmem:[%s154 + $0x1fc] sm:%s146] %v409
                %v411 = vld [vmem:[%s153 + $0x800] sm:%s146]
                %412 = vst [vmem:[%s154 + $0x200] sm:%s146] %v411
                %v413 = vld [vmem:[%s153 + $0x810] sm:%s146]
                %414 = vst [vmem:[%s154 + $0x204] sm:%s146] %v413
                %v415 = vld [vmem:[%s153 + $0x820] sm:%s146]
                %416 = vst [vmem:[%s154 + $0x208] sm:%s146] %v415
                %v417 = vld [vmem:[%s153 + $0x830] sm:%s146]
                %418 = vst [vmem:[%s154 + $0x20c] sm:%s146] %v417
                %v419 = vld [vmem:[%s153 + $0x840] sm:%s146]
                %420 = vst [vmem:[%s154 + $0x210] sm:%s146] %v419
                %v421 = vld [vmem:[%s153 + $0x850] sm:%s146]
                %422 = vst [vmem:[%s154 + $0x214] sm:%s146] %v421
                %v423 = vld [vmem:[%s153 + $0x860] sm:%s146]
                %424 = vst [vmem:[%s154 + $0x218] sm:%s146] %v423
                %v425 = vld [vmem:[%s153 + $0x870] sm:%s146]
                %426 = vst [vmem:[%s154 + $0x21c] sm:%s146] %v425
                %v427 = vld [vmem:[%s153 + $0x880] sm:%s146]
                %428 = vst [vmem:[%s154 + $0x220] sm:%s146] %v427
                %v429 = vld [vmem:[%s153 + $0x890] sm:%s146]
                %430 = vst [vmem:[%s154 + $0x224] sm:%s146] %v429
                %v431 = vld [vmem:[%s153 + $0x8a0] sm:%s146]
                %432 = vst [vmem:[%s154 + $0x228] sm:%s146] %v431
                %v433 = vld [vmem:[%s153 + $0x8b0] sm:%s146]
                %434 = vst [vmem:[%s154 + $0x22c] sm:%s146] %v433
                %v435 = vld [vmem:[%s153 + $0x8c0] sm:%s146]
                %436 = vst [vmem:[%s154 + $0x230] sm:%s146] %v435
                %v437 = vld [vmem:[%s153 + $0x8d0] sm:%s146]
                %438 = vst [vmem:[%s154 + $0x234] sm:%s146] %v437
                %v439 = vld [vmem:[%s153 + $0x8e0] sm:%s146]
                %440 = vst [vmem:[%s154 + $0x238] sm:%s146] %v439
                %v441 = vld [vmem:[%s153 + $0x8f0] sm:%s146]
                %442 = vst [vmem:[%s154 + $0x23c] sm:%s146] %v441
                %v443 = vld [vmem:[%s153 + $0x900] sm:%s146]
                %444 = vst [vmem:[%s154 + $0x240] sm:%s146] %v443
                %v445 = vld [vmem:[%s153 + $0x910] sm:%s146]
                %446 = vst [vmem:[%s154 + $0x244] sm:%s146] %v445
                %v447 = vld [vmem:[%s153 + $0x920] sm:%s146]
                %448 = vst [vmem:[%s154 + $0x248] sm:%s146] %v447
                %v449 = vld [vmem:[%s153 + $0x930] sm:%s146]
                %450 = vst [vmem:[%s154 + $0x24c] sm:%s146] %v449
                %v451 = vld [vmem:[%s153 + $0x940] sm:%s146]
                %452 = vst [vmem:[%s154 + $0x250] sm:%s146] %v451
                %v453 = vld [vmem:[%s153 + $0x950] sm:%s146]
                %454 = vst [vmem:[%s154 + $0x254] sm:%s146] %v453
                %v455 = vld [vmem:[%s153 + $0x960] sm:%s146]
                %456 = vst [vmem:[%s154 + $0x258] sm:%s146] %v455
                %v457 = vld [vmem:[%s153 + $0x970] sm:%s146]
                %458 = vst [vmem:[%s154 + $0x25c] sm:%s146] %v457
                %v459 = vld [vmem:[%s153 + $0x980] sm:%s146]
                %460 = vst [vmem:[%s154 + $0x260] sm:%s146] %v459
                %v461 = vld [vmem:[%s153 + $0x990] sm:%s146]
                %462 = vst [vmem:[%s154 + $0x264] sm:%s146] %v461
                %v463 = vld [vmem:[%s153 + $0x9a0] sm:%s146]
                %464 = vst [vmem:[%s154 + $0x268] sm:%s146] %v463
                %v465 = vld [vmem:[%s153 + $0x9b0] sm:%s146]
                %466 = vst [vmem:[%s154 + $0x26c] sm:%s146] %v465
                %v467 = vld [vmem:[%s153 + $0x9c0] sm:%s146]
                %468 = vst [vmem:[%s154 + $0x270] sm:%s146] %v467
                %v469 = vld [vmem:[%s153 + $0x9d0] sm:%s146]
                %470 = vst [vmem:[%s154 + $0x274] sm:%s146] %v469
                %v471 = vld [vmem:[%s153 + $0x9e0] sm:%s146]
                %472 = vst [vmem:[%s154 + $0x278] sm:%s146] %v471
                %v473 = vld [vmem:[%s153 + $0x9f0] sm:%s146]
                %474 = vst [vmem:[%s154 + $0x27c] sm:%s146] %v473
                %v475 = vld [vmem:[%s153 + $0xa00] sm:%s146]
                %476 = vst [vmem:[%s154 + $0x280] sm:%s146] %v475
                %v477 = vld [vmem:[%s153 + $0xa10] sm:%s146]
                %478 = vst [vmem:[%s154 + $0x284] sm:%s146] %v477
                %v479 = vld [vmem:[%s153 + $0xa20] sm:%s146]
                %480 = vst [vmem:[%s154 + $0x288] sm:%s146] %v479
                %v481 = vld [vmem:[%s153 + $0xa30] sm:%s146]
                %482 = vst [vmem:[%s154 + $0x28c] sm:%s146] %v481
                %v483 = vld [vmem:[%s153 + $0xa40] sm:%s146]
                %484 = vst [vmem:[%s154 + $0x290] sm:%s146] %v483
                %v485 = vld [vmem:[%s153 + $0xa50] sm:%s146]
                %486 = vst [vmem:[%s154 + $0x294] sm:%s146] %v485
                %v487 = vld [vmem:[%s153 + $0xa60] sm:%s146]
                %488 = vst [vmem:[%s154 + $0x298] sm:%s146] %v487
                %v489 = vld [vmem:[%s153 + $0xa70] sm:%s146]
                %490 = vst [vmem:[%s154 + $0x29c] sm:%s146] %v489
                %v491 = vld [vmem:[%s153 + $0xa80] sm:%s146]
                %492 = vst [vmem:[%s154 + $0x2a0] sm:%s146] %v491
                %v493 = vld [vmem:[%s153 + $0xa90] sm:%s146]
                %494 = vst [vmem:[%s154 + $0x2a4] sm:%s146] %v493
                %v495 = vld [vmem:[%s153 + $0xaa0] sm:%s146]
                %496 = vst [vmem:[%s154 + $0x2a8] sm:%s146] %v495
                %v497 = vld [vmem:[%s153 + $0xab0] sm:%s146]
                %498 = vst [vmem:[%s154 + $0x2ac] sm:%s146] %v497
                %v499 = vld [vmem:[%s153 + $0xac0] sm:%s146]
                %500 = vst [vmem:[%s154 + $0x2b0] sm:%s146] %v499
                %v501 = vld [vmem:[%s153 + $0xad0] sm:%s146]
                %502 = vst [vmem:[%s154 + $0x2b4] sm:%s146] %v501
                %v503 = vld [vmem:[%s153 + $0xae0] sm:%s146]
                %504 = vst [vmem:[%s154 + $0x2b8] sm:%s146] %v503
                %v505 = vld [vmem:[%s153 + $0xaf0] sm:%s146]
                %506 = vst [vmem:[%s154 + $0x2bc] sm:%s146] %v505
                %v507 = vld [vmem:[%s153 + $0xb00] sm:%s146]
                %508 = vst [vmem:[%s154 + $0x2c0] sm:%s146] %v507
                %v509 = vld [vmem:[%s153 + $0xb10] sm:%s146]
                %510 = vst [vmem:[%s154 + $0x2c4] sm:%s146] %v509
                %v511 = vld [vmem:[%s153 + $0xb20] sm:%s146]
                %512 = vst [vmem:[%s154 + $0x2c8] sm:%s146] %v511
                %v513 = vld [vmem:[%s153 + $0xb30] sm:%s146]
                %514 = vst [vmem:[%s154 + $0x2cc] sm:%s146] %v513
                %v515 = vld [vmem:[%s153 + $0xb40] sm:%s146]
                %516 = vst [vmem:[%s154 + $0x2d0] sm:%s146] %v515
                %v517 = vld [vmem:[%s153 + $0xb50] sm:%s146]
                %518 = vst [vmem:[%s154 + $0x2d4] sm:%s146] %v517
                %v519 = vld [vmem:[%s153 + $0xb60] sm:%s146]
                %520 = vst [vmem:[%s154 + $0x2d8] sm:%s146] %v519
                %v521 = vld [vmem:[%s153 + $0xb70] sm:%s146]
                %522 = vst [vmem:[%s154 + $0x2dc] sm:%s146] %v521
                %v523 = vld [vmem:[%s153 + $0xb80] sm:%s146]
                %524 = vst [vmem:[%s154 + $0x2e0] sm:%s146] %v523
                %v525 = vld [vmem:[%s153 + $0xb90] sm:%s146]
                %526 = vst [vmem:[%s154 + $0x2e4] sm:%s146] %v525
                %v527 = vld [vmem:[%s153 + $0xba0] sm:%s146]
                %528 = vst [vmem:[%s154 + $0x2e8] sm:%s146] %v527
                %v529 = vld [vmem:[%s153 + $0xbb0] sm:%s146]
                %530 = vst [vmem:[%s154 + $0x2ec] sm:%s146] %v529
                %v531 = vld [vmem:[%s153 + $0xbc0] sm:%s146]
                %532 = vst [vmem:[%s154 + $0x2f0] sm:%s146] %v531
                %v533 = vld [vmem:[%s153 + $0xbd0] sm:%s146]
                %534 = vst [vmem:[%s154 + $0x2f4] sm:%s146] %v533
                %v535 = vld [vmem:[%s153 + $0xbe0] sm:%s146]
                %536 = vst [vmem:[%s154 + $0x2f8] sm:%s146] %v535
                %v537 = vld [vmem:[%s153 + $0xbf0] sm:%s146]
                %538 = vst [vmem:[%s154 + $0x2fc] sm:%s146] %v537
                %v539 = vld [vmem:[%s153 + $0xc00] sm:%s146]
                %540 = vst [vmem:[%s154 + $0x300] sm:%s146] %v539
                %v541 = vld [vmem:[%s153 + $0xc10] sm:%s146]
                %542 = vst [vmem:[%s154 + $0x304] sm:%s146] %v541
                %v543 = vld [vmem:[%s153 + $0xc20] sm:%s146]
                %544 = vst [vmem:[%s154 + $0x308] sm:%s146] %v543
                %v545 = vld [vmem:[%s153 + $0xc30] sm:%s146]
                %546 = vst [vmem:[%s154 + $0x30c] sm:%s146] %v545
                %v547 = vld [vmem:[%s153 + $0xc40] sm:%s146]
                %548 = vst [vmem:[%s154 + $0x310] sm:%s146] %v547
                %v549 = vld [vmem:[%s153 + $0xc50] sm:%s146]
                %550 = vst [vmem:[%s154 + $0x314] sm:%s146] %v549
                %v551 = vld [vmem:[%s153 + $0xc60] sm:%s146]
                %552 = vst [vmem:[%s154 + $0x318] sm:%s146] %v551
                %v553 = vld [vmem:[%s153 + $0xc70] sm:%s146]
                %554 = vst [vmem:[%s154 + $0x31c] sm:%s146] %v553
                %v555 = vld [vmem:[%s153 + $0xc80] sm:%s146]
                %556 = vst [vmem:[%s154 + $0x320] sm:%s146] %v555
                %v557 = vld [vmem:[%s153 + $0xc90] sm:%s146]
                %558 = vst [vmem:[%s154 + $0x324] sm:%s146] %v557
                %v559 = vld [vmem:[%s153 + $0xca0] sm:%s146]
                %560 = vst [vmem:[%s154 + $0x328] sm:%s146] %v559
                %v561 = vld [vmem:[%s153 + $0xcb0] sm:%s146]
                %562 = vst [vmem:[%s154 + $0x32c] sm:%s146] %v561
                %v563 = vld [vmem:[%s153 + $0xcc0] sm:%s146]
                %564 = vst [vmem:[%s154 + $0x330] sm:%s146] %v563
                %v565 = vld [vmem:[%s153 + $0xcd0] sm:%s146]
                %566 = vst [vmem:[%s154 + $0x334] sm:%s146] %v565
                %v567 = vld [vmem:[%s153 + $0xce0] sm:%s146]
                %568 = vst [vmem:[%s154 + $0x338] sm:%s146] %v567
                %v569 = vld [vmem:[%s153 + $0xcf0] sm:%s146]
                %570 = vst [vmem:[%s154 + $0x33c] sm:%s146] %v569
                %v571 = vld [vmem:[%s153 + $0xd00] sm:%s146]
                %572 = vst [vmem:[%s154 + $0x340] sm:%s146] %v571
                %v573 = vld [vmem:[%s153 + $0xd10] sm:%s146]
                %574 = vst [vmem:[%s154 + $0x344] sm:%s146] %v573
                %v575 = vld [vmem:[%s153 + $0xd20] sm:%s146]
                %576 = vst [vmem:[%s154 + $0x348] sm:%s146] %v575
                %v577 = vld [vmem:[%s153 + $0xd30] sm:%s146]
                %578 = vst [vmem:[%s154 + $0x34c] sm:%s146] %v577
                %v579 = vld [vmem:[%s153 + $0xd40] sm:%s146]
                %580 = vst [vmem:[%s154 + $0x350] sm:%s146] %v579
                %v581 = vld [vmem:[%s153 + $0xd50] sm:%s146]
                %582 = vst [vmem:[%s154 + $0x354] sm:%s146] %v581
                %v583 = vld [vmem:[%s153 + $0xd60] sm:%s146]
                %584 = vst [vmem:[%s154 + $0x358] sm:%s146] %v583
                %v585 = vld [vmem:[%s153 + $0xd70] sm:%s146]
                %586 = vst [vmem:[%s154 + $0x35c] sm:%s146] %v585
                %v587 = vld [vmem:[%s153 + $0xd80] sm:%s146]
                %588 = vst [vmem:[%s154 + $0x360] sm:%s146] %v587
                %v589 = vld [vmem:[%s153 + $0xd90] sm:%s146]
                %590 = vst [vmem:[%s154 + $0x364] sm:%s146] %v589
                %v591 = vld [vmem:[%s153 + $0xda0] sm:%s146]
                %592 = vst [vmem:[%s154 + $0x368] sm:%s146] %v591
                %v593 = vld [vmem:[%s153 + $0xdb0] sm:%s146]
                %594 = vst [vmem:[%s154 + $0x36c] sm:%s146] %v593
                %v595 = vld [vmem:[%s153 + $0xdc0] sm:%s146]
                %596 = vst [vmem:[%s154 + $0x370] sm:%s146] %v595
                %v597 = vld [vmem:[%s153 + $0xdd0] sm:%s146]
                %598 = vst [vmem:[%s154 + $0x374] sm:%s146] %v597
                %v599 = vld [vmem:[%s153 + $0xde0] sm:%s146]
                %600 = vst [vmem:[%s154 + $0x378] sm:%s146] %v599
                %v601 = vld [vmem:[%s153 + $0xdf0] sm:%s146]
                %602 = vst [vmem:[%s154 + $0x37c] sm:%s146] %v601
                %v603 = vld [vmem:[%s153 + $0xe00] sm:%s146]
                %604 = vst [vmem:[%s154 + $0x380] sm:%s146] %v603
                %v605 = vld [vmem:[%s153 + $0xe10] sm:%s146]
                %606 = vst [vmem:[%s154 + $0x384] sm:%s146] %v605
                %v607 = vld [vmem:[%s153 + $0xe20] sm:%s146]
                %608 = vst [vmem:[%s154 + $0x388] sm:%s146] %v607
                %v609 = vld [vmem:[%s153 + $0xe30] sm:%s146]
                %610 = vst [vmem:[%s154 + $0x38c] sm:%s146] %v609
                %v611 = vld [vmem:[%s153 + $0xe40] sm:%s146]
                %612 = vst [vmem:[%s154 + $0x390] sm:%s146] %v611
                %v613 = vld [vmem:[%s153 + $0xe50] sm:%s146]
                %614 = vst [vmem:[%s154 + $0x394] sm:%s146] %v613
                %v615 = vld [vmem:[%s153 + $0xe60] sm:%s146]
                %616 = vst [vmem:[%s154 + $0x398] sm:%s146] %v615
                %v617 = vld [vmem:[%s153 + $0xe70] sm:%s146]
                %618 = vst [vmem:[%s154 + $0x39c] sm:%s146] %v617
                %v619 = vld [vmem:[%s153 + $0xe80] sm:%s146]
                %620 = vst [vmem:[%s154 + $0x3a0] sm:%s146] %v619
                %v621 = vld [vmem:[%s153 + $0xe90] sm:%s146]
                %622 = vst [vmem:[%s154 + $0x3a4] sm:%s146] %v621
                %v623 = vld [vmem:[%s153 + $0xea0] sm:%s146]
                %624 = vst [vmem:[%s154 + $0x3a8] sm:%s146] %v623
                %v625 = vld [vmem:[%s153 + $0xeb0] sm:%s146]
                %626 = vst [vmem:[%s154 + $0x3ac] sm:%s146] %v625
                %v627 = vld [vmem:[%s153 + $0xec0] sm:%s146]
                %628 = vst [vmem:[%s154 + $0x3b0] sm:%s146] %v627
                %v629 = vld [vmem:[%s153 + $0xed0] sm:%s146]
                %630 = vst [vmem:[%s154 + $0x3b4] sm:%s146] %v629
                %v631 = vld [vmem:[%s153 + $0xee0] sm:%s146]
                %632 = vst [vmem:[%s154 + $0x3b8] sm:%s146] %v631
                %v633 = vld [vmem:[%s153 + $0xef0] sm:%s146]
                %634 = vst [vmem:[%s154 + $0x3bc] sm:%s146] %v633
                %v635 = vld [vmem:[%s153 + $0xf00] sm:%s146]
                %636 = vst [vmem:[%s154 + $0x3c0] sm:%s146] %v635
                %v637 = vld [vmem:[%s153 + $0xf10] sm:%s146]
                %638 = vst [vmem:[%s154 + $0x3c4] sm:%s146] %v637
                %v639 = vld [vmem:[%s153 + $0xf20] sm:%s146]
                %640 = vst [vmem:[%s154 + $0x3c8] sm:%s146] %v639
                %v641 = vld [vmem:[%s153 + $0xf30] sm:%s146]
                %642 = vst [vmem:[%s154 + $0x3cc] sm:%s146] %v641
                %v643 = vld [vmem:[%s153 + $0xf40] sm:%s146]
                %644 = vst [vmem:[%s154 + $0x3d0] sm:%s146] %v643
                %v645 = vld [vmem:[%s153 + $0xf50] sm:%s146]
                %646 = vst [vmem:[%s154 + $0x3d4] sm:%s146] %v645
                %v647 = vld [vmem:[%s153 + $0xf60] sm:%s146]
                %648 = vst [vmem:[%s154 + $0x3d8] sm:%s146] %v647
                %v649 = vld [vmem:[%s153 + $0xf70] sm:%s146]
                %650 = vst [vmem:[%s154 + $0x3dc] sm:%s146] %v649
                %v651 = vld [vmem:[%s153 + $0xf80] sm:%s146]
                %652 = vst [vmem:[%s154 + $0x3e0] sm:%s146] %v651
                %v653 = vld [vmem:[%s153 + $0xf90] sm:%s146]
                %654 = vst [vmem:[%s154 + $0x3e4] sm:%s146] %v653
                %v655 = vld [vmem:[%s153 + $0xfa0] sm:%s146]
                %656 = vst [vmem:[%s154 + $0x3e8] sm:%s146] %v655
                %v657 = vld [vmem:[%s153 + $0xfb0] sm:%s146]
                %658 = vst [vmem:[%s154 + $0x3ec] sm:%s146] %v657
                %v659 = vld [vmem:[%s153 + $0xfc0] sm:%s146]
                %660 = vst [vmem:[%s154 + $0x3f0] sm:%s146] %v659
                %v661 = vld [vmem:[%s153 + $0xfd0] sm:%s146]
                %662 = vst [vmem:[%s154 + $0x3f4] sm:%s146] %v661
                %v663 = vld [vmem:[%s153 + $0xfe0] sm:%s146]
                %664 = vst [vmem:[%s154 + $0x3f8] sm:%s146] %v663
                %v665 = vld [vmem:[%s153 + $0xff0] sm:%s146]
                %666 = vst [vmem:[%s154 + $0x3fc] sm:%s146] %v665
                %v667 = vld [vmem:[%s153 + $0x1000] sm:%s146]
                %668 = vst [vmem:[%s154 + $0x400] sm:%s146] %v667
                %v669 = vld [vmem:[%s153 + $0x1010] sm:%s146]
                %670 = vst [vmem:[%s154 + $0x404] sm:%s146] %v669
                %v671 = vld [vmem:[%s153 + $0x1020] sm:%s146]
                %672 = vst [vmem:[%s154 + $0x408] sm:%s146] %v671
                %v673 = vld [vmem:[%s153 + $0x1030] sm:%s146]
                %674 = vst [vmem:[%s154 + $0x40c] sm:%s146] %v673
                %v675 = vld [vmem:[%s153 + $0x1040] sm:%s146]
                %676 = vst [vmem:[%s154 + $0x410] sm:%s146] %v675
                %v677 = vld [vmem:[%s153 + $0x1050] sm:%s146]
                %678 = vst [vmem:[%s154 + $0x414] sm:%s146] %v677
                %v679 = vld [vmem:[%s153 + $0x1060] sm:%s146]
                %680 = vst [vmem:[%s154 + $0x418] sm:%s146] %v679
                %v681 = vld [vmem:[%s153 + $0x1070] sm:%s146]
                %682 = vst [vmem:[%s154 + $0x41c] sm:%s146] %v681
                %v683 = vld [vmem:[%s153 + $0x1080] sm:%s146]
                %684 = vst [vmem:[%s154 + $0x420] sm:%s146] %v683
                %v685 = vld [vmem:[%s153 + $0x1090] sm:%s146]
                %686 = vst [vmem:[%s154 + $0x424] sm:%s146] %v685
                %v687 = vld [vmem:[%s153 + $0x10a0] sm:%s146]
                %688 = vst [vmem:[%s154 + $0x428] sm:%s146] %v687
                %v689 = vld [vmem:[%s153 + $0x10b0] sm:%s146]
                %690 = vst [vmem:[%s154 + $0x42c] sm:%s146] %v689
                %v691 = vld [vmem:[%s153 + $0x10c0] sm:%s146]
                %692 = vst [vmem:[%s154 + $0x430] sm:%s146] %v691
                %v693 = vld [vmem:[%s153 + $0x10d0] sm:%s146]
                %694 = vst [vmem:[%s154 + $0x434] sm:%s146] %v693
                %v695 = vld [vmem:[%s153 + $0x10e0] sm:%s146]
                %696 = vst [vmem:[%s154 + $0x438] sm:%s146] %v695
                %v697 = vld [vmem:[%s153 + $0x10f0] sm:%s146]
                %698 = vst [vmem:[%s154 + $0x43c] sm:%s146] %v697
                %v699 = vld [vmem:[%s153 + $0x1100] sm:%s146]
                %700 = vst [vmem:[%s154 + $0x440] sm:%s146] %v699
                %v701 = vld [vmem:[%s153 + $0x1110] sm:%s146]
                %702 = vst [vmem:[%s154 + $0x444] sm:%s146] %v701
                %v703 = vld [vmem:[%s153 + $0x1120] sm:%s146]
                %704 = vst [vmem:[%s154 + $0x448] sm:%s146] %v703
                %v705 = vld [vmem:[%s153 + $0x1130] sm:%s146]
                %706 = vst [vmem:[%s154 + $0x44c] sm:%s146] %v705
                %v707 = vld [vmem:[%s153 + $0x1140] sm:%s146]
                %708 = vst [vmem:[%s154 + $0x450] sm:%s146] %v707
                %v709 = vld [vmem:[%s153 + $0x1150] sm:%s146]
                %710 = vst [vmem:[%s154 + $0x454] sm:%s146] %v709
                %v711 = vld [vmem:[%s153 + $0x1160] sm:%s146]
                %712 = vst [vmem:[%s154 + $0x458] sm:%s146] %v711
                %v713 = vld [vmem:[%s153 + $0x1170] sm:%s146]
                %714 = vst [vmem:[%s154 + $0x45c] sm:%s146] %v713
                %v715 = vld [vmem:[%s153 + $0x1180] sm:%s146]
                %716 = vst [vmem:[%s154 + $0x460] sm:%s146] %v715
                %v717 = vld [vmem:[%s153 + $0x1190] sm:%s146]
                %718 = vst [vmem:[%s154 + $0x464] sm:%s146] %v717
                %v719 = vld [vmem:[%s153 + $0x11a0] sm:%s146]
                %720 = vst [vmem:[%s154 + $0x468] sm:%s146] %v719
                %v721 = vld [vmem:[%s153 + $0x11b0] sm:%s146]
                %722 = vst [vmem:[%s154 + $0x46c] sm:%s146] %v721
                %v723 = vld [vmem:[%s153 + $0x11c0] sm:%s146]
                %724 = vst [vmem:[%s154 + $0x470] sm:%s146] %v723
                %v725 = vld [vmem:[%s153 + $0x11d0] sm:%s146]
                %726 = vst [vmem:[%s154 + $0x474] sm:%s146] %v725
                %v727 = vld [vmem:[%s153 + $0x11e0] sm:%s146]
                %728 = vst [vmem:[%s154 + $0x478] sm:%s146] %v727
                %v729 = vld [vmem:[%s153 + $0x11f0] sm:%s146]
                %730 = vst [vmem:[%s154 + $0x47c] sm:%s146] %v729
                %v731 = vld [vmem:[%s153 + $0x1200] sm:%s146]
                %732 = vst [vmem:[%s154 + $0x480] sm:%s146] %v731
                %v733 = vld [vmem:[%s153 + $0x1210] sm:%s146]
                %734 = vst [vmem:[%s154 + $0x484] sm:%s146] %v733
                %v735 = vld [vmem:[%s153 + $0x1220] sm:%s146]
                %736 = vst [vmem:[%s154 + $0x488] sm:%s146] %v735
                %v737 = vld [vmem:[%s153 + $0x1230] sm:%s146]
                %738 = vst [vmem:[%s154 + $0x48c] sm:%s146] %v737
                %v739 = vld [vmem:[%s153 + $0x1240] sm:%s146]
                %740 = vst [vmem:[%s154 + $0x490] sm:%s146] %v739
                %v741 = vld [vmem:[%s153 + $0x1250] sm:%s146]
                %742 = vst [vmem:[%s154 + $0x494] sm:%s146] %v741
                %v743 = vld [vmem:[%s153 + $0x1260] sm:%s146]
                %744 = vst [vmem:[%s154 + $0x498] sm:%s146] %v743
                %v745 = vld [vmem:[%s153 + $0x1270] sm:%s146]
                %746 = vst [vmem:[%s154 + $0x49c] sm:%s146] %v745
                %v747 = vld [vmem:[%s153 + $0x1280] sm:%s146]
                %748 = vst [vmem:[%s154 + $0x4a0] sm:%s146] %v747
                %v749 = vld [vmem:[%s153 + $0x1290] sm:%s146]
                %750 = vst [vmem:[%s154 + $0x4a4] sm:%s146] %v749
                %v751 = vld [vmem:[%s153 + $0x12a0] sm:%s146]
                %752 = vst [vmem:[%s154 + $0x4a8] sm:%s146] %v751
                %v753 = vld [vmem:[%s153 + $0x12b0] sm:%s146]
                %754 = vst [vmem:[%s154 + $0x4ac] sm:%s146] %v753
                %v755 = vld [vmem:[%s153 + $0x12c0] sm:%s146]
                %756 = vst [vmem:[%s154 + $0x4b0] sm:%s146] %v755
                %v757 = vld [vmem:[%s153 + $0x12d0] sm:%s146]
                %758 = vst [vmem:[%s154 + $0x4b4] sm:%s146] %v757
                %v759 = vld [vmem:[%s153 + $0x12e0] sm:%s146]
                %760 = vst [vmem:[%s154 + $0x4b8] sm:%s146] %v759
                %v761 = vld [vmem:[%s153 + $0x12f0] sm:%s146]
                %762 = vst [vmem:[%s154 + $0x4bc] sm:%s146] %v761
                %v763 = vld [vmem:[%s153 + $0x1300] sm:%s146]
                %764 = vst [vmem:[%s154 + $0x4c0] sm:%s146] %v763
                %v765 = vld [vmem:[%s153 + $0x1310] sm:%s146]
                %766 = vst [vmem:[%s154 + $0x4c4] sm:%s146] %v765
                %v767 = vld [vmem:[%s153 + $0x1320] sm:%s146]
                %768 = vst [vmem:[%s154 + $0x4c8] sm:%s146] %v767
                %v769 = vld [vmem:[%s153 + $0x1330] sm:%s146]
                %770 = vst [vmem:[%s154 + $0x4cc] sm:%s146] %v769
                %v771 = vld [vmem:[%s153 + $0x1340] sm:%s146]
                %772 = vst [vmem:[%s154 + $0x4d0] sm:%s146] %v771
                %v773 = vld [vmem:[%s153 + $0x1350] sm:%s146]
                %774 = vst [vmem:[%s154 + $0x4d4] sm:%s146] %v773
                %v775 = vld [vmem:[%s153 + $0x1360] sm:%s146]
                %776 = vst [vmem:[%s154 + $0x4d8] sm:%s146] %v775
                %v777 = vld [vmem:[%s153 + $0x1370] sm:%s146]
                %778 = vst [vmem:[%s154 + $0x4dc] sm:%s146] %v777
                %v779 = vld [vmem:[%s153 + $0x1380] sm:%s146]
                %780 = vst [vmem:[%s154 + $0x4e0] sm:%s146] %v779
                %v781 = vld [vmem:[%s153 + $0x1390] sm:%s146]
                %782 = vst [vmem:[%s154 + $0x4e4] sm:%s146] %v781
                %v783 = vld [vmem:[%s153 + $0x13a0] sm:%s146]
                %784 = vst [vmem:[%s154 + $0x4e8] sm:%s146] %v783
                %v785 = vld [vmem:[%s153 + $0x13b0] sm:%s146]
                %786 = vst [vmem:[%s154 + $0x4ec] sm:%s146] %v785
                %v787 = vld [vmem:[%s153 + $0x13c0] sm:%s146]
                %788 = vst [vmem:[%s154 + $0x4f0] sm:%s146] %v787
                %v789 = vld [vmem:[%s153 + $0x13d0] sm:%s146]
                %790 = vst [vmem:[%s154 + $0x4f4] sm:%s146] %v789
                %v791 = vld [vmem:[%s153 + $0x13e0] sm:%s146]
                %792 = vst [vmem:[%s154 + $0x4f8] sm:%s146] %v791
                %v793 = vld [vmem:[%s153 + $0x13f0] sm:%s146]
                %794 = vst [vmem:[%s154 + $0x4fc] sm:%s146] %v793
              $region41: #{encoder_fwd.8} parent=35 // loop_footer
                %s152 = sadd.s32 1, %s148
              $region42: #{encoder_fwd.8} parent=35 // loop_footer_branch
                %147 = sbr.rel target = $region38
              $region43: #{encoder_fwd.8} parent=35 // loop_exit
                _
            $region36: #{encoder_fwd.8} parent=27 // pred_fallthru
              _
          $region28: #{encoder_fwd.8} parent=23 // pred_fallthru
            _
          %2761 = vnop
        $region24: #{encoder_fwd.8} parent=19 // pred_fallthru
          _
        // Predicated region
        $region73: #{encoder_fwd.8} parent=19 // pred_check
          %p2762 = pneg %p76
        $region74: #{encoder_fwd.8} parent=19 // pred_check_branch
          %2764 = sbr.rel (%p2762) target = $region76
        $region75: #{encoder_fwd.8} parent=19 // pred_region
          %p2765 = scmp.lt.s32.totalorder %s9, 3
          %s2766 = scalar_select %p2765, %s9, 3
          %s2767 = scalar_lea.vmem %s2, %s2766
        $region76: #{encoder_fwd.8} parent=19 // pred_fallthru
          _
      $region20: #{encoder_fwd.8} parent=5 // pred_fallthru
        _
      %p2768 = scmp.le.s32.totalorder 1, %s9
      %p2769 = scmp.lt.s32.totalorder %s9, 5
      %p2770 = pnand %p2768, %p2769
      %p2771 = pneg %p2770
      // Predicated region
      $region77: #{encoder_fwd.8} parent=5 // pred_check
        _
      $region78: #{encoder_fwd.8} parent=5 // pred_check_branch
        %2773 = sbr.rel (%p2770) target = $region80
      $region79: #{encoder_fwd.8} parent=5 // pred_region
        %s2774 = ssub.s32 %s9, 1
        %s2775 = sand.u32 %s43, 1
        %s2776 = sand.u32 %s43, 1
        %s2777 = smul.addr %s2776, 1280
        %s2778 = scalar_lea.vmem [#allocation2], %s2777
        // Predicated region
        $region81: #{encoder_fwd.8} parent=79 // pred_check
          %p2779 = pneg %p56
        $region82: #{encoder_fwd.8} parent=79 // pred_check_branch
          %2781 = sbr.rel (%p2779) target = $region84
        $region83: #{encoder_fwd.8} parent=79 // pred_region
          _
        $region84: #{encoder_fwd.8} parent=79 // pred_fallthru
          _
        %p2782 = pneg %p30
        %p2783 = pneg %p27
        %s2784 = sand.u32 %s43, 1
        %s2785 = sand.u32 %s43, 1
        %s2786 = smul.addr %s2785, 1280
        %s2787 = scalar_lea.vmem [#allocation2], %s2786
        %p2788 = pneg %p56
        %p2789 = pneg %p53
        %p2790 = scmp.lt.s32.totalorder %s14, 3
        %s2791 = scalar_select %p2790, %s14, 3
        %s2792 = scalar_lea.vmem %s2, %s2791
        %p2793 = pneg %p82
        %p2794 = pneg %p79
        %p2795 = pneg %p108
        %p2796 = pneg %p105
        %s2797 = sand.u32 %s95, 1
        %s2798 = sand.u32 %s95, 1
        %s2799 = smul.addr %s2798, 16
        %s2800 = scalar_lea.vmem [#allocation3], %s2799
        %p2801 = scmp.lt.s32.totalorder %s14, 3
        %s2802 = scalar_select %p2801, %s14, 3
        %s2803 = scalar_lea.vmem %s2, %s2802
        %v2804 = vld [vmem:[%s0] sm:$0xff]
        %v2805 = vld [vmem:[%s0 + $0x8] sm:$0xff]
        %v2806 = vld [vmem:[%s0 + $0x10] sm:$0xff]
        %v2807 = vld [vmem:[%s0 + $0x18] sm:$0xff]
        %v2808 = vld [vmem:[%s0 + $0x20] sm:$0xff]
        %v2809 = vld [vmem:[%s0 + $0x28] sm:$0xff]
        %v2810 = vld [vmem:[%s2778] sm:$0xf]
        %v2811 = vld [vmem:[%s2778 + $0x4] sm:$0xf]
        %v2812 = vld [vmem:[%s2778 + $0x8] sm:$0xf]
        %v2813 = vld [vmem:[%s2778 + $0xc] sm:$0xf]
        %v2814 = vld [vmem:[%s2778 + $0x10] sm:$0xf]
        %v2815 = vld [vmem:[%s2778 + $0x14] sm:$0xf]
        %v2816 = vld [vmem:[%s2778 + $0x18] sm:$0xf]
        %v2817 = vld [vmem:[%s2778 + $0x1c] sm:$0xf]
        %v2818 = vld [vmem:[%s2778 + $0x20] sm:$0xf]
        %v2819 = vld [vmem:[%s2778 + $0x24] sm:$0xf]
        %v2820 = vld [vmem:[%s2778 + $0x28] sm:$0xf]
        %v2821 = vld [vmem:[%s2778 + $0x2c] sm:$0xf]
        %v2822 = vld [vmem:[%s2778 + $0x30] sm:$0xf]
        %v2823 = vld [vmem:[%s2778 + $0x34] sm:$0xf]
        %v2824 = vld [vmem:[%s2778 + $0x38] sm:$0xf]
        %v2825 = vld [vmem:[%s2778 + $0x3c] sm:$0xf]
        %v2826 = vld [vmem:[%s2778 + $0x40] sm:$0xf]
        %v2827 = vld [vmem:[%s2778 + $0x44] sm:$0xf]
        %v2828 = vld [vmem:[%s2778 + $0x48] sm:$0xf]
        %v2829 = vld [vmem:[%s2778 + $0x4c] sm:$0xf]
        %v2830 = vld [vmem:[%s2778 + $0x50] sm:$0xf]
        %v2831 = vld [vmem:[%s2778 + $0x54] sm:$0xf]
        %v2832 = vld [vmem:[%s2778 + $0x58] sm:$0xf]
        %v2833 = vld [vmem:[%s2778 + $0x5c] sm:$0xf]
        %v2834 = vld [vmem:[%s2778 + $0x60] sm:$0xf]
        %v2835 = vld [vmem:[%s2778 + $0x64] sm:$0xf]
        %v2836 = vld [vmem:[%s2778 + $0x68] sm:$0xf]
        %v2837 = vld [vmem:[%s2778 + $0x6c] sm:$0xf]
        %v2838 = vld [vmem:[%s2778 + $0x70] sm:$0xf]
        %v2839 = vld [vmem:[%s2778 + $0x74] sm:$0xf]
        %v2840 = vld [vmem:[%s2778 + $0x78] sm:$0xf]
        %v2841 = vld [vmem:[%s2778 + $0x7c] sm:$0xf]
        %v2842 = vld [vmem:[%s2778 + $0x80] sm:$0xf]
        %v2843 = vld [vmem:[%s2778 + $0x84] sm:$0xf]
        %v2844 = vld [vmem:[%s2778 + $0x88] sm:$0xf]
        %v2845 = vld [vmem:[%s2778 + $0x8c] sm:$0xf]
        %v2846 = vld [vmem:[%s2778 + $0x90] sm:$0xf]
        %v2847 = vld [vmem:[%s2778 + $0x94] sm:$0xf]
        %v2848 = vld [vmem:[%s2778 + $0x98] sm:$0xf]
        %v2849 = vld [vmem:[%s2778 + $0x9c] sm:$0xf]
        %v2850 = vld [vmem:[%s2778 + $0xa0] sm:$0xf]
        %v2851 = vld [vmem:[%s2778 + $0xa4] sm:$0xf]
        %v2852 = vld [vmem:[%s2778 + $0xa8] sm:$0xf]
        %v2853 = vld [vmem:[%s2778 + $0xac] sm:$0xf]
        %v2854 = vld [vmem:[%s2778 + $0xb0] sm:$0xf]
        %v2855 = vld [vmem:[%s2778 + $0xb4] sm:$0xf]
        %v2856 = vld [vmem:[%s2778 + $0xb8] sm:$0xf]
        %v2857 = vld [vmem:[%s2778 + $0xbc] sm:$0xf]
        %v2858 = vld [vmem:[%s2778 + $0xc0] sm:$0xf]
        %v2859 = vld [vmem:[%s2778 + $0xc4] sm:$0xf]
        %v2860 = vld [vmem:[%s2778 + $0xc8] sm:$0xf]
        %v2861 = vld [vmem:[%s2778 + $0xcc] sm:$0xf]
        %v2862 = vld [vmem:[%s2778 + $0xd0] sm:$0xf]
        %v2863 = vld [vmem:[%s2778 + $0xd4] sm:$0xf]
        %v2864 = vld [vmem:[%s2778 + $0xd8] sm:$0xf]
        %v2865 = vld [vmem:[%s2778 + $0xdc] sm:$0xf]
        %v2866 = vld [vmem:[%s2778 + $0xe0] sm:$0xf]
        %v2867 = vld [vmem:[%s2778 + $0xe4] sm:$0xf]
        %v2868 = vld [vmem:[%s2778 + $0xe8] sm:$0xf]
        %v2869 = vld [vmem:[%s2778 + $0xec] sm:$0xf]
        %v2870 = vld [vmem:[%s2778 + $0xf0] sm:$0xf]
        %v2871 = vld [vmem:[%s2778 + $0xf4] sm:$0xf]
        %v2872 = vld [vmem:[%s2778 + $0xf8] sm:$0xf]
        %v2873 = vld [vmem:[%s2778 + $0xfc] sm:$0xf]
        %v2874 = vld [vmem:[%s2778 + $0x100] sm:$0xf]
        %v2875 = vld [vmem:[%s2778 + $0x104] sm:$0xf]
        %v2876 = vld [vmem:[%s2778 + $0x108] sm:$0xf]
        %v2877 = vld [vmem:[%s2778 + $0x10c] sm:$0xf]
        %v2878 = vld [vmem:[%s2778 + $0x110] sm:$0xf]
        %v2879 = vld [vmem:[%s2778 + $0x114] sm:$0xf]
        %v2880 = vld [vmem:[%s2778 + $0x118] sm:$0xf]
        %v2881 = vld [vmem:[%s2778 + $0x11c] sm:$0xf]
        %v2882 = vld [vmem:[%s2778 + $0x120] sm:$0xf]
        %v2883 = vld [vmem:[%s2778 + $0x124] sm:$0xf]
        %v2884 = vld [vmem:[%s2778 + $0x128] sm:$0xf]
        %v2885 = vld [vmem:[%s2778 + $0x12c] sm:$0xf]
        %v2886 = vld [vmem:[%s2778 + $0x130] sm:$0xf]
        %v2887 = vld [vmem:[%s2778 + $0x134] sm:$0xf]
        %v2888 = vld [vmem:[%s2778 + $0x138] sm:$0xf]
        %v2889 = vld [vmem:[%s2778 + $0x13c] sm:$0xf]
        %v2890 = vld [vmem:[%s2778 + $0x140] sm:$0xf]
        %v2891 = vld [vmem:[%s2778 + $0x144] sm:$0xf]
        %v2892 = vld [vmem:[%s2778 + $0x148] sm:$0xf]
        %v2893 = vld [vmem:[%s2778 + $0x14c] sm:$0xf]
        %v2894 = vld [vmem:[%s2778 + $0x150] sm:$0xf]
        %v2895 = vld [vmem:[%s2778 + $0x154] sm:$0xf]
        %v2896 = vld [vmem:[%s2778 + $0x158] sm:$0xf]
        %v2897 = vld [vmem:[%s2778 + $0x15c] sm:$0xf]
        %v2898 = vld [vmem:[%s2778 + $0x160] sm:$0xf]
        %v2899 = vld [vmem:[%s2778 + $0x164] sm:$0xf]
        %v2900 = vld [vmem:[%s2778 + $0x168] sm:$0xf]
        %v2901 = vld [vmem:[%s2778 + $0x16c] sm:$0xf]
        %v2902 = vld [vmem:[%s2778 + $0x170] sm:$0xf]
        %v2903 = vld [vmem:[%s2778 + $0x174] sm:$0xf]
        %v2904 = vld [vmem:[%s2778 + $0x178] sm:$0xf]
        %v2905 = vld [vmem:[%s2778 + $0x17c] sm:$0xf]
        %v2906 = vld [vmem:[%s2778 + $0x180] sm:$0xf]
        %v2907 = vld [vmem:[%s2778 + $0x184] sm:$0xf]
        %v2908 = vld [vmem:[%s2778 + $0x188] sm:$0xf]
        %v2909 = vld [vmem:[%s2778 + $0x18c] sm:$0xf]
        %v2910 = vld [vmem:[%s2778 + $0x190] sm:$0xf]
        %v2911 = vld [vmem:[%s2778 + $0x194] sm:$0xf]
        %v2912 = vld [vmem:[%s2778 + $0x198] sm:$0xf]
        %v2913 = vld [vmem:[%s2778 + $0x19c] sm:$0xf]
        %v2914 = vld [vmem:[%s2778 + $0x1a0] sm:$0xf]
        %v2915 = vld [vmem:[%s2778 + $0x1a4] sm:$0xf]
        %v2916 = vld [vmem:[%s2778 + $0x1a8] sm:$0xf]
        %v2917 = vld [vmem:[%s2778 + $0x1ac] sm:$0xf]
        %v2918 = vld [vmem:[%s2778 + $0x1b0] sm:$0xf]
        %v2919 = vld [vmem:[%s2778 + $0x1b4] sm:$0xf]
        %v2920 = vld [vmem:[%s2778 + $0x1b8] sm:$0xf]
        %v2921 = vld [vmem:[%s2778 + $0x1bc] sm:$0xf]
        %v2922 = vld [vmem:[%s2778 + $0x1c0] sm:$0xf]
        %v2923 = vld [vmem:[%s2778 + $0x1c4] sm:$0xf]
        %v2924 = vld [vmem:[%s2778 + $0x1c8] sm:$0xf]
        %v2925 = vld [vmem:[%s2778 + $0x1cc] sm:$0xf]
        %v2926 = vld [vmem:[%s2778 + $0x1d0] sm:$0xf]
        %v2927 = vld [vmem:[%s2778 + $0x1d4] sm:$0xf]
        %v2928 = vld [vmem:[%s2778 + $0x1d8] sm:$0xf]
        %v2929 = vld [vmem:[%s2778 + $0x1dc] sm:$0xf]
        %v2930 = vld [vmem:[%s2778 + $0x1e0] sm:$0xf]
        %v2931 = vld [vmem:[%s2778 + $0x1e4] sm:$0xf]
        %v2932 = vld [vmem:[%s2778 + $0x1e8] sm:$0xf]
        %v2933 = vld [vmem:[%s2778 + $0x1ec] sm:$0xf]
        %v2934 = vld [vmem:[%s2778 + $0x1f0] sm:$0xf]
        %v2935 = vld [vmem:[%s2778 + $0x1f4] sm:$0xf]
        %v2936 = vld [vmem:[%s2778 + $0x1f8] sm:$0xf]
        %v2937 = vld [vmem:[%s2778 + $0x1fc] sm:$0xf]
        %v2944 = vunpack.c.l.b16 %v2804
        %v2945 = vunpack.c.h.b16 %v2804
        %v2946 = vunpack.c.l.b16 %v2805
        %v2947 = vunpack.c.h.b16 %v2805
        %v2948 = vunpack.c.l.b16 %v2806
        %v2949 = vunpack.c.h.b16 %v2806
        %v2950 = vunpack.c.l.b16 %v2807
        %v2951 = vunpack.c.h.b16 %v2807
        %v2952 = vunpack.c.l.b16 %v2808
        %v2953 = vunpack.c.h.b16 %v2808
        %v2954 = vunpack.c.l.b16 %v2809
        %v2955 = vunpack.c.h.b16 %v2809
        %v2956 = vpack.c.b16 %v2948, %v2944
        %v2957 = vpack.c.b16 %v2949, %v2945
        %v2958 = vpack.c.b16 %v2950, %v2946
        %v2959 = vpack.c.b16 %v2951, %v2947
        %v2960 = vpack.c.b16 %v2952, %v2952
        %v2961 = vpack.c.b16 %v2953, %v2953
        %v2962 = vpack.c.b16 %v2954, %v2954
        %v2963 = vpack.c.b16 %v2955, %v2955
        %vm2964 = vcmask 1046528
        %v2965 = vrot.slane %v2956, 1
        %v2966 = vrot.slane %v2960, 1
        %v2967 = vsel %vm2964, %v2965, %v2966
        %v2968 = vrot.slane %v2957, 1
        %v2969 = vrot.slane %v2961, 1
        %v2970 = vsel %vm2964, %v2968, %v2969
        %v2971 = vrot.slane %v2958, 1
        %v2972 = vrot.slane %v2962, 1
        %v2973 = vsel %vm2964, %v2971, %v2972
        %v2974 = vrot.slane %v2959, 1
        %v2975 = vrot.slane %v2963, 1
        %v2976 = vsel %vm2964, %v2974, %v2975
        %v3045 = vunpack.c.l.b16 %v2874
        %v3046 = vunpack.c.l.b16 %v2875
        %v3047 = vunpack.c.l.b16 %v2876
        %v3048 = vunpack.c.l.b16 %v2877
        %v3049 = vunpack.c.l.b16 %v2878
        %v3050 = vunpack.c.l.b16 %v2879
        %v3051 = vunpack.c.l.b16 %v2880
        %v3052 = vunpack.c.l.b16 %v2881
        %v3053 = vunpack.c.l.b16 %v2882
        %v3054 = vunpack.c.l.b16 %v2883
        %v3055 = vunpack.c.l.b16 %v2884
        %v3056 = vunpack.c.l.b16 %v2885
        %v3057 = vunpack.c.l.b16 %v2886
        %v3058 = vunpack.c.l.b16 %v2887
        %v3059 = vunpack.c.l.b16 %v2888
        %v3060 = vunpack.c.l.b16 %v2889
        %v3061 = vunpack.c.l.b16 %v2890
        %v3062 = vunpack.c.l.b16 %v2891
        %v3063 = vunpack.c.l.b16 %v2892
        %v3064 = vunpack.c.l.b16 %v2893
        %v3065 = vunpack.c.l.b16 %v2894
        %v3066 = vunpack.c.l.b16 %v2895
        %v3067 = vunpack.c.l.b16 %v2896
        %v3068 = vunpack.c.l.b16 %v2897
        %v3069 = vunpack.c.l.b16 %v2898
        %v3070 = vunpack.c.l.b16 %v2899
        %v3071 = vunpack.c.l.b16 %v2900
        %v3072 = vunpack.c.l.b16 %v2901
        %v3073 = vunpack.c.l.b16 %v2902
        %v3074 = vunpack.c.l.b16 %v2903
        %v3075 = vunpack.c.l.b16 %v2904
        %v3076 = vunpack.c.l.b16 %v2905
        %v3077 = vunpack.c.l.b16 %v2906
        %v3078 = vunpack.c.l.b16 %v2907
        %v3079 = vunpack.c.l.b16 %v2908
        %v3080 = vunpack.c.l.b16 %v2909
        %v3081 = vunpack.c.l.b16 %v2910
        %v3082 = vunpack.c.l.b16 %v2911
        %v3083 = vunpack.c.l.b16 %v2912
        %v3084 = vunpack.c.l.b16 %v2913
        %v3085 = vunpack.c.l.b16 %v2914
        %v3086 = vunpack.c.l.b16 %v2915
        %v3087 = vunpack.c.l.b16 %v2916
        %v3088 = vunpack.c.l.b16 %v2917
        %v3089 = vunpack.c.l.b16 %v2918
        %v3090 = vunpack.c.l.b16 %v2919
        %v3091 = vunpack.c.l.b16 %v2920
        %v3092 = vunpack.c.l.b16 %v2921
        %v3093 = vunpack.c.l.b16 %v2922
        %v3094 = vunpack.c.l.b16 %v2923
        %v3095 = vunpack.c.l.b16 %v2924
        %v3096 = vunpack.c.l.b16 %v2925
        %v3097 = vunpack.c.l.b16 %v2926
        %v3098 = vunpack.c.l.b16 %v2927
        %v3099 = vunpack.c.l.b16 %v2928
        %v3100 = vunpack.c.l.b16 %v2929
        %v3101 = vunpack.c.l.b16 %v2930
        %v3102 = vunpack.c.l.b16 %v2931
        %v3103 = vunpack.c.l.b16 %v2932
        %v3104 = vunpack.c.l.b16 %v2933
        %v3105 = vunpack.c.l.b16 %v2934
        %v3106 = vunpack.c.l.b16 %v2935
        %v3107 = vunpack.c.l.b16 %v2936
        %v3108 = vunpack.c.l.b16 %v2937
        %v3109 = vpack.c.b16 %v3046, %v3045
        %v3110 = vpack.c.b16 %v3048, %v3047
        %v3111 = vpack.c.b16 %v3050, %v3049
        %v3112 = vpack.c.b16 %v3052, %v3051
        %v3113 = vpack.c.b16 %v3054, %v3053
        %v3114 = vpack.c.b16 %v3056, %v3055
        %v3115 = vpack.c.b16 %v3058, %v3057
        %v3116 = vpack.c.b16 %v3060, %v3059
        %v3117 = vpack.c.b16 %v3062, %v3061
        %v3118 = vpack.c.b16 %v3064, %v3063
        %v3119 = vpack.c.b16 %v3066, %v3065
        %v3120 = vpack.c.b16 %v3068, %v3067
        %v3121 = vpack.c.b16 %v3070, %v3069
        %v3122 = vpack.c.b16 %v3072, %v3071
        %v3123 = vpack.c.b16 %v3074, %v3073
        %v3124 = vpack.c.b16 %v3076, %v3075
        %v3125 = vpack.c.b16 %v3078, %v3077
        %v3126 = vpack.c.b16 %v3080, %v3079
        %v3127 = vpack.c.b16 %v3082, %v3081
        %v3128 = vpack.c.b16 %v3084, %v3083
        %v3129 = vpack.c.b16 %v3086, %v3085
        %v3130 = vpack.c.b16 %v3088, %v3087
        %v3131 = vpack.c.b16 %v3090, %v3089
        %v3132 = vpack.c.b16 %v3092, %v3091
        %v3133 = vpack.c.b16 %v3094, %v3093
        %v3134 = vpack.c.b16 %v3096, %v3095
        %v3135 = vpack.c.b16 %v3098, %v3097
        %v3136 = vpack.c.b16 %v3100, %v3099
        %v3137 = vpack.c.b16 %v3102, %v3101
        %v3138 = vpack.c.b16 %v3104, %v3103
        %v3139 = vpack.c.b16 %v3106, %v3105
        %v3140 = vpack.c.b16 %v3108, %v3107
        %3173 = vmatpush.bf16.msra.mxu0 %v3116
        %3174 = vmatpush.bf16.msra.mxu0 %v3115
        %3175 = vmatpush.bf16.msra.mxu0 %v3114
        %3176 = vmatpush.bf16.msra.mxu0 %v3113
        %3177 = vmatpush.bf16.msra.mxu0 %v3112
        %3178 = vmatpush.bf16.msra.mxu0 %v3111
        %3179 = vmatpush.bf16.msra.mxu0 %v3110
        %3180 = vmatpush.bf16.msra.mxu0 %v3109
        %3181 = vmatmul.bf16.gmra.mxu0 %v2967
        %v3182 = vpop.f32.mrf.mxu0
        %v3183 = vadd.f32 0.0, %v3182
        %v3184 = vpop.f32.mrf.mxu0
        %v3185 = vadd.f32 0.0, %v3184
        %3186 = vdwg.mxu0
        %3187 = vmatpush.bf16.msra.mxu0 %v3124
        %3188 = vmatpush.bf16.msra.mxu0 %v3123
        %3189 = vmatpush.bf16.msra.mxu0 %v3122
        %3190 = vmatpush.bf16.msra.mxu0 %v3121
        %3191 = vmatpush.bf16.msra.mxu0 %v3120
        %3192 = vmatpush.bf16.msra.mxu0 %v3119
        %3193 = vmatpush.bf16.msra.mxu0 %v3118
        %3194 = vmatpush.bf16.msra.mxu0 %v3117
        %3195 = vmatmul.bf16.gmra.mxu0 %v2970
        %v3196 = vpop.f32.mrf.mxu0
        %v3197 = vadd.f32 %v3183, %v3196
        %v3198 = vpop.f32.mrf.mxu0
        %v3199 = vadd.f32 %v3185, %v3198
        %3200 = vdwg.mxu0
        %3201 = vmatpush.bf16.msra.mxu0 %v3132
        %3202 = vmatpush.bf16.msra.mxu0 %v3131
        %3203 = vmatpush.bf16.msra.mxu0 %v3130
        %3204 = vmatpush.bf16.msra.mxu0 %v3129
        %3205 = vmatpush.bf16.msra.mxu0 %v3128
        %3206 = vmatpush.bf16.msra.mxu0 %v3127
        %3207 = vmatpush.bf16.msra.mxu0 %v3126
        %3208 = vmatpush.bf16.msra.mxu0 %v3125
        %3209 = vmatmul.bf16.gmra.mxu0 %v2973
        %v3210 = vpop.f32.mrf.mxu0
        %v3211 = vadd.f32 %v3197, %v3210
        %v3212 = vpop.f32.mrf.mxu0
        %v3213 = vadd.f32 %v3199, %v3212
        %3214 = vdwg.mxu0
        %3215 = vmatpush.bf16.msra.mxu0 %v3140
        %3216 = vmatpush.bf16.msra.mxu0 %v3139
        %3217 = vmatpush.bf16.msra.mxu0 %v3138
        %3218 = vmatpush.bf16.msra.mxu0 %v3137
        %3219 = vmatpush.bf16.msra.mxu0 %v3136
        %3220 = vmatpush.bf16.msra.mxu0 %v3135
        %3221 = vmatpush.bf16.msra.mxu0 %v3134
        %3222 = vmatpush.bf16.msra.mxu0 %v3133
        %3223 = vmatmul.bf16.gmra.mxu0 %v2976
        %v3224 = vpop.f32.mrf.mxu0
        %v3225 = vadd.f32 %v3211, %v3224
        %v3226 = vpop.f32.mrf.mxu0
        %v3227 = vadd.f32 %v3213, %v3226
        %3228 = vdwg.mxu0
        %v3297 = vunpack.c.l.b16 %v2810
        %v3298 = vunpack.c.l.b16 %v2811
        %v3299 = vunpack.c.l.b16 %v2812
        %v3300 = vunpack.c.l.b16 %v2813
        %v3301 = vunpack.c.l.b16 %v2814
        %v3302 = vunpack.c.l.b16 %v2815
        %v3303 = vunpack.c.l.b16 %v2816
        %v3304 = vunpack.c.l.b16 %v2817
        %v3305 = vunpack.c.l.b16 %v2818
        %v3306 = vunpack.c.l.b16 %v2819
        %v3307 = vunpack.c.l.b16 %v2820
        %v3308 = vunpack.c.l.b16 %v2821
        %v3309 = vunpack.c.l.b16 %v2822
        %v3310 = vunpack.c.l.b16 %v2823
        %v3311 = vunpack.c.l.b16 %v2824
        %v3312 = vunpack.c.l.b16 %v2825
        %v3313 = vunpack.c.l.b16 %v2826
        %v3314 = vunpack.c.l.b16 %v2827
        %v3315 = vunpack.c.l.b16 %v2828
        %v3316 = vunpack.c.l.b16 %v2829
        %v3317 = vunpack.c.l.b16 %v2830
        %v3318 = vunpack.c.l.b16 %v2831
        %v3319 = vunpack.c.l.b16 %v2832
        %v3320 = vunpack.c.l.b16 %v2833
        %v3321 = vunpack.c.l.b16 %v2834
        %v3322 = vunpack.c.l.b16 %v2835
        %v3323 = vunpack.c.l.b16 %v2836
        %v3324 = vunpack.c.l.b16 %v2837
        %v3325 = vunpack.c.l.b16 %v2838
        %v3326 = vunpack.c.l.b16 %v2839
        %v3327 = vunpack.c.l.b16 %v2840
        %v3328 = vunpack.c.l.b16 %v2841
        %v3329 = vunpack.c.l.b16 %v2842
        %v3330 = vunpack.c.l.b16 %v2843
        %v3331 = vunpack.c.l.b16 %v2844
        %v3332 = vunpack.c.l.b16 %v2845
        %v3333 = vunpack.c.l.b16 %v2846
        %v3334 = vunpack.c.l.b16 %v2847
        %v3335 = vunpack.c.l.b16 %v2848
        %v3336 = vunpack.c.l.b16 %v2849
        %v3337 = vunpack.c.l.b16 %v2850
        %v3338 = vunpack.c.l.b16 %v2851
        %v3339 = vunpack.c.l.b16 %v2852
        %v3340 = vunpack.c.l.b16 %v2853
        %v3341 = vunpack.c.l.b16 %v2854
        %v3342 = vunpack.c.l.b16 %v2855
        %v3343 = vunpack.c.l.b16 %v2856
        %v3344 = vunpack.c.l.b16 %v2857
        %v3345 = vunpack.c.l.b16 %v2858
        %v3346 = vunpack.c.l.b16 %v2859
        %v3347 = vunpack.c.l.b16 %v2860
        %v3348 = vunpack.c.l.b16 %v2861
        %v3349 = vunpack.c.l.b16 %v2862
        %v3350 = vunpack.c.l.b16 %v2863
        %v3351 = vunpack.c.l.b16 %v2864
        %v3352 = vunpack.c.l.b16 %v2865
        %v3353 = vunpack.c.l.b16 %v2866
        %v3354 = vunpack.c.l.b16 %v2867
        %v3355 = vunpack.c.l.b16 %v2868
        %v3356 = vunpack.c.l.b16 %v2869
        %v3357 = vunpack.c.l.b16 %v2870
        %v3358 = vunpack.c.l.b16 %v2871
        %v3359 = vunpack.c.l.b16 %v2872
        %v3360 = vunpack.c.l.b16 %v2873
        %v3361 = vpack.c.b16 %v3298, %v3297
        %v3362 = vpack.c.b16 %v3300, %v3299
        %v3363 = vpack.c.b16 %v3302, %v3301
        %v3364 = vpack.c.b16 %v3304, %v3303
        %v3365 = vpack.c.b16 %v3306, %v3305
        %v3366 = vpack.c.b16 %v3308, %v3307
        %v3367 = vpack.c.b16 %v3310, %v3309
        %v3368 = vpack.c.b16 %v3312, %v3311
        %v3369 = vpack.c.b16 %v3314, %v3313
        %v3370 = vpack.c.b16 %v3316, %v3315
        %v3371 = vpack.c.b16 %v3318, %v3317
        %v3372 = vpack.c.b16 %v3320, %v3319
        %v3373 = vpack.c.b16 %v3322, %v3321
        %v3374 = vpack.c.b16 %v3324, %v3323
        %v3375 = vpack.c.b16 %v3326, %v3325
        %v3376 = vpack.c.b16 %v3328, %v3327
        %v3377 = vpack.c.b16 %v3330, %v3329
        %v3378 = vpack.c.b16 %v3332, %v3331
        %v3379 = vpack.c.b16 %v3334, %v3333
        %v3380 = vpack.c.b16 %v3336, %v3335
        %v3381 = vpack.c.b16 %v3338, %v3337
        %v3382 = vpack.c.b16 %v3340, %v3339
        %v3383 = vpack.c.b16 %v3342, %v3341
        %v3384 = vpack.c.b16 %v3344, %v3343
        %v3385 = vpack.c.b16 %v3346, %v3345
        %v3386 = vpack.c.b16 %v3348, %v3347
        %v3387 = vpack.c.b16 %v3350, %v3349
        %v3388 = vpack.c.b16 %v3352, %v3351
        %v3389 = vpack.c.b16 %v3354, %v3353
        %v3390 = vpack.c.b16 %v3356, %v3355
        %v3391 = vpack.c.b16 %v3358, %v3357
        %v3392 = vpack.c.b16 %v3360, %v3359
        %3425 = vmatpush.bf16.msra.mxu0 %v3368
        %3426 = vmatpush.bf16.msra.mxu0 %v3367
        %3427 = vmatpush.bf16.msra.mxu0 %v3366
        %3428 = vmatpush.bf16.msra.mxu0 %v3365
        %3429 = vmatpush.bf16.msra.mxu0 %v3364
        %3430 = vmatpush.bf16.msra.mxu0 %v3363
        %3431 = vmatpush.bf16.msra.mxu0 %v3362
        %3432 = vmatpush.bf16.msra.mxu0 %v3361
        %3433 = vmatmul.bf16.gmra.mxu0 %v2956
        %v3434 = vpop.f32.mrf.mxu0
        %v3435 = vadd.f32 %v3225, %v3434
        %v3436 = vpop.f32.mrf.mxu0
        %v3437 = vadd.f32 %v3227, %v3436
        %3438 = vdwg.mxu0
        %3439 = vmatpush.bf16.msra.mxu0 %v3376
        %3440 = vmatpush.bf16.msra.mxu0 %v3375
        %3441 = vmatpush.bf16.msra.mxu0 %v3374
        %3442 = vmatpush.bf16.msra.mxu0 %v3373
        %3443 = vmatpush.bf16.msra.mxu0 %v3372
        %3444 = vmatpush.bf16.msra.mxu0 %v3371
        %3445 = vmatpush.bf16.msra.mxu0 %v3370
        %3446 = vmatpush.bf16.msra.mxu0 %v3369
        %3447 = vmatmul.bf16.gmra.mxu0 %v2957
        %v3448 = vpop.f32.mrf.mxu0
        %v3449 = vadd.f32 %v3435, %v3448
        %v3450 = vpop.f32.mrf.mxu0
        %v3451 = vadd.f32 %v3437, %v3450
        %3452 = vdwg.mxu0
        %3453 = vmatpush.bf16.msra.mxu0 %v3384
        %3454 = vmatpush.bf16.msra.mxu0 %v3383
        %3455 = vmatpush.bf16.msra.mxu0 %v3382
        %3456 = vmatpush.bf16.msra.mxu0 %v3381
        %3457 = vmatpush.bf16.msra.mxu0 %v3380
        %3458 = vmatpush.bf16.msra.mxu0 %v3379
        %3459 = vmatpush.bf16.msra.mxu0 %v3378
        %3460 = vmatpush.bf16.msra.mxu0 %v3377
        %3461 = vmatmul.bf16.gmra.mxu0 %v2958
        %v3462 = vpop.f32.mrf.mxu0
        %v3463 = vadd.f32 %v3449, %v3462
        %v3464 = vpop.f32.mrf.mxu0
        %v3465 = vadd.f32 %v3451, %v3464
        %3466 = vdwg.mxu0
        %3467 = vmatpush.bf16.msra.mxu0 %v3392
        %3468 = vmatpush.bf16.msra.mxu0 %v3391
        %3469 = vmatpush.bf16.msra.mxu0 %v3390
        %3470 = vmatpush.bf16.msra.mxu0 %v3389
        %3471 = vmatpush.bf16.msra.mxu0 %v3388
        %3472 = vmatpush.bf16.msra.mxu0 %v3387
        %3473 = vmatpush.bf16.msra.mxu0 %v3386
        %3474 = vmatpush.bf16.msra.mxu0 %v3385
        %3475 = vmatmul.bf16.gmra.mxu0 %v2959
        %v3476 = vpop.f32.mrf.mxu0
        %v3477 = vadd.f32 %v3463, %v3476
        %v3478 = vpop.f32.mrf.mxu0
        %v3479 = vadd.f32 %v3465, %v3478
        %3480 = vdwg.mxu0
        %v3481 = vld [vmem:[%s2778 + $0x200] sm:$0xf]
        %v3482 = vld [vmem:[%s2778 + $0x204] sm:$0xf]
        %v3483 = vld [vmem:[%s2778 + $0x208] sm:$0xf]
        %v3484 = vld [vmem:[%s2778 + $0x20c] sm:$0xf]
        %v3485 = vld [vmem:[%s2778 + $0x210] sm:$0xf]
        %v3486 = vld [vmem:[%s2778 + $0x214] sm:$0xf]
        %v3487 = vld [vmem:[%s2778 + $0x218] sm:$0xf]
        %v3488 = vld [vmem:[%s2778 + $0x21c] sm:$0xf]
        %v3489 = vld [vmem:[%s2778 + $0x220] sm:$0xf]
        %v3490 = vld [vmem:[%s2778 + $0x224] sm:$0xf]
        %v3491 = vld [vmem:[%s2778 + $0x228] sm:$0xf]
        %v3492 = vld [vmem:[%s2778 + $0x22c] sm:$0xf]
        %v3493 = vld [vmem:[%s2778 + $0x230] sm:$0xf]
        %v3494 = vld [vmem:[%s2778 + $0x234] sm:$0xf]
        %v3495 = vld [vmem:[%s2778 + $0x238] sm:$0xf]
        %v3496 = vld [vmem:[%s2778 + $0x23c] sm:$0xf]
        %v3497 = vld [vmem:[%s2778 + $0x240] sm:$0xf]
        %v3498 = vld [vmem:[%s2778 + $0x244] sm:$0xf]
        %v3499 = vld [vmem:[%s2778 + $0x248] sm:$0xf]
        %v3500 = vld [vmem:[%s2778 + $0x24c] sm:$0xf]
        %v3501 = vld [vmem:[%s2778 + $0x250] sm:$0xf]
        %v3502 = vld [vmem:[%s2778 + $0x254] sm:$0xf]
        %v3503 = vld [vmem:[%s2778 + $0x258] sm:$0xf]
        %v3504 = vld [vmem:[%s2778 + $0x25c] sm:$0xf]
        %v3505 = vld [vmem:[%s2778 + $0x260] sm:$0xf]
        %v3506 = vld [vmem:[%s2778 + $0x264] sm:$0xf]
        %v3507 = vld [vmem:[%s2778 + $0x268] sm:$0xf]
        %v3508 = vld [vmem:[%s2778 + $0x26c] sm:$0xf]
        %v3509 = vld [vmem:[%s2778 + $0x270] sm:$0xf]
        %v3510 = vld [vmem:[%s2778 + $0x274] sm:$0xf]
        %v3511 = vld [vmem:[%s2778 + $0x278] sm:$0xf]
        %v3512 = vld [vmem:[%s2778 + $0x27c] sm:$0xf]
        %v3513 = vld [vmem:[%s2778 + $0x280] sm:$0xf]
        %v3514 = vld [vmem:[%s2778 + $0x284] sm:$0xf]
        %v3515 = vld [vmem:[%s2778 + $0x288] sm:$0xf]
        %v3516 = vld [vmem:[%s2778 + $0x28c] sm:$0xf]
        %v3517 = vld [vmem:[%s2778 + $0x290] sm:$0xf]
        %v3518 = vld [vmem:[%s2778 + $0x294] sm:$0xf]
        %v3519 = vld [vmem:[%s2778 + $0x298] sm:$0xf]
        %v3520 = vld [vmem:[%s2778 + $0x29c] sm:$0xf]
        %v3521 = vld [vmem:[%s2778 + $0x2a0] sm:$0xf]
        %v3522 = vld [vmem:[%s2778 + $0x2a4] sm:$0xf]
        %v3523 = vld [vmem:[%s2778 + $0x2a8] sm:$0xf]
        %v3524 = vld [vmem:[%s2778 + $0x2ac] sm:$0xf]
        %v3525 = vld [vmem:[%s2778 + $0x2b0] sm:$0xf]
        %v3526 = vld [vmem:[%s2778 + $0x2b4] sm:$0xf]
        %v3527 = vld [vmem:[%s2778 + $0x2b8] sm:$0xf]
        %v3528 = vld [vmem:[%s2778 + $0x2bc] sm:$0xf]
        %v3529 = vld [vmem:[%s2778 + $0x2c0] sm:$0xf]
        %v3530 = vld [vmem:[%s2778 + $0x2c4] sm:$0xf]
        %v3531 = vld [vmem:[%s2778 + $0x2c8] sm:$0xf]
        %v3532 = vld [vmem:[%s2778 + $0x2cc] sm:$0xf]
        %v3533 = vld [vmem:[%s2778 + $0x2d0] sm:$0xf]
        %v3534 = vld [vmem:[%s2778 + $0x2d4] sm:$0xf]
        %v3535 = vld [vmem:[%s2778 + $0x2d8] sm:$0xf]
        %v3536 = vld [vmem:[%s2778 + $0x2dc] sm:$0xf]
        %v3537 = vld [vmem:[%s2778 + $0x2e0] sm:$0xf]
        %v3538 = vld [vmem:[%s2778 + $0x2e4] sm:$0xf]
        %v3539 = vld [vmem:[%s2778 + $0x2e8] sm:$0xf]
        %v3540 = vld [vmem:[%s2778 + $0x2ec] sm:$0xf]
        %v3541 = vld [vmem:[%s2778 + $0x2f0] sm:$0xf]
        %v3542 = vld [vmem:[%s2778 + $0x2f4] sm:$0xf]
        %v3543 = vld [vmem:[%s2778 + $0x2f8] sm:$0xf]
        %v3544 = vld [vmem:[%s2778 + $0x2fc] sm:$0xf]
        %vm3545 = vcmask 1045504
        %v3546 = vrot.slane %v2956, 2
        %v3547 = vrot.slane %v2960, 2
        %v3548 = vsel %vm3545, %v3546, %v3547
        %v3549 = vrot.slane %v2957, 2
        %v3550 = vrot.slane %v2961, 2
        %v3551 = vsel %vm3545, %v3549, %v3550
        %v3552 = vrot.slane %v2958, 2
        %v3553 = vrot.slane %v2962, 2
        %v3554 = vsel %vm3545, %v3552, %v3553
        %v3555 = vrot.slane %v2959, 2
        %v3556 = vrot.slane %v2963, 2
        %v3557 = vsel %vm3545, %v3555, %v3556
        %v3626 = vunpack.c.l.b16 %v3481
        %v3627 = vunpack.c.l.b16 %v3482
        %v3628 = vunpack.c.l.b16 %v3483
        %v3629 = vunpack.c.l.b16 %v3484
        %v3630 = vunpack.c.l.b16 %v3485
        %v3631 = vunpack.c.l.b16 %v3486
        %v3632 = vunpack.c.l.b16 %v3487
        %v3633 = vunpack.c.l.b16 %v3488
        %v3634 = vunpack.c.l.b16 %v3489
        %v3635 = vunpack.c.l.b16 %v3490
        %v3636 = vunpack.c.l.b16 %v3491
        %v3637 = vunpack.c.l.b16 %v3492
        %v3638 = vunpack.c.l.b16 %v3493
        %v3639 = vunpack.c.l.b16 %v3494
        %v3640 = vunpack.c.l.b16 %v3495
        %v3641 = vunpack.c.l.b16 %v3496
        %v3642 = vunpack.c.l.b16 %v3497
        %v3643 = vunpack.c.l.b16 %v3498
        %v3644 = vunpack.c.l.b16 %v3499
        %v3645 = vunpack.c.l.b16 %v3500
        %v3646 = vunpack.c.l.b16 %v3501
        %v3647 = vunpack.c.l.b16 %v3502
        %v3648 = vunpack.c.l.b16 %v3503
        %v3649 = vunpack.c.l.b16 %v3504
        %v3650 = vunpack.c.l.b16 %v3505
        %v3651 = vunpack.c.l.b16 %v3506
        %v3652 = vunpack.c.l.b16 %v3507
        %v3653 = vunpack.c.l.b16 %v3508
        %v3654 = vunpack.c.l.b16 %v3509
        %v3655 = vunpack.c.l.b16 %v3510
        %v3656 = vunpack.c.l.b16 %v3511
        %v3657 = vunpack.c.l.b16 %v3512
        %v3658 = vunpack.c.l.b16 %v3513
        %v3659 = vunpack.c.l.b16 %v3514
        %v3660 = vunpack.c.l.b16 %v3515
        %v3661 = vunpack.c.l.b16 %v3516
        %v3662 = vunpack.c.l.b16 %v3517
        %v3663 = vunpack.c.l.b16 %v3518
        %v3664 = vunpack.c.l.b16 %v3519
        %v3665 = vunpack.c.l.b16 %v3520
        %v3666 = vunpack.c.l.b16 %v3521
        %v3667 = vunpack.c.l.b16 %v3522
        %v3668 = vunpack.c.l.b16 %v3523
        %v3669 = vunpack.c.l.b16 %v3524
        %v3670 = vunpack.c.l.b16 %v3525
        %v3671 = vunpack.c.l.b16 %v3526
        %v3672 = vunpack.c.l.b16 %v3527
        %v3673 = vunpack.c.l.b16 %v3528
        %v3674 = vunpack.c.l.b16 %v3529
        %v3675 = vunpack.c.l.b16 %v3530
        %v3676 = vunpack.c.l.b16 %v3531
        %v3677 = vunpack.c.l.b16 %v3532
        %v3678 = vunpack.c.l.b16 %v3533
        %v3679 = vunpack.c.l.b16 %v3534
        %v3680 = vunpack.c.l.b16 %v3535
        %v3681 = vunpack.c.l.b16 %v3536
        %v3682 = vunpack.c.l.b16 %v3537
        %v3683 = vunpack.c.l.b16 %v3538
        %v3684 = vunpack.c.l.b16 %v3539
        %v3685 = vunpack.c.l.b16 %v3540
        %v3686 = vunpack.c.l.b16 %v3541
        %v3687 = vunpack.c.l.b16 %v3542
        %v3688 = vunpack.c.l.b16 %v3543
        %v3689 = vunpack.c.l.b16 %v3544
        %v3690 = vpack.c.b16 %v3627, %v3626
        %v3691 = vpack.c.b16 %v3629, %v3628
        %v3692 = vpack.c.b16 %v3631, %v3630
        %v3693 = vpack.c.b16 %v3633, %v3632
        %v3694 = vpack.c.b16 %v3635, %v3634
        %v3695 = vpack.c.b16 %v3637, %v3636
        %v3696 = vpack.c.b16 %v3639, %v3638
        %v3697 = vpack.c.b16 %v3641, %v3640
        %v3698 = vpack.c.b16 %v3643, %v3642
        %v3699 = vpack.c.b16 %v3645, %v3644
        %v3700 = vpack.c.b16 %v3647, %v3646
        %v3701 = vpack.c.b16 %v3649, %v3648
        %v3702 = vpack.c.b16 %v3651, %v3650
        %v3703 = vpack.c.b16 %v3653, %v3652
        %v3704 = vpack.c.b16 %v3655, %v3654
        %v3705 = vpack.c.b16 %v3657, %v3656
        %v3706 = vpack.c.b16 %v3659, %v3658
        %v3707 = vpack.c.b16 %v3661, %v3660
        %v3708 = vpack.c.b16 %v3663, %v3662
        %v3709 = vpack.c.b16 %v3665, %v3664
        %v3710 = vpack.c.b16 %v3667, %v3666
        %v3711 = vpack.c.b16 %v3669, %v3668
        %v3712 = vpack.c.b16 %v3671, %v3670
        %v3713 = vpack.c.b16 %v3673, %v3672
        %v3714 = vpack.c.b16 %v3675, %v3674
        %v3715 = vpack.c.b16 %v3677, %v3676
        %v3716 = vpack.c.b16 %v3679, %v3678
        %v3717 = vpack.c.b16 %v3681, %v3680
        %v3718 = vpack.c.b16 %v3683, %v3682
        %v3719 = vpack.c.b16 %v3685, %v3684
        %v3720 = vpack.c.b16 %v3687, %v3686
        %v3721 = vpack.c.b16 %v3689, %v3688
        %3754 = vmatpush.bf16.msra.mxu0 %v3697
        %3755 = vmatpush.bf16.msra.mxu0 %v3696
        %3756 = vmatpush.bf16.msra.mxu0 %v3695
        %3757 = vmatpush.bf16.msra.mxu0 %v3694
        %3758 = vmatpush.bf16.msra.mxu0 %v3693
        %3759 = vmatpush.bf16.msra.mxu0 %v3692
        %3760 = vmatpush.bf16.msra.mxu0 %v3691
        %3761 = vmatpush.bf16.msra.mxu0 %v3690
        %3762 = vmatmul.bf16.gmra.mxu0 %v3548
        %v3763 = vpop.f32.mrf.mxu0
        %v3764 = vadd.f32 0.0, %v3763
        %v3765 = vpop.f32.mrf.mxu0
        %v3766 = vadd.f32 0.0, %v3765
        %3767 = vdwg.mxu0
        %3768 = vmatpush.bf16.msra.mxu0 %v3705
        %3769 = vmatpush.bf16.msra.mxu0 %v3704
        %3770 = vmatpush.bf16.msra.mxu0 %v3703
        %3771 = vmatpush.bf16.msra.mxu0 %v3702
        %3772 = vmatpush.bf16.msra.mxu0 %v3701
        %3773 = vmatpush.bf16.msra.mxu0 %v3700
        %3774 = vmatpush.bf16.msra.mxu0 %v3699
        %3775 = vmatpush.bf16.msra.mxu0 %v3698
        %3776 = vmatmul.bf16.gmra.mxu0 %v3551
        %v3777 = vpop.f32.mrf.mxu0
        %v3778 = vadd.f32 %v3764, %v3777
        %v3779 = vpop.f32.mrf.mxu0
        %v3780 = vadd.f32 %v3766, %v3779
        %3781 = vdwg.mxu0
        %3782 = vmatpush.bf16.msra.mxu0 %v3713
        %3783 = vmatpush.bf16.msra.mxu0 %v3712
        %3784 = vmatpush.bf16.msra.mxu0 %v3711
        %3785 = vmatpush.bf16.msra.mxu0 %v3710
        %3786 = vmatpush.bf16.msra.mxu0 %v3709
        %3787 = vmatpush.bf16.msra.mxu0 %v3708
        %3788 = vmatpush.bf16.msra.mxu0 %v3707
        %3789 = vmatpush.bf16.msra.mxu0 %v3706
        %3790 = vmatmul.bf16.gmra.mxu0 %v3554
        %v3791 = vpop.f32.mrf.mxu0
        %v3792 = vadd.f32 %v3778, %v3791
        %v3793 = vpop.f32.mrf.mxu0
        %v3794 = vadd.f32 %v3780, %v3793
        %3795 = vdwg.mxu0
        %3796 = vmatpush.bf16.msra.mxu0 %v3721
        %3797 = vmatpush.bf16.msra.mxu0 %v3720
        %3798 = vmatpush.bf16.msra.mxu0 %v3719
        %3799 = vmatpush.bf16.msra.mxu0 %v3718
        %3800 = vmatpush.bf16.msra.mxu0 %v3717
        %3801 = vmatpush.bf16.msra.mxu0 %v3716
        %3802 = vmatpush.bf16.msra.mxu0 %v3715
        %3803 = vmatpush.bf16.msra.mxu0 %v3714
        %3804 = vmatmul.bf16.gmra.mxu0 %v3557
        %v3805 = vpop.f32.mrf.mxu0
        %v3806 = vadd.f32 %v3792, %v3805
        %v3807 = vpop.f32.mrf.mxu0
        %v3808 = vadd.f32 %v3794, %v3807
        %3809 = vdwg.mxu0
        %v3810 = vadd.f32 %v3477, %v3806
        %v3811 = vadd.f32 %v3479, %v3808
        %v3812 = vld [vmem:[%s2778 + $0x300] sm:$0xf]
        %v3813 = vld [vmem:[%s2778 + $0x304] sm:$0xf]
        %v3814 = vld [vmem:[%s2778 + $0x308] sm:$0xf]
        %v3815 = vld [vmem:[%s2778 + $0x30c] sm:$0xf]
        %v3816 = vld [vmem:[%s2778 + $0x310] sm:$0xf]
        %v3817 = vld [vmem:[%s2778 + $0x314] sm:$0xf]
        %v3818 = vld [vmem:[%s2778 + $0x318] sm:$0xf]
        %v3819 = vld [vmem:[%s2778 + $0x31c] sm:$0xf]
        %v3820 = vld [vmem:[%s2778 + $0x320] sm:$0xf]
        %v3821 = vld [vmem:[%s2778 + $0x324] sm:$0xf]
        %v3822 = vld [vmem:[%s2778 + $0x328] sm:$0xf]
        %v3823 = vld [vmem:[%s2778 + $0x32c] sm:$0xf]
        %v3824 = vld [vmem:[%s2778 + $0x330] sm:$0xf]
        %v3825 = vld [vmem:[%s2778 + $0x334] sm:$0xf]
        %v3826 = vld [vmem:[%s2778 + $0x338] sm:$0xf]
        %v3827 = vld [vmem:[%s2778 + $0x33c] sm:$0xf]
        %v3828 = vld [vmem:[%s2778 + $0x340] sm:$0xf]
        %v3829 = vld [vmem:[%s2778 + $0x344] sm:$0xf]
        %v3830 = vld [vmem:[%s2778 + $0x348] sm:$0xf]
        %v3831 = vld [vmem:[%s2778 + $0x34c] sm:$0xf]
        %v3832 = vld [vmem:[%s2778 + $0x350] sm:$0xf]
        %v3833 = vld [vmem:[%s2778 + $0x354] sm:$0xf]
        %v3834 = vld [vmem:[%s2778 + $0x358] sm:$0xf]
        %v3835 = vld [vmem:[%s2778 + $0x35c] sm:$0xf]
        %v3836 = vld [vmem:[%s2778 + $0x360] sm:$0xf]
        %v3837 = vld [vmem:[%s2778 + $0x364] sm:$0xf]
        %v3838 = vld [vmem:[%s2778 + $0x368] sm:$0xf]
        %v3839 = vld [vmem:[%s2778 + $0x36c] sm:$0xf]
        %v3840 = vld [vmem:[%s2778 + $0x370] sm:$0xf]
        %v3841 = vld [vmem:[%s2778 + $0x374] sm:$0xf]
        %v3842 = vld [vmem:[%s2778 + $0x378] sm:$0xf]
        %v3843 = vld [vmem:[%s2778 + $0x37c] sm:$0xf]
        %v3844 = vld [vmem:[%s2778 + $0x380] sm:$0xf]
        %v3845 = vld [vmem:[%s2778 + $0x384] sm:$0xf]
        %v3846 = vld [vmem:[%s2778 + $0x388] sm:$0xf]
        %v3847 = vld [vmem:[%s2778 + $0x38c] sm:$0xf]
        %v3848 = vld [vmem:[%s2778 + $0x390] sm:$0xf]
        %v3849 = vld [vmem:[%s2778 + $0x394] sm:$0xf]
        %v3850 = vld [vmem:[%s2778 + $0x398] sm:$0xf]
        %v3851 = vld [vmem:[%s2778 + $0x39c] sm:$0xf]
        %v3852 = vld [vmem:[%s2778 + $0x3a0] sm:$0xf]
        %v3853 = vld [vmem:[%s2778 + $0x3a4] sm:$0xf]
        %v3854 = vld [vmem:[%s2778 + $0x3a8] sm:$0xf]
        %v3855 = vld [vmem:[%s2778 + $0x3ac] sm:$0xf]
        %v3856 = vld [vmem:[%s2778 + $0x3b0] sm:$0xf]
        %v3857 = vld [vmem:[%s2778 + $0x3b4] sm:$0xf]
        %v3858 = vld [vmem:[%s2778 + $0x3b8] sm:$0xf]
        %v3859 = vld [vmem:[%s2778 + $0x3bc] sm:$0xf]
        %v3860 = vld [vmem:[%s2778 + $0x3c0] sm:$0xf]
        %v3861 = vld [vmem:[%s2778 + $0x3c4] sm:$0xf]
        %v3862 = vld [vmem:[%s2778 + $0x3c8] sm:$0xf]
        %v3863 = vld [vmem:[%s2778 + $0x3cc] sm:$0xf]
        %v3864 = vld [vmem:[%s2778 + $0x3d0] sm:$0xf]
        %v3865 = vld [vmem:[%s2778 + $0x3d4] sm:$0xf]
        %v3866 = vld [vmem:[%s2778 + $0x3d8] sm:$0xf]
        %v3867 = vld [vmem:[%s2778 + $0x3dc] sm:$0xf]
        %v3868 = vld [vmem:[%s2778 + $0x3e0] sm:$0xf]
        %v3869 = vld [vmem:[%s2778 + $0x3e4] sm:$0xf]
        %v3870 = vld [vmem:[%s2778 + $0x3e8] sm:$0xf]
        %v3871 = vld [vmem:[%s2778 + $0x3ec] sm:$0xf]
        %v3872 = vld [vmem:[%s2778 + $0x3f0] sm:$0xf]
        %v3873 = vld [vmem:[%s2778 + $0x3f4] sm:$0xf]
        %v3874 = vld [vmem:[%s2778 + $0x3f8] sm:$0xf]
        %v3875 = vld [vmem:[%s2778 + $0x3fc] sm:$0xf]
        %vm3876 = vcmask 1044480
        %v3877 = vrot.slane %v2956, 3
        %v3878 = vrot.slane %v2960, 3
        %v3879 = vsel %vm3876, %v3877, %v3878
        %v3880 = vrot.slane %v2957, 3
        %v3881 = vrot.slane %v2961, 3
        %v3882 = vsel %vm3876, %v3880, %v3881
        %v3883 = vrot.slane %v2958, 3
        %v3884 = vrot.slane %v2962, 3
        %v3885 = vsel %vm3876, %v3883, %v3884
        %v3886 = vrot.slane %v2959, 3
        %v3887 = vrot.slane %v2963, 3
        %v3888 = vsel %vm3876, %v3886, %v3887
        %v3957 = vunpack.c.l.b16 %v3812
        %v3958 = vunpack.c.l.b16 %v3813
        %v3959 = vunpack.c.l.b16 %v3814
        %v3960 = vunpack.c.l.b16 %v3815
        %v3961 = vunpack.c.l.b16 %v3816
        %v3962 = vunpack.c.l.b16 %v3817
        %v3963 = vunpack.c.l.b16 %v3818
        %v3964 = vunpack.c.l.b16 %v3819
        %v3965 = vunpack.c.l.b16 %v3820
        %v3966 = vunpack.c.l.b16 %v3821
        %v3967 = vunpack.c.l.b16 %v3822
        %v3968 = vunpack.c.l.b16 %v3823
        %v3969 = vunpack.c.l.b16 %v3824
        %v3970 = vunpack.c.l.b16 %v3825
        %v3971 = vunpack.c.l.b16 %v3826
        %v3972 = vunpack.c.l.b16 %v3827
        %v3973 = vunpack.c.l.b16 %v3828
        %v3974 = vunpack.c.l.b16 %v3829
        %v3975 = vunpack.c.l.b16 %v3830
        %v3976 = vunpack.c.l.b16 %v3831
        %v3977 = vunpack.c.l.b16 %v3832
        %v3978 = vunpack.c.l.b16 %v3833
        %v3979 = vunpack.c.l.b16 %v3834
        %v3980 = vunpack.c.l.b16 %v3835
        %v3981 = vunpack.c.l.b16 %v3836
        %v3982 = vunpack.c.l.b16 %v3837
        %v3983 = vunpack.c.l.b16 %v3838
        %v3984 = vunpack.c.l.b16 %v3839
        %v3985 = vunpack.c.l.b16 %v3840
        %v3986 = vunpack.c.l.b16 %v3841
        %v3987 = vunpack.c.l.b16 %v3842
        %v3988 = vunpack.c.l.b16 %v3843
        %v3989 = vunpack.c.l.b16 %v3844
        %v3990 = vunpack.c.l.b16 %v3845
        %v3991 = vunpack.c.l.b16 %v3846
        %v3992 = vunpack.c.l.b16 %v3847
        %v3993 = vunpack.c.l.b16 %v3848
        %v3994 = vunpack.c.l.b16 %v3849
        %v3995 = vunpack.c.l.b16 %v3850
        %v3996 = vunpack.c.l.b16 %v3851
        %v3997 = vunpack.c.l.b16 %v3852
        %v3998 = vunpack.c.l.b16 %v3853
        %v3999 = vunpack.c.l.b16 %v3854
        %v4000 = vunpack.c.l.b16 %v3855
        %v4001 = vunpack.c.l.b16 %v3856
        %v4002 = vunpack.c.l.b16 %v3857
        %v4003 = vunpack.c.l.b16 %v3858
        %v4004 = vunpack.c.l.b16 %v3859
        %v4005 = vunpack.c.l.b16 %v3860
        %v4006 = vunpack.c.l.b16 %v3861
        %v4007 = vunpack.c.l.b16 %v3862
        %v4008 = vunpack.c.l.b16 %v3863
        %v4009 = vunpack.c.l.b16 %v3864
        %v4010 = vunpack.c.l.b16 %v3865
        %v4011 = vunpack.c.l.b16 %v3866
        %v4012 = vunpack.c.l.b16 %v3867
        %v4013 = vunpack.c.l.b16 %v3868
        %v4014 = vunpack.c.l.b16 %v3869
        %v4015 = vunpack.c.l.b16 %v3870
        %v4016 = vunpack.c.l.b16 %v3871
        %v4017 = vunpack.c.l.b16 %v3872
        %v4018 = vunpack.c.l.b16 %v3873
        %v4019 = vunpack.c.l.b16 %v3874
        %v4020 = vunpack.c.l.b16 %v3875
        %v4021 = vpack.c.b16 %v3958, %v3957
        %v4022 = vpack.c.b16 %v3960, %v3959
        %v4023 = vpack.c.b16 %v3962, %v3961
        %v4024 = vpack.c.b16 %v3964, %v3963
        %v4025 = vpack.c.b16 %v3966, %v3965
        %v4026 = vpack.c.b16 %v3968, %v3967
        %v4027 = vpack.c.b16 %v3970, %v3969
        %v4028 = vpack.c.b16 %v3972, %v3971
        %v4029 = vpack.c.b16 %v3974, %v3973
        %v4030 = vpack.c.b16 %v3976, %v3975
        %v4031 = vpack.c.b16 %v3978, %v3977
        %v4032 = vpack.c.b16 %v3980, %v3979
        %v4033 = vpack.c.b16 %v3982, %v3981
        %v4034 = vpack.c.b16 %v3984, %v3983
        %v4035 = vpack.c.b16 %v3986, %v3985
        %v4036 = vpack.c.b16 %v3988, %v3987
        %v4037 = vpack.c.b16 %v3990, %v3989
        %v4038 = vpack.c.b16 %v3992, %v3991
        %v4039 = vpack.c.b16 %v3994, %v3993
        %v4040 = vpack.c.b16 %v3996, %v3995
        %v4041 = vpack.c.b16 %v3998, %v3997
        %v4042 = vpack.c.b16 %v4000, %v3999
        %v4043 = vpack.c.b16 %v4002, %v4001
        %v4044 = vpack.c.b16 %v4004, %v4003
        %v4045 = vpack.c.b16 %v4006, %v4005
        %v4046 = vpack.c.b16 %v4008, %v4007
        %v4047 = vpack.c.b16 %v4010, %v4009
        %v4048 = vpack.c.b16 %v4012, %v4011
        %v4049 = vpack.c.b16 %v4014, %v4013
        %v4050 = vpack.c.b16 %v4016, %v4015
        %v4051 = vpack.c.b16 %v4018, %v4017
        %v4052 = vpack.c.b16 %v4020, %v4019
        %4085 = vmatpush.bf16.msra.mxu0 %v4028
        %4086 = vmatpush.bf16.msra.mxu0 %v4027
        %4087 = vmatpush.bf16.msra.mxu0 %v4026
        %4088 = vmatpush.bf16.msra.mxu0 %v4025
        %4089 = vmatpush.bf16.msra.mxu0 %v4024
        %4090 = vmatpush.bf16.msra.mxu0 %v4023
        %4091 = vmatpush.bf16.msra.mxu0 %v4022
        %4092 = vmatpush.bf16.msra.mxu0 %v4021
        %4093 = vmatmul.bf16.gmra.mxu0 %v3879
        %v4094 = vpop.f32.mrf.mxu0
        %v4095 = vadd.f32 0.0, %v4094
        %v4096 = vpop.f32.mrf.mxu0
        %v4097 = vadd.f32 0.0, %v4096
        %4098 = vdwg.mxu0
        %4099 = vmatpush.bf16.msra.mxu0 %v4036
        %4100 = vmatpush.bf16.msra.mxu0 %v4035
        %4101 = vmatpush.bf16.msra.mxu0 %v4034
        %4102 = vmatpush.bf16.msra.mxu0 %v4033
        %4103 = vmatpush.bf16.msra.mxu0 %v4032
        %4104 = vmatpush.bf16.msra.mxu0 %v4031
        %4105 = vmatpush.bf16.msra.mxu0 %v4030
        %4106 = vmatpush.bf16.msra.mxu0 %v4029
        %4107 = vmatmul.bf16.gmra.mxu0 %v3882
        %v4108 = vpop.f32.mrf.mxu0
        %v4109 = vadd.f32 %v4095, %v4108
        %v4110 = vpop.f32.mrf.mxu0
        %v4111 = vadd.f32 %v4097, %v4110
        %4112 = vdwg.mxu0
        %4113 = vmatpush.bf16.msra.mxu0 %v4044
        %4114 = vmatpush.bf16.msra.mxu0 %v4043
        %4115 = vmatpush.bf16.msra.mxu0 %v4042
        %4116 = vmatpush.bf16.msra.mxu0 %v4041
        %4117 = vmatpush.bf16.msra.mxu0 %v4040
        %4118 = vmatpush.bf16.msra.mxu0 %v4039
        %4119 = vmatpush.bf16.msra.mxu0 %v4038
        %4120 = vmatpush.bf16.msra.mxu0 %v4037
        %4121 = vmatmul.bf16.gmra.mxu0 %v3885
        %v4122 = vpop.f32.mrf.mxu0
        %v4123 = vadd.f32 %v4109, %v4122
        %v4124 = vpop.f32.mrf.mxu0
        %v4125 = vadd.f32 %v4111, %v4124
        %4126 = vdwg.mxu0
        %4127 = vmatpush.bf16.msra.mxu0 %v4052
        %4128 = vmatpush.bf16.msra.mxu0 %v4051
        %4129 = vmatpush.bf16.msra.mxu0 %v4050
        %4130 = vmatpush.bf16.msra.mxu0 %v4049
        %4131 = vmatpush.bf16.msra.mxu0 %v4048
        %4132 = vmatpush.bf16.msra.mxu0 %v4047
        %4133 = vmatpush.bf16.msra.mxu0 %v4046
        %4134 = vmatpush.bf16.msra.mxu0 %v4045
        %4135 = vmatmul.bf16.gmra.mxu0 %v3888
        %v4136 = vpop.f32.mrf.mxu0
        %v4137 = vadd.f32 %v4123, %v4136
        %v4138 = vpop.f32.mrf.mxu0
        %v4139 = vadd.f32 %v4125, %v4138
        %4140 = vdwg.mxu0
        %v4141 = vadd.f32 %v3810, %v4137
        %v4142 = vadd.f32 %v3811, %v4139
        %v4143 = vld [vmem:[%s2778 + $0x400] sm:$0xf]
        %v4144 = vld [vmem:[%s2778 + $0x404] sm:$0xf]
        %v4145 = vld [vmem:[%s2778 + $0x408] sm:$0xf]
        %v4146 = vld [vmem:[%s2778 + $0x40c] sm:$0xf]
        %v4147 = vld [vmem:[%s2778 + $0x410] sm:$0xf]
        %v4148 = vld [vmem:[%s2778 + $0x414] sm:$0xf]
        %v4149 = vld [vmem:[%s2778 + $0x418] sm:$0xf]
        %v4150 = vld [vmem:[%s2778 + $0x41c] sm:$0xf]
        %v4151 = vld [vmem:[%s2778 + $0x420] sm:$0xf]
        %v4152 = vld [vmem:[%s2778 + $0x424] sm:$0xf]
        %v4153 = vld [vmem:[%s2778 + $0x428] sm:$0xf]
        %v4154 = vld [vmem:[%s2778 + $0x42c] sm:$0xf]
        %v4155 = vld [vmem:[%s2778 + $0x430] sm:$0xf]
        %v4156 = vld [vmem:[%s2778 + $0x434] sm:$0xf]
        %v4157 = vld [vmem:[%s2778 + $0x438] sm:$0xf]
        %v4158 = vld [vmem:[%s2778 + $0x43c] sm:$0xf]
        %v4159 = vld [vmem:[%s2778 + $0x440] sm:$0xf]
        %v4160 = vld [vmem:[%s2778 + $0x444] sm:$0xf]
        %v4161 = vld [vmem:[%s2778 + $0x448] sm:$0xf]
        %v4162 = vld [vmem:[%s2778 + $0x44c] sm:$0xf]
        %v4163 = vld [vmem:[%s2778 + $0x450] sm:$0xf]
        %v4164 = vld [vmem:[%s2778 + $0x454] sm:$0xf]
        %v4165 = vld [vmem:[%s2778 + $0x458] sm:$0xf]
        %v4166 = vld [vmem:[%s2778 + $0x45c] sm:$0xf]
        %v4167 = vld [vmem:[%s2778 + $0x460] sm:$0xf]
        %v4168 = vld [vmem:[%s2778 + $0x464] sm:$0xf]
        %v4169 = vld [vmem:[%s2778 + $0x468] sm:$0xf]
        %v4170 = vld [vmem:[%s2778 + $0x46c] sm:$0xf]
        %v4171 = vld [vmem:[%s2778 + $0x470] sm:$0xf]
        %v4172 = vld [vmem:[%s2778 + $0x474] sm:$0xf]
        %v4173 = vld [vmem:[%s2778 + $0x478] sm:$0xf]
        %v4174 = vld [vmem:[%s2778 + $0x47c] sm:$0xf]
        %v4175 = vld [vmem:[%s2778 + $0x480] sm:$0xf]
        %v4176 = vld [vmem:[%s2778 + $0x484] sm:$0xf]
        %v4177 = vld [vmem:[%s2778 + $0x488] sm:$0xf]
        %v4178 = vld [vmem:[%s2778 + $0x48c] sm:$0xf]
        %v4179 = vld [vmem:[%s2778 + $0x490] sm:$0xf]
        %v4180 = vld [vmem:[%s2778 + $0x494] sm:$0xf]
        %v4181 = vld [vmem:[%s2778 + $0x498] sm:$0xf]
        %v4182 = vld [vmem:[%s2778 + $0x49c] sm:$0xf]
        %v4183 = vld [vmem:[%s2778 + $0x4a0] sm:$0xf]
        %v4184 = vld [vmem:[%s2778 + $0x4a4] sm:$0xf]
        %v4185 = vld [vmem:[%s2778 + $0x4a8] sm:$0xf]
        %v4186 = vld [vmem:[%s2778 + $0x4ac] sm:$0xf]
        %v4187 = vld [vmem:[%s2778 + $0x4b0] sm:$0xf]
        %v4188 = vld [vmem:[%s2778 + $0x4b4] sm:$0xf]
        %v4189 = vld [vmem:[%s2778 + $0x4b8] sm:$0xf]
        %v4190 = vld [vmem:[%s2778 + $0x4bc] sm:$0xf]
        %v4191 = vld [vmem:[%s2778 + $0x4c0] sm:$0xf]
        %v4192 = vld [vmem:[%s2778 + $0x4c4] sm:$0xf]
        %v4193 = vld [vmem:[%s2778 + $0x4c8] sm:$0xf]
        %v4194 = vld [vmem:[%s2778 + $0x4cc] sm:$0xf]
        %v4195 = vld [vmem:[%s2778 + $0x4d0] sm:$0xf]
        %v4196 = vld [vmem:[%s2778 + $0x4d4] sm:$0xf]
        %v4197 = vld [vmem:[%s2778 + $0x4d8] sm:$0xf]
        %v4198 = vld [vmem:[%s2778 + $0x4dc] sm:$0xf]
        %v4199 = vld [vmem:[%s2778 + $0x4e0] sm:$0xf]
        %v4200 = vld [vmem:[%s2778 + $0x4e4] sm:$0xf]
        %v4201 = vld [vmem:[%s2778 + $0x4e8] sm:$0xf]
        %v4202 = vld [vmem:[%s2778 + $0x4ec] sm:$0xf]
        %v4203 = vld [vmem:[%s2778 + $0x4f0] sm:$0xf]
        %v4204 = vld [vmem:[%s2778 + $0x4f4] sm:$0xf]
        %v4205 = vld [vmem:[%s2778 + $0x4f8] sm:$0xf]
        %v4206 = vld [vmem:[%s2778 + $0x4fc] sm:$0xf]
        %v4207 = vpack.c.b16 %v2952, %v2948
        %v4208 = vpack.c.b16 %v2953, %v2949
        %v4209 = vpack.c.b16 %v2954, %v2950
        %v4210 = vpack.c.b16 %v2955, %v2951
        %v4279 = vunpack.c.l.b16 %v4143
        %v4280 = vunpack.c.l.b16 %v4144
        %v4281 = vunpack.c.l.b16 %v4145
        %v4282 = vunpack.c.l.b16 %v4146
        %v4283 = vunpack.c.l.b16 %v4147
        %v4284 = vunpack.c.l.b16 %v4148
        %v4285 = vunpack.c.l.b16 %v4149
        %v4286 = vunpack.c.l.b16 %v4150
        %v4287 = vunpack.c.l.b16 %v4151
        %v4288 = vunpack.c.l.b16 %v4152
        %v4289 = vunpack.c.l.b16 %v4153
        %v4290 = vunpack.c.l.b16 %v4154
        %v4291 = vunpack.c.l.b16 %v4155
        %v4292 = vunpack.c.l.b16 %v4156
        %v4293 = vunpack.c.l.b16 %v4157
        %v4294 = vunpack.c.l.b16 %v4158
        %v4295 = vunpack.c.l.b16 %v4159
        %v4296 = vunpack.c.l.b16 %v4160
        %v4297 = vunpack.c.l.b16 %v4161
        %v4298 = vunpack.c.l.b16 %v4162
        %v4299 = vunpack.c.l.b16 %v4163
        %v4300 = vunpack.c.l.b16 %v4164
        %v4301 = vunpack.c.l.b16 %v4165
        %v4302 = vunpack.c.l.b16 %v4166
        %v4303 = vunpack.c.l.b16 %v4167
        %v4304 = vunpack.c.l.b16 %v4168
        %v4305 = vunpack.c.l.b16 %v4169
        %v4306 = vunpack.c.l.b16 %v4170
        %v4307 = vunpack.c.l.b16 %v4171
        %v4308 = vunpack.c.l.b16 %v4172
        %v4309 = vunpack.c.l.b16 %v4173
        %v4310 = vunpack.c.l.b16 %v4174
        %v4311 = vunpack.c.l.b16 %v4175
        %v4312 = vunpack.c.l.b16 %v4176
        %v4313 = vunpack.c.l.b16 %v4177
        %v4314 = vunpack.c.l.b16 %v4178
        %v4315 = vunpack.c.l.b16 %v4179
        %v4316 = vunpack.c.l.b16 %v4180
        %v4317 = vunpack.c.l.b16 %v4181
        %v4318 = vunpack.c.l.b16 %v4182
        %v4319 = vunpack.c.l.b16 %v4183
        %v4320 = vunpack.c.l.b16 %v4184
        %v4321 = vunpack.c.l.b16 %v4185
        %v4322 = vunpack.c.l.b16 %v4186
        %v4323 = vunpack.c.l.b16 %v4187
        %v4324 = vunpack.c.l.b16 %v4188
        %v4325 = vunpack.c.l.b16 %v4189
        %v4326 = vunpack.c.l.b16 %v4190
        %v4327 = vunpack.c.l.b16 %v4191
        %v4328 = vunpack.c.l.b16 %v4192
        %v4329 = vunpack.c.l.b16 %v4193
        %v4330 = vunpack.c.l.b16 %v4194
        %v4331 = vunpack.c.l.b16 %v4195
        %v4332 = vunpack.c.l.b16 %v4196
        %v4333 = vunpack.c.l.b16 %v4197
        %v4334 = vunpack.c.l.b16 %v4198
        %v4335 = vunpack.c.l.b16 %v4199
        %v4336 = vunpack.c.l.b16 %v4200
        %v4337 = vunpack.c.l.b16 %v4201
        %v4338 = vunpack.c.l.b16 %v4202
        %v4339 = vunpack.c.l.b16 %v4203
        %v4340 = vunpack.c.l.b16 %v4204
        %v4341 = vunpack.c.l.b16 %v4205
        %v4342 = vunpack.c.l.b16 %v4206
        %v4343 = vpack.c.b16 %v4280, %v4279
        %v4344 = vpack.c.b16 %v4282, %v4281
        %v4345 = vpack.c.b16 %v4284, %v4283
        %v4346 = vpack.c.b16 %v4286, %v4285
        %v4347 = vpack.c.b16 %v4288, %v4287
        %v4348 = vpack.c.b16 %v4290, %v4289
        %v4349 = vpack.c.b16 %v4292, %v4291
        %v4350 = vpack.c.b16 %v4294, %v4293
        %v4351 = vpack.c.b16 %v4296, %v4295
        %v4352 = vpack.c.b16 %v4298, %v4297
        %v4353 = vpack.c.b16 %v4300, %v4299
        %v4354 = vpack.c.b16 %v4302, %v4301
        %v4355 = vpack.c.b16 %v4304, %v4303
        %v4356 = vpack.c.b16 %v4306, %v4305
        %v4357 = vpack.c.b16 %v4308, %v4307
        %v4358 = vpack.c.b16 %v4310, %v4309
        %v4359 = vpack.c.b16 %v4312, %v4311
        %v4360 = vpack.c.b16 %v4314, %v4313
        %v4361 = vpack.c.b16 %v4316, %v4315
        %v4362 = vpack.c.b16 %v4318, %v4317
        %v4363 = vpack.c.b16 %v4320, %v4319
        %v4364 = vpack.c.b16 %v4322, %v4321
        %v4365 = vpack.c.b16 %v4324, %v4323
        %v4366 = vpack.c.b16 %v4326, %v4325
        %v4367 = vpack.c.b16 %v4328, %v4327
        %v4368 = vpack.c.b16 %v4330, %v4329
        %v4369 = vpack.c.b16 %v4332, %v4331
        %v4370 = vpack.c.b16 %v4334, %v4333
        %v4371 = vpack.c.b16 %v4336, %v4335
        %v4372 = vpack.c.b16 %v4338, %v4337
        %v4373 = vpack.c.b16 %v4340, %v4339
        %v4374 = vpack.c.b16 %v4342, %v4341
        %4407 = vmatpush.bf16.msra.mxu0 %v4350
        %4408 = vmatpush.bf16.msra.mxu0 %v4349
        %4409 = vmatpush.bf16.msra.mxu0 %v4348
        %4410 = vmatpush.bf16.msra.mxu0 %v4347
        %4411 = vmatpush.bf16.msra.mxu0 %v4346
        %4412 = vmatpush.bf16.msra.mxu0 %v4345
        %4413 = vmatpush.bf16.msra.mxu0 %v4344
        %4414 = vmatpush.bf16.msra.mxu0 %v4343
        %4415 = vmatmul.bf16.gmra.mxu0 %v4207
        %v4416 = vpop.f32.mrf.mxu0
        %v4417 = vadd.f32 0.0, %v4416
        %v4418 = vpop.f32.mrf.mxu0
        %v4419 = vadd.f32 0.0, %v4418
        %4420 = vdwg.mxu0
        %4421 = vmatpush.bf16.msra.mxu0 %v4358
        %4422 = vmatpush.bf16.msra.mxu0 %v4357
        %4423 = vmatpush.bf16.msra.mxu0 %v4356
        %4424 = vmatpush.bf16.msra.mxu0 %v4355
        %4425 = vmatpush.bf16.msra.mxu0 %v4354
        %4426 = vmatpush.bf16.msra.mxu0 %v4353
        %4427 = vmatpush.bf16.msra.mxu0 %v4352
        %4428 = vmatpush.bf16.msra.mxu0 %v4351
        %4429 = vmatmul.bf16.gmra.mxu0 %v4208
        %v4430 = vpop.f32.mrf.mxu0
        %v4431 = vadd.f32 %v4417, %v4430
        %v4432 = vpop.f32.mrf.mxu0
        %v4433 = vadd.f32 %v4419, %v4432
        %4434 = vdwg.mxu0
        %4435 = vmatpush.bf16.msra.mxu0 %v4366
        %4436 = vmatpush.bf16.msra.mxu0 %v4365
        %4437 = vmatpush.bf16.msra.mxu0 %v4364
        %4438 = vmatpush.bf16.msra.mxu0 %v4363
        %4439 = vmatpush.bf16.msra.mxu0 %v4362
        %4440 = vmatpush.bf16.msra.mxu0 %v4361
        %4441 = vmatpush.bf16.msra.mxu0 %v4360
        %4442 = vmatpush.bf16.msra.mxu0 %v4359
        %4443 = vmatmul.bf16.gmra.mxu0 %v4209
        %v4444 = vpop.f32.mrf.mxu0
        %v4445 = vadd.f32 %v4431, %v4444
        %v4446 = vpop.f32.mrf.mxu0
        %v4447 = vadd.f32 %v4433, %v4446
        %4448 = vdwg.mxu0
        %4449 = vmatpush.bf16.msra.mxu0 %v4374
        %4450 = vmatpush.bf16.msra.mxu0 %v4373
        %4451 = vmatpush.bf16.msra.mxu0 %v4372
        %4452 = vmatpush.bf16.msra.mxu0 %v4371
        %4453 = vmatpush.bf16.msra.mxu0 %v4370
        %4454 = vmatpush.bf16.msra.mxu0 %v4369
        %4455 = vmatpush.bf16.msra.mxu0 %v4368
        %4456 = vmatpush.bf16.msra.mxu0 %v4367
        %4457 = vmatmul.bf16.gmra.mxu0 %v4210
        %v4458 = vpop.f32.mrf.mxu0
        %v4459 = vadd.f32 %v4445, %v4458
        %v4460 = vpop.f32.mrf.mxu0
        %v4461 = vadd.f32 %v4447, %v4460
        %4462 = vdwg.mxu0
        %v4463 = vadd.f32 %v4141, %v4459
        %v4464 = vadd.f32 %v4142, %v4461
        %v4465 = vld [vmem:[%s2803] sm:$0x1]
        %v4467 = vperm.slane %v4465, 0
        %v4469 = vadd.f32 %v4463, %v4467
        %v4470 = vadd.f32 %v4464, %v4467
        %v4471 = vadd.f32 %v4469, %v4470
        %v4472 = vrot.slane %v4471, 4
        %v4473 = vadd.f32 %v4471, %v4472
        %v4474 = vrot.slane %v4473, 2
        %v4475 = vadd.f32 %v4473, %v4474
        %v4476 = vrot.slane %v4475, 1
        %v4477 = vadd.f32 %v4475, %v4476
        %v4478 = vrcp.pop 16.0
        %v4479 = vmul.f32 16.0, %v4478
        %v4480 = vsub.f32 1.0, %v4479
        %v4481 = vmul.f32 %v4478, %v4480
        %v4482 = vadd.f32 %v4478, %v4481
        %vm4483 = vweird.f32 %v4478
        %v4484 = vsel %vm4483, %v4478, %v4482
        %v4485 = vmul.f32 %v4477, %v4484
        %v4486 = vsub.f32 %v4469, %v4485
        %v4487 = vsub.f32 %v4470, %v4485
        %v4488 = vmul.f32 %v4486, %v4486
        %v4489 = vmul.f32 %v4487, %v4487
        %v4490 = vadd.f32 %v4488, %v4489
        %v4491 = vrot.slane %v4490, 4
        %v4492 = vadd.f32 %v4490, %v4491
        %v4493 = vrot.slane %v4492, 2
        %v4494 = vadd.f32 %v4492, %v4493
        %v4495 = vrot.slane %v4494, 1
        %v4496 = vadd.f32 %v4494, %v4495
        %v4497 = vmul.f32 %v4496, %v4484
        %v4498 = vadd.f32 %v4497, 1e-05
        %v4499 = vrsqrt.pop %v4498
        %v4500 = vmul.f32 %v4499, %v4498
        %v4501 = vmul.f32 %v4500, %v4499
        %v4502 = vmul.f32 0.5, %v4501
        %v4503 = vsub.f32 1.5, %v4502
        %v4504 = vmul.f32 %v4499, %v4503
        %vm4505 = vweird.f32 %v4498
        %vm4506 = vweird.f32 %v4499
        %vm4507 = vmor %vm4505, %vm4506
        %v4508 = vsel %vm4507, %v4499, %v4504
        %v4509 = vmul.f32 %v4486, %v4508
        %v4510 = vmul.f32 %v4487, %v4508
        %v4511 = vmax.f32 %v4509, 0.0
        %v4512 = vmax.f32 %v4510, 0.0
        %4513 = vst [vmem:[%s2800] sm:$0xff] %v4511
        %4514 = vst [vmem:[%s2800 + $0x8] sm:$0xff] %v4512
        %s4515 = sand.u32 %s95, 1
        %s4516 = sand.u32 %s95, 1
        %s4517 = smul.addr %s4516, 16
        %s4518 = scalar_lea.vmem [#allocation3], %s4517
        // Predicated region
        $region85: #{encoder_fwd.8} parent=79 // pred_check
          %p4519 = pneg %p105
        $region86: #{encoder_fwd.8} parent=79 // pred_check_branch
          %4521 = sbr.rel (%p4519) target = $region88
        $region87: #{encoder_fwd.8} parent=79 // pred_region
          %s4522 = smul.addr %s14, 8
          %s4523 = scalar_lea.vmem %s3, %s4522
          // Predicated region
          $region89: #{encoder_fwd.8} parent=87 // pred_check
            _
          $region90: #{encoder_fwd.8} parent=87 // pred_check_branch
            %4525 = sbr.rel (0) target = $region92
          $region91: #{encoder_fwd.8} parent=87 // pred_region
            // Predicated region
            $region93: #{encoder_fwd.8} parent=91 // pred_check
              _
            $region94: #{encoder_fwd.8} parent=91 // pred_check_branch
              %4527 = sbr.rel (0) target = $region96
            $region95: #{encoder_fwd.8} parent=91 // pred_region
              // Predicated region
              $region108: #{encoder_fwd.8} parent=95 // pred_check
                _
              $region109: #{encoder_fwd.8} parent=95 // pred_check_branch
                %4545 = sbr.rel (0) target = $region111
              $region110: #{encoder_fwd.8} parent=95 // pred_region
                loop: start=0, step=1, limit=1
                $region112: #{encoder_fwd.8} parent=110 // loop_pre_header
                  _
                $region113: #{encoder_fwd.8} parent=110 // loop_header
                  %s4547 = sphi 0, %s4551
                  %p4548 = scmp.ge.s32.totalorder %s4547, 1
                  %s4552 = sphi %s4518, %s4518
                  %s4553 = sphi %s4523, %s4523
                $region114: #{encoder_fwd.8} parent=110 // loop_header_branch
                  %4550 = sbr.rel (%p4548) target = $region118
                $region115: #{encoder_fwd.8} parent=110 // loop_body
                  %v4554 = vld [vmem:[%s4552] sm:$0xff]
                  %4555 = vst [vmem:[%s4553] sm:$0xff] %v4554
                  %v4556 = vld [vmem:[%s4552 + $0x8] sm:$0xff]
                  %4557 = vst [vmem:[%s4553 + $0x20] sm:$0xff] %v4556
                $region116: #{encoder_fwd.8} parent=110 // loop_footer
                  %s4551 = sadd.s32 1, %s4547
                $region117: #{encoder_fwd.8} parent=110 // loop_footer_branch
                  %4546 = sbr.rel target = $region113
                $region118: #{encoder_fwd.8} parent=110 // loop_exit
                  _
              $region111: #{encoder_fwd.8} parent=95 // pred_fallthru
                _
              // Predicated region
              $region119: #{encoder_fwd.8} parent=95 // pred_check
                _
              $region120: #{encoder_fwd.8} parent=95 // pred_check_branch
                %4559 = sbr.rel target = $region122
              $region121: #{encoder_fwd.8} parent=95 // pred_region
                _
              $region122: #{encoder_fwd.8} parent=95 // pred_fallthru
                _
            $region96: #{encoder_fwd.8} parent=91 // pred_fallthru
              _
            // Predicated region
            $region97: #{encoder_fwd.8} parent=91 // pred_check
              _
            $region98: #{encoder_fwd.8} parent=91 // pred_check_branch
              %4529 = sbr.rel target = $region100
            $region99: #{encoder_fwd.8} parent=91 // pred_region
              %s4531 = ssub.s32 256, 1
              loop: start=0, step=1, limit=1
              $region101: #{encoder_fwd.8} parent=99 // loop_pre_header
                _
              $region102: #{encoder_fwd.8} parent=99 // loop_header
                %s4533 = sphi 0, %s4537
                %p4534 = scmp.ge.s32.totalorder %s4533, 1
                %s4538 = sphi %s4518, %s4518
                %s4539 = sphi %s4523, %s4523
              $region103: #{encoder_fwd.8} parent=99 // loop_header_branch
                %4536 = sbr.rel (%p4534) target = $region107
              $region104: #{encoder_fwd.8} parent=99 // loop_body
                %v4540 = vld [vmem:[%s4538] sm:%s4531]
                %4541 = vst [vmem:[%s4539] sm:%s4531] %v4540
                %v4542 = vld [vmem:[%s4538 + $0x8] sm:%s4531]
                %4543 = vst [vmem:[%s4539 + $0x20] sm:%s4531] %v4542
              $region105: #{encoder_fwd.8} parent=99 // loop_footer
                %s4537 = sadd.s32 1, %s4533
              $region106: #{encoder_fwd.8} parent=99 // loop_footer_branch
                %4532 = sbr.rel target = $region102
              $region107: #{encoder_fwd.8} parent=99 // loop_exit
                _
            $region100: #{encoder_fwd.8} parent=91 // pred_fallthru
              _
          $region92: #{encoder_fwd.8} parent=87 // pred_fallthru
            _
          %4560 = vnop
        $region88: #{encoder_fwd.8} parent=79 // pred_fallthru
          _
      $region80: #{encoder_fwd.8} parent=5 // pred_fallthru
        _
      %p4561 = scmp.le.s32.totalorder 2, %s9
      // Predicated region
      $region123: #{encoder_fwd.8} parent=5 // pred_check
        %p4562 = pneg %p4561
      $region124: #{encoder_fwd.8} parent=5 // pred_check_branch
        %4564 = sbr.rel (%p4562) target = $region126
      $region125: #{encoder_fwd.8} parent=5 // pred_region
        %s4565 = ssub.s32 %s9, 2
        // Predicated region
        $region127: #{encoder_fwd.8} parent=125 // pred_check
          %p4566 = pneg %p111
        $region128: #{encoder_fwd.8} parent=125 // pred_check_branch
          %4568 = sbr.rel (%p4566) target = $region130
        $region129: #{encoder_fwd.8} parent=125 // pred_region
          %s4569 = sand.u32 %s96, 1
          %s4570 = sand.u32 %s96, 1
          %s4571 = smul.addr %s4570, 16
          %s4572 = scalar_lea.vmem [#allocation3], %s4571
        $region130: #{encoder_fwd.8} parent=125 // pred_fallthru
          _
      $region126: #{encoder_fwd.8} parent=5 // pred_fallthru
        _
    $region6: #{encoder_fwd.8} parent=1 // loop_footer
      %s13 = sadd.s32 1, %s9
    $region7: #{encoder_fwd.8} parent=1 // loop_footer_branch
      %8 = sbr.rel target = $region3
    $region8: #{encoder_fwd.8} parent=1 // loop_exit
      _

// kernel: encoder_fwd.12
$region0: #{encoder_fwd.12}
  #allocation0 [shape = 'u32[]', space=smem, size = 0x4, offset = 0x4, fixed_abs, tag = 'smem constant byte address 0x4 - core index']
  #allocation1 [shape = 'u32[72,128]{1,0:T(1,128)}', space=vmem, size = 0x9000, scoped, tag = 'internal scratch']
  %s0 = inlined_call_operand.vmem [shape: bf16[16,16], index: 0, kind: input, shape index: {}]
  %s1 = inlined_call_operand.vmem [shape: bf16[16,64], index: 1, kind: input, shape index: {}]
  %s2 = inlined_call_operand.vmem [shape: f32[1,64], index: 2, kind: input, shape index: {}]
  %s3 = inlined_call_operand.vmem [shape: f32[16,64], index: 3, kind: output, shape index: {}]
  %s4 = sld [smem:[#allocation0]]
  $region22: #{encoder_fwd.12} parent=0
    _
  %s6 = ssub.s32 1, %s4
  %s7 = scalar_select 0, %s6, %s4
  // Predicated region
  $region2: #{encoder_fwd.12} parent=0 // pred_check
    _
  $region3: #{encoder_fwd.12} parent=0 // pred_check_branch
    %9 = sbr.rel (0) target = $region5
  $region4: #{encoder_fwd.12} parent=0 // pred_region
    _
  $region5: #{encoder_fwd.12} parent=0 // pred_fallthru
    _
  // Predicated region
  $region6: #{encoder_fwd.12} parent=0 // pred_check
    _
  $region7: #{encoder_fwd.12} parent=0 // pred_check_branch
    %11 = sbr.rel (0) target = $region9
  $region8: #{encoder_fwd.12} parent=0 // pred_region
    _
  $region9: #{encoder_fwd.12} parent=0 // pred_fallthru
    _
  // Predicated region
  $region10: #{encoder_fwd.12} parent=0 // pred_check
    _
  $region11: #{encoder_fwd.12} parent=0 // pred_check_branch
    %13 = sbr.rel (0) target = $region13
  $region12: #{encoder_fwd.12} parent=0 // pred_region
    _
  $region13: #{encoder_fwd.12} parent=0 // pred_fallthru
    _
  %v15 = vld [vmem:[%s0] sm:$0xf]
  %v16 = vld [vmem:[%s0 + $0x4] sm:$0xf]
  %v17 = vld [vmem:[%s1] sm:$0xf]
  %v18 = vld [vmem:[%s1 + $0x4] sm:$0xf]
  %v19 = vld [vmem:[%s2] sm:$0x1]
  %v21 = vperm.slane %v19, 0
  %v25 = vunpack.c.l.b16 %v15
  %v26 = vunpack.c.l.b16 %v16
  %v27 = vpack.c.b16 %v26, %v25
  %v30 = vunpack.c.l.b16 %v17
  %v31 = vunpack.c.l.b16 %v18
  %v32 = vpack.c.b16 %v31, %v30
  %vm34 = vcmask 130048
  %v36 = vsel %vm34, %v27, 0
  %38 = vmatpush.bf16.msra.mxu0 0
  %39 = vmatpush.bf16.msra.mxu0 0
  %40 = vmatpush.bf16.msra.mxu0 0
  %41 = vmatpush.bf16.msra.mxu0 0
  %42 = vmatpush.bf16.msra.mxu0 0
  %43 = vmatpush.bf16.msra.mxu0 0
  %44 = vmatpush.bf16.msra.mxu0 0
  %45 = vmatpush.bf16.msra.mxu0 %v32
  %46 = vmatmul.bf16.gmra.mxu0 %v36
  %v47 = vpop.f32.mrf.mxu0
  %v48 = vadd.f32 %v21, %v47
  %v49 = vpop.f32.mrf.mxu0
  %v50 = vadd.f32 %v21, %v49
  %51 = vdwg.mxu0
  %vm52 = vcmask 523264
  %53 = vst.msk [vmem:[%s3] sm:$0xff] %vm52, %v48
  %54 = vst.msk [vmem:[%s3 + $0x8] sm:$0xff] %vm52, %v50
  // Predicated region
  $region14: #{encoder_fwd.12} parent=0 // pred_check
    _
  $region15: #{encoder_fwd.12} parent=0 // pred_check_branch
    %56 = sbr.rel (0) target = $region17
  $region16: #{encoder_fwd.12} parent=0 // pred_region
    _
  $region17: #{encoder_fwd.12} parent=0 // pred_fallthru
    _
  // Predicated region
  $region18: #{encoder_fwd.12} parent=0 // pred_check
    _
  $region19: #{encoder_fwd.12} parent=0 // pred_check_branch
    %58 = sbr.rel (0) target = $region21
  $region20: #{encoder_fwd.12} parent=0 // pred_region
    _
  $region21: #{encoder_fwd.12} parent=0 // pred_fallthru
    _

</llo_original>
